<compile_context>
chip_gen: v7x
topology: tpu7x:2x2x1
jax: 0.10.0
libtpu: 0.0.40
codegen_flags: <defaults>
</compile_context>

<pallas_src>
from functools import partial

import jax
import jax.numpy as jnp
from jax.experimental import pallas as pl
from jax.experimental.pallas import tpu as pltpu


# --------------------------------------------------------------------------
# Tile-size helpers
# --------------------------------------------------------------------------
def _choose_row_tile(M, cap=512):
    """Largest row tile (multiple of 8) dividing M that still gives >=2 steps."""
    for tm in (512, 256, 128, 64, 32, 16, 8):
        if tm <= cap and M % tm == 0 and M // tm >= 2:
            return tm
    return M


def _choose_stereo_th(Hc, Wc, C, B, budget_bytes=4 * 1024 * 1024):
    """H-tile for the stereo head: fits a VMEM budget, prefers >=2 grid steps."""
    cands = sorted({Hc} | {t for t in range(8, Hc + 1, 8) if Hc % t == 0},
                   reverse=True)
    # per H-row bytes: f1+f2 rows (bf16) + gram row (f32) + ~16 f32 work slabs
    per_row = 2 * Wc * C * 2 + Wc * Wc * 4 + 16 * Wc * 4
    th = cands[-1]
    for t in cands:
        if t * per_row <= budget_bytes:
            th = t
            break
    if B * (Hc // th) < 2:                       # keep both v7x TCs busy if possible
        for t in cands:
            if t < th and B * (Hc // t) >= 2:
                th = t
                break
    return th


# --------------------------------------------------------------------------
# Pallas kernel 1: fused ViTAS feature pyramid
#   rows = 1/16-scale pixels, columns = hierarchically ordered 16x16 block.
#   Three MXU matmuls (patch-embed, pool+d8, pool+d16); f4/f8 stay in VMEM.
# --------------------------------------------------------------------------
def _pyramid_kernel(x_ref, wp_ref, bp_ref, w8_ref, b8_ref, w16_ref, b16_ref,
                    o_ref):
    x = x_ref[...]                                         # (TM, 768) bf16
    f4 = jnp.dot(x, wp_ref[...],
                 preferred_element_type=jnp.float32) + bp_ref[...]
    f8 = jnp.dot(f4.astype(jnp.bfloat16), w8_ref[...],
                 preferred_element_type=jnp.float32) + b8_ref[...]
    f16 = jnp.dot(f8.astype(jnp.bfloat16), w16_ref[...],
                  preferred_element_type=jnp.float32) + b16_ref[...]
    o_ref[...] = f16.astype(o_ref.dtype)


def pallas_feature_pyramid(x, wp, bp, w8, b8, w16, b16):
    """x: (M, 768) bf16 -> 1/16-scale features (M, 64) bf16."""
    M, K = x.shape
    N = w16.shape[1]
    tm = _choose_row_tile(M)
    return pl.pallas_call(
        _pyramid_kernel,
        out_shape=jax.ShapeDtypeStruct((M, N), jnp.bfloat16),
        grid=(M // tm,),
        in_specs=[
            pl.BlockSpec((tm, K), lambda i: (i, 0)),
            pl.BlockSpec(wp.shape, lambda i: (0, 0)),
            pl.BlockSpec(bp.shape, lambda i: (0, 0)),
            pl.BlockSpec(w8.shape, lambda i: (0, 0)),
            pl.BlockSpec(b8.shape, lambda i: (0, 0)),
            pl.BlockSpec(w16.shape, lambda i: (0, 0)),
            pl.BlockSpec(b16.shape, lambda i: (0, 0)),
        ],
        out_specs=pl.BlockSpec((tm, N), lambda i: (i, 0)),
        compiler_params=pltpu.CompilerParams(
            dimension_semantics=("parallel",),
            vmem_limit_bytes=32 * 1024 * 1024),
    )(x, wp, bp, w8, b8, w16, b16)


# --------------------------------------------------------------------------
# Pallas kernel 2: IGEV-style stereo head
#   MXU Gram-matrix correlation -> masked soft-argmin -> iterative refinement.
#   Gridded over (batch, H-tiles); all operands stay tile-aligned (no W-slice
#   relayouts).
# --------------------------------------------------------------------------
def _stereo_kernel(f1_ref, f2_ref, w1_ref, b1_ref, w2_ref, b2_ref, disp_ref,
                   *, num_disp, iters, refine_ch):
    f1 = f1_ref[0]                                         # (TH, W, C) bf16
    f2 = f2_ref[0]
    TH, W, C = f1.shape
    inv_sqrt_c = 1.0 / float(C) ** 0.5

    # Per-row Gram matrix on the MXU (bf16 in, f32 accumulate).  Diagonal d of
    # gram[h] is the correlation at disparity d; extracting it with an iota
    # mask keeps every operand full-tile aligned (no unaligned W slices).
    gram = jnp.einsum("hwc,hvc->hwv", f1, f2,
                      preferred_element_type=jnp.float32)   # (TH, W, W)

    wv_diff = (jax.lax.broadcasted_iota(jnp.int32, (W, W), 0)
               - jax.lax.broadcasted_iota(jnp.int32, (W, W), 1))
    col = jax.lax.broadcasted_iota(jnp.int32, (TH, W), 1)
    NEG = jnp.float32(-1e30)

    corr = []                                # 0-masked features for refinement
    for d in range(num_disp):                # static unroll (num_disp small)
        sel = (wv_diff == d)[None, :, :]
        corr.append(jnp.sum(jnp.where(sel, gram, 0.0), axis=-1) * inv_sqrt_c)

    # --- soft-argmin over *valid* disparities (invalid -> -inf logit) --------
    m = corr[0]
    for d in range(1, num_disp):
        m = jnp.maximum(m, jnp.where(col >= d, corr[d], NEG))
    den = jnp.zeros_like(m)
    num = jnp.zeros_like(m)
    for d in range(num_disp):
        logit = corr[d] if d == 0 else jnp.where(col >= d, corr[d], NEG)
        p = jnp.exp(logit - m)
        den = den + p
        num = num + float(d) * p
    disp = num * pl.reciprocal(den, approx=True)            # (TH, W)

    # --- iterative refinement (ConvGRU distilled to a per-pixel MLP) ---------
    # Only the num_disp corr slabs + disp stay live; the per-channel
    # pre-activation is recomputed each iteration with a few VALU FMAs.
    w_corr = [[w1_ref[d, c] for d in range(num_disp)] for c in range(refine_ch)]
    w_disp = [w1_ref[num_disp, c] for c in range(refine_ch)]
    b1s = [b1_ref[c] for c in range(refine_ch)]
    w2s = [w2_ref[c] for c in range(refine_ch)]
    b2s = b2_ref[0]

    for _ in range(iters):                   # `iters` is static at trace time
        delta = None
        for c in range(refine_ch):
            pre = disp * w_disp[c] + b1s[c]
            for d in range(num_disp):
                pre = pre + corr[d] * w_corr[c][d]
            h = jnp.tanh(pre)
            t = h * w2s[c]
            delta = t if delta is None else delta + t
        disp = disp + delta + b2s

    disp = jnp.clip(disp, 0.0, float(num_disp - 1))
    disp_ref[0] = disp.astype(disp_ref.dtype)


def pallas_stereo_head(feats, batch, w1, b1, w2, b2, *, num_disp, iters):
    """feats: (2B, Hc, Wc, C) bf16 (rows [0:B]=img1, [B:2B]=img2) -> (B, Hc, Wc)."""
    twoB, Hc, Wc, C = feats.shape
    refine_ch = w1.shape[1]
    TH = _choose_stereo_th(Hc, Wc, C, batch)

    kernel = partial(_stereo_kernel, num_disp=num_disp, iters=iters,
                     refine_ch=refine_ch)
    smem = pl.BlockSpec(memory_space=pltpu.MemorySpace.SMEM)

    return pl.pallas_call(
        kernel,
        out_shape=jax.ShapeDtypeStruct((batch, Hc, Wc), jnp.float32),
        grid=(batch, Hc // TH),
        in_specs=[
            pl.BlockSpec((1, TH, Wc, C), lambda b, h: (b, h, 0, 0)),
            pl.BlockSpec((1, TH, Wc, C), lambda b, h: (b + batch, h, 0, 0)),
            smem,  # w1 (D+1, Ch)
            smem,  # b1 (Ch,)
            smem,  # w2 (Ch,)
            smem,  # b2 (1,)
        ],
        out_specs=pl.BlockSpec((1, TH, Wc), lambda b, h: (b, h, 0)),
        compiler_params=pltpu.CompilerParams(
            dimension_semantics=("parallel", "parallel"),
            vmem_limit_bytes=32 * 1024 * 1024),
    )(
        feats, feats,
        w1.astype(jnp.float32),
        b1.reshape(-1).astype(jnp.float32),
        w2.reshape(-1).astype(jnp.float32),
        b2.reshape(-1).astype(jnp.float32),
    )


# --------------------------------------------------------------------------
# Model wrapper mirroring ViTASIGEVModel.forward
# --------------------------------------------------------------------------
class ViTASIGEVPallas:
    PATCH = 4
    C4, C8, C16 = 32, 48, 64
    NUM_DISP = 4
    REFINE_CH = 16

    def __init__(self, key):
        k = jax.random.split(key, 10)
        s = 0.05
        kin = self.PATCH * self.PATCH * 3
        # ViTAS (shared / Siamese) feature-pyramid parameters (reference, f32)
        self.w_patch = s * jax.random.normal(k[0], (kin, self.C4), jnp.float32)
        self.b_patch = s * jax.random.normal(k[1], (self.C4,), jnp.float32)
        self.w_d8 = s * jax.random.normal(k[2], (self.C4, self.C8), jnp.float32)
        self.b_d8 = s * jax.random.normal(k[3], (self.C8,), jnp.float32)
        self.w_d16 = s * jax.random.normal(k[4], (self.C8, self.C16), jnp.float32)
        self.b_d16 = s * jax.random.normal(k[5], (self.C16,), jnp.float32)
        # IGEV refinement parameters
        self.w1 = s * jax.random.normal(
            k[6], (self.NUM_DISP + 1, self.REFINE_CH), jnp.float32)
        self.b1 = s * jax.random.normal(k[7], (self.REFINE_CH,), jnp.float32)
        self.w2 = s * jax.random.normal(k[8], (self.REFINE_CH, 1), jnp.float32)
        self.b2 = s * jax.random.normal(k[9], (1,), jnp.float32)

        # --- fused bf16 weights for the single-pass pyramid kernel ----------
        # 16x16 blocks are ordered (quadrant, sub-quadrant, 4x4 patch), so the
        # 2x2 avg-pools become 0.25-tiled, block-diagonal projection weights.
        eye16 = jnp.eye(16, dtype=jnp.float32)
        eye4 = jnp.eye(4, dtype=jnp.float32)
        self.wp_bd = jnp.kron(eye16, self.w_patch).astype(jnp.bfloat16)   # (768, 512)
        self.bp_bd = jnp.tile(self.b_patch, 16)[None, :]                  # (1, 512)
        pool8 = 0.25 * jnp.concatenate([self.w_d8] * 4, axis=0)          # (128, 48)
        self.w8_bd = jnp.kron(eye4, pool8).astype(jnp.bfloat16)           # (512, 192)
        self.b8_bd = jnp.tile(self.b_d8, 4)[None, :]                      # (1, 192)
        self.w16_fp = (0.25 * jnp.concatenate([self.w_d16] * 4, axis=0)
                       ).astype(jnp.bfloat16)                             # (192, 64)
        self.b16_fp = self.b_d16[None, :]                                 # (1, 64)

        self._jit_forward = jax.jit(
            self._forward_impl, static_argnames=("iters", "test_mode"))

    # ---- NCHW image -> rows of hierarchically ordered 16x16 blocks (bf16) ---
    def _patchify16(self, img):
        B, C, H, W = img.shape
        Hc, Wc = H // 16, W // 16
        x = img.reshape(B, C, Hc, 2, 2, 4, Wc, 2, 2, 4)
        # dims: 0 B, 1 c, 2 Hc, 3 S8y, 4 s4y, 5 py, 6 Wc, 7 S8x, 8 s4x, 9 px
        x = jnp.transpose(x, (0, 2, 6, 3, 7, 4, 8, 5, 9, 1))
        # -> (B, Hc, Wc, S8y, S8x, s4y, s4x, py, px, c); one fused XLA relayout+cast
        return x.reshape(B * Hc * Wc, 16 * 16 * C).astype(jnp.bfloat16)

    # ---- jitted implementation of ViTASIGEVModel.forward --------------------
    def _forward_impl(self, img1, img2, iters, test_mode=False):
        B, _, H, W = img1.shape
        assert H % 16 == 0 and W % 16 == 0, "H and W must be multiples of 16"

        # Siamese batching: one shared-weight fused pyramid pass for both images.
        x16 = jnp.concatenate(
            [self._patchify16(img1), self._patchify16(img2)], axis=0)
        f16 = pallas_feature_pyramid(
            x16, self.wp_bd, self.bp_bd, self.w8_bd, self.b8_bd,
            self.w16_fp, self.b16_fp)                        # (2B*Hc*Wc, 64) bf16

        Hc, Wc = H // 16, W // 16
        feats = f16.reshape(2 * B, Hc, Wc, self.C16)         # free reshape (bf16)

        disp_c = pallas_stereo_head(
            feats, B, self.w1, self.b1, self.w2, self.b2,
            num_disp=self.NUM_DISP, iters=iters)             # (B, Hc, Wc) f32

        # 16x upsample to full resolution via a single broadcast + reshape,
        # with the disparity scale fused; output is NCHW [B, 1, H, W].
        sh, sw = H // Hc, W // Wc
        disp = disp_c * float(sw)
        disp = jnp.broadcast_to(disp[:, :, None, :, None], (B, Hc, sh, Wc, sw))
        disp = disp.reshape(B, 1, H, W)
        if test_mode:
            return disp
        return [disp]

    # ---- mirrors ViTASIGEVModel.forward -------------------------------------
    def forward(self, img1, img2, iters, test_mode=False):
        return self._jit_forward(img1, img2, iters=iters, test_mode=test_mode)


# --------------------------------------------------------------------------
if __name__ == "__main__":
    key = jax.random.PRNGKey(0)
    kp, k1, k2 = jax.random.split(key, 3)

    B, C, H, W = 2, 3, 64, 64
    img1 = jax.random.normal(k1, (B, C, H, W), jnp.float32)
    img2 = jax.random.normal(k2, (B, C, H, W), jnp.float32)

    model = ViTASIGEVPallas(kp)
    pred_disp = model.forward(img1, img2, iters=4, test_mode=True)
    pred_disp = jax.block_until_ready(pred_disp)

    assert pred_disp.shape == (B, 1, H, W)
    assert bool(jnp.all(jnp.isfinite(pred_disp)))
    print("KERNEL_OK")
</pallas_src>

<mosaic_0001>
module attributes {stable_mosaic.version = 11 : i64} {
  func.func @_pyramid_kernel(%arg0: i32, %arg1: memref<32x768xbf16, #tpu.memory_space<vmem>>, %arg2: memref<768x512xbf16, #tpu.memory_space<vmem>>, %arg3: memref<1x512xf32, #tpu.memory_space<vmem>>, %arg4: memref<512x192xbf16, #tpu.memory_space<vmem>>, %arg5: memref<1x192xf32, #tpu.memory_space<vmem>>, %arg6: memref<192x64xbf16, #tpu.memory_space<vmem>>, %arg7: memref<1x64xf32, #tpu.memory_space<vmem>>, %arg8: memref<32x64xbf16, #tpu.memory_space<vmem>>) attributes {dimension_semantics = [#tpu.dimension_semantics<parallel>], iteration_bounds = array<i64: 2>, scalar_prefetch = 0 : i64, scratch_operands = 0 : i64, tpu.core_type = #tpu.core_type<tc>, window_params = [{transform_indices = @transform_0, window_bounds = array<i64: 32, 768>}, {pipeline_mode = #tpu.pipeline_mode<synchronous>, transform_indices = @transform_1, window_bounds = array<i64: 768, 512>}, {pipeline_mode = #tpu.pipeline_mode<synchronous>, transform_indices = @transform_2, window_bounds = array<i64: 1, 512>}, {pipeline_mode = #tpu.pipeline_mode<synchronous>, transform_indices = @transform_3, window_bounds = array<i64: 512, 192>}, {pipeline_mode = #tpu.pipeline_mode<synchronous>, transform_indices = @transform_4, window_bounds = array<i64: 1, 192>}, {pipeline_mode = #tpu.pipeline_mode<synchronous>, transform_indices = @transform_5, window_bounds = array<i64: 192, 64>}, {pipeline_mode = #tpu.pipeline_mode<synchronous>, transform_indices = @transform_6, window_bounds = array<i64: 1, 64>}, {transform_indices = @transform_7, window_bounds = array<i64: 32, 64>}]} {
    %c0 = arith.constant 0 : index
    %c0_0 = arith.constant 0 : index
    %0 = vector.load %arg1[%c0, %c0_0] : memref<32x768xbf16, #tpu.memory_space<vmem>>, vector<32x768xbf16>
    %c0_1 = arith.constant 0 : index
    %c0_2 = arith.constant 0 : index
    %1 = vector.load %arg2[%c0_1, %c0_2] : memref<768x512xbf16, #tpu.memory_space<vmem>>, vector<768x512xbf16>
    %cst = arith.constant dense<0.000000e+00> : vector<32x512xf32>
    %2 = tpu.matmul %0, %1, %cst {dimension_numbers = #tpu.dot_dimension_numbers<[1], [0], [0], [1], [0, 0, 1, 1], [], []>} : vector<32x768xbf16>, vector<768x512xbf16>, vector<32x512xf32> -> vector<32x512xf32>
    %c0_3 = arith.constant 0 : index
    %c0_4 = arith.constant 0 : index
    %3 = vector.load %arg3[%c0_3, %c0_4] : memref<1x512xf32, #tpu.memory_space<vmem>>, vector<1x512xf32>
    %4 = vector.broadcast %3 : vector<1x512xf32> to vector<32x512xf32>
    %5 = arith.addf %2, %4 : vector<32x512xf32>
    %6 = arith.truncf %5 : vector<32x512xf32> to vector<32x512xbf16>
    %c0_5 = arith.constant 0 : index
    %c0_6 = arith.constant 0 : index
    %7 = vector.load %arg4[%c0_5, %c0_6] : memref<512x192xbf16, #tpu.memory_space<vmem>>, vector<512x192xbf16>
    %cst_7 = arith.constant dense<0.000000e+00> : vector<32x192xf32>
    %8 = tpu.matmul %6, %7, %cst_7 {dimension_numbers = #tpu.dot_dimension_numbers<[1], [0], [0], [1], [0, 0, 1, 1], [], []>} : vector<32x512xbf16>, vector<512x192xbf16>, vector<32x192xf32> -> vector<32x192xf32>
    %c0_8 = arith.constant 0 : index
    %c0_9 = arith.constant 0 : index
    %9 = vector.load %arg5[%c0_8, %c0_9] : memref<1x192xf32, #tpu.memory_space<vmem>>, vector<1x192xf32>
    %10 = vector.broadcast %9 : vector<1x192xf32> to vector<32x192xf32>
    %11 = arith.addf %8, %10 : vector<32x192xf32>
    %12 = arith.truncf %11 : vector<32x192xf32> to vector<32x192xbf16>
    %c0_10 = arith.constant 0 : index
    %c0_11 = arith.constant 0 : index
    %13 = vector.load %arg6[%c0_10, %c0_11] : memref<192x64xbf16, #tpu.memory_space<vmem>>, vector<192x64xbf16>
    %cst_12 = arith.constant dense<0.000000e+00> : vector<32x64xf32>
    %14 = tpu.matmul %12, %13, %cst_12 {dimension_numbers = #tpu.dot_dimension_numbers<[1], [0], [0], [1], [0, 0, 1, 1], [], []>} : vector<32x192xbf16>, vector<192x64xbf16>, vector<32x64xf32> -> vector<32x64xf32>
    %c0_13 = arith.constant 0 : index
    %c0_14 = arith.constant 0 : index
    %15 = vector.load %arg7[%c0_13, %c0_14] : memref<1x64xf32, #tpu.memory_space<vmem>>, vector<1x64xf32>
    %16 = vector.broadcast %15 : vector<1x64xf32> to vector<32x64xf32>
    %17 = arith.addf %14, %16 : vector<32x64xf32>
    %18 = arith.truncf %17 : vector<32x64xf32> to vector<32x64xbf16>
    %c0_15 = arith.constant 0 : index
    %c0_16 = arith.constant 0 : index
    %19 = vector.load %arg8[%c0_15, %c0_16] : memref<32x64xbf16, #tpu.memory_space<vmem>>, vector<32x64xbf16>
    tpu.vector_store %arg8[%c0_15, %c0_16], %18 {strides = array<i32>} : memref<32x64xbf16, #tpu.memory_space<vmem>>, vector<32x64xbf16>,
    return
  }
  func.func @transform_0(%arg0: i32) -> (i32, i32) {
    %c0_i32 = arith.constant 0 : i32
    %c0_i32_0 = arith.constant 0 : i32
    return %arg0, %c0_i32 : i32, i32
  }
  func.func @transform_1(%arg0: i32) -> (i32, i32) {
    %c0_i32 = arith.constant 0 : i32
    %c0_i32_0 = arith.constant 0 : i32
    %c0_i32_1 = arith.constant 0 : i32
    return %c0_i32, %c0_i32_0 : i32, i32
  }
  func.func @transform_2(%arg0: i32) -> (i32, i32) {
    %c0_i32 = arith.constant 0 : i32
    %c0_i32_0 = arith.constant 0 : i32
    %c0_i32_1 = arith.constant 0 : i32
    return %c0_i32, %c0_i32_0 : i32, i32
  }
  func.func @transform_3(%arg0: i32) -> (i32, i32) {
    %c0_i32 = arith.constant 0 : i32
    %c0_i32_0 = arith.constant 0 : i32
    %c0_i32_1 = arith.constant 0 : i32
    return %c0_i32, %c0_i32_0 : i32, i32
  }
  func.func @transform_4(%arg0: i32) -> (i32, i32) {
    %c0_i32 = arith.constant 0 : i32
    %c0_i32_0 = arith.constant 0 : i32
    %c0_i32_1 = arith.constant 0 : i32
    return %c0_i32, %c0_i32_0 : i32, i32
  }
  func.func @transform_5(%arg0: i32) -> (i32, i32) {
    %c0_i32 = arith.constant 0 : i32
    %c0_i32_0 = arith.constant 0 : i32
    %c0_i32_1 = arith.constant 0 : i32
    return %c0_i32, %c0_i32_0 : i32, i32
  }
  func.func @transform_6(%arg0: i32) -> (i32, i32) {
    %c0_i32 = arith.constant 0 : i32
    %c0_i32_0 = arith.constant 0 : i32
    %c0_i32_1 = arith.constant 0 : i32
    return %c0_i32, %c0_i32_0 : i32, i32
  }
  func.func @transform_7(%arg0: i32) -> (i32, i32) {
    %c0_i32 = arith.constant 0 : i32
    %c0_i32_0 = arith.constant 0 : i32
    return %arg0, %c0_i32 : i32, i32
  }
}

module attributes {stable_mosaic.version = 11 : i64} {
  func.func @_stereo_kernel(%arg0: i32, %arg1: i32, %arg2: memref<1x4x4x64xbf16, #tpu.memory_space<vmem>>, %arg3: memref<1x4x4x64xbf16, #tpu.memory_space<vmem>>, %arg4: memref<5x16xf32, #tpu.memory_space<smem>>, %arg5: memref<16xf32, #tpu.memory_space<smem>>, %arg6: memref<16xf32, #tpu.memory_space<smem>>, %arg7: memref<1xf32, #tpu.memory_space<smem>>, %arg8: memref<1x4x4xf32, #tpu.memory_space<vmem>>) attributes {dimension_semantics = [#tpu.dimension_semantics<parallel>, #tpu.dimension_semantics<parallel>], iteration_bounds = array<i64: 2, 1>, scalar_prefetch = 0 : i64, scratch_operands = 0 : i64, tpu.core_type = #tpu.core_type<tc>, window_params = [{transform_indices = @transform_0, window_bounds = array<i64: 1, 4, 4, 64>}, {transform_indices = @transform_1, window_bounds = array<i64: 1, 4, 4, 64>}, {transform_indices = @transform_2, window_bounds = array<i64: 5, 16>}, {transform_indices = @transform_3, window_bounds = array<i64: 16>}, {transform_indices = @transform_4, window_bounds = array<i64: 16>}, {transform_indices = @transform_5, window_bounds = array<i64: 1>}, {transform_indices = @transform_6, window_bounds = array<i64: 1, 4, 4>}]} {
    %c0 = arith.constant 0 : index
    %c0_0 = arith.constant 0 : index
    %c0_1 = arith.constant 0 : index
    %c0_2 = arith.constant 0 : index
    %0 = vector.load %arg2[%c0, %c0_0, %c0_1, %c0_2] : memref<1x4x4x64xbf16, #tpu.memory_space<vmem>>, vector<1x4x4x64xbf16>
    %1 = vector.shape_cast %0 : vector<1x4x4x64xbf16> to vector<4x4x64xbf16>
    %c0_3 = arith.constant 0 : index
    %c0_4 = arith.constant 0 : index
    %c0_5 = arith.constant 0 : index
    %c0_6 = arith.constant 0 : index
    %2 = vector.load %arg3[%c0_3, %c0_4, %c0_5, %c0_6] : memref<1x4x4x64xbf16, #tpu.memory_space<vmem>>, vector<1x4x4x64xbf16>
    %3 = vector.shape_cast %2 : vector<1x4x4x64xbf16> to vector<4x4x64xbf16>
    "tpu.trace_start"() <{level = 10 : i32, message = "hwc,hvc->hwv"}> : () -> ()
    %cst = arith.constant dense<0.000000e+00> : vector<4x4x4xf32>
    %4 = tpu.matmul %1, %3, %cst {dimension_numbers = #tpu.dot_dimension_numbers<[2], [2], [1], [1], [0, 0, 0, 1, 1, 1], [0], [0]>} : vector<4x4x64xbf16>, vector<4x4x64xbf16>, vector<4x4x4xf32> -> vector<4x4x4xf32>
    "tpu.trace_stop"() : () -> ()
    %5 = tpu.iota {dimensions = array<i32: 0>} : vector<4x4xi32>
    %6 = tpu.iota {dimensions = array<i32: 1>} : vector<4x4xi32>
    %7 = arith.subi %5, %6 : vector<4x4xi32>
    %8 = tpu.iota {dimensions = array<i32: 1>} : vector<4x4xi32>
    %c0_i32 = arith.constant 0 : i32
    %9 = vector.broadcast %c0_i32 : i32 to vector<4x4xi32>
    %10 = arith.cmpi eq, %7, %9 : vector<4x4xi32>
    %11 = vector.shape_cast %10 : vector<4x4xi1> to vector<1x4x4xi1>
    %cst_7 = arith.constant 0.000000e+00 : f32
    %12 = vector.shape_cast %11 : vector<1x4x4xi1> to vector<1x4x4xi1>
    %13 = vector.broadcast %12 : vector<1x4x4xi1> to vector<4x4x4xi1>
    %14 = vector.broadcast %cst_7 : f32 to vector<4x4x4xf32>
    %15 = arith.select %13, %4, %14 : vector<4x4x4xi1>, vector<4x4x4xf32>
    %cst_8 = arith.constant dense<0.000000e+00> : vector<4x4xf32>
    %16 = vector.multi_reduction <add>, %15, %cst_8 [2] : vector<4x4x4xf32> to vector<4x4xf32>
    %cst_9 = arith.constant 1.250000e-01 : f32
    %17 = vector.broadcast %cst_9 : f32 to vector<4x4xf32>
    %18 = arith.mulf %16, %17 : vector<4x4xf32>
    %c1_i32 = arith.constant 1 : i32
    %19 = vector.broadcast %c1_i32 : i32 to vector<4x4xi32>
    %20 = arith.cmpi eq, %7, %19 : vector<4x4xi32>
    %21 = vector.shape_cast %20 : vector<4x4xi1> to vector<1x4x4xi1>
    %cst_10 = arith.constant 0.000000e+00 : f32
    %22 = vector.shape_cast %21 : vector<1x4x4xi1> to vector<1x4x4xi1>
    %23 = vector.broadcast %22 : vector<1x4x4xi1> to vector<4x4x4xi1>
    %24 = vector.broadcast %cst_10 : f32 to vector<4x4x4xf32>
    %25 = arith.select %23, %4, %24 : vector<4x4x4xi1>, vector<4x4x4xf32>
    %cst_11 = arith.constant dense<0.000000e+00> : vector<4x4xf32>
    %26 = vector.multi_reduction <add>, %25, %cst_11 [2] : vector<4x4x4xf32> to vector<4x4xf32>
    %cst_12 = arith.constant 1.250000e-01 : f32
    %27 = vector.broadcast %cst_12 : f32 to vector<4x4xf32>
    %28 = arith.mulf %26, %27 : vector<4x4xf32>
    %c2_i32 = arith.constant 2 : i32
    %29 = vector.broadcast %c2_i32 : i32 to vector<4x4xi32>
    %30 = arith.cmpi eq, %7, %29 : vector<4x4xi32>
    %31 = vector.shape_cast %30 : vector<4x4xi1> to vector<1x4x4xi1>
    %cst_13 = arith.constant 0.000000e+00 : f32
    %32 = vector.shape_cast %31 : vector<1x4x4xi1> to vector<1x4x4xi1>
    %33 = vector.broadcast %32 : vector<1x4x4xi1> to vector<4x4x4xi1>
    %34 = vector.broadcast %cst_13 : f32 to vector<4x4x4xf32>
    %35 = arith.select %33, %4, %34 : vector<4x4x4xi1>, vector<4x4x4xf32>
    %cst_14 = arith.constant dense<0.000000e+00> : vector<4x4xf32>
    %36 = vector.multi_reduction <add>, %35, %cst_14 [2] : vector<4x4x4xf32> to vector<4x4xf32>
    %cst_15 = arith.constant 1.250000e-01 : f32
    %37 = vector.broadcast %cst_15 : f32 to vector<4x4xf32>
    %38 = arith.mulf %36, %37 : vector<4x4xf32>
    %c3_i32 = arith.constant 3 : i32
    %39 = vector.broadcast %c3_i32 : i32 to vector<4x4xi32>
    %40 = arith.cmpi eq, %7, %39 : vector<4x4xi32>
    %41 = vector.shape_cast %40 : vector<4x4xi1> to vector<1x4x4xi1>
    %cst_16 = arith.constant 0.000000e+00 : f32
    %42 = vector.shape_cast %41 : vector<1x4x4xi1> to vector<1x4x4xi1>
    %43 = vector.broadcast %42 : vector<1x4x4xi1> to vector<4x4x4xi1>
    %44 = vector.broadcast %cst_16 : f32 to vector<4x4x4xf32>
    %45 = arith.select %43, %4, %44 : vector<4x4x4xi1>, vector<4x4x4xf32>
    %cst_17 = arith.constant dense<0.000000e+00> : vector<4x4xf32>
    %46 = vector.multi_reduction <add>, %45, %cst_17 [2] : vector<4x4x4xf32> to vector<4x4xf32>
    %cst_18 = arith.constant 1.250000e-01 : f32
    %47 = vector.broadcast %cst_18 : f32 to vector<4x4xf32>
    %48 = arith.mulf %46, %47 : vector<4x4xf32>
    %c1_i32_19 = arith.constant 1 : i32
    %49 = vector.broadcast %c1_i32_19 : i32 to vector<4x4xi32>
    %50 = arith.cmpi sge, %8, %49 : vector<4x4xi32>
    %cst_20 = arith.constant -1.000000e+30 : f32
    %51 = vector.broadcast %cst_20 : f32 to vector<4x4xf32>
    %52 = arith.select %50, %28, %51 : vector<4x4xi1>, vector<4x4xf32>
    %53 = arith.maximumf %18, %52 : vector<4x4xf32>
    %c2_i32_21 = arith.constant 2 : i32
    %54 = vector.broadcast %c2_i32_21 : i32 to vector<4x4xi32>
    %55 = arith.cmpi sge, %8, %54 : vector<4x4xi32>
    %cst_22 = arith.constant -1.000000e+30 : f32
    %56 = vector.broadcast %cst_22 : f32 to vector<4x4xf32>
    %57 = arith.select %55, %38, %56 : vector<4x4xi1>, vector<4x4xf32>
    %58 = arith.maximumf %53, %57 : vector<4x4xf32>
    %c3_i32_23 = arith.constant 3 : i32
    %59 = vector.broadcast %c3_i32_23 : i32 to vector<4x4xi32>
    %60 = arith.cmpi sge, %8, %59 : vector<4x4xi32>
    %cst_24 = arith.constant -1.000000e+30 : f32
    %61 = vector.broadcast %cst_24 : f32 to vector<4x4xf32>
    %62 = arith.select %60, %48, %61 : vector<4x4xi1>, vector<4x4xf32>
    %63 = arith.maximumf %58, %62 : vector<4x4xf32>
    %cst_25 = arith.constant 0.000000e+00 : f32
    %64 = vector.broadcast %cst_25 : f32 to vector<4x4xf32>
    %cst_26 = arith.constant 0.000000e+00 : f32
    %65 = vector.broadcast %cst_26 : f32 to vector<4x4xf32>
    %66 = arith.subf %18, %63 : vector<4x4xf32>
    %67 = math.exp %66 : vector<4x4xf32>
    %68 = arith.addf %64, %67 : vector<4x4xf32>
    %cst_27 = arith.constant 0.000000e+00 : f32
    %69 = vector.broadcast %cst_27 : f32 to vector<4x4xf32>
    %70 = arith.mulf %69, %67 : vector<4x4xf32>
    %71 = arith.addf %65, %70 : vector<4x4xf32>
    %c1_i32_28 = arith.constant 1 : i32
    %72 = vector.broadcast %c1_i32_28 : i32 to vector<4x4xi32>
    %73 = arith.cmpi sge, %8, %72 : vector<4x4xi32>
    %cst_29 = arith.constant -1.000000e+30 : f32
    %74 = vector.broadcast %cst_29 : f32 to vector<4x4xf32>
    %75 = arith.select %73, %28, %74 : vector<4x4xi1>, vector<4x4xf32>
    %76 = arith.subf %75, %63 : vector<4x4xf32>
    %77 = math.exp %76 : vector<4x4xf32>
    %78 = arith.addf %68, %77 : vector<4x4xf32>
    %cst_30 = arith.constant 1.000000e+00 : f32
    %79 = vector.broadcast %cst_30 : f32 to vector<4x4xf32>
    %80 = arith.mulf %79, %77 : vector<4x4xf32>
    %81 = arith.addf %71, %80 : vector<4x4xf32>
    %c2_i32_31 = arith.constant 2 : i32
    %82 = vector.broadcast %c2_i32_31 : i32 to vector<4x4xi32>
    %83 = arith.cmpi sge, %8, %82 : vector<4x4xi32>
    %cst_32 = arith.constant -1.000000e+30 : f32
    %84 = vector.broadcast %cst_32 : f32 to vector<4x4xf32>
    %85 = arith.select %83, %38, %84 : vector<4x4xi1>, vector<4x4xf32>
    %86 = arith.subf %85, %63 : vector<4x4xf32>
    %87 = math.exp %86 : vector<4x4xf32>
    %88 = arith.addf %78, %87 : vector<4x4xf32>
    %cst_33 = arith.constant 2.000000e+00 : f32
    %89 = vector.broadcast %cst_33 : f32 to vector<4x4xf32>
    %90 = arith.mulf %89, %87 : vector<4x4xf32>
    %91 = arith.addf %81, %90 : vector<4x4xf32>
    %c3_i32_34 = arith.constant 3 : i32
    %92 = vector.broadcast %c3_i32_34 : i32 to vector<4x4xi32>
    %93 = arith.cmpi sge, %8, %92 : vector<4x4xi32>
    %cst_35 = arith.constant -1.000000e+30 : f32
    %94 = vector.broadcast %cst_35 : f32 to vector<4x4xf32>
    %95 = arith.select %93, %48, %94 : vector<4x4xi1>, vector<4x4xf32>
    %96 = arith.subf %95, %63 : vector<4x4xf32>
    %97 = math.exp %96 : vector<4x4xf32>
    %98 = arith.addf %88, %97 : vector<4x4xf32>
    %cst_36 = arith.constant 3.000000e+00 : f32
    %99 = vector.broadcast %cst_36 : f32 to vector<4x4xf32>
    %100 = arith.mulf %99, %97 : vector<4x4xf32>
    %101 = arith.addf %91, %100 : vector<4x4xf32>
    %102 = tpu.reciprocal %98 {approx = true} : vector<4x4xf32> -> vector<4x4xf32>
    %103 = arith.mulf %101, %102 : vector<4x4xf32>
    %c0_37 = arith.constant 0 : index
    %c0_38 = arith.constant 0 : index
    %104 = memref.load %arg4[%c0_37, %c0_38] : memref<5x16xf32, #tpu.memory_space<smem>>
    %c1 = arith.constant 1 : index
    %c0_39 = arith.constant 0 : index
    %105 = memref.load %arg4[%c1, %c0_39] : memref<5x16xf32, #tpu.memory_space<smem>>
    %c2 = arith.constant 2 : index
    %c0_40 = arith.constant 0 : index
    %106 = memref.load %arg4[%c2, %c0_40] : memref<5x16xf32, #tpu.memory_space<smem>>
    %c3 = arith.constant 3 : index
    %c0_41 = arith.constant 0 : index
    %107 = memref.load %arg4[%c3, %c0_41] : memref<5x16xf32, #tpu.memory_space<smem>>
    %c0_42 = arith.constant 0 : index
    %c1_43 = arith.constant 1 : index
    %108 = memref.load %arg4[%c0_42, %c1_43] : memref<5x16xf32, #tpu.memory_space<smem>>
    %c1_44 = arith.constant 1 : index
    %c1_45 = arith.constant 1 : index
    %109 = memref.load %arg4[%c1_44, %c1_45] : memref<5x16xf32, #tpu.memory_space<smem>>
    %c2_46 = arith.constant 2 : index
    %c1_47 = arith.constant 1 : index
    %110 = memref.load %arg4[%c2_46, %c1_47] : memref<5x16xf32, #tpu.memory_space<smem>>
    %c3_48 = arith.constant 3 : index
    %c1_49 = arith.constant 1 : index
    %111 = memref.load %arg4[%c3_48, %c1_49] : memref<5x16xf32, #tpu.memory_space<smem>>
    %c0_50 = arith.constant 0 : index
    %c2_51 = arith.constant 2 : index
    %112 = memref.load %arg4[%c0_50, %c2_51] : memref<5x16xf32, #tpu.memory_space<smem>>
    %c1_52 = arith.constant 1 : index
    %c2_53 = arith.constant 2 : index
    %113 = memref.load %arg4[%c1_52, %c2_53] : memref<5x16xf32, #tpu.memory_space<smem>>
    %c2_54 = arith.constant 2 : index
    %c2_55 = arith.constant 2 : index
    %114 = memref.load %arg4[%c2_54, %c2_55] : memref<5x16xf32, #tpu.memory_space<smem>>
    %c3_56 = arith.constant 3 : index
    %c2_57 = arith.constant 2 : index
    %115 = memref.load %arg4[%c3_56, %c2_57] : memref<5x16xf32, #tpu.memory_space<smem>>
    %c0_58 = arith.constant 0 : index
    %c3_59 = arith.constant 3 : index
    %116 = memref.load %arg4[%c0_58, %c3_59] : memref<5x16xf32, #tpu.memory_space<smem>>
    %c1_60 = arith.constant 1 : index
    %c3_61 = arith.constant 3 : index
    %117 = memref.load %arg4[%c1_60, %c3_61] : memref<5x16xf32, #tpu.memory_space<smem>>
    %c2_62 = arith.constant 2 : index
    %c3_63 = arith.constant 3 : index
    %118 = memref.load %arg4[%c2_62, %c3_63] : memref<5x16xf32, #tpu.memory_space<smem>>
    %c3_64 = arith.constant 3 : index
    %c3_65 = arith.constant 3 : index
    %119 = memref.load %arg4[%c3_64, %c3_65] : memref<5x16xf32, #tpu.memory_space<smem>>
    %c0_66 = arith.constant 0 : index
    %c4 = arith.constant 4 : index
    %120 = memref.load %arg4[%c0_66, %c4] : memref<5x16xf32, #tpu.memory_space<smem>>
    %c1_67 = arith.constant 1 : index
    %c4_68 = arith.constant 4 : index
    %121 = memref.load %arg4[%c1_67, %c4_68] : memref<5x16xf32, #tpu.memory_space<smem>>
    %c2_69 = arith.constant 2 : index
    %c4_70 = arith.constant 4 : index
    %122 = memref.load %arg4[%c2_69, %c4_70] : memref<5x16xf32, #tpu.memory_space<smem>>
    %c3_71 = arith.constant 3 : index
    %c4_72 = arith.constant 4 : index
    %123 = memref.load %arg4[%c3_71, %c4_72] : memref<5x16xf32, #tpu.memory_space<smem>>
    %c0_73 = arith.constant 0 : index
    %c5 = arith.constant 5 : index
    %124 = memref.load %arg4[%c0_73, %c5] : memref<5x16xf32, #tpu.memory_space<smem>>
    %c1_74 = arith.constant 1 : index
    %c5_75 = arith.constant 5 : index
    %125 = memref.load %arg4[%c1_74, %c5_75] : memref<5x16xf32, #tpu.memory_space<smem>>
    %c2_76 = arith.constant 2 : index
    %c5_77 = arith.constant 5 : index
    %126 = memref.load %arg4[%c2_76, %c5_77] : memref<5x16xf32, #tpu.memory_space<smem>>
    %c3_78 = arith.constant 3 : index
    %c5_79 = arith.constant 5 : index
    %127 = memref.load %arg4[%c3_78, %c5_79] : memref<5x16xf32, #tpu.memory_space<smem>>
    %c0_80 = arith.constant 0 : index
    %c6 = arith.constant 6 : index
    %128 = memref.load %arg4[%c0_80, %c6] : memref<5x16xf32, #tpu.memory_space<smem>>
    %c1_81 = arith.constant 1 : index
    %c6_82 = arith.constant 6 : index
    %129 = memref.load %arg4[%c1_81, %c6_82] : memref<5x16xf32, #tpu.memory_space<smem>>
    %c2_83 = arith.constant 2 : index
    %c6_84 = arith.constant 6 : index
    %130 = memref.load %arg4[%c2_83, %c6_84] : memref<5x16xf32, #tpu.memory_space<smem>>
    %c3_85 = arith.constant 3 : index
    %c6_86 = arith.constant 6 : index
    %131 = memref.load %arg4[%c3_85, %c6_86] : memref<5x16xf32, #tpu.memory_space<smem>>
    %c0_87 = arith.constant 0 : index
    %c7 = arith.constant 7 : index
    %132 = memref.load %arg4[%c0_87, %c7] : memref<5x16xf32, #tpu.memory_space<smem>>
    %c1_88 = arith.constant 1 : index
    %c7_89 = arith.constant 7 : index
    %133 = memref.load %arg4[%c1_88, %c7_89] : memref<5x16xf32, #tpu.memory_space<smem>>
    %c2_90 = arith.constant 2 : index
    %c7_91 = arith.constant 7 : index
    %134 = memref.load %arg4[%c2_90, %c7_91] : memref<5x16xf32, #tpu.memory_space<smem>>
    %c3_92 = arith.constant 3 : index
    %c7_93 = arith.constant 7 : index
    %135 = memref.load %arg4[%c3_92, %c7_93] : memref<5x16xf32, #tpu.memory_space<smem>>
    %c0_94 = arith.constant 0 : index
    %c8 = arith.constant 8 : index
    %136 = memref.load %arg4[%c0_94, %c8] : memref<5x16xf32, #tpu.memory_space<smem>>
    %c1_95 = arith.constant 1 : index
    %c8_96 = arith.constant 8 : index
    %137 = memref.load %arg4[%c1_95, %c8_96] : memref<5x16xf32, #tpu.memory_space<smem>>
    %c2_97 = arith.constant 2 : index
    %c8_98 = arith.constant 8 : index
    %138 = memref.load %arg4[%c2_97, %c8_98] : memref<5x16xf32, #tpu.memory_space<smem>>
    %c3_99 = arith.constant 3 : index
    %c8_100 = arith.constant 8 : index
    %139 = memref.load %arg4[%c3_99, %c8_100] : memref<5x16xf32, #tpu.memory_space<smem>>
    %c0_101 = arith.constant 0 : index
    %c9 = arith.constant 9 : index
    %140 = memref.load %arg4[%c0_101, %c9] : memref<5x16xf32, #tpu.memory_space<smem>>
    %c1_102 = arith.constant 1 : index
    %c9_103 = arith.constant 9 : index
    %141 = memref.load %arg4[%c1_102, %c9_103] : memref<5x16xf32, #tpu.memory_space<smem>>
    %c2_104 = arith.constant 2 : index
    %c9_105 = arith.constant 9 : index
    %142 = memref.load %arg4[%c2_104, %c9_105] : memref<5x16xf32, #tpu.memory_space<smem>>
    %c3_106 = arith.constant 3 : index
    %c9_107 = arith.constant 9 : index
    %143 = memref.load %arg4[%c3_106, %c9_107] : memref<5x16xf32, #tpu.memory_space<smem>>
    %c0_108 = arith.constant 0 : index
    %c10 = arith.constant 10 : index
    %144 = memref.load %arg4[%c0_108, %c10] : memref<5x16xf32, #tpu.memory_space<smem>>
    %c1_109 = arith.constant 1 : index
    %c10_110 = arith.constant 10 : index
    %145 = memref.load %arg4[%c1_109, %c10_110] : memref<5x16xf32, #tpu.memory_space<smem>>
    %c2_111 = arith.constant 2 : index
    %c10_112 = arith.constant 10 : index
    %146 = memref.load %arg4[%c2_111, %c10_112] : memref<5x16xf32, #tpu.memory_space<smem>>
    %c3_113 = arith.constant 3 : index
    %c10_114 = arith.constant 10 : index
    %147 = memref.load %arg4[%c3_113, %c10_114] : memref<5x16xf32, #tpu.memory_space<smem>>
    %c0_115 = arith.constant 0 : index
    %c11 = arith.constant 11 : index
    %148 = memref.load %arg4[%c0_115, %c11] : memref<5x16xf32, #tpu.memory_space<smem>>
    %c1_116 = arith.constant 1 : index
    %c11_117 = arith.constant 11 : index
    %149 = memref.load %arg4[%c1_116, %c11_117] : memref<5x16xf32, #tpu.memory_space<smem>>
    %c2_118 = arith.constant 2 : index
    %c11_119 = arith.constant 11 : index
    %150 = memref.load %arg4[%c2_118, %c11_119] : memref<5x16xf32, #tpu.memory_space<smem>>
    %c3_120 = arith.constant 3 : index
    %c11_121 = arith.constant 11 : index
    %151 = memref.load %arg4[%c3_120, %c11_121] : memref<5x16xf32, #tpu.memory_space<smem>>
    %c0_122 = arith.constant 0 : index
    %c12 = arith.constant 12 : index
    %152 = memref.load %arg4[%c0_122, %c12] : memref<5x16xf32, #tpu.memory_space<smem>>
    %c1_123 = arith.constant 1 : index
    %c12_124 = arith.constant 12 : index
    %153 = memref.load %arg4[%c1_123, %c12_124] : memref<5x16xf32, #tpu.memory_space<smem>>
    %c2_125 = arith.constant 2 : index
    %c12_126 = arith.constant 12 : index
    %154 = memref.load %arg4[%c2_125, %c12_126] : memref<5x16xf32, #tpu.memory_space<smem>>
    %c3_127 = arith.constant 3 : index
    %c12_128 = arith.constant 12 : index
    %155 = memref.load %arg4[%c3_127, %c12_128] : memref<5x16xf32, #tpu.memory_space<smem>>
    %c0_129 = arith.constant 0 : index
    %c13 = arith.constant 13 : index
    %156 = memref.load %arg4[%c0_129, %c13] : memref<5x16xf32, #tpu.memory_space<smem>>
    %c1_130 = arith.constant 1 : index
    %c13_131 = arith.constant 13 : index
    %157 = memref.load %arg4[%c1_130, %c13_131] : memref<5x16xf32, #tpu.memory_space<smem>>
    %c2_132 = arith.constant 2 : index
    %c13_133 = arith.constant 13 : index
    %158 = memref.load %arg4[%c2_132, %c13_133] : memref<5x16xf32, #tpu.memory_space<smem>>
    %c3_134 = arith.constant 3 : index
    %c13_135 = arith.constant 13 : index
    %159 = memref.load %arg4[%c3_134, %c13_135] : memref<5x16xf32, #tpu.memory_space<smem>>
    %c0_136 = arith.constant 0 : index
    %c14 = arith.constant 14 : index
    %160 = memref.load %arg4[%c0_136, %c14] : memref<5x16xf32, #tpu.memory_space<smem>>
    %c1_137 = arith.constant 1 : index
    %c14_138 = arith.constant 14 : index
    %161 = memref.load %arg4[%c1_137, %c14_138] : memref<5x16xf32, #tpu.memory_space<smem>>
    %c2_139 = arith.constant 2 : index
    %c14_140 = arith.constant 14 : index
    %162 = memref.load %arg4[%c2_139, %c14_140] : memref<5x16xf32, #tpu.memory_space<smem>>
    %c3_141 = arith.constant 3 : index
    %c14_142 = arith.constant 14 : index
    %163 = memref.load %arg4[%c3_141, %c14_142] : memref<5x16xf32, #tpu.memory_space<smem>>
    %c0_143 = arith.constant 0 : index
    %c15 = arith.constant 15 : index
    %164 = memref.load %arg4[%c0_143, %c15] : memref<5x16xf32, #tpu.memory_space<smem>>
    %c1_144 = arith.constant 1 : index
    %c15_145 = arith.constant 15 : index
    %165 = memref.load %arg4[%c1_144, %c15_145] : memref<5x16xf32, #tpu.memory_space<smem>>
    %c2_146 = arith.constant 2 : index
    %c15_147 = arith.constant 15 : index
    %166 = memref.load %arg4[%c2_146, %c15_147] : memref<5x16xf32, #tpu.memory_space<smem>>
    %c3_148 = arith.constant 3 : index
    %c15_149 = arith.constant 15 : index
    %167 = memref.load %arg4[%c3_148, %c15_149] : memref<5x16xf32, #tpu.memory_space<smem>>
    %c4_150 = arith.constant 4 : index
    %c0_151 = arith.constant 0 : index
    %168 = memref.load %arg4[%c4_150, %c0_151] : memref<5x16xf32, #tpu.memory_space<smem>>
    %c4_152 = arith.constant 4 : index
    %c1_153 = arith.constant 1 : index
    %169 = memref.load %arg4[%c4_152, %c1_153] : memref<5x16xf32, #tpu.memory_space<smem>>
    %c4_154 = arith.constant 4 : index
    %c2_155 = arith.constant 2 : index
    %170 = memref.load %arg4[%c4_154, %c2_155] : memref<5x16xf32, #tpu.memory_space<smem>>
    %c4_156 = arith.constant 4 : index
    %c3_157 = arith.constant 3 : index
    %171 = memref.load %arg4[%c4_156, %c3_157] : memref<5x16xf32, #tpu.memory_space<smem>>
    %c4_158 = arith.constant 4 : index
    %c4_159 = arith.constant 4 : index
    %172 = memref.load %arg4[%c4_158, %c4_159] : memref<5x16xf32, #tpu.memory_space<smem>>
    %c4_160 = arith.constant 4 : index
    %c5_161 = arith.constant 5 : index
    %173 = memref.load %arg4[%c4_160, %c5_161] : memref<5x16xf32, #tpu.memory_space<smem>>
    %c4_162 = arith.constant 4 : index
    %c6_163 = arith.constant 6 : index
    %174 = memref.load %arg4[%c4_162, %c6_163] : memref<5x16xf32, #tpu.memory_space<smem>>
    %c4_164 = arith.constant 4 : index
    %c7_165 = arith.constant 7 : index
    %175 = memref.load %arg4[%c4_164, %c7_165] : memref<5x16xf32, #tpu.memory_space<smem>>
    %c4_166 = arith.constant 4 : index
    %c8_167 = arith.constant 8 : index
    %176 = memref.load %arg4[%c4_166, %c8_167] : memref<5x16xf32, #tpu.memory_space<smem>>
    %c4_168 = arith.constant 4 : index
    %c9_169 = arith.constant 9 : index
    %177 = memref.load %arg4[%c4_168, %c9_169] : memref<5x16xf32, #tpu.memory_space<smem>>
    %c4_170 = arith.constant 4 : index
    %c10_171 = arith.constant 10 : index
    %178 = memref.load %arg4[%c4_170, %c10_171] : memref<5x16xf32, #tpu.memory_space<smem>>
    %c4_172 = arith.constant 4 : index
    %c11_173 = arith.constant 11 : index
    %179 = memref.load %arg4[%c4_172, %c11_173] : memref<5x16xf32, #tpu.memory_space<smem>>
    %c4_174 = arith.constant 4 : index
    %c12_175 = arith.constant 12 : index
    %180 = memref.load %arg4[%c4_174, %c12_175] : memref<5x16xf32, #tpu.memory_space<smem>>
    %c4_176 = arith.constant 4 : index
    %c13_177 = arith.constant 13 : index
    %181 = memref.load %arg4[%c4_176, %c13_177] : memref<5x16xf32, #tpu.memory_space<smem>>
    %c4_178 = arith.constant 4 : index
    %c14_179 = arith.constant 14 : index
    %182 = memref.load %arg4[%c4_178, %c14_179] : memref<5x16xf32, #tpu.memory_space<smem>>
    %c4_180 = arith.constant 4 : index
    %c15_181 = arith.constant 15 : index
    %183 = memref.load %arg4[%c4_180, %c15_181] : memref<5x16xf32, #tpu.memory_space<smem>>
    %c0_182 = arith.constant 0 : index
    %184 = memref.load %arg5[%c0_182] : memref<16xf32, #tpu.memory_space<smem>>
    %c1_183 = arith.constant 1 : index
    %185 = memref.load %arg5[%c1_183] : memref<16xf32, #tpu.memory_space<smem>>
    %c2_184 = arith.constant 2 : index
    %186 = memref.load %arg5[%c2_184] : memref<16xf32, #tpu.memory_space<smem>>
    %c3_185 = arith.constant 3 : index
    %187 = memref.load %arg5[%c3_185] : memref<16xf32, #tpu.memory_space<smem>>
    %c4_186 = arith.constant 4 : index
    %188 = memref.load %arg5[%c4_186] : memref<16xf32, #tpu.memory_space<smem>>
    %c5_187 = arith.constant 5 : index
    %189 = memref.load %arg5[%c5_187] : memref<16xf32, #tpu.memory_space<smem>>
    %c6_188 = arith.constant 6 : index
    %190 = memref.load %arg5[%c6_188] : memref<16xf32, #tpu.memory_space<smem>>
    %c7_189 = arith.constant 7 : index
    %191 = memref.load %arg5[%c7_189] : memref<16xf32, #tpu.memory_space<smem>>
    %c8_190 = arith.constant 8 : index
    %192 = memref.load %arg5[%c8_190] : memref<16xf32, #tpu.memory_space<smem>>
    %c9_191 = arith.constant 9 : index
    %193 = memref.load %arg5[%c9_191] : memref<16xf32, #tpu.memory_space<smem>>
    %c10_192 = arith.constant 10 : index
    %194 = memref.load %arg5[%c10_192] : memref<16xf32, #tpu.memory_space<smem>>
    %c11_193 = arith.constant 11 : index
    %195 = memref.load %arg5[%c11_193] : memref<16xf32, #tpu.memory_space<smem>>
    %c12_194 = arith.constant 12 : index
    %196 = memref.load %arg5[%c12_194] : memref<16xf32, #tpu.memory_space<smem>>
    %c13_195 = arith.constant 13 : index
    %197 = memref.load %arg5[%c13_195] : memref<16xf32, #tpu.memory_space<smem>>
    %c14_196 = arith.constant 14 : index
    %198 = memref.load %arg5[%c14_196] : memref<16xf32, #tpu.memory_space<smem>>
    %c15_197 = arith.constant 15 : index
    %199 = memref.load %arg5[%c15_197] : memref<16xf32, #tpu.memory_space<smem>>
    %c0_198 = arith.constant 0 : index
    %200 = memref.load %arg6[%c0_198] : memref<16xf32, #tpu.memory_space<smem>>
    %c1_199 = arith.constant 1 : index
    %201 = memref.load %arg6[%c1_199] : memref<16xf32, #tpu.memory_space<smem>>
    %c2_200 = arith.constant 2 : index
    %202 = memref.load %arg6[%c2_200] : memref<16xf32, #tpu.memory_space<smem>>
    %c3_201 = arith.constant 3 : index
    %203 = memref.load %arg6[%c3_201] : memref<16xf32, #tpu.memory_space<smem>>
    %c4_202 = arith.constant 4 : index
    %204 = memref.load %arg6[%c4_202] : memref<16xf32, #tpu.memory_space<smem>>
    %c5_203 = arith.constant 5 : index
    %205 = memref.load %arg6[%c5_203] : memref<16xf32, #tpu.memory_space<smem>>
    %c6_204 = arith.constant 6 : index
    %206 = memref.load %arg6[%c6_204] : memref<16xf32, #tpu.memory_space<smem>>
    %c7_205 = arith.constant 7 : index
    %207 = memref.load %arg6[%c7_205] : memref<16xf32, #tpu.memory_space<smem>>
    %c8_206 = arith.constant 8 : index
    %208 = memref.load %arg6[%c8_206] : memref<16xf32, #tpu.memory_space<smem>>
    %c9_207 = arith.constant 9 : index
    %209 = memref.load %arg6[%c9_207] : memref<16xf32, #tpu.memory_space<smem>>
    %c10_208 = arith.constant 10 : index
    %210 = memref.load %arg6[%c10_208] : memref<16xf32, #tpu.memory_space<smem>>
    %c11_209 = arith.constant 11 : index
    %211 = memref.load %arg6[%c11_209] : memref<16xf32, #tpu.memory_space<smem>>
    %c12_210 = arith.constant 12 : index
    %212 = memref.load %arg6[%c12_210] : memref<16xf32, #tpu.memory_space<smem>>
    %c13_211 = arith.constant 13 : index
    %213 = memref.load %arg6[%c13_211] : memref<16xf32, #tpu.memory_space<smem>>
    %c14_212 = arith.constant 14 : index
    %214 = memref.load %arg6[%c14_212] : memref<16xf32, #tpu.memory_space<smem>>
    %c15_213 = arith.constant 15 : index
    %215 = memref.load %arg6[%c15_213] : memref<16xf32, #tpu.memory_space<smem>>
    %c0_214 = arith.constant 0 : index
    %216 = memref.load %arg7[%c0_214] : memref<1xf32, #tpu.memory_space<smem>>
    %217 = vector.broadcast %168 : f32 to vector<4x4xf32>
    %218 = arith.mulf %103, %217 : vector<4x4xf32>
    %219 = vector.broadcast %184 : f32 to vector<4x4xf32>
    %220 = arith.addf %218, %219 : vector<4x4xf32>
    %221 = vector.broadcast %104 : f32 to vector<4x4xf32>
    %222 = arith.mulf %18, %221 : vector<4x4xf32>
    %223 = arith.addf %220, %222 : vector<4x4xf32>
    %224 = vector.broadcast %105 : f32 to vector<4x4xf32>
    %225 = arith.mulf %28, %224 : vector<4x4xf32>
    %226 = arith.addf %223, %225 : vector<4x4xf32>
    %227 = vector.broadcast %106 : f32 to vector<4x4xf32>
    %228 = arith.mulf %38, %227 : vector<4x4xf32>
    %229 = arith.addf %226, %228 : vector<4x4xf32>
    %230 = vector.broadcast %107 : f32 to vector<4x4xf32>
    %231 = arith.mulf %48, %230 : vector<4x4xf32>
    %232 = arith.addf %229, %231 : vector<4x4xf32>
    %233 = math.tanh %232 : vector<4x4xf32>
    %234 = vector.broadcast %200 : f32 to vector<4x4xf32>
    %235 = arith.mulf %233, %234 : vector<4x4xf32>
    %236 = vector.broadcast %169 : f32 to vector<4x4xf32>
    %237 = arith.mulf %103, %236 : vector<4x4xf32>
    %238 = vector.broadcast %185 : f32 to vector<4x4xf32>
    %239 = arith.addf %237, %238 : vector<4x4xf32>
    %240 = vector.broadcast %108 : f32 to vector<4x4xf32>
    %241 = arith.mulf %18, %240 : vector<4x4xf32>
    %242 = arith.addf %239, %241 : vector<4x4xf32>
    %243 = vector.broadcast %109 : f32 to vector<4x4xf32>
    %244 = arith.mulf %28, %243 : vector<4x4xf32>
    %245 = arith.addf %242, %244 : vector<4x4xf32>
    %246 = vector.broadcast %110 : f32 to vector<4x4xf32>
    %247 = arith.mulf %38, %246 : vector<4x4xf32>
    %248 = arith.addf %245, %247 : vector<4x4xf32>
    %249 = vector.broadcast %111 : f32 to vector<4x4xf32>
    %250 = arith.mulf %48, %249 : vector<4x4xf32>
    %251 = arith.addf %248, %250 : vector<4x4xf32>
    %252 = math.tanh %251 : vector<4x4xf32>
    %253 = vector.broadcast %201 : f32 to vector<4x4xf32>
    %254 = arith.mulf %252, %253 : vector<4x4xf32>
    %255 = arith.addf %235, %254 : vector<4x4xf32>
    %256 = vector.broadcast %170 : f32 to vector<4x4xf32>
    %257 = arith.mulf %103, %256 : vector<4x4xf32>
    %258 = vector.broadcast %186 : f32 to vector<4x4xf32>
    %259 = arith.addf %257, %258 : vector<4x4xf32>
    %260 = vector.broadcast %112 : f32 to vector<4x4xf32>
    %261 = arith.mulf %18, %260 : vector<4x4xf32>
    %262 = arith.addf %259, %261 : vector<4x4xf32>
    %263 = vector.broadcast %113 : f32 to vector<4x4xf32>
    %264 = arith.mulf %28, %263 : vector<4x4xf32>
    %265 = arith.addf %262, %264 : vector<4x4xf32>
    %266 = vector.broadcast %114 : f32 to vector<4x4xf32>
    %267 = arith.mulf %38, %266 : vector<4x4xf32>
    %268 = arith.addf %265, %267 : vector<4x4xf32>
    %269 = vector.broadcast %115 : f32 to vector<4x4xf32>
    %270 = arith.mulf %48, %269 : vector<4x4xf32>
    %271 = arith.addf %268, %270 : vector<4x4xf32>
    %272 = math.tanh %271 : vector<4x4xf32>
    %273 = vector.broadcast %202 : f32 to vector<4x4xf32>
    %274 = arith.mulf %272, %273 : vector<4x4xf32>
    %275 = arith.addf %255, %274 : vector<4x4xf32>
    %276 = vector.broadcast %171 : f32 to vector<4x4xf32>
    %277 = arith.mulf %103, %276 : vector<4x4xf32>
    %278 = vector.broadcast %187 : f32 to vector<4x4xf32>
    %279 = arith.addf %277, %278 : vector<4x4xf32>
    %280 = vector.broadcast %116 : f32 to vector<4x4xf32>
    %281 = arith.mulf %18, %280 : vector<4x4xf32>
    %282 = arith.addf %279, %281 : vector<4x4xf32>
    %283 = vector.broadcast %117 : f32 to vector<4x4xf32>
    %284 = arith.mulf %28, %283 : vector<4x4xf32>
    %285 = arith.addf %282, %284 : vector<4x4xf32>
    %286 = vector.broadcast %118 : f32 to vector<4x4xf32>
    %287 = arith.mulf %38, %286 : vector<4x4xf32>
    %288 = arith.addf %285, %287 : vector<4x4xf32>
    %289 = vector.broadcast %119 : f32 to vector<4x4xf32>
    %290 = arith.mulf %48, %289 : vector<4x4xf32>
    %291 = arith.addf %288, %290 : vector<4x4xf32>
    %292 = math.tanh %291 : vector<4x4xf32>
    %293 = vector.broadcast %203 : f32 to vector<4x4xf32>
    %294 = arith.mulf %292, %293 : vector<4x4xf32>
    %295 = arith.addf %275, %294 : vector<4x4xf32>
    %296 = vector.broadcast %172 : f32 to vector<4x4xf32>
    %297 = arith.mulf %103, %296 : vector<4x4xf32>
    %298 = vector.broadcast %188 : f32 to vector<4x4xf32>
    %299 = arith.addf %297, %298 : vector<4x4xf32>
    %300 = vector.broadcast %120 : f32 to vector<4x4xf32>
    %301 = arith.mulf %18, %300 : vector<4x4xf32>
    %302 = arith.addf %299, %301 : vector<4x4xf32>
    %303 = vector.broadcast %121 : f32 to vector<4x4xf32>
    %304 = arith.mulf %28, %303 : vector<4x4xf32>
    %305 = arith.addf %302, %304 : vector<4x4xf32>
    %306 = vector.broadcast %122 : f32 to vector<4x4xf32>
    %307 = arith.mulf %38, %306 : vector<4x4xf32>
    %308 = arith.addf %305, %307 : vector<4x4xf32>
    %309 = vector.broadcast %123 : f32 to vector<4x4xf32>
    %310 = arith.mulf %48, %309 : vector<4x4xf32>
    %311 = arith.addf %308, %310 : vector<4x4xf32>
    %312 = math.tanh %311 : vector<4x4xf32>
    %313 = vector.broadcast %204 : f32 to vector<4x4xf32>
    %314 = arith.mulf %312, %313 : vector<4x4xf32>
    %315 = arith.addf %295, %314 : vector<4x4xf32>
    %316 = vector.broadcast %173 : f32 to vector<4x4xf32>
    %317 = arith.mulf %103, %316 : vector<4x4xf32>
    %318 = vector.broadcast %189 : f32 to vector<4x4xf32>
    %319 = arith.addf %317, %318 : vector<4x4xf32>
    %320 = vector.broadcast %124 : f32 to vector<4x4xf32>
    %321 = arith.mulf %18, %320 : vector<4x4xf32>
    %322 = arith.addf %319, %321 : vector<4x4xf32>
    %323 = vector.broadcast %125 : f32 to vector<4x4xf32>
    %324 = arith.mulf %28, %323 : vector<4x4xf32>
    %325 = arith.addf %322, %324 : vector<4x4xf32>
    %326 = vector.broadcast %126 : f32 to vector<4x4xf32>
    %327 = arith.mulf %38, %326 : vector<4x4xf32>
    %328 = arith.addf %325, %327 : vector<4x4xf32>
    %329 = vector.broadcast %127 : f32 to vector<4x4xf32>
    %330 = arith.mulf %48, %329 : vector<4x4xf32>
    %331 = arith.addf %328, %330 : vector<4x4xf32>
    %332 = math.tanh %331 : vector<4x4xf32>
    %333 = vector.broadcast %205 : f32 to vector<4x4xf32>
    %334 = arith.mulf %332, %333 : vector<4x4xf32>
    %335 = arith.addf %315, %334 : vector<4x4xf32>
    %336 = vector.broadcast %174 : f32 to vector<4x4xf32>
    %337 = arith.mulf %103, %336 : vector<4x4xf32>
    %338 = vector.broadcast %190 : f32 to vector<4x4xf32>
    %339 = arith.addf %337, %338 : vector<4x4xf32>
    %340 = vector.broadcast %128 : f32 to vector<4x4xf32>
    %341 = arith.mulf %18, %340 : vector<4x4xf32>
    %342 = arith.addf %339, %341 : vector<4x4xf32>
    %343 = vector.broadcast %129 : f32 to vector<4x4xf32>
    %344 = arith.mulf %28, %343 : vector<4x4xf32>
    %345 = arith.addf %342, %344 : vector<4x4xf32>
    %346 = vector.broadcast %130 : f32 to vector<4x4xf32>
    %347 = arith.mulf %38, %346 : vector<4x4xf32>
    %348 = arith.addf %345, %347 : vector<4x4xf32>
    %349 = vector.broadcast %131 : f32 to vector<4x4xf32>
    %350 = arith.mulf %48, %349 : vector<4x4xf32>
    %351 = arith.addf %348, %350 : vector<4x4xf32>
    %352 = math.tanh %351 : vector<4x4xf32>
    %353 = vector.broadcast %206 : f32 to vector<4x4xf32>
    %354 = arith.mulf %352, %353 : vector<4x4xf32>
    %355 = arith.addf %335, %354 : vector<4x4xf32>
    %356 = vector.broadcast %175 : f32 to vector<4x4xf32>
    %357 = arith.mulf %103, %356 : vector<4x4xf32>
    %358 = vector.broadcast %191 : f32 to vector<4x4xf32>
    %359 = arith.addf %357, %358 : vector<4x4xf32>
    %360 = vector.broadcast %132 : f32 to vector<4x4xf32>
    %361 = arith.mulf %18, %360 : vector<4x4xf32>
    %362 = arith.addf %359, %361 : vector<4x4xf32>
    %363 = vector.broadcast %133 : f32 to vector<4x4xf32>
    %364 = arith.mulf %28, %363 : vector<4x4xf32>
    %365 = arith.addf %362, %364 : vector<4x4xf32>
    %366 = vector.broadcast %134 : f32 to vector<4x4xf32>
    %367 = arith.mulf %38, %366 : vector<4x4xf32>
    %368 = arith.addf %365, %367 : vector<4x4xf32>
    %369 = vector.broadcast %135 : f32 to vector<4x4xf32>
    %370 = arith.mulf %48, %369 : vector<4x4xf32>
    %371 = arith.addf %368, %370 : vector<4x4xf32>
    %372 = math.tanh %371 : vector<4x4xf32>
    %373 = vector.broadcast %207 : f32 to vector<4x4xf32>
    %374 = arith.mulf %372, %373 : vector<4x4xf32>
    %375 = arith.addf %355, %374 : vector<4x4xf32>
    %376 = vector.broadcast %176 : f32 to vector<4x4xf32>
    %377 = arith.mulf %103, %376 : vector<4x4xf32>
    %378 = vector.broadcast %192 : f32 to vector<4x4xf32>
    %379 = arith.addf %377, %378 : vector<4x4xf32>
    %380 = vector.broadcast %136 : f32 to vector<4x4xf32>
    %381 = arith.mulf %18, %380 : vector<4x4xf32>
    %382 = arith.addf %379, %381 : vector<4x4xf32>
    %383 = vector.broadcast %137 : f32 to vector<4x4xf32>
    %384 = arith.mulf %28, %383 : vector<4x4xf32>
    %385 = arith.addf %382, %384 : vector<4x4xf32>
    %386 = vector.broadcast %138 : f32 to vector<4x4xf32>
    %387 = arith.mulf %38, %386 : vector<4x4xf32>
    %388 = arith.addf %385, %387 : vector<4x4xf32>
    %389 = vector.broadcast %139 : f32 to vector<4x4xf32>
    %390 = arith.mulf %48, %389 : vector<4x4xf32>
    %391 = arith.addf %388, %390 : vector<4x4xf32>
    %392 = math.tanh %391 : vector<4x4xf32>
    %393 = vector.broadcast %208 : f32 to vector<4x4xf32>
    %394 = arith.mulf %392, %393 : vector<4x4xf32>
    %395 = arith.addf %375, %394 : vector<4x4xf32>
    %396 = vector.broadcast %177 : f32 to vector<4x4xf32>
    %397 = arith.mulf %103, %396 : vector<4x4xf32>
    %398 = vector.broadcast %193 : f32 to vector<4x4xf32>
    %399 = arith.addf %397, %398 : vector<4x4xf32>
    %400 = vector.broadcast %140 : f32 to vector<4x4xf32>
    %401 = arith.mulf %18, %400 : vector<4x4xf32>
    %402 = arith.addf %399, %401 : vector<4x4xf32>
    %403 = vector.broadcast %141 : f32 to vector<4x4xf32>
    %404 = arith.mulf %28, %403 : vector<4x4xf32>
    %405 = arith.addf %402, %404 : vector<4x4xf32>
    %406 = vector.broadcast %142 : f32 to vector<4x4xf32>
    %407 = arith.mulf %38, %406 : vector<4x4xf32>
    %408 = arith.addf %405, %407 : vector<4x4xf32>
    %409 = vector.broadcast %143 : f32 to vector<4x4xf32>
    %410 = arith.mulf %48, %409 : vector<4x4xf32>
    %411 = arith.addf %408, %410 : vector<4x4xf32>
    %412 = math.tanh %411 : vector<4x4xf32>
    %413 = vector.broadcast %209 : f32 to vector<4x4xf32>
    %414 = arith.mulf %412, %413 : vector<4x4xf32>
    %415 = arith.addf %395, %414 : vector<4x4xf32>
    %416 = vector.broadcast %178 : f32 to vector<4x4xf32>
    %417 = arith.mulf %103, %416 : vector<4x4xf32>
    %418 = vector.broadcast %194 : f32 to vector<4x4xf32>
    %419 = arith.addf %417, %418 : vector<4x4xf32>
    %420 = vector.broadcast %144 : f32 to vector<4x4xf32>
    %421 = arith.mulf %18, %420 : vector<4x4xf32>
    %422 = arith.addf %419, %421 : vector<4x4xf32>
    %423 = vector.broadcast %145 : f32 to vector<4x4xf32>
    %424 = arith.mulf %28, %423 : vector<4x4xf32>
    %425 = arith.addf %422, %424 : vector<4x4xf32>
    %426 = vector.broadcast %146 : f32 to vector<4x4xf32>
    %427 = arith.mulf %38, %426 : vector<4x4xf32>
    %428 = arith.addf %425, %427 : vector<4x4xf32>
    %429 = vector.broadcast %147 : f32 to vector<4x4xf32>
    %430 = arith.mulf %48, %429 : vector<4x4xf32>
    %431 = arith.addf %428, %430 : vector<4x4xf32>
    %432 = math.tanh %431 : vector<4x4xf32>
    %433 = vector.broadcast %210 : f32 to vector<4x4xf32>
    %434 = arith.mulf %432, %433 : vector<4x4xf32>
    %435 = arith.addf %415, %434 : vector<4x4xf32>
    %436 = vector.broadcast %179 : f32 to vector<4x4xf32>
    %437 = arith.mulf %103, %436 : vector<4x4xf32>
    %438 = vector.broadcast %195 : f32 to vector<4x4xf32>
    %439 = arith.addf %437, %438 : vector<4x4xf32>
    %440 = vector.broadcast %148 : f32 to vector<4x4xf32>
    %441 = arith.mulf %18, %440 : vector<4x4xf32>
    %442 = arith.addf %439, %441 : vector<4x4xf32>
    %443 = vector.broadcast %149 : f32 to vector<4x4xf32>
    %444 = arith.mulf %28, %443 : vector<4x4xf32>
    %445 = arith.addf %442, %444 : vector<4x4xf32>
    %446 = vector.broadcast %150 : f32 to vector<4x4xf32>
    %447 = arith.mulf %38, %446 : vector<4x4xf32>
    %448 = arith.addf %445, %447 : vector<4x4xf32>
    %449 = vector.broadcast %151 : f32 to vector<4x4xf32>
    %450 = arith.mulf %48, %449 : vector<4x4xf32>
    %451 = arith.addf %448, %450 : vector<4x4xf32>
    %452 = math.tanh %451 : vector<4x4xf32>
    %453 = vector.broadcast %211 : f32 to vector<4x4xf32>
    %454 = arith.mulf %452, %453 : vector<4x4xf32>
    %455 = arith.addf %435, %454 : vector<4x4xf32>
    %456 = vector.broadcast %180 : f32 to vector<4x4xf32>
    %457 = arith.mulf %103, %456 : vector<4x4xf32>
    %458 = vector.broadcast %196 : f32 to vector<4x4xf32>
    %459 = arith.addf %457, %458 : vector<4x4xf32>
    %460 = vector.broadcast %152 : f32 to vector<4x4xf32>
    %461 = arith.mulf %18, %460 : vector<4x4xf32>
    %462 = arith.addf %459, %461 : vector<4x4xf32>
    %463 = vector.broadcast %153 : f32 to vector<4x4xf32>
    %464 = arith.mulf %28, %463 : vector<4x4xf32>
    %465 = arith.addf %462, %464 : vector<4x4xf32>
    %466 = vector.broadcast %154 : f32 to vector<4x4xf32>
    %467 = arith.mulf %38, %466 : vector<4x4xf32>
    %468 = arith.addf %465, %467 : vector<4x4xf32>
    %469 = vector.broadcast %155 : f32 to vector<4x4xf32>
    %470 = arith.mulf %48, %469 : vector<4x4xf32>
    %471 = arith.addf %468, %470 : vector<4x4xf32>
    %472 = math.tanh %471 : vector<4x4xf32>
    %473 = vector.broadcast %212 : f32 to vector<4x4xf32>
    %474 = arith.mulf %472, %473 : vector<4x4xf32>
    %475 = arith.addf %455, %474 : vector<4x4xf32>
    %476 = vector.broadcast %181 : f32 to vector<4x4xf32>
    %477 = arith.mulf %103, %476 : vector<4x4xf32>
    %478 = vector.broadcast %197 : f32 to vector<4x4xf32>
    %479 = arith.addf %477, %478 : vector<4x4xf32>
    %480 = vector.broadcast %156 : f32 to vector<4x4xf32>
    %481 = arith.mulf %18, %480 : vector<4x4xf32>
    %482 = arith.addf %479, %481 : vector<4x4xf32>
    %483 = vector.broadcast %157 : f32 to vector<4x4xf32>
    %484 = arith.mulf %28, %483 : vector<4x4xf32>
    %485 = arith.addf %482, %484 : vector<4x4xf32>
    %486 = vector.broadcast %158 : f32 to vector<4x4xf32>
    %487 = arith.mulf %38, %486 : vector<4x4xf32>
    %488 = arith.addf %485, %487 : vector<4x4xf32>
    %489 = vector.broadcast %159 : f32 to vector<4x4xf32>
    %490 = arith.mulf %48, %489 : vector<4x4xf32>
    %491 = arith.addf %488, %490 : vector<4x4xf32>
    %492 = math.tanh %491 : vector<4x4xf32>
    %493 = vector.broadcast %213 : f32 to vector<4x4xf32>
    %494 = arith.mulf %492, %493 : vector<4x4xf32>
    %495 = arith.addf %475, %494 : vector<4x4xf32>
    %496 = vector.broadcast %182 : f32 to vector<4x4xf32>
    %497 = arith.mulf %103, %496 : vector<4x4xf32>
    %498 = vector.broadcast %198 : f32 to vector<4x4xf32>
    %499 = arith.addf %497, %498 : vector<4x4xf32>
    %500 = vector.broadcast %160 : f32 to vector<4x4xf32>
    %501 = arith.mulf %18, %500 : vector<4x4xf32>
    %502 = arith.addf %499, %501 : vector<4x4xf32>
    %503 = vector.broadcast %161 : f32 to vector<4x4xf32>
    %504 = arith.mulf %28, %503 : vector<4x4xf32>
    %505 = arith.addf %502, %504 : vector<4x4xf32>
    %506 = vector.broadcast %162 : f32 to vector<4x4xf32>
    %507 = arith.mulf %38, %506 : vector<4x4xf32>
    %508 = arith.addf %505, %507 : vector<4x4xf32>
    %509 = vector.broadcast %163 : f32 to vector<4x4xf32>
    %510 = arith.mulf %48, %509 : vector<4x4xf32>
    %511 = arith.addf %508, %510 : vector<4x4xf32>
    %512 = math.tanh %511 : vector<4x4xf32>
    %513 = vector.broadcast %214 : f32 to vector<4x4xf32>
    %514 = arith.mulf %512, %513 : vector<4x4xf32>
    %515 = arith.addf %495, %514 : vector<4x4xf32>
    %516 = vector.broadcast %183 : f32 to vector<4x4xf32>
    %517 = arith.mulf %103, %516 : vector<4x4xf32>
    %518 = vector.broadcast %199 : f32 to vector<4x4xf32>
    %519 = arith.addf %517, %518 : vector<4x4xf32>
    %520 = vector.broadcast %164 : f32 to vector<4x4xf32>
    %521 = arith.mulf %18, %520 : vector<4x4xf32>
    %522 = arith.addf %519, %521 : vector<4x4xf32>
    %523 = vector.broadcast %165 : f32 to vector<4x4xf32>
    %524 = arith.mulf %28, %523 : vector<4x4xf32>
    %525 = arith.addf %522, %524 : vector<4x4xf32>
    %526 = vector.broadcast %166 : f32 to vector<4x4xf32>
    %527 = arith.mulf %38, %526 : vector<4x4xf32>
    %528 = arith.addf %525, %527 : vector<4x4xf32>
    %529 = vector.broadcast %167 : f32 to vector<4x4xf32>
    %530 = arith.mulf %48, %529 : vector<4x4xf32>
    %531 = arith.addf %528, %530 : vector<4x4xf32>
    %532 = math.tanh %531 : vector<4x4xf32>
    %533 = vector.broadcast %215 : f32 to vector<4x4xf32>
    %534 = arith.mulf %532, %533 : vector<4x4xf32>
    %535 = arith.addf %515, %534 : vector<4x4xf32>
    %536 = arith.addf %103, %535 : vector<4x4xf32>
    %537 = vector.broadcast %216 : f32 to vector<4x4xf32>
    %538 = arith.addf %536, %537 : vector<4x4xf32>
    %539 = vector.broadcast %168 : f32 to vector<4x4xf32>
    %540 = arith.mulf %538, %539 : vector<4x4xf32>
    %541 = vector.broadcast %184 : f32 to vector<4x4xf32>
    %542 = arith.addf %540, %541 : vector<4x4xf32>
    %543 = vector.broadcast %104 : f32 to vector<4x4xf32>
    %544 = arith.mulf %18, %543 : vector<4x4xf32>
    %545 = arith.addf %542, %544 : vector<4x4xf32>
    %546 = vector.broadcast %105 : f32 to vector<4x4xf32>
    %547 = arith.mulf %28, %546 : vector<4x4xf32>
    %548 = arith.addf %545, %547 : vector<4x4xf32>
    %549 = vector.broadcast %106 : f32 to vector<4x4xf32>
    %550 = arith.mulf %38, %549 : vector<4x4xf32>
    %551 = arith.addf %548, %550 : vector<4x4xf32>
    %552 = vector.broadcast %107 : f32 to vector<4x4xf32>
    %553 = arith.mulf %48, %552 : vector<4x4xf32>
    %554 = arith.addf %551, %553 : vector<4x4xf32>
    %555 = math.tanh %554 : vector<4x4xf32>
    %556 = vector.broadcast %200 : f32 to vector<4x4xf32>
    %557 = arith.mulf %555, %556 : vector<4x4xf32>
    %558 = vector.broadcast %169 : f32 to vector<4x4xf32>
    %559 = arith.mulf %538, %558 : vector<4x4xf32>
    %560 = vector.broadcast %185 : f32 to vector<4x4xf32>
    %561 = arith.addf %559, %560 : vector<4x4xf32>
    %562 = vector.broadcast %108 : f32 to vector<4x4xf32>
    %563 = arith.mulf %18, %562 : vector<4x4xf32>
    %564 = arith.addf %561, %563 : vector<4x4xf32>
    %565 = vector.broadcast %109 : f32 to vector<4x4xf32>
    %566 = arith.mulf %28, %565 : vector<4x4xf32>
    %567 = arith.addf %564, %566 : vector<4x4xf32>
    %568 = vector.broadcast %110 : f32 to vector<4x4xf32>
    %569 = arith.mulf %38, %568 : vector<4x4xf32>
    %570 = arith.addf %567, %569 : vector<4x4xf32>
    %571 = vector.broadcast %111 : f32 to vector<4x4xf32>
    %572 = arith.mulf %48, %571 : vector<4x4xf32>
    %573 = arith.addf %570, %572 : vector<4x4xf32>
    %574 = math.tanh %573 : vector<4x4xf32>
    %575 = vector.broadcast %201 : f32 to vector<4x4xf32>
    %576 = arith.mulf %574, %575 : vector<4x4xf32>
    %577 = arith.addf %557, %576 : vector<4x4xf32>
    %578 = vector.broadcast %170 : f32 to vector<4x4xf32>
    %579 = arith.mulf %538, %578 : vector<4x4xf32>
    %580 = vector.broadcast %186 : f32 to vector<4x4xf32>
    %581 = arith.addf %579, %580 : vector<4x4xf32>
    %582 = vector.broadcast %112 : f32 to vector<4x4xf32>
    %583 = arith.mulf %18, %582 : vector<4x4xf32>
    %584 = arith.addf %581, %583 : vector<4x4xf32>
    %585 = vector.broadcast %113 : f32 to vector<4x4xf32>
    %586 = arith.mulf %28, %585 : vector<4x4xf32>
    %587 = arith.addf %584, %586 : vector<4x4xf32>
    %588 = vector.broadcast %114 : f32 to vector<4x4xf32>
    %589 = arith.mulf %38, %588 : vector<4x4xf32>
    %590 = arith.addf %587, %589 : vector<4x4xf32>
    %591 = vector.broadcast %115 : f32 to vector<4x4xf32>
    %592 = arith.mulf %48, %591 : vector<4x4xf32>
    %593 = arith.addf %590, %592 : vector<4x4xf32>
    %594 = math.tanh %593 : vector<4x4xf32>
    %595 = vector.broadcast %202 : f32 to vector<4x4xf32>
    %596 = arith.mulf %594, %595 : vector<4x4xf32>
    %597 = arith.addf %577, %596 : vector<4x4xf32>
    %598 = vector.broadcast %171 : f32 to vector<4x4xf32>
    %599 = arith.mulf %538, %598 : vector<4x4xf32>
    %600 = vector.broadcast %187 : f32 to vector<4x4xf32>
    %601 = arith.addf %599, %600 : vector<4x4xf32>
    %602 = vector.broadcast %116 : f32 to vector<4x4xf32>
    %603 = arith.mulf %18, %602 : vector<4x4xf32>
    %604 = arith.addf %601, %603 : vector<4x4xf32>
    %605 = vector.broadcast %117 : f32 to vector<4x4xf32>
    %606 = arith.mulf %28, %605 : vector<4x4xf32>
    %607 = arith.addf %604, %606 : vector<4x4xf32>
    %608 = vector.broadcast %118 : f32 to vector<4x4xf32>
    %609 = arith.mulf %38, %608 : vector<4x4xf32>
    %610 = arith.addf %607, %609 : vector<4x4xf32>
    %611 = vector.broadcast %119 : f32 to vector<4x4xf32>
    %612 = arith.mulf %48, %611 : vector<4x4xf32>
    %613 = arith.addf %610, %612 : vector<4x4xf32>
    %614 = math.tanh %613 : vector<4x4xf32>
    %615 = vector.broadcast %203 : f32 to vector<4x4xf32>
    %616 = arith.mulf %614, %615 : vector<4x4xf32>
    %617 = arith.addf %597, %616 : vector<4x4xf32>
    %618 = vector.broadcast %172 : f32 to vector<4x4xf32>
    %619 = arith.mulf %538, %618 : vector<4x4xf32>
    %620 = vector.broadcast %188 : f32 to vector<4x4xf32>
    %621 = arith.addf %619, %620 : vector<4x4xf32>
    %622 = vector.broadcast %120 : f32 to vector<4x4xf32>
    %623 = arith.mulf %18, %622 : vector<4x4xf32>
    %624 = arith.addf %621, %623 : vector<4x4xf32>
    %625 = vector.broadcast %121 : f32 to vector<4x4xf32>
    %626 = arith.mulf %28, %625 : vector<4x4xf32>
    %627 = arith.addf %624, %626 : vector<4x4xf32>
    %628 = vector.broadcast %122 : f32 to vector<4x4xf32>
    %629 = arith.mulf %38, %628 : vector<4x4xf32>
    %630 = arith.addf %627, %629 : vector<4x4xf32>
    %631 = vector.broadcast %123 : f32 to vector<4x4xf32>
    %632 = arith.mulf %48, %631 : vector<4x4xf32>
    %633 = arith.addf %630, %632 : vector<4x4xf32>
    %634 = math.tanh %633 : vector<4x4xf32>
    %635 = vector.broadcast %204 : f32 to vector<4x4xf32>
    %636 = arith.mulf %634, %635 : vector<4x4xf32>
    %637 = arith.addf %617, %636 : vector<4x4xf32>
    %638 = vector.broadcast %173 : f32 to vector<4x4xf32>
    %639 = arith.mulf %538, %638 : vector<4x4xf32>
    %640 = vector.broadcast %189 : f32 to vector<4x4xf32>
    %641 = arith.addf %639, %640 : vector<4x4xf32>
    %642 = vector.broadcast %124 : f32 to vector<4x4xf32>
    %643 = arith.mulf %18, %642 : vector<4x4xf32>
    %644 = arith.addf %641, %643 : vector<4x4xf32>
    %645 = vector.broadcast %125 : f32 to vector<4x4xf32>
    %646 = arith.mulf %28, %645 : vector<4x4xf32>
    %647 = arith.addf %644, %646 : vector<4x4xf32>
    %648 = vector.broadcast %126 : f32 to vector<4x4xf32>
    %649 = arith.mulf %38, %648 : vector<4x4xf32>
    %650 = arith.addf %647, %649 : vector<4x4xf32>
    %651 = vector.broadcast %127 : f32 to vector<4x4xf32>
    %652 = arith.mulf %48, %651 : vector<4x4xf32>
    %653 = arith.addf %650, %652 : vector<4x4xf32>
    %654 = math.tanh %653 : vector<4x4xf32>
    %655 = vector.broadcast %205 : f32 to vector<4x4xf32>
    %656 = arith.mulf %654, %655 : vector<4x4xf32>
    %657 = arith.addf %637, %656 : vector<4x4xf32>
    %658 = vector.broadcast %174 : f32 to vector<4x4xf32>
    %659 = arith.mulf %538, %658 : vector<4x4xf32>
    %660 = vector.broadcast %190 : f32 to vector<4x4xf32>
    %661 = arith.addf %659, %660 : vector<4x4xf32>
    %662 = vector.broadcast %128 : f32 to vector<4x4xf32>
    %663 = arith.mulf %18, %662 : vector<4x4xf32>
    %664 = arith.addf %661, %663 : vector<4x4xf32>
    %665 = vector.broadcast %129 : f32 to vector<4x4xf32>
    %666 = arith.mulf %28, %665 : vector<4x4xf32>
    %667 = arith.addf %664, %666 : vector<4x4xf32>
    %668 = vector.broadcast %130 : f32 to vector<4x4xf32>
    %669 = arith.mulf %38, %668 : vector<4x4xf32>
    %670 = arith.addf %667, %669 : vector<4x4xf32>
    %671 = vector.broadcast %131 : f32 to vector<4x4xf32>
    %672 = arith.mulf %48, %671 : vector<4x4xf32>
    %673 = arith.addf %670, %672 : vector<4x4xf32>
    %674 = math.tanh %673 : vector<4x4xf32>
    %675 = vector.broadcast %206 : f32 to vector<4x4xf32>
    %676 = arith.mulf %674, %675 : vector<4x4xf32>
    %677 = arith.addf %657, %676 : vector<4x4xf32>
    %678 = vector.broadcast %175 : f32 to vector<4x4xf32>
    %679 = arith.mulf %538, %678 : vector<4x4xf32>
    %680 = vector.broadcast %191 : f32 to vector<4x4xf32>
    %681 = arith.addf %679, %680 : vector<4x4xf32>
    %682 = vector.broadcast %132 : f32 to vector<4x4xf32>
    %683 = arith.mulf %18, %682 : vector<4x4xf32>
    %684 = arith.addf %681, %683 : vector<4x4xf32>
    %685 = vector.broadcast %133 : f32 to vector<4x4xf32>
    %686 = arith.mulf %28, %685 : vector<4x4xf32>
    %687 = arith.addf %684, %686 : vector<4x4xf32>
    %688 = vector.broadcast %134 : f32 to vector<4x4xf32>
    %689 = arith.mulf %38, %688 : vector<4x4xf32>
    %690 = arith.addf %687, %689 : vector<4x4xf32>
    %691 = vector.broadcast %135 : f32 to vector<4x4xf32>
    %692 = arith.mulf %48, %691 : vector<4x4xf32>
    %693 = arith.addf %690, %692 : vector<4x4xf32>
    %694 = math.tanh %693 : vector<4x4xf32>
    %695 = vector.broadcast %207 : f32 to vector<4x4xf32>
    %696 = arith.mulf %694, %695 : vector<4x4xf32>
    %697 = arith.addf %677, %696 : vector<4x4xf32>
    %698 = vector.broadcast %176 : f32 to vector<4x4xf32>
    %699 = arith.mulf %538, %698 : vector<4x4xf32>
    %700 = vector.broadcast %192 : f32 to vector<4x4xf32>
    %701 = arith.addf %699, %700 : vector<4x4xf32>
    %702 = vector.broadcast %136 : f32 to vector<4x4xf32>
    %703 = arith.mulf %18, %702 : vector<4x4xf32>
    %704 = arith.addf %701, %703 : vector<4x4xf32>
    %705 = vector.broadcast %137 : f32 to vector<4x4xf32>
    %706 = arith.mulf %28, %705 : vector<4x4xf32>
    %707 = arith.addf %704, %706 : vector<4x4xf32>
    %708 = vector.broadcast %138 : f32 to vector<4x4xf32>
    %709 = arith.mulf %38, %708 : vector<4x4xf32>
    %710 = arith.addf %707, %709 : vector<4x4xf32>
    %711 = vector.broadcast %139 : f32 to vector<4x4xf32>
    %712 = arith.mulf %48, %711 : vector<4x4xf32>
    %713 = arith.addf %710, %712 : vector<4x4xf32>
    %714 = math.tanh %713 : vector<4x4xf32>
    %715 = vector.broadcast %208 : f32 to vector<4x4xf32>
    %716 = arith.mulf %714, %715 : vector<4x4xf32>
    %717 = arith.addf %697, %716 : vector<4x4xf32>
    %718 = vector.broadcast %177 : f32 to vector<4x4xf32>
    %719 = arith.mulf %538, %718 : vector<4x4xf32>
    %720 = vector.broadcast %193 : f32 to vector<4x4xf32>
    %721 = arith.addf %719, %720 : vector<4x4xf32>
    %722 = vector.broadcast %140 : f32 to vector<4x4xf32>
    %723 = arith.mulf %18, %722 : vector<4x4xf32>
    %724 = arith.addf %721, %723 : vector<4x4xf32>
    %725 = vector.broadcast %141 : f32 to vector<4x4xf32>
    %726 = arith.mulf %28, %725 : vector<4x4xf32>
    %727 = arith.addf %724, %726 : vector<4x4xf32>
    %728 = vector.broadcast %142 : f32 to vector<4x4xf32>
    %729 = arith.mulf %38, %728 : vector<4x4xf32>
    %730 = arith.addf %727, %729 : vector<4x4xf32>
    %731 = vector.broadcast %143 : f32 to vector<4x4xf32>
    %732 = arith.mulf %48, %731 : vector<4x4xf32>
    %733 = arith.addf %730, %732 : vector<4x4xf32>
    %734 = math.tanh %733 : vector<4x4xf32>
    %735 = vector.broadcast %209 : f32 to vector<4x4xf32>
    %736 = arith.mulf %734, %735 : vector<4x4xf32>
    %737 = arith.addf %717, %736 : vector<4x4xf32>
    %738 = vector.broadcast %178 : f32 to vector<4x4xf32>
    %739 = arith.mulf %538, %738 : vector<4x4xf32>
    %740 = vector.broadcast %194 : f32 to vector<4x4xf32>
    %741 = arith.addf %739, %740 : vector<4x4xf32>
    %742 = vector.broadcast %144 : f32 to vector<4x4xf32>
    %743 = arith.mulf %18, %742 : vector<4x4xf32>
    %744 = arith.addf %741, %743 : vector<4x4xf32>
    %745 = vector.broadcast %145 : f32 to vector<4x4xf32>
    %746 = arith.mulf %28, %745 : vector<4x4xf32>
    %747 = arith.addf %744, %746 : vector<4x4xf32>
    %748 = vector.broadcast %146 : f32 to vector<4x4xf32>
    %749 = arith.mulf %38, %748 : vector<4x4xf32>
    %750 = arith.addf %747, %749 : vector<4x4xf32>
    %751 = vector.broadcast %147 : f32 to vector<4x4xf32>
    %752 = arith.mulf %48, %751 : vector<4x4xf32>
    %753 = arith.addf %750, %752 : vector<4x4xf32>
    %754 = math.tanh %753 : vector<4x4xf32>
    %755 = vector.broadcast %210 : f32 to vector<4x4xf32>
    %756 = arith.mulf %754, %755 : vector<4x4xf32>
    %757 = arith.addf %737, %756 : vector<4x4xf32>
    %758 = vector.broadcast %179 : f32 to vector<4x4xf32>
    %759 = arith.mulf %538, %758 : vector<4x4xf32>
    %760 = vector.broadcast %195 : f32 to vector<4x4xf32>
    %761 = arith.addf %759, %760 : vector<4x4xf32>
    %762 = vector.broadcast %148 : f32 to vector<4x4xf32>
    %763 = arith.mulf %18, %762 : vector<4x4xf32>
    %764 = arith.addf %761, %763 : vector<4x4xf32>
    %765 = vector.broadcast %149 : f32 to vector<4x4xf32>
    %766 = arith.mulf %28, %765 : vector<4x4xf32>
    %767 = arith.addf %764, %766 : vector<4x4xf32>
    %768 = vector.broadcast %150 : f32 to vector<4x4xf32>
    %769 = arith.mulf %38, %768 : vector<4x4xf32>
    %770 = arith.addf %767, %769 : vector<4x4xf32>
    %771 = vector.broadcast %151 : f32 to vector<4x4xf32>
    %772 = arith.mulf %48, %771 : vector<4x4xf32>
    %773 = arith.addf %770, %772 : vector<4x4xf32>
    %774 = math.tanh %773 : vector<4x4xf32>
    %775 = vector.broadcast %211 : f32 to vector<4x4xf32>
    %776 = arith.mulf %774, %775 : vector<4x4xf32>
    %777 = arith.addf %757, %776 : vector<4x4xf32>
    %778 = vector.broadcast %180 : f32 to vector<4x4xf32>
    %779 = arith.mulf %538, %778 : vector<4x4xf32>
    %780 = vector.broadcast %196 : f32 to vector<4x4xf32>
    %781 = arith.addf %779, %780 : vector<4x4xf32>
    %782 = vector.broadcast %152 : f32 to vector<4x4xf32>
    %783 = arith.mulf %18, %782 : vector<4x4xf32>
    %784 = arith.addf %781, %783 : vector<4x4xf32>
    %785 = vector.broadcast %153 : f32 to vector<4x4xf32>
    %786 = arith.mulf %28, %785 : vector<4x4xf32>
    %787 = arith.addf %784, %786 : vector<4x4xf32>
    %788 = vector.broadcast %154 : f32 to vector<4x4xf32>
    %789 = arith.mulf %38, %788 : vector<4x4xf32>
    %790 = arith.addf %787, %789 : vector<4x4xf32>
    %791 = vector.broadcast %155 : f32 to vector<4x4xf32>
    %792 = arith.mulf %48, %791 : vector<4x4xf32>
    %793 = arith.addf %790, %792 : vector<4x4xf32>
    %794 = math.tanh %793 : vector<4x4xf32>
    %795 = vector.broadcast %212 : f32 to vector<4x4xf32>
    %796 = arith.mulf %794, %795 : vector<4x4xf32>
    %797 = arith.addf %777, %796 : vector<4x4xf32>
    %798 = vector.broadcast %181 : f32 to vector<4x4xf32>
    %799 = arith.mulf %538, %798 : vector<4x4xf32>
    %800 = vector.broadcast %197 : f32 to vector<4x4xf32>
    %801 = arith.addf %799, %800 : vector<4x4xf32>
    %802 = vector.broadcast %156 : f32 to vector<4x4xf32>
    %803 = arith.mulf %18, %802 : vector<4x4xf32>
    %804 = arith.addf %801, %803 : vector<4x4xf32>
    %805 = vector.broadcast %157 : f32 to vector<4x4xf32>
    %806 = arith.mulf %28, %805 : vector<4x4xf32>
    %807 = arith.addf %804, %806 : vector<4x4xf32>
    %808 = vector.broadcast %158 : f32 to vector<4x4xf32>
    %809 = arith.mulf %38, %808 : vector<4x4xf32>
    %810 = arith.addf %807, %809 : vector<4x4xf32>
    %811 = vector.broadcast %159 : f32 to vector<4x4xf32>
    %812 = arith.mulf %48, %811 : vector<4x4xf32>
    %813 = arith.addf %810, %812 : vector<4x4xf32>
    %814 = math.tanh %813 : vector<4x4xf32>
    %815 = vector.broadcast %213 : f32 to vector<4x4xf32>
    %816 = arith.mulf %814, %815 : vector<4x4xf32>
    %817 = arith.addf %797, %816 : vector<4x4xf32>
    %818 = vector.broadcast %182 : f32 to vector<4x4xf32>
    %819 = arith.mulf %538, %818 : vector<4x4xf32>
    %820 = vector.broadcast %198 : f32 to vector<4x4xf32>
    %821 = arith.addf %819, %820 : vector<4x4xf32>
    %822 = vector.broadcast %160 : f32 to vector<4x4xf32>
    %823 = arith.mulf %18, %822 : vector<4x4xf32>
    %824 = arith.addf %821, %823 : vector<4x4xf32>
    %825 = vector.broadcast %161 : f32 to vector<4x4xf32>
    %826 = arith.mulf %28, %825 : vector<4x4xf32>
    %827 = arith.addf %824, %826 : vector<4x4xf32>
    %828 = vector.broadcast %162 : f32 to vector<4x4xf32>
    %829 = arith.mulf %38, %828 : vector<4x4xf32>
    %830 = arith.addf %827, %829 : vector<4x4xf32>
    %831 = vector.broadcast %163 : f32 to vector<4x4xf32>
    %832 = arith.mulf %48, %831 : vector<4x4xf32>
    %833 = arith.addf %830, %832 : vector<4x4xf32>
    %834 = math.tanh %833 : vector<4x4xf32>
    %835 = vector.broadcast %214 : f32 to vector<4x4xf32>
    %836 = arith.mulf %834, %835 : vector<4x4xf32>
    %837 = arith.addf %817, %836 : vector<4x4xf32>
    %838 = vector.broadcast %183 : f32 to vector<4x4xf32>
    %839 = arith.mulf %538, %838 : vector<4x4xf32>
    %840 = vector.broadcast %199 : f32 to vector<4x4xf32>
    %841 = arith.addf %839, %840 : vector<4x4xf32>
    %842 = vector.broadcast %164 : f32 to vector<4x4xf32>
    %843 = arith.mulf %18, %842 : vector<4x4xf32>
    %844 = arith.addf %841, %843 : vector<4x4xf32>
    %845 = vector.broadcast %165 : f32 to vector<4x4xf32>
    %846 = arith.mulf %28, %845 : vector<4x4xf32>
    %847 = arith.addf %844, %846 : vector<4x4xf32>
    %848 = vector.broadcast %166 : f32 to vector<4x4xf32>
    %849 = arith.mulf %38, %848 : vector<4x4xf32>
    %850 = arith.addf %847, %849 : vector<4x4xf32>
    %851 = vector.broadcast %167 : f32 to vector<4x4xf32>
    %852 = arith.mulf %48, %851 : vector<4x4xf32>
    %853 = arith.addf %850, %852 : vector<4x4xf32>
    %854 = math.tanh %853 : vector<4x4xf32>
    %855 = vector.broadcast %215 : f32 to vector<4x4xf32>
    %856 = arith.mulf %854, %855 : vector<4x4xf32>
    %857 = arith.addf %837, %856 : vector<4x4xf32>
    %858 = arith.addf %538, %857 : vector<4x4xf32>
    %859 = vector.broadcast %216 : f32 to vector<4x4xf32>
    %860 = arith.addf %858, %859 : vector<4x4xf32>
    %861 = vector.broadcast %168 : f32 to vector<4x4xf32>
    %862 = arith.mulf %860, %861 : vector<4x4xf32>
    %863 = vector.broadcast %184 : f32 to vector<4x4xf32>
    %864 = arith.addf %862, %863 : vector<4x4xf32>
    %865 = vector.broadcast %104 : f32 to vector<4x4xf32>
    %866 = arith.mulf %18, %865 : vector<4x4xf32>
    %867 = arith.addf %864, %866 : vector<4x4xf32>
    %868 = vector.broadcast %105 : f32 to vector<4x4xf32>
    %869 = arith.mulf %28, %868 : vector<4x4xf32>
    %870 = arith.addf %867, %869 : vector<4x4xf32>
    %871 = vector.broadcast %106 : f32 to vector<4x4xf32>
    %872 = arith.mulf %38, %871 : vector<4x4xf32>
    %873 = arith.addf %870, %872 : vector<4x4xf32>
    %874 = vector.broadcast %107 : f32 to vector<4x4xf32>
    %875 = arith.mulf %48, %874 : vector<4x4xf32>
    %876 = arith.addf %873, %875 : vector<4x4xf32>
    %877 = math.tanh %876 : vector<4x4xf32>
    %878 = vector.broadcast %200 : f32 to vector<4x4xf32>
    %879 = arith.mulf %877, %878 : vector<4x4xf32>
    %880 = vector.broadcast %169 : f32 to vector<4x4xf32>
    %881 = arith.mulf %860, %880 : vector<4x4xf32>
    %882 = vector.broadcast %185 : f32 to vector<4x4xf32>
    %883 = arith.addf %881, %882 : vector<4x4xf32>
    %884 = vector.broadcast %108 : f32 to vector<4x4xf32>
    %885 = arith.mulf %18, %884 : vector<4x4xf32>
    %886 = arith.addf %883, %885 : vector<4x4xf32>
    %887 = vector.broadcast %109 : f32 to vector<4x4xf32>
    %888 = arith.mulf %28, %887 : vector<4x4xf32>
    %889 = arith.addf %886, %888 : vector<4x4xf32>
    %890 = vector.broadcast %110 : f32 to vector<4x4xf32>
    %891 = arith.mulf %38, %890 : vector<4x4xf32>
    %892 = arith.addf %889, %891 : vector<4x4xf32>
    %893 = vector.broadcast %111 : f32 to vector<4x4xf32>
    %894 = arith.mulf %48, %893 : vector<4x4xf32>
    %895 = arith.addf %892, %894 : vector<4x4xf32>
    %896 = math.tanh %895 : vector<4x4xf32>
    %897 = vector.broadcast %201 : f32 to vector<4x4xf32>
    %898 = arith.mulf %896, %897 : vector<4x4xf32>
    %899 = arith.addf %879, %898 : vector<4x4xf32>
    %900 = vector.broadcast %170 : f32 to vector<4x4xf32>
    %901 = arith.mulf %860, %900 : vector<4x4xf32>
    %902 = vector.broadcast %186 : f32 to vector<4x4xf32>
    %903 = arith.addf %901, %902 : vector<4x4xf32>
    %904 = vector.broadcast %112 : f32 to vector<4x4xf32>
    %905 = arith.mulf %18, %904 : vector<4x4xf32>
    %906 = arith.addf %903, %905 : vector<4x4xf32>
    %907 = vector.broadcast %113 : f32 to vector<4x4xf32>
    %908 = arith.mulf %28, %907 : vector<4x4xf32>
    %909 = arith.addf %906, %908 : vector<4x4xf32>
    %910 = vector.broadcast %114 : f32 to vector<4x4xf32>
    %911 = arith.mulf %38, %910 : vector<4x4xf32>
    %912 = arith.addf %909, %911 : vector<4x4xf32>
    %913 = vector.broadcast %115 : f32 to vector<4x4xf32>
    %914 = arith.mulf %48, %913 : vector<4x4xf32>
    %915 = arith.addf %912, %914 : vector<4x4xf32>
    %916 = math.tanh %915 : vector<4x4xf32>
    %917 = vector.broadcast %202 : f32 to vector<4x4xf32>
    %918 = arith.mulf %916, %917 : vector<4x4xf32>
    %919 = arith.addf %899, %918 : vector<4x4xf32>
    %920 = vector.broadcast %171 : f32 to vector<4x4xf32>
    %921 = arith.mulf %860, %920 : vector<4x4xf32>
    %922 = vector.broadcast %187 : f32 to vector<4x4xf32>
    %923 = arith.addf %921, %922 : vector<4x4xf32>
    %924 = vector.broadcast %116 : f32 to vector<4x4xf32>
    %925 = arith.mulf %18, %924 : vector<4x4xf32>
    %926 = arith.addf %923, %925 : vector<4x4xf32>
    %927 = vector.broadcast %117 : f32 to vector<4x4xf32>
    %928 = arith.mulf %28, %927 : vector<4x4xf32>
    %929 = arith.addf %926, %928 : vector<4x4xf32>
    %930 = vector.broadcast %118 : f32 to vector<4x4xf32>
    %931 = arith.mulf %38, %930 : vector<4x4xf32>
    %932 = arith.addf %929, %931 : vector<4x4xf32>
    %933 = vector.broadcast %119 : f32 to vector<4x4xf32>
    %934 = arith.mulf %48, %933 : vector<4x4xf32>
    %935 = arith.addf %932, %934 : vector<4x4xf32>
    %936 = math.tanh %935 : vector<4x4xf32>
    %937 = vector.broadcast %203 : f32 to vector<4x4xf32>
    %938 = arith.mulf %936, %937 : vector<4x4xf32>
    %939 = arith.addf %919, %938 : vector<4x4xf32>
    %940 = vector.broadcast %172 : f32 to vector<4x4xf32>
    %941 = arith.mulf %860, %940 : vector<4x4xf32>
    %942 = vector.broadcast %188 : f32 to vector<4x4xf32>
    %943 = arith.addf %941, %942 : vector<4x4xf32>
    %944 = vector.broadcast %120 : f32 to vector<4x4xf32>
    %945 = arith.mulf %18, %944 : vector<4x4xf32>
    %946 = arith.addf %943, %945 : vector<4x4xf32>
    %947 = vector.broadcast %121 : f32 to vector<4x4xf32>
    %948 = arith.mulf %28, %947 : vector<4x4xf32>
    %949 = arith.addf %946, %948 : vector<4x4xf32>
    %950 = vector.broadcast %122 : f32 to vector<4x4xf32>
    %951 = arith.mulf %38, %950 : vector<4x4xf32>
    %952 = arith.addf %949, %951 : vector<4x4xf32>
    %953 = vector.broadcast %123 : f32 to vector<4x4xf32>
    %954 = arith.mulf %48, %953 : vector<4x4xf32>
    %955 = arith.addf %952, %954 : vector<4x4xf32>
    %956 = math.tanh %955 : vector<4x4xf32>
    %957 = vector.broadcast %204 : f32 to vector<4x4xf32>
    %958 = arith.mulf %956, %957 : vector<4x4xf32>
    %959 = arith.addf %939, %958 : vector<4x4xf32>
    %960 = vector.broadcast %173 : f32 to vector<4x4xf32>
    %961 = arith.mulf %860, %960 : vector<4x4xf32>
    %962 = vector.broadcast %189 : f32 to vector<4x4xf32>
    %963 = arith.addf %961, %962 : vector<4x4xf32>
    %964 = vector.broadcast %124 : f32 to vector<4x4xf32>
    %965 = arith.mulf %18, %964 : vector<4x4xf32>
    %966 = arith.addf %963, %965 : vector<4x4xf32>
    %967 = vector.broadcast %125 : f32 to vector<4x4xf32>
    %968 = arith.mulf %28, %967 : vector<4x4xf32>
    %969 = arith.addf %966, %968 : vector<4x4xf32>
    %970 = vector.broadcast %126 : f32 to vector<4x4xf32>
    %971 = arith.mulf %38, %970 : vector<4x4xf32>
    %972 = arith.addf %969, %971 : vector<4x4xf32>
    %973 = vector.broadcast %127 : f32 to vector<4x4xf32>
    %974 = arith.mulf %48, %973 : vector<4x4xf32>
    %975 = arith.addf %972, %974 : vector<4x4xf32>
    %976 = math.tanh %975 : vector<4x4xf32>
    %977 = vector.broadcast %205 : f32 to vector<4x4xf32>
    %978 = arith.mulf %976, %977 : vector<4x4xf32>
    %979 = arith.addf %959, %978 : vector<4x4xf32>
    %980 = vector.broadcast %174 : f32 to vector<4x4xf32>
    %981 = arith.mulf %860, %980 : vector<4x4xf32>
    %982 = vector.broadcast %190 : f32 to vector<4x4xf32>
    %983 = arith.addf %981, %982 : vector<4x4xf32>
    %984 = vector.broadcast %128 : f32 to vector<4x4xf32>
    %985 = arith.mulf %18, %984 : vector<4x4xf32>
    %986 = arith.addf %983, %985 : vector<4x4xf32>
    %987 = vector.broadcast %129 : f32 to vector<4x4xf32>
    %988 = arith.mulf %28, %987 : vector<4x4xf32>
    %989 = arith.addf %986, %988 : vector<4x4xf32>
    %990 = vector.broadcast %130 : f32 to vector<4x4xf32>
    %991 = arith.mulf %38, %990 : vector<4x4xf32>
    %992 = arith.addf %989, %991 : vector<4x4xf32>
    %993 = vector.broadcast %131 : f32 to vector<4x4xf32>
    %994 = arith.mulf %48, %993 : vector<4x4xf32>
    %995 = arith.addf %992, %994 : vector<4x4xf32>
    %996 = math.tanh %995 : vector<4x4xf32>
    %997 = vector.broadcast %206 : f32 to vector<4x4xf32>
    %998 = arith.mulf %996, %997 : vector<4x4xf32>
    %999 = arith.addf %979, %998 : vector<4x4xf32>
    %1000 = vector.broadcast %175 : f32 to vector<4x4xf32>
    %1001 = arith.mulf %860, %1000 : vector<4x4xf32>
    %1002 = vector.broadcast %191 : f32 to vector<4x4xf32>
    %1003 = arith.addf %1001, %1002 : vector<4x4xf32>
    %1004 = vector.broadcast %132 : f32 to vector<4x4xf32>
    %1005 = arith.mulf %18, %1004 : vector<4x4xf32>
    %1006 = arith.addf %1003, %1005 : vector<4x4xf32>
    %1007 = vector.broadcast %133 : f32 to vector<4x4xf32>
    %1008 = arith.mulf %28, %1007 : vector<4x4xf32>
    %1009 = arith.addf %1006, %1008 : vector<4x4xf32>
    %1010 = vector.broadcast %134 : f32 to vector<4x4xf32>
    %1011 = arith.mulf %38, %1010 : vector<4x4xf32>
    %1012 = arith.addf %1009, %1011 : vector<4x4xf32>
    %1013 = vector.broadcast %135 : f32 to vector<4x4xf32>
    %1014 = arith.mulf %48, %1013 : vector<4x4xf32>
    %1015 = arith.addf %1012, %1014 : vector<4x4xf32>
    %1016 = math.tanh %1015 : vector<4x4xf32>
    %1017 = vector.broadcast %207 : f32 to vector<4x4xf32>
    %1018 = arith.mulf %1016, %1017 : vector<4x4xf32>
    %1019 = arith.addf %999, %1018 : vector<4x4xf32>
    %1020 = vector.broadcast %176 : f32 to vector<4x4xf32>
    %1021 = arith.mulf %860, %1020 : vector<4x4xf32>
    %1022 = vector.broadcast %192 : f32 to vector<4x4xf32>
    %1023 = arith.addf %1021, %1022 : vector<4x4xf32>
    %1024 = vector.broadcast %136 : f32 to vector<4x4xf32>
    %1025 = arith.mulf %18, %1024 : vector<4x4xf32>
    %1026 = arith.addf %1023, %1025 : vector<4x4xf32>
    %1027 = vector.broadcast %137 : f32 to vector<4x4xf32>
    %1028 = arith.mulf %28, %1027 : vector<4x4xf32>
    %1029 = arith.addf %1026, %1028 : vector<4x4xf32>
    %1030 = vector.broadcast %138 : f32 to vector<4x4xf32>
    %1031 = arith.mulf %38, %1030 : vector<4x4xf32>
    %1032 = arith.addf %1029, %1031 : vector<4x4xf32>
    %1033 = vector.broadcast %139 : f32 to vector<4x4xf32>
    %1034 = arith.mulf %48, %1033 : vector<4x4xf32>
    %1035 = arith.addf %1032, %1034 : vector<4x4xf32>
    %1036 = math.tanh %1035 : vector<4x4xf32>
    %1037 = vector.broadcast %208 : f32 to vector<4x4xf32>
    %1038 = arith.mulf %1036, %1037 : vector<4x4xf32>
    %1039 = arith.addf %1019, %1038 : vector<4x4xf32>
    %1040 = vector.broadcast %177 : f32 to vector<4x4xf32>
    %1041 = arith.mulf %860, %1040 : vector<4x4xf32>
    %1042 = vector.broadcast %193 : f32 to vector<4x4xf32>
    %1043 = arith.addf %1041, %1042 : vector<4x4xf32>
    %1044 = vector.broadcast %140 : f32 to vector<4x4xf32>
    %1045 = arith.mulf %18, %1044 : vector<4x4xf32>
    %1046 = arith.addf %1043, %1045 : vector<4x4xf32>
    %1047 = vector.broadcast %141 : f32 to vector<4x4xf32>
    %1048 = arith.mulf %28, %1047 : vector<4x4xf32>
    %1049 = arith.addf %1046, %1048 : vector<4x4xf32>
    %1050 = vector.broadcast %142 : f32 to vector<4x4xf32>
    %1051 = arith.mulf %38, %1050 : vector<4x4xf32>
    %1052 = arith.addf %1049, %1051 : vector<4x4xf32>
    %1053 = vector.broadcast %143 : f32 to vector<4x4xf32>
    %1054 = arith.mulf %48, %1053 : vector<4x4xf32>
    %1055 = arith.addf %1052, %1054 : vector<4x4xf32>
    %1056 = math.tanh %1055 : vector<4x4xf32>
    %1057 = vector.broadcast %209 : f32 to vector<4x4xf32>
    %1058 = arith.mulf %1056, %1057 : vector<4x4xf32>
    %1059 = arith.addf %1039, %1058 : vector<4x4xf32>
    %1060 = vector.broadcast %178 : f32 to vector<4x4xf32>
    %1061 = arith.mulf %860, %1060 : vector<4x4xf32>
    %1062 = vector.broadcast %194 : f32 to vector<4x4xf32>
    %1063 = arith.addf %1061, %1062 : vector<4x4xf32>
    %1064 = vector.broadcast %144 : f32 to vector<4x4xf32>
    %1065 = arith.mulf %18, %1064 : vector<4x4xf32>
    %1066 = arith.addf %1063, %1065 : vector<4x4xf32>
    %1067 = vector.broadcast %145 : f32 to vector<4x4xf32>
    %1068 = arith.mulf %28, %1067 : vector<4x4xf32>
    %1069 = arith.addf %1066, %1068 : vector<4x4xf32>
    %1070 = vector.broadcast %146 : f32 to vector<4x4xf32>
    %1071 = arith.mulf %38, %1070 : vector<4x4xf32>
    %1072 = arith.addf %1069, %1071 : vector<4x4xf32>
    %1073 = vector.broadcast %147 : f32 to vector<4x4xf32>
    %1074 = arith.mulf %48, %1073 : vector<4x4xf32>
    %1075 = arith.addf %1072, %1074 : vector<4x4xf32>
    %1076 = math.tanh %1075 : vector<4x4xf32>
    %1077 = vector.broadcast %210 : f32 to vector<4x4xf32>
    %1078 = arith.mulf %1076, %1077 : vector<4x4xf32>
    %1079 = arith.addf %1059, %1078 : vector<4x4xf32>
    %1080 = vector.broadcast %179 : f32 to vector<4x4xf32>
    %1081 = arith.mulf %860, %1080 : vector<4x4xf32>
    %1082 = vector.broadcast %195 : f32 to vector<4x4xf32>
    %1083 = arith.addf %1081, %1082 : vector<4x4xf32>
    %1084 = vector.broadcast %148 : f32 to vector<4x4xf32>
    %1085 = arith.mulf %18, %1084 : vector<4x4xf32>
    %1086 = arith.addf %1083, %1085 : vector<4x4xf32>
    %1087 = vector.broadcast %149 : f32 to vector<4x4xf32>
    %1088 = arith.mulf %28, %1087 : vector<4x4xf32>
    %1089 = arith.addf %1086, %1088 : vector<4x4xf32>
    %1090 = vector.broadcast %150 : f32 to vector<4x4xf32>
    %1091 = arith.mulf %38, %1090 : vector<4x4xf32>
    %1092 = arith.addf %1089, %1091 : vector<4x4xf32>
    %1093 = vector.broadcast %151 : f32 to vector<4x4xf32>
    %1094 = arith.mulf %48, %1093 : vector<4x4xf32>
    %1095 = arith.addf %1092, %1094 : vector<4x4xf32>
    %1096 = math.tanh %1095 : vector<4x4xf32>
    %1097 = vector.broadcast %211 : f32 to vector<4x4xf32>
    %1098 = arith.mulf %1096, %1097 : vector<4x4xf32>
    %1099 = arith.addf %1079, %1098 : vector<4x4xf32>
    %1100 = vector.broadcast %180 : f32 to vector<4x4xf32>
    %1101 = arith.mulf %860, %1100 : vector<4x4xf32>
    %1102 = vector.broadcast %196 : f32 to vector<4x4xf32>
    %1103 = arith.addf %1101, %1102 : vector<4x4xf32>
    %1104 = vector.broadcast %152 : f32 to vector<4x4xf32>
    %1105 = arith.mulf %18, %1104 : vector<4x4xf32>
    %1106 = arith.addf %1103, %1105 : vector<4x4xf32>
    %1107 = vector.broadcast %153 : f32 to vector<4x4xf32>
    %1108 = arith.mulf %28, %1107 : vector<4x4xf32>
    %1109 = arith.addf %1106, %1108 : vector<4x4xf32>
    %1110 = vector.broadcast %154 : f32 to vector<4x4xf32>
    %1111 = arith.mulf %38, %1110 : vector<4x4xf32>
    %1112 = arith.addf %1109, %1111 : vector<4x4xf32>
    %1113 = vector.broadcast %155 : f32 to vector<4x4xf32>
    %1114 = arith.mulf %48, %1113 : vector<4x4xf32>
    %1115 = arith.addf %1112, %1114 : vector<4x4xf32>
    %1116 = math.tanh %1115 : vector<4x4xf32>
    %1117 = vector.broadcast %212 : f32 to vector<4x4xf32>
    %1118 = arith.mulf %1116, %1117 : vector<4x4xf32>
    %1119 = arith.addf %1099, %1118 : vector<4x4xf32>
    %1120 = vector.broadcast %181 : f32 to vector<4x4xf32>
    %1121 = arith.mulf %860, %1120 : vector<4x4xf32>
    %1122 = vector.broadcast %197 : f32 to vector<4x4xf32>
    %1123 = arith.addf %1121, %1122 : vector<4x4xf32>
    %1124 = vector.broadcast %156 : f32 to vector<4x4xf32>
    %1125 = arith.mulf %18, %1124 : vector<4x4xf32>
    %1126 = arith.addf %1123, %1125 : vector<4x4xf32>
    %1127 = vector.broadcast %157 : f32 to vector<4x4xf32>
    %1128 = arith.mulf %28, %1127 : vector<4x4xf32>
    %1129 = arith.addf %1126, %1128 : vector<4x4xf32>
    %1130 = vector.broadcast %158 : f32 to vector<4x4xf32>
    %1131 = arith.mulf %38, %1130 : vector<4x4xf32>
    %1132 = arith.addf %1129, %1131 : vector<4x4xf32>
    %1133 = vector.broadcast %159 : f32 to vector<4x4xf32>
    %1134 = arith.mulf %48, %1133 : vector<4x4xf32>
    %1135 = arith.addf %1132, %1134 : vector<4x4xf32>
    %1136 = math.tanh %1135 : vector<4x4xf32>
    %1137 = vector.broadcast %213 : f32 to vector<4x4xf32>
    %1138 = arith.mulf %1136, %1137 : vector<4x4xf32>
    %1139 = arith.addf %1119, %1138 : vector<4x4xf32>
    %1140 = vector.broadcast %182 : f32 to vector<4x4xf32>
    %1141 = arith.mulf %860, %1140 : vector<4x4xf32>
    %1142 = vector.broadcast %198 : f32 to vector<4x4xf32>
    %1143 = arith.addf %1141, %1142 : vector<4x4xf32>
    %1144 = vector.broadcast %160 : f32 to vector<4x4xf32>
    %1145 = arith.mulf %18, %1144 : vector<4x4xf32>
    %1146 = arith.addf %1143, %1145 : vector<4x4xf32>
    %1147 = vector.broadcast %161 : f32 to vector<4x4xf32>
    %1148 = arith.mulf %28, %1147 : vector<4x4xf32>
    %1149 = arith.addf %1146, %1148 : vector<4x4xf32>
    %1150 = vector.broadcast %162 : f32 to vector<4x4xf32>
    %1151 = arith.mulf %38, %1150 : vector<4x4xf32>
    %1152 = arith.addf %1149, %1151 : vector<4x4xf32>
    %1153 = vector.broadcast %163 : f32 to vector<4x4xf32>
    %1154 = arith.mulf %48, %1153 : vector<4x4xf32>
    %1155 = arith.addf %1152, %1154 : vector<4x4xf32>
    %1156 = math.tanh %1155 : vector<4x4xf32>
    %1157 = vector.broadcast %214 : f32 to vector<4x4xf32>
    %1158 = arith.mulf %1156, %1157 : vector<4x4xf32>
    %1159 = arith.addf %1139, %1158 : vector<4x4xf32>
    %1160 = vector.broadcast %183 : f32 to vector<4x4xf32>
    %1161 = arith.mulf %860, %1160 : vector<4x4xf32>
    %1162 = vector.broadcast %199 : f32 to vector<4x4xf32>
    %1163 = arith.addf %1161, %1162 : vector<4x4xf32>
    %1164 = vector.broadcast %164 : f32 to vector<4x4xf32>
    %1165 = arith.mulf %18, %1164 : vector<4x4xf32>
    %1166 = arith.addf %1163, %1165 : vector<4x4xf32>
    %1167 = vector.broadcast %165 : f32 to vector<4x4xf32>
    %1168 = arith.mulf %28, %1167 : vector<4x4xf32>
    %1169 = arith.addf %1166, %1168 : vector<4x4xf32>
    %1170 = vector.broadcast %166 : f32 to vector<4x4xf32>
    %1171 = arith.mulf %38, %1170 : vector<4x4xf32>
    %1172 = arith.addf %1169, %1171 : vector<4x4xf32>
    %1173 = vector.broadcast %167 : f32 to vector<4x4xf32>
    %1174 = arith.mulf %48, %1173 : vector<4x4xf32>
    %1175 = arith.addf %1172, %1174 : vector<4x4xf32>
    %1176 = math.tanh %1175 : vector<4x4xf32>
    %1177 = vector.broadcast %215 : f32 to vector<4x4xf32>
    %1178 = arith.mulf %1176, %1177 : vector<4x4xf32>
    %1179 = arith.addf %1159, %1178 : vector<4x4xf32>
    %1180 = arith.addf %860, %1179 : vector<4x4xf32>
    %1181 = vector.broadcast %216 : f32 to vector<4x4xf32>
    %1182 = arith.addf %1180, %1181 : vector<4x4xf32>
    %1183 = vector.broadcast %168 : f32 to vector<4x4xf32>
    %1184 = arith.mulf %1182, %1183 : vector<4x4xf32>
    %1185 = vector.broadcast %184 : f32 to vector<4x4xf32>
    %1186 = arith.addf %1184, %1185 : vector<4x4xf32>
    %1187 = vector.broadcast %104 : f32 to vector<4x4xf32>
    %1188 = arith.mulf %18, %1187 : vector<4x4xf32>
    %1189 = arith.addf %1186, %1188 : vector<4x4xf32>
    %1190 = vector.broadcast %105 : f32 to vector<4x4xf32>
    %1191 = arith.mulf %28, %1190 : vector<4x4xf32>
    %1192 = arith.addf %1189, %1191 : vector<4x4xf32>
    %1193 = vector.broadcast %106 : f32 to vector<4x4xf32>
    %1194 = arith.mulf %38, %1193 : vector<4x4xf32>
    %1195 = arith.addf %1192, %1194 : vector<4x4xf32>
    %1196 = vector.broadcast %107 : f32 to vector<4x4xf32>
    %1197 = arith.mulf %48, %1196 : vector<4x4xf32>
    %1198 = arith.addf %1195, %1197 : vector<4x4xf32>
    %1199 = math.tanh %1198 : vector<4x4xf32>
    %1200 = vector.broadcast %200 : f32 to vector<4x4xf32>
    %1201 = arith.mulf %1199, %1200 : vector<4x4xf32>
    %1202 = vector.broadcast %169 : f32 to vector<4x4xf32>
    %1203 = arith.mulf %1182, %1202 : vector<4x4xf32>
    %1204 = vector.broadcast %185 : f32 to vector<4x4xf32>
    %1205 = arith.addf %1203, %1204 : vector<4x4xf32>
    %1206 = vector.broadcast %108 : f32 to vector<4x4xf32>
    %1207 = arith.mulf %18, %1206 : vector<4x4xf32>
    %1208 = arith.addf %1205, %1207 : vector<4x4xf32>
    %1209 = vector.broadcast %109 : f32 to vector<4x4xf32>
    %1210 = arith.mulf %28, %1209 : vector<4x4xf32>
    %1211 = arith.addf %1208, %1210 : vector<4x4xf32>
    %1212 = vector.broadcast %110 : f32 to vector<4x4xf32>
    %1213 = arith.mulf %38, %1212 : vector<4x4xf32>
    %1214 = arith.addf %1211, %1213 : vector<4x4xf32>
    %1215 = vector.broadcast %111 : f32 to vector<4x4xf32>
    %1216 = arith.mulf %48, %1215 : vector<4x4xf32>
    %1217 = arith.addf %1214, %1216 : vector<4x4xf32>
    %1218 = math.tanh %1217 : vector<4x4xf32>
    %1219 = vector.broadcast %201 : f32 to vector<4x4xf32>
    %1220 = arith.mulf %1218, %1219 : vector<4x4xf32>
    %1221 = arith.addf %1201, %1220 : vector<4x4xf32>
    %1222 = vector.broadcast %170 : f32 to vector<4x4xf32>
    %1223 = arith.mulf %1182, %1222 : vector<4x4xf32>
    %1224 = vector.broadcast %186 : f32 to vector<4x4xf32>
    %1225 = arith.addf %1223, %1224 : vector<4x4xf32>
    %1226 = vector.broadcast %112 : f32 to vector<4x4xf32>
    %1227 = arith.mulf %18, %1226 : vector<4x4xf32>
    %1228 = arith.addf %1225, %1227 : vector<4x4xf32>
    %1229 = vector.broadcast %113 : f32 to vector<4x4xf32>
    %1230 = arith.mulf %28, %1229 : vector<4x4xf32>
    %1231 = arith.addf %1228, %1230 : vector<4x4xf32>
    %1232 = vector.broadcast %114 : f32 to vector<4x4xf32>
    %1233 = arith.mulf %38, %1232 : vector<4x4xf32>
    %1234 = arith.addf %1231, %1233 : vector<4x4xf32>
    %1235 = vector.broadcast %115 : f32 to vector<4x4xf32>
    %1236 = arith.mulf %48, %1235 : vector<4x4xf32>
    %1237 = arith.addf %1234, %1236 : vector<4x4xf32>
    %1238 = math.tanh %1237 : vector<4x4xf32>
    %1239 = vector.broadcast %202 : f32 to vector<4x4xf32>
    %1240 = arith.mulf %1238, %1239 : vector<4x4xf32>
    %1241 = arith.addf %1221, %1240 : vector<4x4xf32>
    %1242 = vector.broadcast %171 : f32 to vector<4x4xf32>
    %1243 = arith.mulf %1182, %1242 : vector<4x4xf32>
    %1244 = vector.broadcast %187 : f32 to vector<4x4xf32>
    %1245 = arith.addf %1243, %1244 : vector<4x4xf32>
    %1246 = vector.broadcast %116 : f32 to vector<4x4xf32>
    %1247 = arith.mulf %18, %1246 : vector<4x4xf32>
    %1248 = arith.addf %1245, %1247 : vector<4x4xf32>
    %1249 = vector.broadcast %117 : f32 to vector<4x4xf32>
    %1250 = arith.mulf %28, %1249 : vector<4x4xf32>
    %1251 = arith.addf %1248, %1250 : vector<4x4xf32>
    %1252 = vector.broadcast %118 : f32 to vector<4x4xf32>
    %1253 = arith.mulf %38, %1252 : vector<4x4xf32>
    %1254 = arith.addf %1251, %1253 : vector<4x4xf32>
    %1255 = vector.broadcast %119 : f32 to vector<4x4xf32>
    %1256 = arith.mulf %48, %1255 : vector<4x4xf32>
    %1257 = arith.addf %1254, %1256 : vector<4x4xf32>
    %1258 = math.tanh %1257 : vector<4x4xf32>
    %1259 = vector.broadcast %203 : f32 to vector<4x4xf32>
    %1260 = arith.mulf %1258, %1259 : vector<4x4xf32>
    %1261 = arith.addf %1241, %1260 : vector<4x4xf32>
    %1262 = vector.broadcast %172 : f32 to vector<4x4xf32>
    %1263 = arith.mulf %1182, %1262 : vector<4x4xf32>
    %1264 = vector.broadcast %188 : f32 to vector<4x4xf32>
    %1265 = arith.addf %1263, %1264 : vector<4x4xf32>
    %1266 = vector.broadcast %120 : f32 to vector<4x4xf32>
    %1267 = arith.mulf %18, %1266 : vector<4x4xf32>
    %1268 = arith.addf %1265, %1267 : vector<4x4xf32>
    %1269 = vector.broadcast %121 : f32 to vector<4x4xf32>
    %1270 = arith.mulf %28, %1269 : vector<4x4xf32>
    %1271 = arith.addf %1268, %1270 : vector<4x4xf32>
    %1272 = vector.broadcast %122 : f32 to vector<4x4xf32>
    %1273 = arith.mulf %38, %1272 : vector<4x4xf32>
    %1274 = arith.addf %1271, %1273 : vector<4x4xf32>
    %1275 = vector.broadcast %123 : f32 to vector<4x4xf32>
    %1276 = arith.mulf %48, %1275 : vector<4x4xf32>
    %1277 = arith.addf %1274, %1276 : vector<4x4xf32>
    %1278 = math.tanh %1277 : vector<4x4xf32>
    %1279 = vector.broadcast %204 : f32 to vector<4x4xf32>
    %1280 = arith.mulf %1278, %1279 : vector<4x4xf32>
    %1281 = arith.addf %1261, %1280 : vector<4x4xf32>
    %1282 = vector.broadcast %173 : f32 to vector<4x4xf32>
    %1283 = arith.mulf %1182, %1282 : vector<4x4xf32>
    %1284 = vector.broadcast %189 : f32 to vector<4x4xf32>
    %1285 = arith.addf %1283, %1284 : vector<4x4xf32>
    %1286 = vector.broadcast %124 : f32 to vector<4x4xf32>
    %1287 = arith.mulf %18, %1286 : vector<4x4xf32>
    %1288 = arith.addf %1285, %1287 : vector<4x4xf32>
    %1289 = vector.broadcast %125 : f32 to vector<4x4xf32>
    %1290 = arith.mulf %28, %1289 : vector<4x4xf32>
    %1291 = arith.addf %1288, %1290 : vector<4x4xf32>
    %1292 = vector.broadcast %126 : f32 to vector<4x4xf32>
    %1293 = arith.mulf %38, %1292 : vector<4x4xf32>
    %1294 = arith.addf %1291, %1293 : vector<4x4xf32>
    %1295 = vector.broadcast %127 : f32 to vector<4x4xf32>
    %1296 = arith.mulf %48, %1295 : vector<4x4xf32>
    %1297 = arith.addf %1294, %1296 : vector<4x4xf32>
    %1298 = math.tanh %1297 : vector<4x4xf32>
    %1299 = vector.broadcast %205 : f32 to vector<4x4xf32>
    %1300 = arith.mulf %1298, %1299 : vector<4x4xf32>
    %1301 = arith.addf %1281, %1300 : vector<4x4xf32>
    %1302 = vector.broadcast %174 : f32 to vector<4x4xf32>
    %1303 = arith.mulf %1182, %1302 : vector<4x4xf32>
    %1304 = vector.broadcast %190 : f32 to vector<4x4xf32>
    %1305 = arith.addf %1303, %1304 : vector<4x4xf32>
    %1306 = vector.broadcast %128 : f32 to vector<4x4xf32>
    %1307 = arith.mulf %18, %1306 : vector<4x4xf32>
    %1308 = arith.addf %1305, %1307 : vector<4x4xf32>
    %1309 = vector.broadcast %129 : f32 to vector<4x4xf32>
    %1310 = arith.mulf %28, %1309 : vector<4x4xf32>
    %1311 = arith.addf %1308, %1310 : vector<4x4xf32>
    %1312 = vector.broadcast %130 : f32 to vector<4x4xf32>
    %1313 = arith.mulf %38, %1312 : vector<4x4xf32>
    %1314 = arith.addf %1311, %1313 : vector<4x4xf32>
    %1315 = vector.broadcast %131 : f32 to vector<4x4xf32>
    %1316 = arith.mulf %48, %1315 : vector<4x4xf32>
    %1317 = arith.addf %1314, %1316 : vector<4x4xf32>
    %1318 = math.tanh %1317 : vector<4x4xf32>
    %1319 = vector.broadcast %206 : f32 to vector<4x4xf32>
    %1320 = arith.mulf %1318, %1319 : vector<4x4xf32>
    %1321 = arith.addf %1301, %1320 : vector<4x4xf32>
    %1322 = vector.broadcast %175 : f32 to vector<4x4xf32>
    %1323 = arith.mulf %1182, %1322 : vector<4x4xf32>
    %1324 = vector.broadcast %191 : f32 to vector<4x4xf32>
    %1325 = arith.addf %1323, %1324 : vector<4x4xf32>
    %1326 = vector.broadcast %132 : f32 to vector<4x4xf32>
    %1327 = arith.mulf %18, %1326 : vector<4x4xf32>
    %1328 = arith.addf %1325, %1327 : vector<4x4xf32>
    %1329 = vector.broadcast %133 : f32 to vector<4x4xf32>
    %1330 = arith.mulf %28, %1329 : vector<4x4xf32>
    %1331 = arith.addf %1328, %1330 : vector<4x4xf32>
    %1332 = vector.broadcast %134 : f32 to vector<4x4xf32>
    %1333 = arith.mulf %38, %1332 : vector<4x4xf32>
    %1334 = arith.addf %1331, %1333 : vector<4x4xf32>
    %1335 = vector.broadcast %135 : f32 to vector<4x4xf32>
    %1336 = arith.mulf %48, %1335 : vector<4x4xf32>
    %1337 = arith.addf %1334, %1336 : vector<4x4xf32>
    %1338 = math.tanh %1337 : vector<4x4xf32>
    %1339 = vector.broadcast %207 : f32 to vector<4x4xf32>
    %1340 = arith.mulf %1338, %1339 : vector<4x4xf32>
    %1341 = arith.addf %1321, %1340 : vector<4x4xf32>
    %1342 = vector.broadcast %176 : f32 to vector<4x4xf32>
    %1343 = arith.mulf %1182, %1342 : vector<4x4xf32>
    %1344 = vector.broadcast %192 : f32 to vector<4x4xf32>
    %1345 = arith.addf %1343, %1344 : vector<4x4xf32>
    %1346 = vector.broadcast %136 : f32 to vector<4x4xf32>
    %1347 = arith.mulf %18, %1346 : vector<4x4xf32>
    %1348 = arith.addf %1345, %1347 : vector<4x4xf32>
    %1349 = vector.broadcast %137 : f32 to vector<4x4xf32>
    %1350 = arith.mulf %28, %1349 : vector<4x4xf32>
    %1351 = arith.addf %1348, %1350 : vector<4x4xf32>
    %1352 = vector.broadcast %138 : f32 to vector<4x4xf32>
    %1353 = arith.mulf %38, %1352 : vector<4x4xf32>
    %1354 = arith.addf %1351, %1353 : vector<4x4xf32>
    %1355 = vector.broadcast %139 : f32 to vector<4x4xf32>
    %1356 = arith.mulf %48, %1355 : vector<4x4xf32>
    %1357 = arith.addf %1354, %1356 : vector<4x4xf32>
    %1358 = math.tanh %1357 : vector<4x4xf32>
    %1359 = vector.broadcast %208 : f32 to vector<4x4xf32>
    %1360 = arith.mulf %1358, %1359 : vector<4x4xf32>
    %1361 = arith.addf %1341, %1360 : vector<4x4xf32>
    %1362 = vector.broadcast %177 : f32 to vector<4x4xf32>
    %1363 = arith.mulf %1182, %1362 : vector<4x4xf32>
    %1364 = vector.broadcast %193 : f32 to vector<4x4xf32>
    %1365 = arith.addf %1363, %1364 : vector<4x4xf32>
    %1366 = vector.broadcast %140 : f32 to vector<4x4xf32>
    %1367 = arith.mulf %18, %1366 : vector<4x4xf32>
    %1368 = arith.addf %1365, %1367 : vector<4x4xf32>
    %1369 = vector.broadcast %141 : f32 to vector<4x4xf32>
    %1370 = arith.mulf %28, %1369 : vector<4x4xf32>
    %1371 = arith.addf %1368, %1370 : vector<4x4xf32>
    %1372 = vector.broadcast %142 : f32 to vector<4x4xf32>
    %1373 = arith.mulf %38, %1372 : vector<4x4xf32>
    %1374 = arith.addf %1371, %1373 : vector<4x4xf32>
    %1375 = vector.broadcast %143 : f32 to vector<4x4xf32>
    %1376 = arith.mulf %48, %1375 : vector<4x4xf32>
    %1377 = arith.addf %1374, %1376 : vector<4x4xf32>
    %1378 = math.tanh %1377 : vector<4x4xf32>
    %1379 = vector.broadcast %209 : f32 to vector<4x4xf32>
    %1380 = arith.mulf %1378, %1379 : vector<4x4xf32>
    %1381 = arith.addf %1361, %1380 : vector<4x4xf32>
    %1382 = vector.broadcast %178 : f32 to vector<4x4xf32>
    %1383 = arith.mulf %1182, %1382 : vector<4x4xf32>
    %1384 = vector.broadcast %194 : f32 to vector<4x4xf32>
    %1385 = arith.addf %1383, %1384 : vector<4x4xf32>
    %1386 = vector.broadcast %144 : f32 to vector<4x4xf32>
    %1387 = arith.mulf %18, %1386 : vector<4x4xf32>
    %1388 = arith.addf %1385, %1387 : vector<4x4xf32>
    %1389 = vector.broadcast %145 : f32 to vector<4x4xf32>
    %1390 = arith.mulf %28, %1389 : vector<4x4xf32>
    %1391 = arith.addf %1388, %1390 : vector<4x4xf32>
    %1392 = vector.broadcast %146 : f32 to vector<4x4xf32>
    %1393 = arith.mulf %38, %1392 : vector<4x4xf32>
    %1394 = arith.addf %1391, %1393 : vector<4x4xf32>
    %1395 = vector.broadcast %147 : f32 to vector<4x4xf32>
    %1396 = arith.mulf %48, %1395 : vector<4x4xf32>
    %1397 = arith.addf %1394, %1396 : vector<4x4xf32>
    %1398 = math.tanh %1397 : vector<4x4xf32>
    %1399 = vector.broadcast %210 : f32 to vector<4x4xf32>
    %1400 = arith.mulf %1398, %1399 : vector<4x4xf32>
    %1401 = arith.addf %1381, %1400 : vector<4x4xf32>
    %1402 = vector.broadcast %179 : f32 to vector<4x4xf32>
    %1403 = arith.mulf %1182, %1402 : vector<4x4xf32>
    %1404 = vector.broadcast %195 : f32 to vector<4x4xf32>
    %1405 = arith.addf %1403, %1404 : vector<4x4xf32>
    %1406 = vector.broadcast %148 : f32 to vector<4x4xf32>
    %1407 = arith.mulf %18, %1406 : vector<4x4xf32>
    %1408 = arith.addf %1405, %1407 : vector<4x4xf32>
    %1409 = vector.broadcast %149 : f32 to vector<4x4xf32>
    %1410 = arith.mulf %28, %1409 : vector<4x4xf32>
    %1411 = arith.addf %1408, %1410 : vector<4x4xf32>
    %1412 = vector.broadcast %150 : f32 to vector<4x4xf32>
    %1413 = arith.mulf %38, %1412 : vector<4x4xf32>
    %1414 = arith.addf %1411, %1413 : vector<4x4xf32>
    %1415 = vector.broadcast %151 : f32 to vector<4x4xf32>
    %1416 = arith.mulf %48, %1415 : vector<4x4xf32>
    %1417 = arith.addf %1414, %1416 : vector<4x4xf32>
    %1418 = math.tanh %1417 : vector<4x4xf32>
    %1419 = vector.broadcast %211 : f32 to vector<4x4xf32>
    %1420 = arith.mulf %1418, %1419 : vector<4x4xf32>
    %1421 = arith.addf %1401, %1420 : vector<4x4xf32>
    %1422 = vector.broadcast %180 : f32 to vector<4x4xf32>
    %1423 = arith.mulf %1182, %1422 : vector<4x4xf32>
    %1424 = vector.broadcast %196 : f32 to vector<4x4xf32>
    %1425 = arith.addf %1423, %1424 : vector<4x4xf32>
    %1426 = vector.broadcast %152 : f32 to vector<4x4xf32>
    %1427 = arith.mulf %18, %1426 : vector<4x4xf32>
    %1428 = arith.addf %1425, %1427 : vector<4x4xf32>
    %1429 = vector.broadcast %153 : f32 to vector<4x4xf32>
    %1430 = arith.mulf %28, %1429 : vector<4x4xf32>
    %1431 = arith.addf %1428, %1430 : vector<4x4xf32>
    %1432 = vector.broadcast %154 : f32 to vector<4x4xf32>
    %1433 = arith.mulf %38, %1432 : vector<4x4xf32>
    %1434 = arith.addf %1431, %1433 : vector<4x4xf32>
    %1435 = vector.broadcast %155 : f32 to vector<4x4xf32>
    %1436 = arith.mulf %48, %1435 : vector<4x4xf32>
    %1437 = arith.addf %1434, %1436 : vector<4x4xf32>
    %1438 = math.tanh %1437 : vector<4x4xf32>
    %1439 = vector.broadcast %212 : f32 to vector<4x4xf32>
    %1440 = arith.mulf %1438, %1439 : vector<4x4xf32>
    %1441 = arith.addf %1421, %1440 : vector<4x4xf32>
    %1442 = vector.broadcast %181 : f32 to vector<4x4xf32>
    %1443 = arith.mulf %1182, %1442 : vector<4x4xf32>
    %1444 = vector.broadcast %197 : f32 to vector<4x4xf32>
    %1445 = arith.addf %1443, %1444 : vector<4x4xf32>
    %1446 = vector.broadcast %156 : f32 to vector<4x4xf32>
    %1447 = arith.mulf %18, %1446 : vector<4x4xf32>
    %1448 = arith.addf %1445, %1447 : vector<4x4xf32>
    %1449 = vector.broadcast %157 : f32 to vector<4x4xf32>
    %1450 = arith.mulf %28, %1449 : vector<4x4xf32>
    %1451 = arith.addf %1448, %1450 : vector<4x4xf32>
    %1452 = vector.broadcast %158 : f32 to vector<4x4xf32>
    %1453 = arith.mulf %38, %1452 : vector<4x4xf32>
    %1454 = arith.addf %1451, %1453 : vector<4x4xf32>
    %1455 = vector.broadcast %159 : f32 to vector<4x4xf32>
    %1456 = arith.mulf %48, %1455 : vector<4x4xf32>
    %1457 = arith.addf %1454, %1456 : vector<4x4xf32>
    %1458 = math.tanh %1457 : vector<4x4xf32>
    %1459 = vector.broadcast %213 : f32 to vector<4x4xf32>
    %1460 = arith.mulf %1458, %1459 : vector<4x4xf32>
    %1461 = arith.addf %1441, %1460 : vector<4x4xf32>
    %1462 = vector.broadcast %182 : f32 to vector<4x4xf32>
    %1463 = arith.mulf %1182, %1462 : vector<4x4xf32>
    %1464 = vector.broadcast %198 : f32 to vector<4x4xf32>
    %1465 = arith.addf %1463, %1464 : vector<4x4xf32>
    %1466 = vector.broadcast %160 : f32 to vector<4x4xf32>
    %1467 = arith.mulf %18, %1466 : vector<4x4xf32>
    %1468 = arith.addf %1465, %1467 : vector<4x4xf32>
    %1469 = vector.broadcast %161 : f32 to vector<4x4xf32>
    %1470 = arith.mulf %28, %1469 : vector<4x4xf32>
    %1471 = arith.addf %1468, %1470 : vector<4x4xf32>
    %1472 = vector.broadcast %162 : f32 to vector<4x4xf32>
    %1473 = arith.mulf %38, %1472 : vector<4x4xf32>
    %1474 = arith.addf %1471, %1473 : vector<4x4xf32>
    %1475 = vector.broadcast %163 : f32 to vector<4x4xf32>
    %1476 = arith.mulf %48, %1475 : vector<4x4xf32>
    %1477 = arith.addf %1474, %1476 : vector<4x4xf32>
    %1478 = math.tanh %1477 : vector<4x4xf32>
    %1479 = vector.broadcast %214 : f32 to vector<4x4xf32>
    %1480 = arith.mulf %1478, %1479 : vector<4x4xf32>
    %1481 = arith.addf %1461, %1480 : vector<4x4xf32>
    %1482 = vector.broadcast %183 : f32 to vector<4x4xf32>
    %1483 = arith.mulf %1182, %1482 : vector<4x4xf32>
    %1484 = vector.broadcast %199 : f32 to vector<4x4xf32>
    %1485 = arith.addf %1483, %1484 : vector<4x4xf32>
    %1486 = vector.broadcast %164 : f32 to vector<4x4xf32>
    %1487 = arith.mulf %18, %1486 : vector<4x4xf32>
    %1488 = arith.addf %1485, %1487 : vector<4x4xf32>
    %1489 = vector.broadcast %165 : f32 to vector<4x4xf32>
    %1490 = arith.mulf %28, %1489 : vector<4x4xf32>
    %1491 = arith.addf %1488, %1490 : vector<4x4xf32>
    %1492 = vector.broadcast %166 : f32 to vector<4x4xf32>
    %1493 = arith.mulf %38, %1492 : vector<4x4xf32>
    %1494 = arith.addf %1491, %1493 : vector<4x4xf32>
    %1495 = vector.broadcast %167 : f32 to vector<4x4xf32>
    %1496 = arith.mulf %48, %1495 : vector<4x4xf32>
    %1497 = arith.addf %1494, %1496 : vector<4x4xf32>
    %1498 = math.tanh %1497 : vector<4x4xf32>
    %1499 = vector.broadcast %215 : f32 to vector<4x4xf32>
    %1500 = arith.mulf %1498, %1499 : vector<4x4xf32>
    %1501 = arith.addf %1481, %1500 : vector<4x4xf32>
    %1502 = arith.addf %1182, %1501 : vector<4x4xf32>
    %1503 = vector.broadcast %216 : f32 to vector<4x4xf32>
    %1504 = arith.addf %1502, %1503 : vector<4x4xf32>
    %cst_215 = arith.constant 0.000000e+00 : f32
    %cst_216 = arith.constant 3.000000e+00 : f32
    %1505 = vector.broadcast %cst_215 : f32 to vector<4x4xf32>
    %1506 = arith.maximumf %1505, %1504 : vector<4x4xf32>
    %1507 = vector.broadcast %cst_216 : f32 to vector<4x4xf32>
    %1508 = arith.minimumf %1507, %1506 : vector<4x4xf32>
    %c0_217 = arith.constant 0 : index
    %c0_218 = arith.constant 0 : index
    %c0_219 = arith.constant 0 : index
    %1509 = vector.load %arg8[%c0_217, %c0_218, %c0_219] : memref<1x4x4xf32, #tpu.memory_space<vmem>>, vector<1x4x4xf32>
    %1510 = vector.shape_cast %1509 : vector<1x4x4xf32> to vector<4x4xf32>
    %1511 = vector.shape_cast %1508 : vector<4x4xf32> to vector<1x4x4xf32>
    tpu.vector_store %arg8[%c0_217, %c0_218, %c0_219], %1511 {strides = array<i32>} : memref<1x4x4xf32, #tpu.memory_space<vmem>>, vector<1x4x4xf32>,
    return
  }
  func.func @transform_0(%arg0: i32, %arg1: i32) -> (i32, i32, i32, i32) {
    %c0_i32 = arith.constant 0 : i32
    %c0_i32_0 = arith.constant 0 : i32
    %c0_i32_1 = arith.constant 0 : i32
    return %arg0, %arg1, %c0_i32, %c0_i32_0 : i32, i32, i32, i32
  }
  func.func @transform_1(%arg0: i32, %arg1: i32) -> (i32, i32, i32, i32) {
    %c2_i32 = arith.constant 2 : i32
    %0 = arith.addi %arg0, %c2_i32 : i32
    %c0_i32 = arith.constant 0 : i32
    %c0_i32_0 = arith.constant 0 : i32
    %c0_i32_1 = arith.constant 0 : i32
    return %0, %arg1, %c0_i32, %c0_i32_0 : i32, i32, i32, i32
  }
  func.func @transform_2(%arg0: i32, %arg1: i32) -> (i32, i32) {
    %c0_i32 = arith.constant 0 : i32
    %c0_i32_0 = arith.constant 0 : i32
    %c0_i32_1 = arith.constant 0 : i32
    return %c0_i32, %c0_i32_0 : i32, i32
  }
  func.func @transform_3(%arg0: i32, %arg1: i32) -> i32 {
    %c0_i32 = arith.constant 0 : i32
    %c0_i32_0 = arith.constant 0 : i32
    return %c0_i32 : i32
  }
  func.func @transform_4(%arg0: i32, %arg1: i32) -> i32 {
    %c0_i32 = arith.constant 0 : i32
    %c0_i32_0 = arith.constant 0 : i32
    return %c0_i32 : i32
  }
  func.func @transform_5(%arg0: i32, %arg1: i32) -> i32 {
    %c0_i32 = arith.constant 0 : i32
    %c0_i32_0 = arith.constant 0 : i32
    return %c0_i32 : i32
  }
  func.func @transform_6(%arg0: i32, %arg1: i32) -> (i32, i32, i32) {
    %c0_i32 = arith.constant 0 : i32
    %c0_i32_0 = arith.constant 0 : i32
    return %arg0, %arg1, %c0_i32 : i32, i32, i32
  }
}

</mosaic_0001>

<llo_original>
// kernel: _forward_impl.2
$region0: #{_forward_impl.2}
  #allocation0 [shape = 'u32[]', space=smem, size = 0x4, offset = 0x4, fixed_abs, tag = 'smem constant byte address 0x4 - core index']
  #allocation1 [shape = 'u32[144,128]{1,0:T(1,128)}', space=vmem, size = 0x12000, scoped, tag = 'internal scratch']
  %s0 = inlined_call_operand.vmem [shape: bf16[64,768], index: 0, kind: input, shape index: {}]
  %s1 = inlined_call_operand.vmem [shape: bf16[768,512], index: 1, kind: input, shape index: {}]
  %s2 = inlined_call_operand.vmem [shape: f32[1,512], index: 2, kind: input, shape index: {}]
  %s3 = inlined_call_operand.vmem [shape: bf16[512,192], index: 3, kind: input, shape index: {}]
  %s4 = inlined_call_operand.vmem [shape: f32[1,192], index: 4, kind: input, shape index: {}]
  %s5 = inlined_call_operand.vmem [shape: bf16[192,64], index: 5, kind: input, shape index: {}]
  %s6 = inlined_call_operand.vmem [shape: f32[1,64], index: 6, kind: input, shape index: {}]
  %s7 = inlined_call_operand.vmem [shape: bf16[64,64], index: 7, kind: output, shape index: {}]
  %s8 = sld [smem:[#allocation0]]
  $region61: #{_forward_impl.2} parent=0
    _
  %s10 = ssub.s32 1, %s8
  %s11 = scalar_select 0, %s10, %s8
  loop: start=0, step=1, limit=4
  $region2: #{_forward_impl.2} parent=0 // loop_pre_header
    _
  $region3: #{_forward_impl.2} parent=0 // loop_header
    %s13 = sphi 0, %s17
    %p14 = scmp.ge.s32.totalorder %s13, 4
    %s23 = sphi 0, %s25
    %s26 = sphi 0, %s23
    %s27 = sphi 0, %s26
    %s43 = sphi 0, %s27
    %s47 = sphi 0, %s47
    %s49 = sphi 0, %s47
    %s50 = sphi 0, %s49
    %s64 = sphi 0, %s50
    %s68 = sphi 0, %s68
    %s70 = sphi 0, %s68
    %s71 = sphi 0, %s70
    %s85 = sphi 0, %s71
    %s89 = sphi 0, %s89
    %s91 = sphi 0, %s89
    %s92 = sphi 0, %s91
    %s106 = sphi 0, %s92
    %s110 = sphi 0, %s110
    %s112 = sphi 0, %s110
    %s113 = sphi 0, %s112
    %s127 = sphi 0, %s113
    %s131 = sphi 0, %s131
    %s133 = sphi 0, %s131
    %s134 = sphi 0, %s133
    %s148 = sphi 0, %s134
    %s152 = sphi 0, %s152
    %s154 = sphi 0, %s152
    %s155 = sphi 0, %s154
    %s169 = sphi 0, %s155
    %s175 = sphi 0, %s177
    %s178 = sphi 0, %s175
    %s179 = sphi 0, %s178
    %s195 = sphi 0, %s179
  $region4: #{_forward_impl.2} parent=0 // loop_header_branch
    %16 = sbr.rel (%p14) target = $region8
  $region5: #{_forward_impl.2} parent=0 // loop_body
    %s18 = ssub.s32 %s13, 1
    %s19 = ssub.s32 %s13, 2
    %s20 = sadd.s32 %s13, 1
    %s21 = ssub.s32 %s13, %s20
    %p22 = scmp.eq.s32.totalorder %s21, 0
    %s24 = sadd.s32 %s23, 1
    %s25 = scalar_select %p22, %s23, %s24
    %p28 = pneg %p22
    %p29 = scmp.eq.s32.totalorder %s13, 1
    %p30 = por %p28, %p29
    %p31 = scmp.ne.s32.totalorder %s23, %s26
    %p32 = scmp.eq.s32.totalorder %s13, 0
    %p33 = por %p31, %p32
    %p34 = scmp.ne.s32.totalorder %s23, %s26
    %p35 = scmp.eq.s32.totalorder %s18, 1
    %p36 = por %p34, %p35
    %p37 = scmp.ne.s32.totalorder %s26, %s27
    %p38 = scmp.eq.s32.totalorder %s18, 0
    %p39 = por %p37, %p38
    %p40 = scmp.ne.s32.totalorder %s26, %s27
    %p41 = scmp.eq.s32.totalorder %s19, 1
    %p42 = por %p40, %p41
    %p44 = scmp.ne.s32.totalorder %s27, %s43
    %p45 = scmp.eq.s32.totalorder %s19, 0
    %p46 = por %p44, %p45
    %s48 = sadd.s32 %s47, 1
    %p51 = scmp.eq.s32.totalorder %s13, 1
    %p52 = scmp.ne.s32.totalorder %s47, %s49
    %p53 = scmp.eq.s32.totalorder %s13, 0
    %p54 = por %p52, %p53
    %p55 = scmp.ne.s32.totalorder %s47, %s49
    %p56 = scmp.eq.s32.totalorder %s18, 1
    %p57 = por %p55, %p56
    %p58 = scmp.ne.s32.totalorder %s49, %s50
    %p59 = scmp.eq.s32.totalorder %s18, 0
    %p60 = por %p58, %p59
    %p61 = scmp.ne.s32.totalorder %s49, %s50
    %p62 = scmp.eq.s32.totalorder %s19, 1
    %p63 = por %p61, %p62
    %p65 = scmp.ne.s32.totalorder %s50, %s64
    %p66 = scmp.eq.s32.totalorder %s19, 0
    %p67 = por %p65, %p66
    %s69 = sadd.s32 %s68, 1
    %p72 = scmp.eq.s32.totalorder %s13, 1
    %p73 = scmp.ne.s32.totalorder %s68, %s70
    %p74 = scmp.eq.s32.totalorder %s13, 0
    %p75 = por %p73, %p74
    %p76 = scmp.ne.s32.totalorder %s68, %s70
    %p77 = scmp.eq.s32.totalorder %s18, 1
    %p78 = por %p76, %p77
    %p79 = scmp.ne.s32.totalorder %s70, %s71
    %p80 = scmp.eq.s32.totalorder %s18, 0
    %p81 = por %p79, %p80
    %p82 = scmp.ne.s32.totalorder %s70, %s71
    %p83 = scmp.eq.s32.totalorder %s19, 1
    %p84 = por %p82, %p83
    %p86 = scmp.ne.s32.totalorder %s71, %s85
    %p87 = scmp.eq.s32.totalorder %s19, 0
    %p88 = por %p86, %p87
    %s90 = sadd.s32 %s89, 1
    %p93 = scmp.eq.s32.totalorder %s13, 1
    %p94 = scmp.ne.s32.totalorder %s89, %s91
    %p95 = scmp.eq.s32.totalorder %s13, 0
    %p96 = por %p94, %p95
    %p97 = scmp.ne.s32.totalorder %s89, %s91
    %p98 = scmp.eq.s32.totalorder %s18, 1
    %p99 = por %p97, %p98
    %p100 = scmp.ne.s32.totalorder %s91, %s92
    %p101 = scmp.eq.s32.totalorder %s18, 0
    %p102 = por %p100, %p101
    %p103 = scmp.ne.s32.totalorder %s91, %s92
    %p104 = scmp.eq.s32.totalorder %s19, 1
    %p105 = por %p103, %p104
    %p107 = scmp.ne.s32.totalorder %s92, %s106
    %p108 = scmp.eq.s32.totalorder %s19, 0
    %p109 = por %p107, %p108
    %s111 = sadd.s32 %s110, 1
    %p114 = scmp.eq.s32.totalorder %s13, 1
    %p115 = scmp.ne.s32.totalorder %s110, %s112
    %p116 = scmp.eq.s32.totalorder %s13, 0
    %p117 = por %p115, %p116
    %p118 = scmp.ne.s32.totalorder %s110, %s112
    %p119 = scmp.eq.s32.totalorder %s18, 1
    %p120 = por %p118, %p119
    %p121 = scmp.ne.s32.totalorder %s112, %s113
    %p122 = scmp.eq.s32.totalorder %s18, 0
    %p123 = por %p121, %p122
    %p124 = scmp.ne.s32.totalorder %s112, %s113
    %p125 = scmp.eq.s32.totalorder %s19, 1
    %p126 = por %p124, %p125
    %p128 = scmp.ne.s32.totalorder %s113, %s127
    %p129 = scmp.eq.s32.totalorder %s19, 0
    %p130 = por %p128, %p129
    %s132 = sadd.s32 %s131, 1
    %p135 = scmp.eq.s32.totalorder %s13, 1
    %p136 = scmp.ne.s32.totalorder %s131, %s133
    %p137 = scmp.eq.s32.totalorder %s13, 0
    %p138 = por %p136, %p137
    %p139 = scmp.ne.s32.totalorder %s131, %s133
    %p140 = scmp.eq.s32.totalorder %s18, 1
    %p141 = por %p139, %p140
    %p142 = scmp.ne.s32.totalorder %s133, %s134
    %p143 = scmp.eq.s32.totalorder %s18, 0
    %p144 = por %p142, %p143
    %p145 = scmp.ne.s32.totalorder %s133, %s134
    %p146 = scmp.eq.s32.totalorder %s19, 1
    %p147 = por %p145, %p146
    %p149 = scmp.ne.s32.totalorder %s134, %s148
    %p150 = scmp.eq.s32.totalorder %s19, 0
    %p151 = por %p149, %p150
    %s153 = sadd.s32 %s152, 1
    %p156 = scmp.eq.s32.totalorder %s13, 1
    %p157 = scmp.ne.s32.totalorder %s152, %s154
    %p158 = scmp.eq.s32.totalorder %s13, 0
    %p159 = por %p157, %p158
    %p160 = scmp.ne.s32.totalorder %s152, %s154
    %p161 = scmp.eq.s32.totalorder %s18, 1
    %p162 = por %p160, %p161
    %p163 = scmp.ne.s32.totalorder %s154, %s155
    %p164 = scmp.eq.s32.totalorder %s18, 0
    %p165 = por %p163, %p164
    %p166 = scmp.ne.s32.totalorder %s154, %s155
    %p167 = scmp.eq.s32.totalorder %s19, 1
    %p168 = por %p166, %p167
    %p170 = scmp.ne.s32.totalorder %s155, %s169
    %p171 = scmp.eq.s32.totalorder %s19, 0
    %p172 = por %p170, %p171
    %s173 = ssub.s32 %s13, %s20
    %p174 = scmp.eq.s32.totalorder %s173, 0
    %s176 = sadd.s32 %s175, 1
    %s177 = scalar_select %p174, %s175, %s176
    %p180 = pneg %p174
    %p181 = scmp.eq.s32.totalorder %s13, 1
    %p182 = por %p180, %p181
    %p183 = scmp.ne.s32.totalorder %s175, %s178
    %p184 = scmp.eq.s32.totalorder %s13, 0
    %p185 = por %p183, %p184
    %p186 = scmp.ne.s32.totalorder %s175, %s178
    %p187 = scmp.eq.s32.totalorder %s18, 1
    %p188 = por %p186, %p187
    %p189 = scmp.ne.s32.totalorder %s178, %s179
    %p190 = scmp.eq.s32.totalorder %s18, 0
    %p191 = por %p189, %p190
    %p192 = scmp.ne.s32.totalorder %s178, %s179
    %p193 = scmp.eq.s32.totalorder %s19, 1
    %p194 = por %p192, %p193
    %p196 = scmp.ne.s32.totalorder %s179, %s195
    %p197 = scmp.eq.s32.totalorder %s19, 0
    %p198 = por %p196, %p197
    %p199 = scmp.le.s32.totalorder 1, %s13
    %p200 = scmp.lt.s32.totalorder %s13, 3
    %p201 = pnand %p199, %p200
    %p202 = pneg %p201
    // Predicated region
    $region9: #{_forward_impl.2} parent=5 // pred_check
      _
    $region10: #{_forward_impl.2} parent=5 // pred_check_branch
      %204 = sbr.rel (%p201) target = $region12
    $region11: #{_forward_impl.2} parent=5 // pred_region
      %s205 = ssub.s32 %s13, 1
      // Predicated region
      $region13: #{_forward_impl.2} parent=11 // pred_check
        %p206 = pneg %p60
      $region14: #{_forward_impl.2} parent=11 // pred_check_branch
        %208 = sbr.rel (%p206) target = $region16
      $region15: #{_forward_impl.2} parent=11 // pred_region
        _
      $region16: #{_forward_impl.2} parent=11 // pred_fallthru
        _
      // Predicated region
      $region17: #{_forward_impl.2} parent=11 // pred_check
        %p209 = pneg %p81
      $region18: #{_forward_impl.2} parent=11 // pred_check_branch
        %211 = sbr.rel (%p209) target = $region20
      $region19: #{_forward_impl.2} parent=11 // pred_region
        _
      $region20: #{_forward_impl.2} parent=11 // pred_fallthru
        _
      // Predicated region
      $region21: #{_forward_impl.2} parent=11 // pred_check
        %p212 = pneg %p102
      $region22: #{_forward_impl.2} parent=11 // pred_check_branch
        %214 = sbr.rel (%p212) target = $region24
      $region23: #{_forward_impl.2} parent=11 // pred_region
        _
      $region24: #{_forward_impl.2} parent=11 // pred_fallthru
        _
      // Predicated region
      $region25: #{_forward_impl.2} parent=11 // pred_check
        %p215 = pneg %p123
      $region26: #{_forward_impl.2} parent=11 // pred_check_branch
        %217 = sbr.rel (%p215) target = $region28
      $region27: #{_forward_impl.2} parent=11 // pred_region
        _
      $region28: #{_forward_impl.2} parent=11 // pred_fallthru
        _
      // Predicated region
      $region29: #{_forward_impl.2} parent=11 // pred_check
        %p218 = pneg %p144
      $region30: #{_forward_impl.2} parent=11 // pred_check_branch
        %220 = sbr.rel (%p218) target = $region32
      $region31: #{_forward_impl.2} parent=11 // pred_region
        _
      $region32: #{_forward_impl.2} parent=11 // pred_fallthru
        _
      // Predicated region
      $region33: #{_forward_impl.2} parent=11 // pred_check
        %p221 = pneg %p165
      $region34: #{_forward_impl.2} parent=11 // pred_check_branch
        %223 = sbr.rel (%p221) target = $region36
      $region35: #{_forward_impl.2} parent=11 // pred_region
        _
      $region36: #{_forward_impl.2} parent=11 // pred_fallthru
        _
    $region12: #{_forward_impl.2} parent=5 // pred_fallthru
      _
    %p224 = scmp.lt.s32.totalorder %s13, 2
    // Predicated region
    $region37: #{_forward_impl.2} parent=5 // pred_check
      %p225 = pneg %p224
    $region38: #{_forward_impl.2} parent=5 // pred_check_branch
      %227 = sbr.rel (%p225) target = $region40
    $region39: #{_forward_impl.2} parent=5 // pred_region
      // Predicated region
      $region41: #{_forward_impl.2} parent=39 // pred_check
        %p228 = pneg %p33
      $region42: #{_forward_impl.2} parent=39 // pred_check_branch
        %230 = sbr.rel (%p228) target = $region44
      $region43: #{_forward_impl.2} parent=39 // pred_region
        %s231 = smul.u32 4, %s13
        %p232 = scmp.lt.s32.totalorder %s231, 7
        %s233 = scalar_select %p232, %s231, 7
        %s234 = smul.addr %s233, 6
        %s235 = smul.addr %s234, 4
        %s236 = scalar_lea.vmem %s0, %s235
        %s237 = smul.u32 4, %s13
      $region44: #{_forward_impl.2} parent=39 // pred_fallthru
        _
    $region40: #{_forward_impl.2} parent=5 // pred_fallthru
      _
    %p238 = scmp.le.s32.totalorder 1, %s13
    %p239 = scmp.lt.s32.totalorder %s13, 3
    %p240 = pnand %p238, %p239
    %p241 = pneg %p240
    // Predicated region
    $region45: #{_forward_impl.2} parent=5 // pred_check
      _
    $region46: #{_forward_impl.2} parent=5 // pred_check_branch
      %243 = sbr.rel (%p240) target = $region48
    $region47: #{_forward_impl.2} parent=5 // pred_region
      %s244 = ssub.s32 %s13, 1
      %s245 = smul.u32 4, %s18
      %p246 = scmp.lt.s32.totalorder %s245, 7
      %s247 = scalar_select %p246, %s245, 7
      %s248 = smul.addr %s247, 6
      %s249 = smul.addr %s248, 4
      %s250 = scalar_lea.vmem %s0, %s249
      %p251 = pneg %p39
      %p252 = pneg %p36
      %p253 = pneg %p60
      %p254 = pneg %p57
      %p255 = pneg %p81
      %p256 = pneg %p78
      %p257 = pneg %p102
      %p258 = pneg %p99
      %p259 = pneg %p123
      %p260 = pneg %p120
      %p261 = pneg %p144
      %p262 = pneg %p141
      %p263 = pneg %p165
      %p264 = pneg %p162
      %p265 = pneg %p191
      %p266 = pneg %p188
      %s267 = smul.u32 4, %s18
      %p268 = scmp.lt.s32.totalorder %s267, 7
      %s269 = scalar_select %p268, %s267, 7
      %s270 = smul.addr %s269, 4
      %s271 = scalar_lea.vmem %s7, %s270
      %s272 = smul.u32 4, %s18
      %p273 = scmp.lt.s32.totalorder %s272, 7
      %s274 = scalar_select %p273, %s272, 7
      %s275 = smul.addr %s274, 6
      %s276 = smul.addr %s275, 4
      %s277 = scalar_lea.vmem %s0, %s276
      %s278 = smul.u32 4, %s18
      %s279 = smul.u32 4, %s18
      %p280 = scmp.lt.s32.totalorder %s279, 7
      %s281 = scalar_select %p280, %s279, 7
      %s282 = smul.addr %s281, 4
      %s283 = scalar_lea.vmem %s7, %s282
      %s284 = smul.u32 4, %s18
      %v286 = vld [vmem:[%s277] sm:$0xff]
      %v287 = vld [vmem:[%s277 + $0x8] sm:$0xff]
      %v288 = vld [vmem:[%s277 + $0x10] sm:$0xff]
      %v289 = vld [vmem:[%s277 + $0x18] sm:$0xff]
      %v290 = vld [vmem:[%s277 + $0x20] sm:$0xff]
      %v291 = vld [vmem:[%s277 + $0x28] sm:$0xff]
      %v292 = vld [vmem:[%s277 + $0x30] sm:$0xff]
      %v293 = vld [vmem:[%s277 + $0x38] sm:$0xff]
      %v294 = vld [vmem:[%s277 + $0x40] sm:$0xff]
      %v295 = vld [vmem:[%s277 + $0x48] sm:$0xff]
      %v296 = vld [vmem:[%s277 + $0x50] sm:$0xff]
      %v297 = vld [vmem:[%s277 + $0x58] sm:$0xff]
      %v298 = vld [vmem:[%s1] sm:$0xff]
      %v299 = vld [vmem:[%s1 + $0x8] sm:$0xff]
      %v300 = vld [vmem:[%s1 + $0x10] sm:$0xff]
      %v301 = vld [vmem:[%s1 + $0x18] sm:$0xff]
      %v302 = vld [vmem:[%s1 + $0x20] sm:$0xff]
      %v303 = vld [vmem:[%s1 + $0x28] sm:$0xff]
      %v304 = vld [vmem:[%s1 + $0x30] sm:$0xff]
      %v305 = vld [vmem:[%s1 + $0x38] sm:$0xff]
      %v306 = vld [vmem:[%s1 + $0x40] sm:$0xff]
      %v307 = vld [vmem:[%s1 + $0x48] sm:$0xff]
      %v308 = vld [vmem:[%s1 + $0x50] sm:$0xff]
      %v309 = vld [vmem:[%s1 + $0x58] sm:$0xff]
      %v310 = vld [vmem:[%s1 + $0x60] sm:$0xff]
      %v311 = vld [vmem:[%s1 + $0x68] sm:$0xff]
      %v312 = vld [vmem:[%s1 + $0x70] sm:$0xff]
      %v313 = vld [vmem:[%s1 + $0x78] sm:$0xff]
      %v314 = vld [vmem:[%s1 + $0x80] sm:$0xff]
      %v315 = vld [vmem:[%s1 + $0x88] sm:$0xff]
      %v316 = vld [vmem:[%s1 + $0x90] sm:$0xff]
      %v317 = vld [vmem:[%s1 + $0x98] sm:$0xff]
      %v318 = vld [vmem:[%s1 + $0xa0] sm:$0xff]
      %v319 = vld [vmem:[%s1 + $0xa8] sm:$0xff]
      %v320 = vld [vmem:[%s1 + $0xb0] sm:$0xff]
      %v321 = vld [vmem:[%s1 + $0xb8] sm:$0xff]
      %v322 = vld [vmem:[%s1 + $0xc0] sm:$0xff]
      %v323 = vld [vmem:[%s1 + $0xc8] sm:$0xff]
      %v324 = vld [vmem:[%s1 + $0xd0] sm:$0xff]
      %v325 = vld [vmem:[%s1 + $0xd8] sm:$0xff]
      %v326 = vld [vmem:[%s1 + $0xe0] sm:$0xff]
      %v327 = vld [vmem:[%s1 + $0xe8] sm:$0xff]
      %v328 = vld [vmem:[%s1 + $0xf0] sm:$0xff]
      %v329 = vld [vmem:[%s1 + $0xf8] sm:$0xff]
      %v330 = vld [vmem:[%s1 + $0x100] sm:$0xff]
      %v331 = vld [vmem:[%s1 + $0x108] sm:$0xff]
      %v332 = vld [vmem:[%s1 + $0x110] sm:$0xff]
      %v333 = vld [vmem:[%s1 + $0x118] sm:$0xff]
      %v334 = vld [vmem:[%s1 + $0x120] sm:$0xff]
      %v335 = vld [vmem:[%s1 + $0x128] sm:$0xff]
      %v336 = vld [vmem:[%s1 + $0x130] sm:$0xff]
      %v337 = vld [vmem:[%s1 + $0x138] sm:$0xff]
      %v338 = vld [vmem:[%s1 + $0x140] sm:$0xff]
      %v339 = vld [vmem:[%s1 + $0x148] sm:$0xff]
      %v340 = vld [vmem:[%s1 + $0x150] sm:$0xff]
      %v341 = vld [vmem:[%s1 + $0x158] sm:$0xff]
      %v342 = vld [vmem:[%s1 + $0x160] sm:$0xff]
      %v343 = vld [vmem:[%s1 + $0x168] sm:$0xff]
      %v344 = vld [vmem:[%s1 + $0x170] sm:$0xff]
      %v345 = vld [vmem:[%s1 + $0x178] sm:$0xff]
      %v346 = vld [vmem:[%s1 + $0x180] sm:$0xff]
      %v347 = vld [vmem:[%s1 + $0x188] sm:$0xff]
      %v348 = vld [vmem:[%s1 + $0x190] sm:$0xff]
      %v349 = vld [vmem:[%s1 + $0x198] sm:$0xff]
      %v350 = vld [vmem:[%s1 + $0x1a0] sm:$0xff]
      %v351 = vld [vmem:[%s1 + $0x1a8] sm:$0xff]
      %v352 = vld [vmem:[%s1 + $0x1b0] sm:$0xff]
      %v353 = vld [vmem:[%s1 + $0x1b8] sm:$0xff]
      %v354 = vld [vmem:[%s1 + $0x1c0] sm:$0xff]
      %v355 = vld [vmem:[%s1 + $0x1c8] sm:$0xff]
      %v356 = vld [vmem:[%s1 + $0x1d0] sm:$0xff]
      %v357 = vld [vmem:[%s1 + $0x1d8] sm:$0xff]
      %v358 = vld [vmem:[%s1 + $0x1e0] sm:$0xff]
      %v359 = vld [vmem:[%s1 + $0x1e8] sm:$0xff]
      %v360 = vld [vmem:[%s1 + $0x1f0] sm:$0xff]
      %v361 = vld [vmem:[%s1 + $0x1f8] sm:$0xff]
      %v362 = vld [vmem:[%s1 + $0x200] sm:$0xff]
      %v363 = vld [vmem:[%s1 + $0x208] sm:$0xff]
      %v364 = vld [vmem:[%s1 + $0x210] sm:$0xff]
      %v365 = vld [vmem:[%s1 + $0x218] sm:$0xff]
      %v366 = vld [vmem:[%s1 + $0x220] sm:$0xff]
      %v367 = vld [vmem:[%s1 + $0x228] sm:$0xff]
      %v368 = vld [vmem:[%s1 + $0x230] sm:$0xff]
      %v369 = vld [vmem:[%s1 + $0x238] sm:$0xff]
      %v370 = vld [vmem:[%s1 + $0x240] sm:$0xff]
      %v371 = vld [vmem:[%s1 + $0x248] sm:$0xff]
      %v372 = vld [vmem:[%s1 + $0x250] sm:$0xff]
      %v373 = vld [vmem:[%s1 + $0x258] sm:$0xff]
      %v374 = vld [vmem:[%s1 + $0x260] sm:$0xff]
      %v375 = vld [vmem:[%s1 + $0x268] sm:$0xff]
      %v376 = vld [vmem:[%s1 + $0x270] sm:$0xff]
      %v377 = vld [vmem:[%s1 + $0x278] sm:$0xff]
      %v378 = vld [vmem:[%s1 + $0x280] sm:$0xff]
      %v379 = vld [vmem:[%s1 + $0x288] sm:$0xff]
      %v380 = vld [vmem:[%s1 + $0x290] sm:$0xff]
      %v381 = vld [vmem:[%s1 + $0x298] sm:$0xff]
      %v382 = vld [vmem:[%s1 + $0x2a0] sm:$0xff]
      %v383 = vld [vmem:[%s1 + $0x2a8] sm:$0xff]
      %v384 = vld [vmem:[%s1 + $0x2b0] sm:$0xff]
      %v385 = vld [vmem:[%s1 + $0x2b8] sm:$0xff]
      %v386 = vld [vmem:[%s1 + $0x2c0] sm:$0xff]
      %v387 = vld [vmem:[%s1 + $0x2c8] sm:$0xff]
      %v388 = vld [vmem:[%s1 + $0x2d0] sm:$0xff]
      %v389 = vld [vmem:[%s1 + $0x2d8] sm:$0xff]
      %v390 = vld [vmem:[%s1 + $0x2e0] sm:$0xff]
      %v391 = vld [vmem:[%s1 + $0x2e8] sm:$0xff]
      %v392 = vld [vmem:[%s1 + $0x2f0] sm:$0xff]
      %v393 = vld [vmem:[%s1 + $0x2f8] sm:$0xff]
      %v394 = vld [vmem:[%s1 + $0x300] sm:$0xff]
      %v395 = vld [vmem:[%s1 + $0x308] sm:$0xff]
      %v396 = vld [vmem:[%s1 + $0x310] sm:$0xff]
      %v397 = vld [vmem:[%s1 + $0x318] sm:$0xff]
      %v398 = vld [vmem:[%s1 + $0x320] sm:$0xff]
      %v399 = vld [vmem:[%s1 + $0x328] sm:$0xff]
      %v400 = vld [vmem:[%s1 + $0x330] sm:$0xff]
      %v401 = vld [vmem:[%s1 + $0x338] sm:$0xff]
      %v402 = vld [vmem:[%s1 + $0x340] sm:$0xff]
      %v403 = vld [vmem:[%s1 + $0x348] sm:$0xff]
      %v404 = vld [vmem:[%s1 + $0x350] sm:$0xff]
      %v405 = vld [vmem:[%s1 + $0x358] sm:$0xff]
      %v406 = vld [vmem:[%s1 + $0x360] sm:$0xff]
      %v407 = vld [vmem:[%s1 + $0x368] sm:$0xff]
      %v408 = vld [vmem:[%s1 + $0x370] sm:$0xff]
      %v409 = vld [vmem:[%s1 + $0x378] sm:$0xff]
      %v410 = vld [vmem:[%s1 + $0x380] sm:$0xff]
      %v411 = vld [vmem:[%s1 + $0x388] sm:$0xff]
      %v412 = vld [vmem:[%s1 + $0x390] sm:$0xff]
      %v413 = vld [vmem:[%s1 + $0x398] sm:$0xff]
      %v414 = vld [vmem:[%s1 + $0x3a0] sm:$0xff]
      %v415 = vld [vmem:[%s1 + $0x3a8] sm:$0xff]
      %v416 = vld [vmem:[%s1 + $0x3b0] sm:$0xff]
      %v417 = vld [vmem:[%s1 + $0x3b8] sm:$0xff]
      %v418 = vld [vmem:[%s1 + $0x3c0] sm:$0xff]
      %v419 = vld [vmem:[%s1 + $0x3c8] sm:$0xff]
      %v420 = vld [vmem:[%s1 + $0x3d0] sm:$0xff]
      %v421 = vld [vmem:[%s1 + $0x3d8] sm:$0xff]
      %v422 = vld [vmem:[%s1 + $0x3e0] sm:$0xff]
      %v423 = vld [vmem:[%s1 + $0x3e8] sm:$0xff]
      %v424 = vld [vmem:[%s1 + $0x3f0] sm:$0xff]
      %v425 = vld [vmem:[%s1 + $0x3f8] sm:$0xff]
      %v426 = vld [vmem:[%s1 + $0x400] sm:$0xff]
      %v427 = vld [vmem:[%s1 + $0x408] sm:$0xff]
      %v428 = vld [vmem:[%s1 + $0x410] sm:$0xff]
      %v429 = vld [vmem:[%s1 + $0x418] sm:$0xff]
      %v430 = vld [vmem:[%s1 + $0x420] sm:$0xff]
      %v431 = vld [vmem:[%s1 + $0x428] sm:$0xff]
      %v432 = vld [vmem:[%s1 + $0x430] sm:$0xff]
      %v433 = vld [vmem:[%s1 + $0x438] sm:$0xff]
      %v434 = vld [vmem:[%s1 + $0x440] sm:$0xff]
      %v435 = vld [vmem:[%s1 + $0x448] sm:$0xff]
      %v436 = vld [vmem:[%s1 + $0x450] sm:$0xff]
      %v437 = vld [vmem:[%s1 + $0x458] sm:$0xff]
      %v438 = vld [vmem:[%s1 + $0x460] sm:$0xff]
      %v439 = vld [vmem:[%s1 + $0x468] sm:$0xff]
      %v440 = vld [vmem:[%s1 + $0x470] sm:$0xff]
      %v441 = vld [vmem:[%s1 + $0x478] sm:$0xff]
      %v442 = vld [vmem:[%s1 + $0x480] sm:$0xff]
      %v443 = vld [vmem:[%s1 + $0x488] sm:$0xff]
      %v444 = vld [vmem:[%s1 + $0x490] sm:$0xff]
      %v445 = vld [vmem:[%s1 + $0x498] sm:$0xff]
      %v446 = vld [vmem:[%s1 + $0x4a0] sm:$0xff]
      %v447 = vld [vmem:[%s1 + $0x4a8] sm:$0xff]
      %v448 = vld [vmem:[%s1 + $0x4b0] sm:$0xff]
      %v449 = vld [vmem:[%s1 + $0x4b8] sm:$0xff]
      %v450 = vld [vmem:[%s1 + $0x4c0] sm:$0xff]
      %v451 = vld [vmem:[%s1 + $0x4c8] sm:$0xff]
      %v452 = vld [vmem:[%s1 + $0x4d0] sm:$0xff]
      %v453 = vld [vmem:[%s1 + $0x4d8] sm:$0xff]
      %v454 = vld [vmem:[%s1 + $0x4e0] sm:$0xff]
      %v455 = vld [vmem:[%s1 + $0x4e8] sm:$0xff]
      %v456 = vld [vmem:[%s1 + $0x4f0] sm:$0xff]
      %v457 = vld [vmem:[%s1 + $0x4f8] sm:$0xff]
      %v458 = vld [vmem:[%s1 + $0x500] sm:$0xff]
      %v459 = vld [vmem:[%s1 + $0x508] sm:$0xff]
      %v460 = vld [vmem:[%s1 + $0x510] sm:$0xff]
      %v461 = vld [vmem:[%s1 + $0x518] sm:$0xff]
      %v462 = vld [vmem:[%s1 + $0x520] sm:$0xff]
      %v463 = vld [vmem:[%s1 + $0x528] sm:$0xff]
      %v464 = vld [vmem:[%s1 + $0x530] sm:$0xff]
      %v465 = vld [vmem:[%s1 + $0x538] sm:$0xff]
      %v466 = vld [vmem:[%s1 + $0x540] sm:$0xff]
      %v467 = vld [vmem:[%s1 + $0x548] sm:$0xff]
      %v468 = vld [vmem:[%s1 + $0x550] sm:$0xff]
      %v469 = vld [vmem:[%s1 + $0x558] sm:$0xff]
      %v470 = vld [vmem:[%s1 + $0x560] sm:$0xff]
      %v471 = vld [vmem:[%s1 + $0x568] sm:$0xff]
      %v472 = vld [vmem:[%s1 + $0x570] sm:$0xff]
      %v473 = vld [vmem:[%s1 + $0x578] sm:$0xff]
      %v474 = vld [vmem:[%s1 + $0x580] sm:$0xff]
      %v475 = vld [vmem:[%s1 + $0x588] sm:$0xff]
      %v476 = vld [vmem:[%s1 + $0x590] sm:$0xff]
      %v477 = vld [vmem:[%s1 + $0x598] sm:$0xff]
      %v478 = vld [vmem:[%s1 + $0x5a0] sm:$0xff]
      %v479 = vld [vmem:[%s1 + $0x5a8] sm:$0xff]
      %v480 = vld [vmem:[%s1 + $0x5b0] sm:$0xff]
      %v481 = vld [vmem:[%s1 + $0x5b8] sm:$0xff]
      %v482 = vld [vmem:[%s1 + $0x5c0] sm:$0xff]
      %v483 = vld [vmem:[%s1 + $0x5c8] sm:$0xff]
      %v484 = vld [vmem:[%s1 + $0x5d0] sm:$0xff]
      %v485 = vld [vmem:[%s1 + $0x5d8] sm:$0xff]
      %v486 = vld [vmem:[%s1 + $0x5e0] sm:$0xff]
      %v487 = vld [vmem:[%s1 + $0x5e8] sm:$0xff]
      %v488 = vld [vmem:[%s1 + $0x5f0] sm:$0xff]
      %v489 = vld [vmem:[%s1 + $0x5f8] sm:$0xff]
      %v490 = vld [vmem:[%s2] sm:$0xf]
      %v492 = vlaneseq
      %v493 = vshrl.u32 %v492, 7
      %v494 = vsub.s32 0, %v493
      %v495 = vrot.slane %v490, %v494
      %v496 = vlaneseq
      %v497 = vshrl.u32 %v496, 7
      %v498 = vsub.s32 1, %v497
      %v499 = vrot.slane %v490, %v498
      %v500 = vlaneseq
      %v501 = vshrl.u32 %v500, 7
      %v502 = vsub.s32 2, %v501
      %v503 = vrot.slane %v490, %v502
      %v504 = vlaneseq
      %v505 = vshrl.u32 %v504, 7
      %v506 = vsub.s32 3, %v505
      %v507 = vrot.slane %v490, %v506
      %v524 = vunpack.c.l.b16 %v286
      %v525 = vunpack.c.h.b16 %v286
      %v526 = vunpack.c.l.b16 %v287
      %v527 = vunpack.c.h.b16 %v287
      %v528 = vunpack.c.l.b16 %v288
      %v529 = vunpack.c.h.b16 %v288
      %v530 = vunpack.c.l.b16 %v289
      %v531 = vunpack.c.h.b16 %v289
      %v532 = vunpack.c.l.b16 %v290
      %v533 = vunpack.c.h.b16 %v290
      %v534 = vunpack.c.l.b16 %v291
      %v535 = vunpack.c.h.b16 %v291
      %v536 = vunpack.c.l.b16 %v292
      %v537 = vunpack.c.h.b16 %v292
      %v538 = vunpack.c.l.b16 %v293
      %v539 = vunpack.c.h.b16 %v293
      %v540 = vunpack.c.l.b16 %v294
      %v541 = vunpack.c.h.b16 %v294
      %v542 = vunpack.c.l.b16 %v295
      %v543 = vunpack.c.h.b16 %v295
      %v544 = vunpack.c.l.b16 %v296
      %v545 = vunpack.c.h.b16 %v296
      %v546 = vunpack.c.l.b16 %v297
      %v547 = vunpack.c.h.b16 %v297
      %v548 = vpack.c.b16 %v530, %v524
      %v549 = vpack.c.b16 %v531, %v525
      %v550 = vpack.c.b16 %v532, %v526
      %v551 = vpack.c.b16 %v533, %v527
      %v552 = vpack.c.b16 %v534, %v528
      %v553 = vpack.c.b16 %v535, %v529
      %v554 = vpack.c.b16 %v542, %v536
      %v555 = vpack.c.b16 %v543, %v537
      %v556 = vpack.c.b16 %v544, %v538
      %v557 = vpack.c.b16 %v545, %v539
      %v558 = vpack.c.b16 %v546, %v540
      %v559 = vpack.c.b16 %v547, %v541
      %v764 = vunpack.c.l.b16 %v298
      %v765 = vunpack.c.h.b16 %v298
      %v766 = vunpack.c.l.b16 %v299
      %v767 = vunpack.c.h.b16 %v299
      %v768 = vunpack.c.l.b16 %v300
      %v769 = vunpack.c.h.b16 %v300
      %v770 = vunpack.c.l.b16 %v301
      %v771 = vunpack.c.h.b16 %v301
      %v772 = vunpack.c.l.b16 %v302
      %v773 = vunpack.c.h.b16 %v302
      %v774 = vunpack.c.l.b16 %v303
      %v775 = vunpack.c.h.b16 %v303
      %v776 = vunpack.c.l.b16 %v304
      %v777 = vunpack.c.h.b16 %v304
      %v778 = vunpack.c.l.b16 %v305
      %v779 = vunpack.c.h.b16 %v305
      %v780 = vunpack.c.l.b16 %v306
      %v781 = vunpack.c.h.b16 %v306
      %v782 = vunpack.c.l.b16 %v307
      %v783 = vunpack.c.h.b16 %v307
      %v784 = vunpack.c.l.b16 %v308
      %v785 = vunpack.c.h.b16 %v308
      %v786 = vunpack.c.l.b16 %v309
      %v787 = vunpack.c.h.b16 %v309
      %v788 = vunpack.c.l.b16 %v310
      %v789 = vunpack.c.h.b16 %v310
      %v790 = vunpack.c.l.b16 %v311
      %v791 = vunpack.c.h.b16 %v311
      %v792 = vunpack.c.l.b16 %v312
      %v793 = vunpack.c.h.b16 %v312
      %v794 = vunpack.c.l.b16 %v313
      %v795 = vunpack.c.h.b16 %v313
      %v796 = vunpack.c.l.b16 %v314
      %v797 = vunpack.c.h.b16 %v314
      %v798 = vunpack.c.l.b16 %v315
      %v799 = vunpack.c.h.b16 %v315
      %v800 = vunpack.c.l.b16 %v316
      %v801 = vunpack.c.h.b16 %v316
      %v802 = vunpack.c.l.b16 %v317
      %v803 = vunpack.c.h.b16 %v317
      %v804 = vunpack.c.l.b16 %v318
      %v805 = vunpack.c.h.b16 %v318
      %v806 = vunpack.c.l.b16 %v319
      %v807 = vunpack.c.h.b16 %v319
      %v808 = vunpack.c.l.b16 %v320
      %v809 = vunpack.c.h.b16 %v320
      %v810 = vunpack.c.l.b16 %v321
      %v811 = vunpack.c.h.b16 %v321
      %v812 = vunpack.c.l.b16 %v322
      %v813 = vunpack.c.h.b16 %v322
      %v814 = vunpack.c.l.b16 %v323
      %v815 = vunpack.c.h.b16 %v323
      %v816 = vunpack.c.l.b16 %v324
      %v817 = vunpack.c.h.b16 %v324
      %v818 = vunpack.c.l.b16 %v325
      %v819 = vunpack.c.h.b16 %v325
      %v820 = vunpack.c.l.b16 %v326
      %v821 = vunpack.c.h.b16 %v326
      %v822 = vunpack.c.l.b16 %v327
      %v823 = vunpack.c.h.b16 %v327
      %v824 = vunpack.c.l.b16 %v328
      %v825 = vunpack.c.h.b16 %v328
      %v826 = vunpack.c.l.b16 %v329
      %v827 = vunpack.c.h.b16 %v329
      %v828 = vunpack.c.l.b16 %v330
      %v829 = vunpack.c.h.b16 %v330
      %v830 = vunpack.c.l.b16 %v331
      %v831 = vunpack.c.h.b16 %v331
      %v832 = vunpack.c.l.b16 %v332
      %v833 = vunpack.c.h.b16 %v332
      %v834 = vunpack.c.l.b16 %v333
      %v835 = vunpack.c.h.b16 %v333
      %v836 = vunpack.c.l.b16 %v334
      %v837 = vunpack.c.h.b16 %v334
      %v838 = vunpack.c.l.b16 %v335
      %v839 = vunpack.c.h.b16 %v335
      %v840 = vunpack.c.l.b16 %v336
      %v841 = vunpack.c.h.b16 %v336
      %v842 = vunpack.c.l.b16 %v337
      %v843 = vunpack.c.h.b16 %v337
      %v844 = vunpack.c.l.b16 %v338
      %v845 = vunpack.c.h.b16 %v338
      %v846 = vunpack.c.l.b16 %v339
      %v847 = vunpack.c.h.b16 %v339
      %v848 = vunpack.c.l.b16 %v340
      %v849 = vunpack.c.h.b16 %v340
      %v850 = vunpack.c.l.b16 %v341
      %v851 = vunpack.c.h.b16 %v341
      %v852 = vunpack.c.l.b16 %v342
      %v853 = vunpack.c.h.b16 %v342
      %v854 = vunpack.c.l.b16 %v343
      %v855 = vunpack.c.h.b16 %v343
      %v856 = vunpack.c.l.b16 %v344
      %v857 = vunpack.c.h.b16 %v344
      %v858 = vunpack.c.l.b16 %v345
      %v859 = vunpack.c.h.b16 %v345
      %v860 = vunpack.c.l.b16 %v346
      %v861 = vunpack.c.h.b16 %v346
      %v862 = vunpack.c.l.b16 %v347
      %v863 = vunpack.c.h.b16 %v347
      %v864 = vunpack.c.l.b16 %v348
      %v865 = vunpack.c.h.b16 %v348
      %v866 = vunpack.c.l.b16 %v349
      %v867 = vunpack.c.h.b16 %v349
      %v868 = vunpack.c.l.b16 %v350
      %v869 = vunpack.c.h.b16 %v350
      %v870 = vunpack.c.l.b16 %v351
      %v871 = vunpack.c.h.b16 %v351
      %v872 = vunpack.c.l.b16 %v352
      %v873 = vunpack.c.h.b16 %v352
      %v874 = vunpack.c.l.b16 %v353
      %v875 = vunpack.c.h.b16 %v353
      %v876 = vunpack.c.l.b16 %v354
      %v877 = vunpack.c.h.b16 %v354
      %v878 = vunpack.c.l.b16 %v355
      %v879 = vunpack.c.h.b16 %v355
      %v880 = vunpack.c.l.b16 %v356
      %v881 = vunpack.c.h.b16 %v356
      %v882 = vunpack.c.l.b16 %v357
      %v883 = vunpack.c.h.b16 %v357
      %v884 = vunpack.c.l.b16 %v358
      %v885 = vunpack.c.h.b16 %v358
      %v886 = vunpack.c.l.b16 %v359
      %v887 = vunpack.c.h.b16 %v359
      %v888 = vunpack.c.l.b16 %v360
      %v889 = vunpack.c.h.b16 %v360
      %v890 = vunpack.c.l.b16 %v361
      %v891 = vunpack.c.h.b16 %v361
      %v892 = vunpack.c.l.b16 %v362
      %v893 = vunpack.c.h.b16 %v362
      %v894 = vunpack.c.l.b16 %v363
      %v895 = vunpack.c.h.b16 %v363
      %v896 = vunpack.c.l.b16 %v364
      %v897 = vunpack.c.h.b16 %v364
      %v898 = vunpack.c.l.b16 %v365
      %v899 = vunpack.c.h.b16 %v365
      %v900 = vunpack.c.l.b16 %v366
      %v901 = vunpack.c.h.b16 %v366
      %v902 = vunpack.c.l.b16 %v367
      %v903 = vunpack.c.h.b16 %v367
      %v904 = vunpack.c.l.b16 %v368
      %v905 = vunpack.c.h.b16 %v368
      %v906 = vunpack.c.l.b16 %v369
      %v907 = vunpack.c.h.b16 %v369
      %v908 = vunpack.c.l.b16 %v370
      %v909 = vunpack.c.h.b16 %v370
      %v910 = vunpack.c.l.b16 %v371
      %v911 = vunpack.c.h.b16 %v371
      %v912 = vunpack.c.l.b16 %v372
      %v913 = vunpack.c.h.b16 %v372
      %v914 = vunpack.c.l.b16 %v373
      %v915 = vunpack.c.h.b16 %v373
      %v916 = vunpack.c.l.b16 %v374
      %v917 = vunpack.c.h.b16 %v374
      %v918 = vunpack.c.l.b16 %v375
      %v919 = vunpack.c.h.b16 %v375
      %v920 = vunpack.c.l.b16 %v376
      %v921 = vunpack.c.h.b16 %v376
      %v922 = vunpack.c.l.b16 %v377
      %v923 = vunpack.c.h.b16 %v377
      %v924 = vunpack.c.l.b16 %v378
      %v925 = vunpack.c.h.b16 %v378
      %v926 = vunpack.c.l.b16 %v379
      %v927 = vunpack.c.h.b16 %v379
      %v928 = vunpack.c.l.b16 %v380
      %v929 = vunpack.c.h.b16 %v380
      %v930 = vunpack.c.l.b16 %v381
      %v931 = vunpack.c.h.b16 %v381
      %v932 = vunpack.c.l.b16 %v382
      %v933 = vunpack.c.h.b16 %v382
      %v934 = vunpack.c.l.b16 %v383
      %v935 = vunpack.c.h.b16 %v383
      %v936 = vunpack.c.l.b16 %v384
      %v937 = vunpack.c.h.b16 %v384
      %v938 = vunpack.c.l.b16 %v385
      %v939 = vunpack.c.h.b16 %v385
      %v940 = vunpack.c.l.b16 %v386
      %v941 = vunpack.c.h.b16 %v386
      %v942 = vunpack.c.l.b16 %v387
      %v943 = vunpack.c.h.b16 %v387
      %v944 = vunpack.c.l.b16 %v388
      %v945 = vunpack.c.h.b16 %v388
      %v946 = vunpack.c.l.b16 %v389
      %v947 = vunpack.c.h.b16 %v389
      %v948 = vunpack.c.l.b16 %v390
      %v949 = vunpack.c.h.b16 %v390
      %v950 = vunpack.c.l.b16 %v391
      %v951 = vunpack.c.h.b16 %v391
      %v952 = vunpack.c.l.b16 %v392
      %v953 = vunpack.c.h.b16 %v392
      %v954 = vunpack.c.l.b16 %v393
      %v955 = vunpack.c.h.b16 %v393
      %v956 = vunpack.c.l.b16 %v394
      %v957 = vunpack.c.h.b16 %v394
      %v958 = vunpack.c.l.b16 %v395
      %v959 = vunpack.c.h.b16 %v395
      %v960 = vunpack.c.l.b16 %v396
      %v961 = vunpack.c.h.b16 %v396
      %v962 = vunpack.c.l.b16 %v397
      %v963 = vunpack.c.h.b16 %v397
      %v964 = vunpack.c.l.b16 %v398
      %v965 = vunpack.c.h.b16 %v398
      %v966 = vunpack.c.l.b16 %v399
      %v967 = vunpack.c.h.b16 %v399
      %v968 = vunpack.c.l.b16 %v400
      %v969 = vunpack.c.h.b16 %v400
      %v970 = vunpack.c.l.b16 %v401
      %v971 = vunpack.c.h.b16 %v401
      %v972 = vunpack.c.l.b16 %v402
      %v973 = vunpack.c.h.b16 %v402
      %v974 = vunpack.c.l.b16 %v403
      %v975 = vunpack.c.h.b16 %v403
      %v976 = vunpack.c.l.b16 %v404
      %v977 = vunpack.c.h.b16 %v404
      %v978 = vunpack.c.l.b16 %v405
      %v979 = vunpack.c.h.b16 %v405
      %v980 = vunpack.c.l.b16 %v406
      %v981 = vunpack.c.h.b16 %v406
      %v982 = vunpack.c.l.b16 %v407
      %v983 = vunpack.c.h.b16 %v407
      %v984 = vunpack.c.l.b16 %v408
      %v985 = vunpack.c.h.b16 %v408
      %v986 = vunpack.c.l.b16 %v409
      %v987 = vunpack.c.h.b16 %v409
      %v988 = vunpack.c.l.b16 %v410
      %v989 = vunpack.c.h.b16 %v410
      %v990 = vunpack.c.l.b16 %v411
      %v991 = vunpack.c.h.b16 %v411
      %v992 = vunpack.c.l.b16 %v412
      %v993 = vunpack.c.h.b16 %v412
      %v994 = vunpack.c.l.b16 %v413
      %v995 = vunpack.c.h.b16 %v413
      %v996 = vunpack.c.l.b16 %v414
      %v997 = vunpack.c.h.b16 %v414
      %v998 = vunpack.c.l.b16 %v415
      %v999 = vunpack.c.h.b16 %v415
      %v1000 = vunpack.c.l.b16 %v416
      %v1001 = vunpack.c.h.b16 %v416
      %v1002 = vunpack.c.l.b16 %v417
      %v1003 = vunpack.c.h.b16 %v417
      %v1004 = vunpack.c.l.b16 %v418
      %v1005 = vunpack.c.h.b16 %v418
      %v1006 = vunpack.c.l.b16 %v419
      %v1007 = vunpack.c.h.b16 %v419
      %v1008 = vunpack.c.l.b16 %v420
      %v1009 = vunpack.c.h.b16 %v420
      %v1010 = vunpack.c.l.b16 %v421
      %v1011 = vunpack.c.h.b16 %v421
      %v1012 = vunpack.c.l.b16 %v422
      %v1013 = vunpack.c.h.b16 %v422
      %v1014 = vunpack.c.l.b16 %v423
      %v1015 = vunpack.c.h.b16 %v423
      %v1016 = vunpack.c.l.b16 %v424
      %v1017 = vunpack.c.h.b16 %v424
      %v1018 = vunpack.c.l.b16 %v425
      %v1019 = vunpack.c.h.b16 %v425
      %v1020 = vunpack.c.l.b16 %v426
      %v1021 = vunpack.c.h.b16 %v426
      %v1022 = vunpack.c.l.b16 %v427
      %v1023 = vunpack.c.h.b16 %v427
      %v1024 = vunpack.c.l.b16 %v428
      %v1025 = vunpack.c.h.b16 %v428
      %v1026 = vunpack.c.l.b16 %v429
      %v1027 = vunpack.c.h.b16 %v429
      %v1028 = vunpack.c.l.b16 %v430
      %v1029 = vunpack.c.h.b16 %v430
      %v1030 = vunpack.c.l.b16 %v431
      %v1031 = vunpack.c.h.b16 %v431
      %v1032 = vunpack.c.l.b16 %v432
      %v1033 = vunpack.c.h.b16 %v432
      %v1034 = vunpack.c.l.b16 %v433
      %v1035 = vunpack.c.h.b16 %v433
      %v1036 = vunpack.c.l.b16 %v434
      %v1037 = vunpack.c.h.b16 %v434
      %v1038 = vunpack.c.l.b16 %v435
      %v1039 = vunpack.c.h.b16 %v435
      %v1040 = vunpack.c.l.b16 %v436
      %v1041 = vunpack.c.h.b16 %v436
      %v1042 = vunpack.c.l.b16 %v437
      %v1043 = vunpack.c.h.b16 %v437
      %v1044 = vunpack.c.l.b16 %v438
      %v1045 = vunpack.c.h.b16 %v438
      %v1046 = vunpack.c.l.b16 %v439
      %v1047 = vunpack.c.h.b16 %v439
      %v1048 = vunpack.c.l.b16 %v440
      %v1049 = vunpack.c.h.b16 %v440
      %v1050 = vunpack.c.l.b16 %v441
      %v1051 = vunpack.c.h.b16 %v441
      %v1052 = vunpack.c.l.b16 %v442
      %v1053 = vunpack.c.h.b16 %v442
      %v1054 = vunpack.c.l.b16 %v443
      %v1055 = vunpack.c.h.b16 %v443
      %v1056 = vunpack.c.l.b16 %v444
      %v1057 = vunpack.c.h.b16 %v444
      %v1058 = vunpack.c.l.b16 %v445
      %v1059 = vunpack.c.h.b16 %v445
      %v1060 = vunpack.c.l.b16 %v446
      %v1061 = vunpack.c.h.b16 %v446
      %v1062 = vunpack.c.l.b16 %v447
      %v1063 = vunpack.c.h.b16 %v447
      %v1064 = vunpack.c.l.b16 %v448
      %v1065 = vunpack.c.h.b16 %v448
      %v1066 = vunpack.c.l.b16 %v449
      %v1067 = vunpack.c.h.b16 %v449
      %v1068 = vunpack.c.l.b16 %v450
      %v1069 = vunpack.c.h.b16 %v450
      %v1070 = vunpack.c.l.b16 %v451
      %v1071 = vunpack.c.h.b16 %v451
      %v1072 = vunpack.c.l.b16 %v452
      %v1073 = vunpack.c.h.b16 %v452
      %v1074 = vunpack.c.l.b16 %v453
      %v1075 = vunpack.c.h.b16 %v453
      %v1076 = vunpack.c.l.b16 %v454
      %v1077 = vunpack.c.h.b16 %v454
      %v1078 = vunpack.c.l.b16 %v455
      %v1079 = vunpack.c.h.b16 %v455
      %v1080 = vunpack.c.l.b16 %v456
      %v1081 = vunpack.c.h.b16 %v456
      %v1082 = vunpack.c.l.b16 %v457
      %v1083 = vunpack.c.h.b16 %v457
      %v1084 = vunpack.c.l.b16 %v458
      %v1085 = vunpack.c.h.b16 %v458
      %v1086 = vunpack.c.l.b16 %v459
      %v1087 = vunpack.c.h.b16 %v459
      %v1088 = vunpack.c.l.b16 %v460
      %v1089 = vunpack.c.h.b16 %v460
      %v1090 = vunpack.c.l.b16 %v461
      %v1091 = vunpack.c.h.b16 %v461
      %v1092 = vunpack.c.l.b16 %v462
      %v1093 = vunpack.c.h.b16 %v462
      %v1094 = vunpack.c.l.b16 %v463
      %v1095 = vunpack.c.h.b16 %v463
      %v1096 = vunpack.c.l.b16 %v464
      %v1097 = vunpack.c.h.b16 %v464
      %v1098 = vunpack.c.l.b16 %v465
      %v1099 = vunpack.c.h.b16 %v465
      %v1100 = vunpack.c.l.b16 %v466
      %v1101 = vunpack.c.h.b16 %v466
      %v1102 = vunpack.c.l.b16 %v467
      %v1103 = vunpack.c.h.b16 %v467
      %v1104 = vunpack.c.l.b16 %v468
      %v1105 = vunpack.c.h.b16 %v468
      %v1106 = vunpack.c.l.b16 %v469
      %v1107 = vunpack.c.h.b16 %v469
      %v1108 = vunpack.c.l.b16 %v470
      %v1109 = vunpack.c.h.b16 %v470
      %v1110 = vunpack.c.l.b16 %v471
      %v1111 = vunpack.c.h.b16 %v471
      %v1112 = vunpack.c.l.b16 %v472
      %v1113 = vunpack.c.h.b16 %v472
      %v1114 = vunpack.c.l.b16 %v473
      %v1115 = vunpack.c.h.b16 %v473
      %v1116 = vunpack.c.l.b16 %v474
      %v1117 = vunpack.c.h.b16 %v474
      %v1118 = vunpack.c.l.b16 %v475
      %v1119 = vunpack.c.h.b16 %v475
      %v1120 = vunpack.c.l.b16 %v476
      %v1121 = vunpack.c.h.b16 %v476
      %v1122 = vunpack.c.l.b16 %v477
      %v1123 = vunpack.c.h.b16 %v477
      %v1124 = vunpack.c.l.b16 %v478
      %v1125 = vunpack.c.h.b16 %v478
      %v1126 = vunpack.c.l.b16 %v479
      %v1127 = vunpack.c.h.b16 %v479
      %v1128 = vunpack.c.l.b16 %v480
      %v1129 = vunpack.c.h.b16 %v480
      %v1130 = vunpack.c.l.b16 %v481
      %v1131 = vunpack.c.h.b16 %v481
      %v1132 = vunpack.c.l.b16 %v482
      %v1133 = vunpack.c.h.b16 %v482
      %v1134 = vunpack.c.l.b16 %v483
      %v1135 = vunpack.c.h.b16 %v483
      %v1136 = vunpack.c.l.b16 %v484
      %v1137 = vunpack.c.h.b16 %v484
      %v1138 = vunpack.c.l.b16 %v485
      %v1139 = vunpack.c.h.b16 %v485
      %v1140 = vunpack.c.l.b16 %v486
      %v1141 = vunpack.c.h.b16 %v486
      %v1142 = vunpack.c.l.b16 %v487
      %v1143 = vunpack.c.h.b16 %v487
      %v1144 = vunpack.c.l.b16 %v488
      %v1145 = vunpack.c.h.b16 %v488
      %v1146 = vunpack.c.l.b16 %v489
      %v1147 = vunpack.c.h.b16 %v489
      %v1148 = vpack.c.b16 %v768, %v764
      %v1149 = vpack.c.b16 %v769, %v765
      %v1150 = vpack.c.b16 %v770, %v766
      %v1151 = vpack.c.b16 %v771, %v767
      %v1152 = vpack.c.b16 %v776, %v772
      %v1153 = vpack.c.b16 %v777, %v773
      %v1154 = vpack.c.b16 %v778, %v774
      %v1155 = vpack.c.b16 %v779, %v775
      %v1156 = vpack.c.b16 %v784, %v780
      %v1157 = vpack.c.b16 %v785, %v781
      %v1158 = vpack.c.b16 %v786, %v782
      %v1159 = vpack.c.b16 %v787, %v783
      %v1160 = vpack.c.b16 %v792, %v788
      %v1161 = vpack.c.b16 %v793, %v789
      %v1162 = vpack.c.b16 %v794, %v790
      %v1163 = vpack.c.b16 %v795, %v791
      %v1164 = vpack.c.b16 %v800, %v796
      %v1165 = vpack.c.b16 %v801, %v797
      %v1166 = vpack.c.b16 %v802, %v798
      %v1167 = vpack.c.b16 %v803, %v799
      %v1168 = vpack.c.b16 %v808, %v804
      %v1169 = vpack.c.b16 %v809, %v805
      %v1170 = vpack.c.b16 %v810, %v806
      %v1171 = vpack.c.b16 %v811, %v807
      %v1172 = vpack.c.b16 %v816, %v812
      %v1173 = vpack.c.b16 %v817, %v813
      %v1174 = vpack.c.b16 %v818, %v814
      %v1175 = vpack.c.b16 %v819, %v815
      %v1176 = vpack.c.b16 %v824, %v820
      %v1177 = vpack.c.b16 %v825, %v821
      %v1178 = vpack.c.b16 %v826, %v822
      %v1179 = vpack.c.b16 %v827, %v823
      %v1180 = vpack.c.b16 %v832, %v828
      %v1181 = vpack.c.b16 %v833, %v829
      %v1182 = vpack.c.b16 %v834, %v830
      %v1183 = vpack.c.b16 %v835, %v831
      %v1184 = vpack.c.b16 %v840, %v836
      %v1185 = vpack.c.b16 %v841, %v837
      %v1186 = vpack.c.b16 %v842, %v838
      %v1187 = vpack.c.b16 %v843, %v839
      %v1188 = vpack.c.b16 %v848, %v844
      %v1189 = vpack.c.b16 %v849, %v845
      %v1190 = vpack.c.b16 %v850, %v846
      %v1191 = vpack.c.b16 %v851, %v847
      %v1192 = vpack.c.b16 %v856, %v852
      %v1193 = vpack.c.b16 %v857, %v853
      %v1194 = vpack.c.b16 %v858, %v854
      %v1195 = vpack.c.b16 %v859, %v855
      %v1196 = vpack.c.b16 %v864, %v860
      %v1197 = vpack.c.b16 %v865, %v861
      %v1198 = vpack.c.b16 %v866, %v862
      %v1199 = vpack.c.b16 %v867, %v863
      %v1200 = vpack.c.b16 %v872, %v868
      %v1201 = vpack.c.b16 %v873, %v869
      %v1202 = vpack.c.b16 %v874, %v870
      %v1203 = vpack.c.b16 %v875, %v871
      %v1204 = vpack.c.b16 %v880, %v876
      %v1205 = vpack.c.b16 %v881, %v877
      %v1206 = vpack.c.b16 %v882, %v878
      %v1207 = vpack.c.b16 %v883, %v879
      %v1208 = vpack.c.b16 %v888, %v884
      %v1209 = vpack.c.b16 %v889, %v885
      %v1210 = vpack.c.b16 %v890, %v886
      %v1211 = vpack.c.b16 %v891, %v887
      %v1212 = vpack.c.b16 %v896, %v892
      %v1213 = vpack.c.b16 %v897, %v893
      %v1214 = vpack.c.b16 %v898, %v894
      %v1215 = vpack.c.b16 %v899, %v895
      %v1216 = vpack.c.b16 %v904, %v900
      %v1217 = vpack.c.b16 %v905, %v901
      %v1218 = vpack.c.b16 %v906, %v902
      %v1219 = vpack.c.b16 %v907, %v903
      %v1220 = vpack.c.b16 %v912, %v908
      %v1221 = vpack.c.b16 %v913, %v909
      %v1222 = vpack.c.b16 %v914, %v910
      %v1223 = vpack.c.b16 %v915, %v911
      %v1224 = vpack.c.b16 %v920, %v916
      %v1225 = vpack.c.b16 %v921, %v917
      %v1226 = vpack.c.b16 %v922, %v918
      %v1227 = vpack.c.b16 %v923, %v919
      %v1228 = vpack.c.b16 %v928, %v924
      %v1229 = vpack.c.b16 %v929, %v925
      %v1230 = vpack.c.b16 %v930, %v926
      %v1231 = vpack.c.b16 %v931, %v927
      %v1232 = vpack.c.b16 %v936, %v932
      %v1233 = vpack.c.b16 %v937, %v933
      %v1234 = vpack.c.b16 %v938, %v934
      %v1235 = vpack.c.b16 %v939, %v935
      %v1236 = vpack.c.b16 %v944, %v940
      %v1237 = vpack.c.b16 %v945, %v941
      %v1238 = vpack.c.b16 %v946, %v942
      %v1239 = vpack.c.b16 %v947, %v943
      %v1240 = vpack.c.b16 %v952, %v948
      %v1241 = vpack.c.b16 %v953, %v949
      %v1242 = vpack.c.b16 %v954, %v950
      %v1243 = vpack.c.b16 %v955, %v951
      %v1244 = vpack.c.b16 %v960, %v956
      %v1245 = vpack.c.b16 %v961, %v957
      %v1246 = vpack.c.b16 %v962, %v958
      %v1247 = vpack.c.b16 %v963, %v959
      %v1248 = vpack.c.b16 %v968, %v964
      %v1249 = vpack.c.b16 %v969, %v965
      %v1250 = vpack.c.b16 %v970, %v966
      %v1251 = vpack.c.b16 %v971, %v967
      %v1252 = vpack.c.b16 %v976, %v972
      %v1253 = vpack.c.b16 %v977, %v973
      %v1254 = vpack.c.b16 %v978, %v974
      %v1255 = vpack.c.b16 %v979, %v975
      %v1256 = vpack.c.b16 %v984, %v980
      %v1257 = vpack.c.b16 %v985, %v981
      %v1258 = vpack.c.b16 %v986, %v982
      %v1259 = vpack.c.b16 %v987, %v983
      %v1260 = vpack.c.b16 %v992, %v988
      %v1261 = vpack.c.b16 %v993, %v989
      %v1262 = vpack.c.b16 %v994, %v990
      %v1263 = vpack.c.b16 %v995, %v991
      %v1264 = vpack.c.b16 %v1000, %v996
      %v1265 = vpack.c.b16 %v1001, %v997
      %v1266 = vpack.c.b16 %v1002, %v998
      %v1267 = vpack.c.b16 %v1003, %v999
      %v1268 = vpack.c.b16 %v1008, %v1004
      %v1269 = vpack.c.b16 %v1009, %v1005
      %v1270 = vpack.c.b16 %v1010, %v1006
      %v1271 = vpack.c.b16 %v1011, %v1007
      %v1272 = vpack.c.b16 %v1016, %v1012
      %v1273 = vpack.c.b16 %v1017, %v1013
      %v1274 = vpack.c.b16 %v1018, %v1014
      %v1275 = vpack.c.b16 %v1019, %v1015
      %v1276 = vpack.c.b16 %v1024, %v1020
      %v1277 = vpack.c.b16 %v1025, %v1021
      %v1278 = vpack.c.b16 %v1026, %v1022
      %v1279 = vpack.c.b16 %v1027, %v1023
      %v1280 = vpack.c.b16 %v1032, %v1028
      %v1281 = vpack.c.b16 %v1033, %v1029
      %v1282 = vpack.c.b16 %v1034, %v1030
      %v1283 = vpack.c.b16 %v1035, %v1031
      %v1284 = vpack.c.b16 %v1040, %v1036
      %v1285 = vpack.c.b16 %v1041, %v1037
      %v1286 = vpack.c.b16 %v1042, %v1038
      %v1287 = vpack.c.b16 %v1043, %v1039
      %v1288 = vpack.c.b16 %v1048, %v1044
      %v1289 = vpack.c.b16 %v1049, %v1045
      %v1290 = vpack.c.b16 %v1050, %v1046
      %v1291 = vpack.c.b16 %v1051, %v1047
      %v1292 = vpack.c.b16 %v1056, %v1052
      %v1293 = vpack.c.b16 %v1057, %v1053
      %v1294 = vpack.c.b16 %v1058, %v1054
      %v1295 = vpack.c.b16 %v1059, %v1055
      %v1296 = vpack.c.b16 %v1064, %v1060
      %v1297 = vpack.c.b16 %v1065, %v1061
      %v1298 = vpack.c.b16 %v1066, %v1062
      %v1299 = vpack.c.b16 %v1067, %v1063
      %v1300 = vpack.c.b16 %v1072, %v1068
      %v1301 = vpack.c.b16 %v1073, %v1069
      %v1302 = vpack.c.b16 %v1074, %v1070
      %v1303 = vpack.c.b16 %v1075, %v1071
      %v1304 = vpack.c.b16 %v1080, %v1076
      %v1305 = vpack.c.b16 %v1081, %v1077
      %v1306 = vpack.c.b16 %v1082, %v1078
      %v1307 = vpack.c.b16 %v1083, %v1079
      %v1308 = vpack.c.b16 %v1088, %v1084
      %v1309 = vpack.c.b16 %v1089, %v1085
      %v1310 = vpack.c.b16 %v1090, %v1086
      %v1311 = vpack.c.b16 %v1091, %v1087
      %v1312 = vpack.c.b16 %v1096, %v1092
      %v1313 = vpack.c.b16 %v1097, %v1093
      %v1314 = vpack.c.b16 %v1098, %v1094
      %v1315 = vpack.c.b16 %v1099, %v1095
      %v1316 = vpack.c.b16 %v1104, %v1100
      %v1317 = vpack.c.b16 %v1105, %v1101
      %v1318 = vpack.c.b16 %v1106, %v1102
      %v1319 = vpack.c.b16 %v1107, %v1103
      %v1320 = vpack.c.b16 %v1112, %v1108
      %v1321 = vpack.c.b16 %v1113, %v1109
      %v1322 = vpack.c.b16 %v1114, %v1110
      %v1323 = vpack.c.b16 %v1115, %v1111
      %v1324 = vpack.c.b16 %v1120, %v1116
      %v1325 = vpack.c.b16 %v1121, %v1117
      %v1326 = vpack.c.b16 %v1122, %v1118
      %v1327 = vpack.c.b16 %v1123, %v1119
      %v1328 = vpack.c.b16 %v1128, %v1124
      %v1329 = vpack.c.b16 %v1129, %v1125
      %v1330 = vpack.c.b16 %v1130, %v1126
      %v1331 = vpack.c.b16 %v1131, %v1127
      %v1332 = vpack.c.b16 %v1136, %v1132
      %v1333 = vpack.c.b16 %v1137, %v1133
      %v1334 = vpack.c.b16 %v1138, %v1134
      %v1335 = vpack.c.b16 %v1139, %v1135
      %v1336 = vpack.c.b16 %v1144, %v1140
      %v1337 = vpack.c.b16 %v1145, %v1141
      %v1338 = vpack.c.b16 %v1146, %v1142
      %v1339 = vpack.c.b16 %v1147, %v1143
      %1532 = vmatprep.subr.bf16.mxu0 %v1149
      %1533 = vmatpush1.bf16.msra.mxu0 %v1148
      %1534 = vmatprep.subr.bf16.mxu0 %v1153
      %1535 = vmatpush1.bf16.msra.mxu0 %v1152
      %1536 = vmatprep.subr.bf16.mxu0 %v1157
      %1537 = vmatpush1.bf16.msra.mxu0 %v1156
      %1538 = vmatprep.subr.bf16.mxu0 %v1161
      %1539 = vmatpush1.bf16.msra.mxu0 %v1160
      %1540 = vmatprep.subr.bf16.mxu0 %v1165
      %1541 = vmatpush1.bf16.msra.mxu0 %v1164
      %1542 = vmatprep.subr.bf16.mxu0 %v1169
      %1543 = vmatpush1.bf16.msra.mxu0 %v1168
      %1544 = vmatprep.subr.bf16.mxu0 %v1173
      %1545 = vmatpush1.bf16.msra.mxu0 %v1172
      %1546 = vmatprep.subr.bf16.mxu0 %v1177
      %1547 = vmatpush1.bf16.msra.mxu0 %v1176
      %1548 = vmatprep.subr.bf16.mxu0 %v1181
      %1549 = vmatpush1.bf16.msra.mxu0 %v1180
      %1550 = vmatprep.subr.bf16.mxu0 %v1185
      %1551 = vmatpush1.bf16.msra.mxu0 %v1184
      %1552 = vmatprep.subr.bf16.mxu0 %v1189
      %1553 = vmatpush1.bf16.msra.mxu0 %v1188
      %1554 = vmatprep.subr.bf16.mxu0 %v1193
      %1555 = vmatpush1.bf16.msra.mxu0 %v1192
      %1556 = vmatprep.subr.bf16.mxu0 %v1197
      %1557 = vmatpush1.bf16.msra.mxu0 %v1196
      %1558 = vmatprep.subr.bf16.mxu0 %v1201
      %1559 = vmatpush1.bf16.msra.mxu0 %v1200
      %1560 = vmatprep.subr.bf16.mxu0 %v1205
      %1561 = vmatpush1.bf16.msra.mxu0 %v1204
      %1562 = vmatprep.subr.bf16.mxu0 %v1209
      %1563 = vmatpush1.bf16.msra.mxu0 %v1208
      %1564 = vmatprep.mubr.bf16.mxu0 %v549
      %1565 = vmatmul.mubr.bf16.gmra.mrb[0].mxu0 %v548
      %v1566 = vpop.f32.mrb[0].mxu0
      %v1567 = vadd.f32 %v495, %v1566
      %v1568 = vpop.f32.mrb[0].mxu0
      %v1569 = vadd.f32 %v499, %v1568
      %v1570 = vpop.f32.mrb[0].mxu0
      %v1571 = vadd.f32 %v495, %v1570
      %v1572 = vpop.f32.mrb[0].mxu0
      %v1573 = vadd.f32 %v499, %v1572
      %1574 = vmatprep.mubr.bf16.mxu0 %v555
      %1575 = vmatmul.mubr.bf16.gmra.mrb[0].mxu0 %v554
      %v1576 = vpop.f32.mrb[0].mxu0
      %v1577 = vadd.f32 %v495, %v1576
      %v1578 = vpop.f32.mrb[0].mxu0
      %v1579 = vadd.f32 %v499, %v1578
      %v1580 = vpop.f32.mrb[0].mxu0
      %v1581 = vadd.f32 %v495, %v1580
      %v1582 = vpop.f32.mrb[0].mxu0
      %v1583 = vadd.f32 %v499, %v1582
      %1584 = vdwg.mxu0
      %1585 = vmatprep.subr.bf16.mxu0 %v1213
      %1586 = vmatpush1.bf16.msra.mxu0 %v1212
      %1587 = vmatprep.subr.bf16.mxu0 %v1217
      %1588 = vmatpush1.bf16.msra.mxu0 %v1216
      %1589 = vmatprep.subr.bf16.mxu0 %v1221
      %1590 = vmatpush1.bf16.msra.mxu0 %v1220
      %1591 = vmatprep.subr.bf16.mxu0 %v1225
      %1592 = vmatpush1.bf16.msra.mxu0 %v1224
      %1593 = vmatprep.subr.bf16.mxu0 %v1229
      %1594 = vmatpush1.bf16.msra.mxu0 %v1228
      %1595 = vmatprep.subr.bf16.mxu0 %v1233
      %1596 = vmatpush1.bf16.msra.mxu0 %v1232
      %1597 = vmatprep.subr.bf16.mxu0 %v1237
      %1598 = vmatpush1.bf16.msra.mxu0 %v1236
      %1599 = vmatprep.subr.bf16.mxu0 %v1241
      %1600 = vmatpush1.bf16.msra.mxu0 %v1240
      %1601 = vmatprep.subr.bf16.mxu0 %v1245
      %1602 = vmatpush1.bf16.msra.mxu0 %v1244
      %1603 = vmatprep.subr.bf16.mxu0 %v1249
      %1604 = vmatpush1.bf16.msra.mxu0 %v1248
      %1605 = vmatprep.subr.bf16.mxu0 %v1253
      %1606 = vmatpush1.bf16.msra.mxu0 %v1252
      %1607 = vmatprep.subr.bf16.mxu0 %v1257
      %1608 = vmatpush1.bf16.msra.mxu0 %v1256
      %1609 = vmatprep.subr.bf16.mxu0 %v1261
      %1610 = vmatpush1.bf16.msra.mxu0 %v1260
      %1611 = vmatprep.subr.bf16.mxu0 %v1265
      %1612 = vmatpush1.bf16.msra.mxu0 %v1264
      %1613 = vmatprep.subr.bf16.mxu0 %v1269
      %1614 = vmatpush1.bf16.msra.mxu0 %v1268
      %1615 = vmatprep.subr.bf16.mxu0 %v1273
      %1616 = vmatpush1.bf16.msra.mxu0 %v1272
      %1617 = vmatprep.mubr.bf16.mxu0 %v551
      %1618 = vmatmul.mubr.bf16.gmra.mrb[0].mxu0 %v550
      %v1619 = vpop.f32.mrb[0].mxu0
      %v1620 = vadd.f32 %v1567, %v1619
      %v1621 = vpop.f32.mrb[0].mxu0
      %v1622 = vadd.f32 %v1569, %v1621
      %v1623 = vpop.f32.mrb[0].mxu0
      %v1624 = vadd.f32 %v1571, %v1623
      %v1625 = vpop.f32.mrb[0].mxu0
      %v1626 = vadd.f32 %v1573, %v1625
      %1627 = vmatprep.mubr.bf16.mxu0 %v557
      %1628 = vmatmul.mubr.bf16.gmra.mrb[0].mxu0 %v556
      %v1629 = vpop.f32.mrb[0].mxu0
      %v1630 = vadd.f32 %v1577, %v1629
      %v1631 = vpop.f32.mrb[0].mxu0
      %v1632 = vadd.f32 %v1579, %v1631
      %v1633 = vpop.f32.mrb[0].mxu0
      %v1634 = vadd.f32 %v1581, %v1633
      %v1635 = vpop.f32.mrb[0].mxu0
      %v1636 = vadd.f32 %v1583, %v1635
      %1637 = vdwg.mxu0
      %1638 = vmatprep.subr.bf16.mxu0 %v1277
      %1639 = vmatpush1.bf16.msra.mxu0 %v1276
      %1640 = vmatprep.subr.bf16.mxu0 %v1281
      %1641 = vmatpush1.bf16.msra.mxu0 %v1280
      %1642 = vmatprep.subr.bf16.mxu0 %v1285
      %1643 = vmatpush1.bf16.msra.mxu0 %v1284
      %1644 = vmatprep.subr.bf16.mxu0 %v1289
      %1645 = vmatpush1.bf16.msra.mxu0 %v1288
      %1646 = vmatprep.subr.bf16.mxu0 %v1293
      %1647 = vmatpush1.bf16.msra.mxu0 %v1292
      %1648 = vmatprep.subr.bf16.mxu0 %v1297
      %1649 = vmatpush1.bf16.msra.mxu0 %v1296
      %1650 = vmatprep.subr.bf16.mxu0 %v1301
      %1651 = vmatpush1.bf16.msra.mxu0 %v1300
      %1652 = vmatprep.subr.bf16.mxu0 %v1305
      %1653 = vmatpush1.bf16.msra.mxu0 %v1304
      %1654 = vmatprep.subr.bf16.mxu0 %v1309
      %1655 = vmatpush1.bf16.msra.mxu0 %v1308
      %1656 = vmatprep.subr.bf16.mxu0 %v1313
      %1657 = vmatpush1.bf16.msra.mxu0 %v1312
      %1658 = vmatprep.subr.bf16.mxu0 %v1317
      %1659 = vmatpush1.bf16.msra.mxu0 %v1316
      %1660 = vmatprep.subr.bf16.mxu0 %v1321
      %1661 = vmatpush1.bf16.msra.mxu0 %v1320
      %1662 = vmatprep.subr.bf16.mxu0 %v1325
      %1663 = vmatpush1.bf16.msra.mxu0 %v1324
      %1664 = vmatprep.subr.bf16.mxu0 %v1329
      %1665 = vmatpush1.bf16.msra.mxu0 %v1328
      %1666 = vmatprep.subr.bf16.mxu0 %v1333
      %1667 = vmatpush1.bf16.msra.mxu0 %v1332
      %1668 = vmatprep.subr.bf16.mxu0 %v1337
      %1669 = vmatpush1.bf16.msra.mxu0 %v1336
      %1670 = vmatprep.mubr.bf16.mxu0 %v553
      %1671 = vmatmul.mubr.bf16.gmra.mrb[0].mxu0 %v552
      %v1672 = vpop.f32.mrb[0].mxu0
      %v1673 = vadd.f32 %v1620, %v1672
      %v1674 = vpop.f32.mrb[0].mxu0
      %v1675 = vadd.f32 %v1622, %v1674
      %v1676 = vpop.f32.mrb[0].mxu0
      %v1677 = vadd.f32 %v1624, %v1676
      %v1678 = vpop.f32.mrb[0].mxu0
      %v1679 = vadd.f32 %v1626, %v1678
      %1680 = vmatprep.mubr.bf16.mxu0 %v559
      %1681 = vmatmul.mubr.bf16.gmra.mrb[0].mxu0 %v558
      %v1682 = vpop.f32.mrb[0].mxu0
      %v1683 = vadd.f32 %v1630, %v1682
      %v1684 = vpop.f32.mrb[0].mxu0
      %v1685 = vadd.f32 %v1632, %v1684
      %v1686 = vpop.f32.mrb[0].mxu0
      %v1687 = vadd.f32 %v1634, %v1686
      %v1688 = vpop.f32.mrb[0].mxu0
      %v1689 = vadd.f32 %v1636, %v1688
      %1690 = vdwg.mxu0
      %1691 = vmatprep.subr.bf16.mxu0 %v1151
      %1692 = vmatpush1.bf16.msra.mxu0 %v1150
      %1693 = vmatprep.subr.bf16.mxu0 %v1155
      %1694 = vmatpush1.bf16.msra.mxu0 %v1154
      %1695 = vmatprep.subr.bf16.mxu0 %v1159
      %1696 = vmatpush1.bf16.msra.mxu0 %v1158
      %1697 = vmatprep.subr.bf16.mxu0 %v1163
      %1698 = vmatpush1.bf16.msra.mxu0 %v1162
      %1699 = vmatprep.subr.bf16.mxu0 %v1167
      %1700 = vmatpush1.bf16.msra.mxu0 %v1166
      %1701 = vmatprep.subr.bf16.mxu0 %v1171
      %1702 = vmatpush1.bf16.msra.mxu0 %v1170
      %1703 = vmatprep.subr.bf16.mxu0 %v1175
      %1704 = vmatpush1.bf16.msra.mxu0 %v1174
      %1705 = vmatprep.subr.bf16.mxu0 %v1179
      %1706 = vmatpush1.bf16.msra.mxu0 %v1178
      %1707 = vmatprep.subr.bf16.mxu0 %v1183
      %1708 = vmatpush1.bf16.msra.mxu0 %v1182
      %1709 = vmatprep.subr.bf16.mxu0 %v1187
      %1710 = vmatpush1.bf16.msra.mxu0 %v1186
      %1711 = vmatprep.subr.bf16.mxu0 %v1191
      %1712 = vmatpush1.bf16.msra.mxu0 %v1190
      %1713 = vmatprep.subr.bf16.mxu0 %v1195
      %1714 = vmatpush1.bf16.msra.mxu0 %v1194
      %1715 = vmatprep.subr.bf16.mxu0 %v1199
      %1716 = vmatpush1.bf16.msra.mxu0 %v1198
      %1717 = vmatprep.subr.bf16.mxu0 %v1203
      %1718 = vmatpush1.bf16.msra.mxu0 %v1202
      %1719 = vmatprep.subr.bf16.mxu0 %v1207
      %1720 = vmatpush1.bf16.msra.mxu0 %v1206
      %1721 = vmatprep.subr.bf16.mxu0 %v1211
      %1722 = vmatpush1.bf16.msra.mxu0 %v1210
      %1723 = vmatprep.mubr.bf16.mxu0 %v549
      %1724 = vmatmul.mubr.bf16.gmra.mrb[0].mxu0 %v548
      %v1725 = vpop.f32.mrb[0].mxu0
      %v1726 = vadd.f32 %v503, %v1725
      %v1727 = vpop.f32.mrb[0].mxu0
      %v1728 = vadd.f32 %v507, %v1727
      %v1729 = vpop.f32.mrb[0].mxu0
      %v1730 = vadd.f32 %v503, %v1729
      %v1731 = vpop.f32.mrb[0].mxu0
      %v1732 = vadd.f32 %v507, %v1731
      %1733 = vmatprep.mubr.bf16.mxu0 %v555
      %1734 = vmatmul.mubr.bf16.gmra.mrb[0].mxu0 %v554
      %v1735 = vpop.f32.mrb[0].mxu0
      %v1736 = vadd.f32 %v503, %v1735
      %v1737 = vpop.f32.mrb[0].mxu0
      %v1738 = vadd.f32 %v507, %v1737
      %v1739 = vpop.f32.mrb[0].mxu0
      %v1740 = vadd.f32 %v503, %v1739
      %v1741 = vpop.f32.mrb[0].mxu0
      %v1742 = vadd.f32 %v507, %v1741
      %1743 = vdwg.mxu0
      %1744 = vmatprep.subr.bf16.mxu0 %v1215
      %1745 = vmatpush1.bf16.msra.mxu0 %v1214
      %1746 = vmatprep.subr.bf16.mxu0 %v1219
      %1747 = vmatpush1.bf16.msra.mxu0 %v1218
      %1748 = vmatprep.subr.bf16.mxu0 %v1223
      %1749 = vmatpush1.bf16.msra.mxu0 %v1222
      %1750 = vmatprep.subr.bf16.mxu0 %v1227
      %1751 = vmatpush1.bf16.msra.mxu0 %v1226
      %1752 = vmatprep.subr.bf16.mxu0 %v1231
      %1753 = vmatpush1.bf16.msra.mxu0 %v1230
      %1754 = vmatprep.subr.bf16.mxu0 %v1235
      %1755 = vmatpush1.bf16.msra.mxu0 %v1234
      %1756 = vmatprep.subr.bf16.mxu0 %v1239
      %1757 = vmatpush1.bf16.msra.mxu0 %v1238
      %1758 = vmatprep.subr.bf16.mxu0 %v1243
      %1759 = vmatpush1.bf16.msra.mxu0 %v1242
      %1760 = vmatprep.subr.bf16.mxu0 %v1247
      %1761 = vmatpush1.bf16.msra.mxu0 %v1246
      %1762 = vmatprep.subr.bf16.mxu0 %v1251
      %1763 = vmatpush1.bf16.msra.mxu0 %v1250
      %1764 = vmatprep.subr.bf16.mxu0 %v1255
      %1765 = vmatpush1.bf16.msra.mxu0 %v1254
      %1766 = vmatprep.subr.bf16.mxu0 %v1259
      %1767 = vmatpush1.bf16.msra.mxu0 %v1258
      %1768 = vmatprep.subr.bf16.mxu0 %v1263
      %1769 = vmatpush1.bf16.msra.mxu0 %v1262
      %1770 = vmatprep.subr.bf16.mxu0 %v1267
      %1771 = vmatpush1.bf16.msra.mxu0 %v1266
      %1772 = vmatprep.subr.bf16.mxu0 %v1271
      %1773 = vmatpush1.bf16.msra.mxu0 %v1270
      %1774 = vmatprep.subr.bf16.mxu0 %v1275
      %1775 = vmatpush1.bf16.msra.mxu0 %v1274
      %1776 = vmatprep.mubr.bf16.mxu0 %v551
      %1777 = vmatmul.mubr.bf16.gmra.mrb[0].mxu0 %v550
      %v1778 = vpop.f32.mrb[0].mxu0
      %v1779 = vadd.f32 %v1726, %v1778
      %v1780 = vpop.f32.mrb[0].mxu0
      %v1781 = vadd.f32 %v1728, %v1780
      %v1782 = vpop.f32.mrb[0].mxu0
      %v1783 = vadd.f32 %v1730, %v1782
      %v1784 = vpop.f32.mrb[0].mxu0
      %v1785 = vadd.f32 %v1732, %v1784
      %1786 = vmatprep.mubr.bf16.mxu0 %v557
      %1787 = vmatmul.mubr.bf16.gmra.mrb[0].mxu0 %v556
      %v1788 = vpop.f32.mrb[0].mxu0
      %v1789 = vadd.f32 %v1736, %v1788
      %v1790 = vpop.f32.mrb[0].mxu0
      %v1791 = vadd.f32 %v1738, %v1790
      %v1792 = vpop.f32.mrb[0].mxu0
      %v1793 = vadd.f32 %v1740, %v1792
      %v1794 = vpop.f32.mrb[0].mxu0
      %v1795 = vadd.f32 %v1742, %v1794
      %1796 = vdwg.mxu0
      %1797 = vmatprep.subr.bf16.mxu0 %v1279
      %1798 = vmatpush1.bf16.msra.mxu0 %v1278
      %1799 = vmatprep.subr.bf16.mxu0 %v1283
      %1800 = vmatpush1.bf16.msra.mxu0 %v1282
      %1801 = vmatprep.subr.bf16.mxu0 %v1287
      %1802 = vmatpush1.bf16.msra.mxu0 %v1286
      %1803 = vmatprep.subr.bf16.mxu0 %v1291
      %1804 = vmatpush1.bf16.msra.mxu0 %v1290
      %1805 = vmatprep.subr.bf16.mxu0 %v1295
      %1806 = vmatpush1.bf16.msra.mxu0 %v1294
      %1807 = vmatprep.subr.bf16.mxu0 %v1299
      %1808 = vmatpush1.bf16.msra.mxu0 %v1298
      %1809 = vmatprep.subr.bf16.mxu0 %v1303
      %1810 = vmatpush1.bf16.msra.mxu0 %v1302
      %1811 = vmatprep.subr.bf16.mxu0 %v1307
      %1812 = vmatpush1.bf16.msra.mxu0 %v1306
      %1813 = vmatprep.subr.bf16.mxu0 %v1311
      %1814 = vmatpush1.bf16.msra.mxu0 %v1310
      %1815 = vmatprep.subr.bf16.mxu0 %v1315
      %1816 = vmatpush1.bf16.msra.mxu0 %v1314
      %1817 = vmatprep.subr.bf16.mxu0 %v1319
      %1818 = vmatpush1.bf16.msra.mxu0 %v1318
      %1819 = vmatprep.subr.bf16.mxu0 %v1323
      %1820 = vmatpush1.bf16.msra.mxu0 %v1322
      %1821 = vmatprep.subr.bf16.mxu0 %v1327
      %1822 = vmatpush1.bf16.msra.mxu0 %v1326
      %1823 = vmatprep.subr.bf16.mxu0 %v1331
      %1824 = vmatpush1.bf16.msra.mxu0 %v1330
      %1825 = vmatprep.subr.bf16.mxu0 %v1335
      %1826 = vmatpush1.bf16.msra.mxu0 %v1334
      %1827 = vmatprep.subr.bf16.mxu0 %v1339
      %1828 = vmatpush1.bf16.msra.mxu0 %v1338
      %1829 = vmatprep.mubr.bf16.mxu0 %v553
      %1830 = vmatmul.mubr.bf16.gmra.mrb[0].mxu0 %v552
      %v1831 = vpop.f32.mrb[0].mxu0
      %v1832 = vadd.f32 %v1779, %v1831
      %v1833 = vpop.f32.mrb[0].mxu0
      %v1834 = vadd.f32 %v1781, %v1833
      %v1835 = vpop.f32.mrb[0].mxu0
      %v1836 = vadd.f32 %v1783, %v1835
      %v1837 = vpop.f32.mrb[0].mxu0
      %v1838 = vadd.f32 %v1785, %v1837
      %1839 = vmatprep.mubr.bf16.mxu0 %v559
      %1840 = vmatmul.mubr.bf16.gmra.mrb[0].mxu0 %v558
      %v1841 = vpop.f32.mrb[0].mxu0
      %v1842 = vadd.f32 %v1789, %v1841
      %v1843 = vpop.f32.mrb[0].mxu0
      %v1844 = vadd.f32 %v1791, %v1843
      %v1845 = vpop.f32.mrb[0].mxu0
      %v1846 = vadd.f32 %v1793, %v1845
      %v1847 = vpop.f32.mrb[0].mxu0
      %v1848 = vadd.f32 %v1795, %v1847
      %1849 = vdwg.mxu0
      %v1850 = vpack.c.bf16 %v1677, %v1673
      %v1851 = vpack.c.bf16 %v1679, %v1675
      %v1852 = vpack.c.bf16 %v1836, %v1832
      %v1853 = vpack.c.bf16 %v1838, %v1834
      %v1854 = vpack.c.bf16 %v1687, %v1683
      %v1855 = vpack.c.bf16 %v1689, %v1685
      %v1856 = vpack.c.bf16 %v1846, %v1842
      %v1857 = vpack.c.bf16 %v1848, %v1844
      %v1858 = vld [vmem:[%s3] sm:$0xff]
      %v1859 = vld [vmem:[%s3 + $0x8] sm:$0xff]
      %v1860 = vld [vmem:[%s3 + $0x10] sm:$0xff]
      %v1861 = vld [vmem:[%s3 + $0x18] sm:$0xff]
      %v1862 = vld [vmem:[%s3 + $0x20] sm:$0xff]
      %v1863 = vld [vmem:[%s3 + $0x28] sm:$0xff]
      %v1864 = vld [vmem:[%s3 + $0x30] sm:$0xff]
      %v1865 = vld [vmem:[%s3 + $0x38] sm:$0xff]
      %v1866 = vld [vmem:[%s3 + $0x40] sm:$0xff]
      %v1867 = vld [vmem:[%s3 + $0x48] sm:$0xff]
      %v1868 = vld [vmem:[%s3 + $0x50] sm:$0xff]
      %v1869 = vld [vmem:[%s3 + $0x58] sm:$0xff]
      %v1870 = vld [vmem:[%s3 + $0x60] sm:$0xff]
      %v1871 = vld [vmem:[%s3 + $0x68] sm:$0xff]
      %v1872 = vld [vmem:[%s3 + $0x70] sm:$0xff]
      %v1873 = vld [vmem:[%s3 + $0x78] sm:$0xff]
      %v1874 = vld [vmem:[%s3 + $0x80] sm:$0xff]
      %v1875 = vld [vmem:[%s3 + $0x88] sm:$0xff]
      %v1876 = vld [vmem:[%s3 + $0x90] sm:$0xff]
      %v1877 = vld [vmem:[%s3 + $0x98] sm:$0xff]
      %v1878 = vld [vmem:[%s3 + $0xa0] sm:$0xff]
      %v1879 = vld [vmem:[%s3 + $0xa8] sm:$0xff]
      %v1880 = vld [vmem:[%s3 + $0xb0] sm:$0xff]
      %v1881 = vld [vmem:[%s3 + $0xb8] sm:$0xff]
      %v1882 = vld [vmem:[%s3 + $0xc0] sm:$0xff]
      %v1883 = vld [vmem:[%s3 + $0xc8] sm:$0xff]
      %v1884 = vld [vmem:[%s3 + $0xd0] sm:$0xff]
      %v1885 = vld [vmem:[%s3 + $0xd8] sm:$0xff]
      %v1886 = vld [vmem:[%s3 + $0xe0] sm:$0xff]
      %v1887 = vld [vmem:[%s3 + $0xe8] sm:$0xff]
      %v1888 = vld [vmem:[%s3 + $0xf0] sm:$0xff]
      %v1889 = vld [vmem:[%s3 + $0xf8] sm:$0xff]
      %v1890 = vld [vmem:[%s3 + $0x100] sm:$0xff]
      %v1891 = vld [vmem:[%s3 + $0x108] sm:$0xff]
      %v1892 = vld [vmem:[%s3 + $0x110] sm:$0xff]
      %v1893 = vld [vmem:[%s3 + $0x118] sm:$0xff]
      %v1894 = vld [vmem:[%s3 + $0x120] sm:$0xff]
      %v1895 = vld [vmem:[%s3 + $0x128] sm:$0xff]
      %v1896 = vld [vmem:[%s3 + $0x130] sm:$0xff]
      %v1897 = vld [vmem:[%s3 + $0x138] sm:$0xff]
      %v1898 = vld [vmem:[%s3 + $0x140] sm:$0xff]
      %v1899 = vld [vmem:[%s3 + $0x148] sm:$0xff]
      %v1900 = vld [vmem:[%s3 + $0x150] sm:$0xff]
      %v1901 = vld [vmem:[%s3 + $0x158] sm:$0xff]
      %v1902 = vld [vmem:[%s3 + $0x160] sm:$0xff]
      %v1903 = vld [vmem:[%s3 + $0x168] sm:$0xff]
      %v1904 = vld [vmem:[%s3 + $0x170] sm:$0xff]
      %v1905 = vld [vmem:[%s3 + $0x178] sm:$0xff]
      %v1906 = vld [vmem:[%s3 + $0x180] sm:$0xff]
      %v1907 = vld [vmem:[%s3 + $0x188] sm:$0xff]
      %v1908 = vld [vmem:[%s3 + $0x190] sm:$0xff]
      %v1909 = vld [vmem:[%s3 + $0x198] sm:$0xff]
      %v1910 = vld [vmem:[%s3 + $0x1a0] sm:$0xff]
      %v1911 = vld [vmem:[%s3 + $0x1a8] sm:$0xff]
      %v1912 = vld [vmem:[%s3 + $0x1b0] sm:$0xff]
      %v1913 = vld [vmem:[%s3 + $0x1b8] sm:$0xff]
      %v1914 = vld [vmem:[%s3 + $0x1c0] sm:$0xff]
      %v1915 = vld [vmem:[%s3 + $0x1c8] sm:$0xff]
      %v1916 = vld [vmem:[%s3 + $0x1d0] sm:$0xff]
      %v1917 = vld [vmem:[%s3 + $0x1d8] sm:$0xff]
      %v1918 = vld [vmem:[%s3 + $0x1e0] sm:$0xff]
      %v1919 = vld [vmem:[%s3 + $0x1e8] sm:$0xff]
      %v1920 = vld [vmem:[%s3 + $0x1f0] sm:$0xff]
      %v1921 = vld [vmem:[%s3 + $0x1f8] sm:$0xff]
      %v1922 = vld [vmem:[%s4] sm:$0x3]
      %v1924 = vlaneseq
      %v1925 = vshrl.u32 %v1924, 7
      %v1926 = vsub.s32 0, %v1925
      %v1927 = vrot.slane %v1922, %v1926
      %v1928 = vlaneseq
      %v1929 = vshrl.u32 %v1928, 7
      %v1930 = vsub.s32 1, %v1929
      %v1931 = vrot.slane %v1922, %v1930
      %v1998 = vunpack.c.l.b16 %v1858
      %v1999 = vunpack.c.h.b16 %v1858
      %v2000 = vunpack.c.l.b16 %v1859
      %v2001 = vunpack.c.h.b16 %v1859
      %v2002 = vunpack.c.l.b16 %v1860
      %v2003 = vunpack.c.h.b16 %v1860
      %v2004 = vunpack.c.l.b16 %v1861
      %v2005 = vunpack.c.h.b16 %v1861
      %v2006 = vunpack.c.l.b16 %v1862
      %v2007 = vunpack.c.h.b16 %v1862
      %v2008 = vunpack.c.l.b16 %v1863
      %v2009 = vunpack.c.h.b16 %v1863
      %v2010 = vunpack.c.l.b16 %v1864
      %v2011 = vunpack.c.h.b16 %v1864
      %v2012 = vunpack.c.l.b16 %v1865
      %v2013 = vunpack.c.h.b16 %v1865
      %v2014 = vunpack.c.l.b16 %v1866
      %v2015 = vunpack.c.h.b16 %v1866
      %v2016 = vunpack.c.l.b16 %v1867
      %v2017 = vunpack.c.h.b16 %v1867
      %v2018 = vunpack.c.l.b16 %v1868
      %v2019 = vunpack.c.h.b16 %v1868
      %v2020 = vunpack.c.l.b16 %v1869
      %v2021 = vunpack.c.h.b16 %v1869
      %v2022 = vunpack.c.l.b16 %v1870
      %v2023 = vunpack.c.h.b16 %v1870
      %v2024 = vunpack.c.l.b16 %v1871
      %v2025 = vunpack.c.h.b16 %v1871
      %v2026 = vunpack.c.l.b16 %v1872
      %v2027 = vunpack.c.h.b16 %v1872
      %v2028 = vunpack.c.l.b16 %v1873
      %v2029 = vunpack.c.h.b16 %v1873
      %v2030 = vunpack.c.l.b16 %v1874
      %v2031 = vunpack.c.h.b16 %v1874
      %v2032 = vunpack.c.l.b16 %v1875
      %v2033 = vunpack.c.h.b16 %v1875
      %v2034 = vunpack.c.l.b16 %v1876
      %v2035 = vunpack.c.h.b16 %v1876
      %v2036 = vunpack.c.l.b16 %v1877
      %v2037 = vunpack.c.h.b16 %v1877
      %v2038 = vunpack.c.l.b16 %v1878
      %v2039 = vunpack.c.h.b16 %v1878
      %v2040 = vunpack.c.l.b16 %v1879
      %v2041 = vunpack.c.h.b16 %v1879
      %v2042 = vunpack.c.l.b16 %v1880
      %v2043 = vunpack.c.h.b16 %v1880
      %v2044 = vunpack.c.l.b16 %v1881
      %v2045 = vunpack.c.h.b16 %v1881
      %v2046 = vunpack.c.l.b16 %v1882
      %v2047 = vunpack.c.h.b16 %v1882
      %v2048 = vunpack.c.l.b16 %v1883
      %v2049 = vunpack.c.h.b16 %v1883
      %v2050 = vunpack.c.l.b16 %v1884
      %v2051 = vunpack.c.h.b16 %v1884
      %v2052 = vunpack.c.l.b16 %v1885
      %v2053 = vunpack.c.h.b16 %v1885
      %v2054 = vunpack.c.l.b16 %v1886
      %v2055 = vunpack.c.h.b16 %v1886
      %v2056 = vunpack.c.l.b16 %v1887
      %v2057 = vunpack.c.h.b16 %v1887
      %v2058 = vunpack.c.l.b16 %v1888
      %v2059 = vunpack.c.h.b16 %v1888
      %v2060 = vunpack.c.l.b16 %v1889
      %v2061 = vunpack.c.h.b16 %v1889
      %v2062 = vunpack.c.l.b16 %v1890
      %v2063 = vunpack.c.h.b16 %v1890
      %v2064 = vunpack.c.l.b16 %v1891
      %v2065 = vunpack.c.h.b16 %v1891
      %v2066 = vunpack.c.l.b16 %v1892
      %v2067 = vunpack.c.h.b16 %v1892
      %v2068 = vunpack.c.l.b16 %v1893
      %v2069 = vunpack.c.h.b16 %v1893
      %v2070 = vunpack.c.l.b16 %v1894
      %v2071 = vunpack.c.h.b16 %v1894
      %v2072 = vunpack.c.l.b16 %v1895
      %v2073 = vunpack.c.h.b16 %v1895
      %v2074 = vunpack.c.l.b16 %v1896
      %v2075 = vunpack.c.h.b16 %v1896
      %v2076 = vunpack.c.l.b16 %v1897
      %v2077 = vunpack.c.h.b16 %v1897
      %v2078 = vunpack.c.l.b16 %v1898
      %v2079 = vunpack.c.h.b16 %v1898
      %v2080 = vunpack.c.l.b16 %v1899
      %v2081 = vunpack.c.h.b16 %v1899
      %v2082 = vunpack.c.l.b16 %v1900
      %v2083 = vunpack.c.h.b16 %v1900
      %v2084 = vunpack.c.l.b16 %v1901
      %v2085 = vunpack.c.h.b16 %v1901
      %v2086 = vunpack.c.l.b16 %v1902
      %v2087 = vunpack.c.h.b16 %v1902
      %v2088 = vunpack.c.l.b16 %v1903
      %v2089 = vunpack.c.h.b16 %v1903
      %v2090 = vunpack.c.l.b16 %v1904
      %v2091 = vunpack.c.h.b16 %v1904
      %v2092 = vunpack.c.l.b16 %v1905
      %v2093 = vunpack.c.h.b16 %v1905
      %v2094 = vunpack.c.l.b16 %v1906
      %v2095 = vunpack.c.h.b16 %v1906
      %v2096 = vunpack.c.l.b16 %v1907
      %v2097 = vunpack.c.h.b16 %v1907
      %v2098 = vunpack.c.l.b16 %v1908
      %v2099 = vunpack.c.h.b16 %v1908
      %v2100 = vunpack.c.l.b16 %v1909
      %v2101 = vunpack.c.h.b16 %v1909
      %v2102 = vunpack.c.l.b16 %v1910
      %v2103 = vunpack.c.h.b16 %v1910
      %v2104 = vunpack.c.l.b16 %v1911
      %v2105 = vunpack.c.h.b16 %v1911
      %v2106 = vunpack.c.l.b16 %v1912
      %v2107 = vunpack.c.h.b16 %v1912
      %v2108 = vunpack.c.l.b16 %v1913
      %v2109 = vunpack.c.h.b16 %v1913
      %v2110 = vunpack.c.l.b16 %v1914
      %v2111 = vunpack.c.h.b16 %v1914
      %v2112 = vunpack.c.l.b16 %v1915
      %v2113 = vunpack.c.h.b16 %v1915
      %v2114 = vunpack.c.l.b16 %v1916
      %v2115 = vunpack.c.h.b16 %v1916
      %v2116 = vunpack.c.l.b16 %v1917
      %v2117 = vunpack.c.h.b16 %v1917
      %v2118 = vunpack.c.l.b16 %v1918
      %v2119 = vunpack.c.h.b16 %v1918
      %v2120 = vunpack.c.l.b16 %v1919
      %v2121 = vunpack.c.h.b16 %v1919
      %v2122 = vunpack.c.l.b16 %v1920
      %v2123 = vunpack.c.h.b16 %v1920
      %v2124 = vunpack.c.l.b16 %v1921
      %v2125 = vunpack.c.h.b16 %v1921
      %v2126 = vpack.c.b16 %v2000, %v1998
      %v2127 = vpack.c.b16 %v2001, %v1999
      %v2128 = vpack.c.b16 %v2004, %v2002
      %v2129 = vpack.c.b16 %v2005, %v2003
      %v2130 = vpack.c.b16 %v2008, %v2006
      %v2131 = vpack.c.b16 %v2009, %v2007
      %v2132 = vpack.c.b16 %v2012, %v2010
      %v2133 = vpack.c.b16 %v2013, %v2011
      %v2134 = vpack.c.b16 %v2016, %v2014
      %v2135 = vpack.c.b16 %v2017, %v2015
      %v2136 = vpack.c.b16 %v2020, %v2018
      %v2137 = vpack.c.b16 %v2021, %v2019
      %v2138 = vpack.c.b16 %v2024, %v2022
      %v2139 = vpack.c.b16 %v2025, %v2023
      %v2140 = vpack.c.b16 %v2028, %v2026
      %v2141 = vpack.c.b16 %v2029, %v2027
      %v2142 = vpack.c.b16 %v2032, %v2030
      %v2143 = vpack.c.b16 %v2033, %v2031
      %v2144 = vpack.c.b16 %v2036, %v2034
      %v2145 = vpack.c.b16 %v2037, %v2035
      %v2146 = vpack.c.b16 %v2040, %v2038
      %v2147 = vpack.c.b16 %v2041, %v2039
      %v2148 = vpack.c.b16 %v2044, %v2042
      %v2149 = vpack.c.b16 %v2045, %v2043
      %v2150 = vpack.c.b16 %v2048, %v2046
      %v2151 = vpack.c.b16 %v2049, %v2047
      %v2152 = vpack.c.b16 %v2052, %v2050
      %v2153 = vpack.c.b16 %v2053, %v2051
      %v2154 = vpack.c.b16 %v2056, %v2054
      %v2155 = vpack.c.b16 %v2057, %v2055
      %v2156 = vpack.c.b16 %v2060, %v2058
      %v2157 = vpack.c.b16 %v2061, %v2059
      %v2158 = vpack.c.b16 %v2064, %v2062
      %v2159 = vpack.c.b16 %v2065, %v2063
      %v2160 = vpack.c.b16 %v2068, %v2066
      %v2161 = vpack.c.b16 %v2069, %v2067
      %v2162 = vpack.c.b16 %v2072, %v2070
      %v2163 = vpack.c.b16 %v2073, %v2071
      %v2164 = vpack.c.b16 %v2076, %v2074
      %v2165 = vpack.c.b16 %v2077, %v2075
      %v2166 = vpack.c.b16 %v2080, %v2078
      %v2167 = vpack.c.b16 %v2081, %v2079
      %v2168 = vpack.c.b16 %v2084, %v2082
      %v2169 = vpack.c.b16 %v2085, %v2083
      %v2170 = vpack.c.b16 %v2088, %v2086
      %v2171 = vpack.c.b16 %v2089, %v2087
      %v2172 = vpack.c.b16 %v2092, %v2090
      %v2173 = vpack.c.b16 %v2093, %v2091
      %v2174 = vpack.c.b16 %v2096, %v2094
      %v2175 = vpack.c.b16 %v2097, %v2095
      %v2176 = vpack.c.b16 %v2100, %v2098
      %v2177 = vpack.c.b16 %v2101, %v2099
      %v2178 = vpack.c.b16 %v2104, %v2102
      %v2179 = vpack.c.b16 %v2105, %v2103
      %v2180 = vpack.c.b16 %v2108, %v2106
      %v2181 = vpack.c.b16 %v2109, %v2107
      %v2182 = vpack.c.b16 %v2112, %v2110
      %v2183 = vpack.c.b16 %v2113, %v2111
      %v2184 = vpack.c.b16 %v2116, %v2114
      %v2185 = vpack.c.b16 %v2117, %v2115
      %v2186 = vpack.c.b16 %v2120, %v2118
      %v2187 = vpack.c.b16 %v2121, %v2119
      %v2188 = vpack.c.b16 %v2124, %v2122
      %v2189 = vpack.c.b16 %v2125, %v2123
      %2254 = vmatprep.subr.bf16.mxu0 %v2127
      %2255 = vmatpush1.bf16.msra.mxu0 %v2126
      %2256 = vmatprep.subr.bf16.mxu0 %v2129
      %2257 = vmatpush1.bf16.msra.mxu0 %v2128
      %2258 = vmatprep.subr.bf16.mxu0 %v2131
      %2259 = vmatpush1.bf16.msra.mxu0 %v2130
      %2260 = vmatprep.subr.bf16.mxu0 %v2133
      %2261 = vmatpush1.bf16.msra.mxu0 %v2132
      %2262 = vmatprep.subr.bf16.mxu0 %v2135
      %2263 = vmatpush1.bf16.msra.mxu0 %v2134
      %2264 = vmatprep.subr.bf16.mxu0 %v2137
      %2265 = vmatpush1.bf16.msra.mxu0 %v2136
      %2266 = vmatprep.subr.bf16.mxu0 %v2139
      %2267 = vmatpush1.bf16.msra.mxu0 %v2138
      %2268 = vmatprep.subr.bf16.mxu0 %v2141
      %2269 = vmatpush1.bf16.msra.mxu0 %v2140
      %2270 = vmatprep.subr.bf16.mxu0 %v2143
      %2271 = vmatpush1.bf16.msra.mxu0 %v2142
      %2272 = vmatprep.subr.bf16.mxu0 %v2145
      %2273 = vmatpush1.bf16.msra.mxu0 %v2144
      %2274 = vmatprep.subr.bf16.mxu0 %v2147
      %2275 = vmatpush1.bf16.msra.mxu0 %v2146
      %2276 = vmatprep.subr.bf16.mxu0 %v2149
      %2277 = vmatpush1.bf16.msra.mxu0 %v2148
      %2278 = vmatprep.subr.bf16.mxu0 %v2151
      %2279 = vmatpush1.bf16.msra.mxu0 %v2150
      %2280 = vmatprep.subr.bf16.mxu0 %v2153
      %2281 = vmatpush1.bf16.msra.mxu0 %v2152
      %2282 = vmatprep.subr.bf16.mxu0 %v2155
      %2283 = vmatpush1.bf16.msra.mxu0 %v2154
      %2284 = vmatprep.subr.bf16.mxu0 %v2157
      %2285 = vmatpush1.bf16.msra.mxu0 %v2156
      %2286 = vmatprep.mubr.bf16.mxu0 %v1851
      %2287 = vmatmul.mubr.bf16.gmra.mrb[0].mxu0 %v1850
      %v2288 = vpop.f32.mrb[0].mxu0
      %v2289 = vadd.f32 %v1927, %v2288
      %v2290 = vpop.f32.mrb[0].mxu0
      %v2291 = vadd.f32 %v1931, %v2290
      %v2292 = vpop.f32.mrb[0].mxu0
      %v2293 = vadd.f32 %v1927, %v2292
      %v2294 = vpop.f32.mrb[0].mxu0
      %v2295 = vadd.f32 %v1931, %v2294
      %2296 = vmatprep.mubr.bf16.mxu0 %v1855
      %2297 = vmatmul.mubr.bf16.gmra.mrb[0].mxu0 %v1854
      %v2298 = vpop.f32.mrb[0].mxu0
      %v2299 = vadd.f32 %v1927, %v2298
      %v2300 = vpop.f32.mrb[0].mxu0
      %v2301 = vadd.f32 %v1931, %v2300
      %v2302 = vpop.f32.mrb[0].mxu0
      %v2303 = vadd.f32 %v1927, %v2302
      %v2304 = vpop.f32.mrb[0].mxu0
      %v2305 = vadd.f32 %v1931, %v2304
      %2306 = vdwg.mxu0
      %2307 = vmatprep.subr.bf16.mxu0 %v2159
      %2308 = vmatpush1.bf16.msra.mxu0 %v2158
      %2309 = vmatprep.subr.bf16.mxu0 %v2161
      %2310 = vmatpush1.bf16.msra.mxu0 %v2160
      %2311 = vmatprep.subr.bf16.mxu0 %v2163
      %2312 = vmatpush1.bf16.msra.mxu0 %v2162
      %2313 = vmatprep.subr.bf16.mxu0 %v2165
      %2314 = vmatpush1.bf16.msra.mxu0 %v2164
      %2315 = vmatprep.subr.bf16.mxu0 %v2167
      %2316 = vmatpush1.bf16.msra.mxu0 %v2166
      %2317 = vmatprep.subr.bf16.mxu0 %v2169
      %2318 = vmatpush1.bf16.msra.mxu0 %v2168
      %2319 = vmatprep.subr.bf16.mxu0 %v2171
      %2320 = vmatpush1.bf16.msra.mxu0 %v2170
      %2321 = vmatprep.subr.bf16.mxu0 %v2173
      %2322 = vmatpush1.bf16.msra.mxu0 %v2172
      %2323 = vmatprep.subr.bf16.mxu0 %v2175
      %2324 = vmatpush1.bf16.msra.mxu0 %v2174
      %2325 = vmatprep.subr.bf16.mxu0 %v2177
      %2326 = vmatpush1.bf16.msra.mxu0 %v2176
      %2327 = vmatprep.subr.bf16.mxu0 %v2179
      %2328 = vmatpush1.bf16.msra.mxu0 %v2178
      %2329 = vmatprep.subr.bf16.mxu0 %v2181
      %2330 = vmatpush1.bf16.msra.mxu0 %v2180
      %2331 = vmatprep.subr.bf16.mxu0 %v2183
      %2332 = vmatpush1.bf16.msra.mxu0 %v2182
      %2333 = vmatprep.subr.bf16.mxu0 %v2185
      %2334 = vmatpush1.bf16.msra.mxu0 %v2184
      %2335 = vmatprep.subr.bf16.mxu0 %v2187
      %2336 = vmatpush1.bf16.msra.mxu0 %v2186
      %2337 = vmatprep.subr.bf16.mxu0 %v2189
      %2338 = vmatpush1.bf16.msra.mxu0 %v2188
      %2339 = vmatprep.mubr.bf16.mxu0 %v1853
      %2340 = vmatmul.mubr.bf16.gmra.mrb[0].mxu0 %v1852
      %v2341 = vpop.f32.mrb[0].mxu0
      %v2342 = vadd.f32 %v2289, %v2341
      %v2343 = vpop.f32.mrb[0].mxu0
      %v2344 = vadd.f32 %v2291, %v2343
      %v2345 = vpop.f32.mrb[0].mxu0
      %v2346 = vadd.f32 %v2293, %v2345
      %v2347 = vpop.f32.mrb[0].mxu0
      %v2348 = vadd.f32 %v2295, %v2347
      %2349 = vmatprep.mubr.bf16.mxu0 %v1857
      %2350 = vmatmul.mubr.bf16.gmra.mrb[0].mxu0 %v1856
      %v2351 = vpop.f32.mrb[0].mxu0
      %v2352 = vadd.f32 %v2299, %v2351
      %v2353 = vpop.f32.mrb[0].mxu0
      %v2354 = vadd.f32 %v2301, %v2353
      %v2355 = vpop.f32.mrb[0].mxu0
      %v2356 = vadd.f32 %v2303, %v2355
      %v2357 = vpop.f32.mrb[0].mxu0
      %v2358 = vadd.f32 %v2305, %v2357
      %2359 = vdwg.mxu0
      %v2360 = vpack.c.bf16 %v2346, %v2342
      %v2361 = vpack.c.bf16 %v2348, %v2344
      %v2362 = vpack.c.bf16 %v2356, %v2352
      %v2363 = vpack.c.bf16 %v2358, %v2354
      %v2364 = vld [vmem:[%s5] sm:$0xf]
      %v2365 = vld [vmem:[%s5 + $0x4] sm:$0xf]
      %v2366 = vld [vmem:[%s5 + $0x8] sm:$0xf]
      %v2367 = vld [vmem:[%s5 + $0xc] sm:$0xf]
      %v2368 = vld [vmem:[%s5 + $0x10] sm:$0xf]
      %v2369 = vld [vmem:[%s5 + $0x14] sm:$0xf]
      %v2370 = vld [vmem:[%s5 + $0x18] sm:$0xf]
      %v2371 = vld [vmem:[%s5 + $0x1c] sm:$0xf]
      %v2372 = vld [vmem:[%s5 + $0x20] sm:$0xf]
      %v2373 = vld [vmem:[%s5 + $0x24] sm:$0xf]
      %v2374 = vld [vmem:[%s5 + $0x28] sm:$0xf]
      %v2375 = vld [vmem:[%s5 + $0x2c] sm:$0xf]
      %v2376 = vld [vmem:[%s5 + $0x30] sm:$0xf]
      %v2377 = vld [vmem:[%s5 + $0x34] sm:$0xf]
      %v2378 = vld [vmem:[%s5 + $0x38] sm:$0xf]
      %v2379 = vld [vmem:[%s5 + $0x3c] sm:$0xf]
      %v2380 = vld [vmem:[%s5 + $0x40] sm:$0xf]
      %v2381 = vld [vmem:[%s5 + $0x44] sm:$0xf]
      %v2382 = vld [vmem:[%s5 + $0x48] sm:$0xf]
      %v2383 = vld [vmem:[%s5 + $0x4c] sm:$0xf]
      %v2384 = vld [vmem:[%s5 + $0x50] sm:$0xf]
      %v2385 = vld [vmem:[%s5 + $0x54] sm:$0xf]
      %v2386 = vld [vmem:[%s5 + $0x58] sm:$0xf]
      %v2387 = vld [vmem:[%s5 + $0x5c] sm:$0xf]
      %v2388 = vld [vmem:[%s6] sm:$0x1]
      %v2390 = vlaneseq
      %v2391 = vshrl.u32 %v2390, 7
      %v2392 = vsub.s32 0, %v2391
      %v2393 = vrot.slane %v2388, %v2392
      %v2419 = vunpack.c.l.b16 %v2364
      %v2420 = vunpack.c.l.b16 %v2365
      %v2421 = vunpack.c.l.b16 %v2366
      %v2422 = vunpack.c.l.b16 %v2367
      %v2423 = vunpack.c.l.b16 %v2368
      %v2424 = vunpack.c.l.b16 %v2369
      %v2425 = vunpack.c.l.b16 %v2370
      %v2426 = vunpack.c.l.b16 %v2371
      %v2427 = vunpack.c.l.b16 %v2372
      %v2428 = vunpack.c.l.b16 %v2373
      %v2429 = vunpack.c.l.b16 %v2374
      %v2430 = vunpack.c.l.b16 %v2375
      %v2431 = vunpack.c.l.b16 %v2376
      %v2432 = vunpack.c.l.b16 %v2377
      %v2433 = vunpack.c.l.b16 %v2378
      %v2434 = vunpack.c.l.b16 %v2379
      %v2435 = vunpack.c.l.b16 %v2380
      %v2436 = vunpack.c.l.b16 %v2381
      %v2437 = vunpack.c.l.b16 %v2382
      %v2438 = vunpack.c.l.b16 %v2383
      %v2439 = vunpack.c.l.b16 %v2384
      %v2440 = vunpack.c.l.b16 %v2385
      %v2441 = vunpack.c.l.b16 %v2386
      %v2442 = vunpack.c.l.b16 %v2387
      %v2443 = vpack.c.b16 %v2420, %v2419
      %v2444 = vpack.c.b16 %v2422, %v2421
      %v2445 = vpack.c.b16 %v2424, %v2423
      %v2446 = vpack.c.b16 %v2426, %v2425
      %v2447 = vpack.c.b16 %v2428, %v2427
      %v2448 = vpack.c.b16 %v2430, %v2429
      %v2449 = vpack.c.b16 %v2432, %v2431
      %v2450 = vpack.c.b16 %v2434, %v2433
      %v2451 = vpack.c.b16 %v2436, %v2435
      %v2452 = vpack.c.b16 %v2438, %v2437
      %v2453 = vpack.c.b16 %v2440, %v2439
      %v2454 = vpack.c.b16 %v2442, %v2441
      %vm2467 = vcmask 523264
      %v2469 = vsel %vm2467, %v2361, 0
      %v2472 = vsel %vm2467, %v2363, 0
      %2474 = vmatprep.subr.bf16.mxu0 0
      %2475 = vmatpush1.bf16.msra.mxu0 %v2443
      %2476 = vmatprep.subr.bf16.mxu0 0
      %2477 = vmatpush1.bf16.msra.mxu0 %v2444
      %2478 = vmatprep.subr.bf16.mxu0 0
      %2479 = vmatpush1.bf16.msra.mxu0 %v2445
      %2480 = vmatprep.subr.bf16.mxu0 0
      %2481 = vmatpush1.bf16.msra.mxu0 %v2446
      %2482 = vmatprep.subr.bf16.mxu0 0
      %2483 = vmatpush1.bf16.msra.mxu0 %v2447
      %2484 = vmatprep.subr.bf16.mxu0 0
      %2485 = vmatpush1.bf16.msra.mxu0 %v2448
      %2486 = vmatprep.subr.bf16.mxu0 0
      %2487 = vmatpush1.bf16.msra.mxu0 %v2449
      %2488 = vmatprep.subr.bf16.mxu0 0
      %2489 = vmatpush1.bf16.msra.mxu0 %v2450
      %2490 = vmatprep.subr.bf16.mxu0 0
      %2491 = vmatpush1.bf16.msra.mxu0 %v2451
      %2492 = vmatprep.subr.bf16.mxu0 0
      %2493 = vmatpush1.bf16.msra.mxu0 %v2452
      %2494 = vmatprep.subr.bf16.mxu0 0
      %2495 = vmatpush1.bf16.msra.mxu0 %v2453
      %2496 = vmatprep.subr.bf16.mxu0 0
      %2497 = vmatpush1.bf16.msra.mxu0 %v2454
      %2498 = vmatprep.subr.bf16.mxu0 0
      %2499 = vmatpush1.bf16.msra.mxu0 0
      %2500 = vmatprep.subr.bf16.mxu0 0
      %2501 = vmatpush1.bf16.msra.mxu0 0
      %2502 = vmatprep.subr.bf16.mxu0 0
      %2503 = vmatpush1.bf16.msra.mxu0 0
      %2504 = vmatprep.subr.bf16.mxu0 0
      %2505 = vmatpush1.bf16.msra.mxu0 0
      %2506 = vmatprep.mubr.bf16.mxu0 %v2469
      %2507 = vmatmul.mubr.bf16.gmra.mrb[0].mxu0 %v2360
      %v2508 = vpop.f32.mrb[0].mxu0
      %v2509 = vadd.f32 %v2393, %v2508
      %v2510 = vpop.f32.mrb[0].mxu0
      %v2511 = vpop.f32.mrb[0].mxu0
      %v2512 = vadd.f32 %v2393, %v2511
      %v2513 = vpop.f32.mrb[0].mxu0
      %2514 = vmatprep.mubr.bf16.mxu0 %v2472
      %2515 = vmatmul.mubr.bf16.gmra.mrb[0].mxu0 %v2362
      %v2516 = vpop.f32.mrb[0].mxu0
      %v2517 = vadd.f32 %v2393, %v2516
      %v2518 = vpop.f32.mrb[0].mxu0
      %v2519 = vpop.f32.mrb[0].mxu0
      %v2520 = vadd.f32 %v2393, %v2519
      %v2521 = vpop.f32.mrb[0].mxu0
      %2522 = vdwg.mxu0
      %v2523 = vpack.c.bf16 %v2512, %v2509
      %v2524 = vpack.c.bf16 %v2520, %v2517
      %v2527 = vunpack.c.l.b16 %v2523
      %v2528 = vunpack.c.h.b16 %v2523
      %v2529 = vunpack.c.l.b16 %v2524
      %v2530 = vunpack.c.h.b16 %v2524
      %v2531 = vpack.c.b16 %v2527, %v2527
      %v2532 = vpack.c.b16 %v2528, %v2528
      %v2533 = vpack.c.b16 %v2529, %v2529
      %v2534 = vpack.c.b16 %v2530, %v2530
      %vm2539 = vcmask 519168
      %2540 = vst.msk [vmem:[%s283] sm:$0xf] %vm2539, %v2531
      %2541 = vst.msk [vmem:[%s283 + $0x4] sm:$0xf] %vm2539, %v2532
      %2542 = vst.msk [vmem:[%s283 + $0x8] sm:$0xf] %vm2539, %v2533
      %2543 = vst.msk [vmem:[%s283 + $0xc] sm:$0xf] %vm2539, %v2534
      %s2544 = smul.u32 4, %s18
      %p2545 = scmp.lt.s32.totalorder %s2544, 7
      %s2546 = scalar_select %p2545, %s2544, 7
      %s2547 = smul.addr %s2546, 4
      %s2548 = scalar_lea.vmem %s7, %s2547
      // Predicated region
      $region49: #{_forward_impl.2} parent=47 // pred_check
        %p2549 = pneg %p188
      $region50: #{_forward_impl.2} parent=47 // pred_check_branch
        %2551 = sbr.rel (%p2549) target = $region52
      $region51: #{_forward_impl.2} parent=47 // pred_region
        %s2552 = smul.u32 4, %s18
      $region52: #{_forward_impl.2} parent=47 // pred_fallthru
        _
    $region48: #{_forward_impl.2} parent=5 // pred_fallthru
      _
    %p2553 = scmp.le.s32.totalorder 2, %s13
    // Predicated region
    $region53: #{_forward_impl.2} parent=5 // pred_check
      %p2554 = pneg %p2553
    $region54: #{_forward_impl.2} parent=5 // pred_check_branch
      %2556 = sbr.rel (%p2554) target = $region56
    $region55: #{_forward_impl.2} parent=5 // pred_region
      %s2557 = ssub.s32 %s13, 2
      // Predicated region
      $region57: #{_forward_impl.2} parent=55 // pred_check
        %p2558 = pneg %p194
      $region58: #{_forward_impl.2} parent=55 // pred_check_branch
        %2560 = sbr.rel (%p2558) target = $region60
      $region59: #{_forward_impl.2} parent=55 // pred_region
        %s2561 = smul.u32 4, %s19
        %p2562 = scmp.lt.s32.totalorder %s2561, 7
        %s2563 = scalar_select %p2562, %s2561, 7
        %s2564 = smul.addr %s2563, 4
        %s2565 = scalar_lea.vmem %s7, %s2564
      $region60: #{_forward_impl.2} parent=55 // pred_fallthru
        _
    $region56: #{_forward_impl.2} parent=5 // pred_fallthru
      _
  $region6: #{_forward_impl.2} parent=0 // loop_footer
    %s17 = sadd.s32 1, %s13
  $region7: #{_forward_impl.2} parent=0 // loop_footer_branch
    %12 = sbr.rel target = $region3
  $region8: #{_forward_impl.2} parent=0 // loop_exit
    _

// kernel: _forward_impl.3
$region0: #{_forward_impl.3}
  #allocation0 [shape = 'u32[]', space=smem, size = 0x4, offset = 0x4, fixed_abs, tag = 'smem constant byte address 0x4 - core index']
  #allocation1 [shape = 'u32[144,128]{1,0:T(1,128)}', space=vmem, size = 0x12000, scoped, tag = 'internal scratch']
  #allocation2 [shape = 'f32[1]{0:T(128)S(6)}', space=smem, size = 0x200, scoped, tag = 'scoped memory for _forward_impl.3']
  %s0 = inlined_call_operand.vmem [shape: bf16[4,4,4,64], index: 0, kind: input, shape index: {}, may-alias: {0,1}]
  %s1 = inlined_call_operand.vmem [shape: bf16[4,4,4,64], index: 1, kind: input, shape index: {}, may-alias: {0,1}]
  %s2 = inlined_call_operand.vmem [shape: f32[5,16], index: 2, kind: input, shape index: {}]
  %s3 = inlined_call_operand.vmem [shape: f32[16], index: 3, kind: input, shape index: {}]
  %s4 = inlined_call_operand.vmem [shape: f32[16], index: 4, kind: input, shape index: {}]
  %s5 = inlined_call_operand.<no memory space> [shape: f32[1], index: 5, kind: input, shape index: {}]
  %s6 = inlined_call_operand.vmem [shape: f32[2,4,4], index: 6, kind: output, shape index: {}]
  %s7 = sld [smem:[#allocation0]]
  $region69: #{_forward_impl.3} parent=0
    _
  %s9 = ssub.s32 1, %s7
  %s10 = scalar_select 0, %s9, %s7
  %11 = sst [smem:[#allocation2]] %s5
  $region1: #{_forward_impl.3} parent=0
    #allocation3 [shape = 'u8[4096]{0}', space=smem, size = 0x1000, scoped, tag = 'input window, operand 2, single buffered']
    #allocation4 [shape = 's32[2]{0}', space=sflag, size = 0x8, scoped, tag = 'scoped memory for _forward_impl.3']
    #allocation5 [shape = 'u8[512]{0}', space=smem, size = 0x200, scoped, tag = 'input window, operand 3, single buffered']
    #allocation6 [shape = 's32[1]{0}', space=sflag, size = 0x4, scoped, tag = 'scoped memory for _forward_impl.3']
    #allocation7 [shape = 'u8[512]{0}', space=smem, size = 0x200, scoped, tag = 'input window, operand 4, single buffered']
    %12 = vsyncpa [#allocation4], 0
    %13 = vsyncpa [#allocation6], 0
    loop: start=0, step=1, limit=4
    $region2: #{_forward_impl.3} parent=1 // loop_pre_header
      _
    $region3: #{_forward_impl.3} parent=1 // loop_header
      %s15 = sphi 0, %s19
      %p16 = scmp.ge.s32.totalorder %s15, 4
      %s22 = sphi 0, %s34
      %s23 = sphi 0, %s30
      %s24 = sphi 0, %s22
      %s25 = sphi 0, %s23
      %s26 = sphi 0, %s24
      %s27 = sphi 0, %s25
      %s39 = sphi 0, %s41
      %s42 = sphi 0, %s39
      %s43 = sphi 0, %s42
      %s59 = sphi 0, %s43
      %s69 = sphi 0, %s71
      %s72 = sphi 0, %s69
      %s73 = sphi 0, %s72
      %s89 = sphi 0, %s73
      %s93 = sphi 0, %s93
      %s95 = sphi 0, %s93
      %s96 = sphi 0, %s95
      %s110 = sphi 0, %s96
      %s114 = sphi 0, %s114
      %s116 = sphi 0, %s114
      %s117 = sphi 0, %s116
      %s131 = sphi 0, %s117
      %s135 = sphi 0, %s135
      %s137 = sphi 0, %s135
      %s138 = sphi 0, %s137
      %s152 = sphi 0, %s138
      %s156 = sphi 0, %s156
      %s158 = sphi 0, %s156
      %s159 = sphi 0, %s158
      %s173 = sphi 0, %s159
      %s181 = sphi 0, %s183
      %s184 = sphi 0, %s181
      %s185 = sphi 0, %s184
      %s201 = sphi 0, %s185
    $region4: #{_forward_impl.3} parent=1 // loop_header_branch
      %18 = sbr.rel (%p16) target = $region8
    $region5: #{_forward_impl.3} parent=1 // loop_body
      %s20 = ssub.s32 %s15, 1
      %s21 = ssub.s32 %s15, 2
      %s28 = sadd.s32 1, %s23
      %p29 = scmp.ge.s32.totalorder %s28, 1
      %s30 = scalar_select %p29, 0, %s28
      %s31 = sadd.s32 1, %s22
      %s32 = scalar_select %p29, %s31, %s22
      %p33 = scmp.ge.s32.totalorder %s32, 2
      %s34 = scalar_select %p33, 0, %s32
      %s35 = ssub.s32 %s22, %s34
      %s36 = ssub.s32 %s23, %s30
      %s37 = sor.u32 %s35, %s36
      %p38 = scmp.eq.s32.totalorder %s37, 0
      %s40 = sadd.s32 %s39, 1
      %s41 = scalar_select %p38, %s39, %s40
      %p44 = pneg %p38
      %p45 = scmp.eq.s32.totalorder %s15, 1
      %p46 = por %p44, %p45
      %p47 = scmp.ne.s32.totalorder %s39, %s42
      %p48 = scmp.eq.s32.totalorder %s15, 0
      %p49 = por %p47, %p48
      %p50 = scmp.ne.s32.totalorder %s39, %s42
      %p51 = scmp.eq.s32.totalorder %s20, 1
      %p52 = por %p50, %p51
      %p53 = scmp.ne.s32.totalorder %s42, %s43
      %p54 = scmp.eq.s32.totalorder %s20, 0
      %p55 = por %p53, %p54
      %p56 = scmp.ne.s32.totalorder %s42, %s43
      %p57 = scmp.eq.s32.totalorder %s21, 1
      %p58 = por %p56, %p57
      %p60 = scmp.ne.s32.totalorder %s43, %s59
      %p61 = scmp.eq.s32.totalorder %s21, 0
      %p62 = por %p60, %p61
      %s63 = sadd.s32 %s22, 2
      %s64 = sadd.s32 %s34, 2
      %s65 = ssub.s32 %s63, %s64
      %s66 = ssub.s32 %s23, %s30
      %s67 = sor.u32 %s65, %s66
      %p68 = scmp.eq.s32.totalorder %s67, 0
      %s70 = sadd.s32 %s69, 1
      %s71 = scalar_select %p68, %s69, %s70
      %p74 = pneg %p68
      %p75 = scmp.eq.s32.totalorder %s15, 1
      %p76 = por %p74, %p75
      %p77 = scmp.ne.s32.totalorder %s69, %s72
      %p78 = scmp.eq.s32.totalorder %s15, 0
      %p79 = por %p77, %p78
      %p80 = scmp.ne.s32.totalorder %s69, %s72
      %p81 = scmp.eq.s32.totalorder %s20, 1
      %p82 = por %p80, %p81
      %p83 = scmp.ne.s32.totalorder %s72, %s73
      %p84 = scmp.eq.s32.totalorder %s20, 0
      %p85 = por %p83, %p84
      %p86 = scmp.ne.s32.totalorder %s72, %s73
      %p87 = scmp.eq.s32.totalorder %s21, 1
      %p88 = por %p86, %p87
      %p90 = scmp.ne.s32.totalorder %s73, %s89
      %p91 = scmp.eq.s32.totalorder %s21, 0
      %p92 = por %p90, %p91
      %s94 = sadd.s32 %s93, 1
      %p97 = scmp.eq.s32.totalorder %s15, 1
      %p98 = scmp.ne.s32.totalorder %s93, %s95
      %p99 = scmp.eq.s32.totalorder %s15, 0
      %p100 = por %p98, %p99
      %p101 = scmp.ne.s32.totalorder %s93, %s95
      %p102 = scmp.eq.s32.totalorder %s20, 1
      %p103 = por %p101, %p102
      %p104 = scmp.ne.s32.totalorder %s95, %s96
      %p105 = scmp.eq.s32.totalorder %s20, 0
      %p106 = por %p104, %p105
      %p107 = scmp.ne.s32.totalorder %s95, %s96
      %p108 = scmp.eq.s32.totalorder %s21, 1
      %p109 = por %p107, %p108
      %p111 = scmp.ne.s32.totalorder %s96, %s110
      %p112 = scmp.eq.s32.totalorder %s21, 0
      %p113 = por %p111, %p112
      %s115 = sadd.s32 %s114, 1
      %p118 = scmp.eq.s32.totalorder %s15, 1
      %p119 = scmp.ne.s32.totalorder %s114, %s116
      %p120 = scmp.eq.s32.totalorder %s15, 0
      %p121 = por %p119, %p120
      %p122 = scmp.ne.s32.totalorder %s114, %s116
      %p123 = scmp.eq.s32.totalorder %s20, 1
      %p124 = por %p122, %p123
      %p125 = scmp.ne.s32.totalorder %s116, %s117
      %p126 = scmp.eq.s32.totalorder %s20, 0
      %p127 = por %p125, %p126
      %p128 = scmp.ne.s32.totalorder %s116, %s117
      %p129 = scmp.eq.s32.totalorder %s21, 1
      %p130 = por %p128, %p129
      %p132 = scmp.ne.s32.totalorder %s117, %s131
      %p133 = scmp.eq.s32.totalorder %s21, 0
      %p134 = por %p132, %p133
      %s136 = sadd.s32 %s135, 1
      %p139 = scmp.eq.s32.totalorder %s15, 1
      %p140 = scmp.ne.s32.totalorder %s135, %s137
      %p141 = scmp.eq.s32.totalorder %s15, 0
      %p142 = por %p140, %p141
      %p143 = scmp.ne.s32.totalorder %s135, %s137
      %p144 = scmp.eq.s32.totalorder %s20, 1
      %p145 = por %p143, %p144
      %p146 = scmp.ne.s32.totalorder %s137, %s138
      %p147 = scmp.eq.s32.totalorder %s20, 0
      %p148 = por %p146, %p147
      %p149 = scmp.ne.s32.totalorder %s137, %s138
      %p150 = scmp.eq.s32.totalorder %s21, 1
      %p151 = por %p149, %p150
      %p153 = scmp.ne.s32.totalorder %s138, %s152
      %p154 = scmp.eq.s32.totalorder %s21, 0
      %p155 = por %p153, %p154
      %s157 = sadd.s32 %s156, 1
      %p160 = scmp.eq.s32.totalorder %s15, 1
      %p161 = scmp.ne.s32.totalorder %s156, %s158
      %p162 = scmp.eq.s32.totalorder %s15, 0
      %p163 = por %p161, %p162
      %p164 = scmp.ne.s32.totalorder %s156, %s158
      %p165 = scmp.eq.s32.totalorder %s20, 1
      %p166 = por %p164, %p165
      %p167 = scmp.ne.s32.totalorder %s158, %s159
      %p168 = scmp.eq.s32.totalorder %s20, 0
      %p169 = por %p167, %p168
      %p170 = scmp.ne.s32.totalorder %s158, %s159
      %p171 = scmp.eq.s32.totalorder %s21, 1
      %p172 = por %p170, %p171
      %p174 = scmp.ne.s32.totalorder %s159, %s173
      %p175 = scmp.eq.s32.totalorder %s21, 0
      %p176 = por %p174, %p175
      %s177 = ssub.s32 %s22, %s34
      %s178 = ssub.s32 %s23, %s30
      %s179 = sor.u32 %s177, %s178
      %p180 = scmp.eq.s32.totalorder %s179, 0
      %s182 = sadd.s32 %s181, 1
      %s183 = scalar_select %p180, %s181, %s182
      %p186 = pneg %p180
      %p187 = scmp.eq.s32.totalorder %s15, 1
      %p188 = por %p186, %p187
      %p189 = scmp.ne.s32.totalorder %s181, %s184
      %p190 = scmp.eq.s32.totalorder %s15, 0
      %p191 = por %p189, %p190
      %p192 = scmp.ne.s32.totalorder %s181, %s184
      %p193 = scmp.eq.s32.totalorder %s20, 1
      %p194 = por %p192, %p193
      %p195 = scmp.ne.s32.totalorder %s184, %s185
      %p196 = scmp.eq.s32.totalorder %s20, 0
      %p197 = por %p195, %p196
      %p198 = scmp.ne.s32.totalorder %s184, %s185
      %p199 = scmp.eq.s32.totalorder %s21, 1
      %p200 = por %p198, %p199
      %p202 = scmp.ne.s32.totalorder %s185, %s201
      %p203 = scmp.eq.s32.totalorder %s21, 0
      %p204 = por %p202, %p203
      %p205 = scmp.le.s32.totalorder 1, %s15
      %p206 = scmp.lt.s32.totalorder %s15, 3
      %p207 = pnand %p205, %p206
      %p208 = pneg %p207
      // Predicated region
      $region9: #{_forward_impl.3} parent=5 // pred_check
        _
      $region10: #{_forward_impl.3} parent=5 // pred_check_branch
        %210 = sbr.rel (%p207) target = $region12
      $region11: #{_forward_impl.3} parent=5 // pred_region
        %s211 = ssub.s32 %s15, 1
        // Predicated region
        $region13: #{_forward_impl.3} parent=11 // pred_check
          %p212 = pneg %p106
        $region14: #{_forward_impl.3} parent=11 // pred_check_branch
          %214 = sbr.rel (%p212) target = $region16
        $region15: #{_forward_impl.3} parent=11 // pred_region
          %s216 = ssub.s32 128, 128
          %217 = vsyncadd [#allocation4], %s216
          %s219 = sshll.u32 %s2, 4
          %s220 = int_to_ptr.vmem [resolvable:$true] %s219
          %222 = dma.vmem_to_smem %s220, 128, [#allocation3], [#allocation4]
        $region16: #{_forward_impl.3} parent=11 // pred_fallthru
          _
        // Predicated region
        $region17: #{_forward_impl.3} parent=11 // pred_check
          %p223 = pneg %p127
        $region18: #{_forward_impl.3} parent=11 // pred_check_branch
          %225 = sbr.rel (%p223) target = $region20
        $region19: #{_forward_impl.3} parent=11 // pred_region
          %s227 = ssub.s32 16, 16
          %228 = vsyncadd [#allocation6], %s227
          %s230 = sshll.u32 %s3, 4
          %s231 = int_to_ptr.vmem [resolvable:$true] %s230
          %233 = dma.vmem_to_smem %s231, 16, [#allocation5], [#allocation6]
        $region20: #{_forward_impl.3} parent=11 // pred_fallthru
          _
        // Predicated region
        $region21: #{_forward_impl.3} parent=11 // pred_check
          %p234 = pneg %p148
        $region22: #{_forward_impl.3} parent=11 // pred_check_branch
          %236 = sbr.rel (%p234) target = $region24
        $region23: #{_forward_impl.3} parent=11 // pred_region
          %s238 = ssub.s32 16, 16
          %239 = vsyncadd [#allocation6], %s238
          %s241 = sshll.u32 %s4, 4
          %s242 = int_to_ptr.vmem [resolvable:$true] %s241
          %244 = dma.vmem_to_smem %s242, 16, [#allocation7], [#allocation6]
        $region24: #{_forward_impl.3} parent=11 // pred_fallthru
          _
        // Predicated region
        $region25: #{_forward_impl.3} parent=11 // pred_check
          %p245 = pneg %p169
        $region26: #{_forward_impl.3} parent=11 // pred_check_branch
          %247 = sbr.rel (%p245) target = $region28
        $region27: #{_forward_impl.3} parent=11 // pred_region
          _
        $region28: #{_forward_impl.3} parent=11 // pred_fallthru
          _
      $region12: #{_forward_impl.3} parent=5 // pred_fallthru
        _
      %p248 = scmp.lt.s32.totalorder %s15, 2
      // Predicated region
      $region29: #{_forward_impl.3} parent=5 // pred_check
        %p249 = pneg %p248
      $region30: #{_forward_impl.3} parent=5 // pred_check_branch
        %251 = sbr.rel (%p249) target = $region32
      $region31: #{_forward_impl.3} parent=5 // pred_region
        // Predicated region
        $region33: #{_forward_impl.3} parent=31 // pred_check
          %p252 = pneg %p49
        $region34: #{_forward_impl.3} parent=31 // pred_check_branch
          %254 = sbr.rel (%p252) target = $region36
        $region35: #{_forward_impl.3} parent=31 // pred_region
          %s255 = smul.u32 4, %s23
          %p256 = scmp.lt.s32.totalorder %s22, 3
          %s257 = scalar_select %p256, %s22, 3
          %p258 = scmp.lt.s32.totalorder %s255, 3
          %s259 = scalar_select %p258, %s255, 3
          %s260 = smul.addr %s257, 4
          %s261 = sadd.s32 %s259, %s260
          %s262 = smul.addr %s261, 2
          %s263 = scalar_lea.vmem %s0, %s262
          %s264 = smul.u32 4, %s23
        $region36: #{_forward_impl.3} parent=31 // pred_fallthru
          _
        // Predicated region
        $region37: #{_forward_impl.3} parent=31 // pred_check
          %p265 = pneg %p79
        $region38: #{_forward_impl.3} parent=31 // pred_check_branch
          %267 = sbr.rel (%p265) target = $region40
        $region39: #{_forward_impl.3} parent=31 // pred_region
          %s268 = sadd.s32 %s22, 2
          %s269 = smul.u32 4, %s23
          %p270 = scmp.lt.s32.totalorder %s268, 3
          %s271 = scalar_select %p270, %s268, 3
          %p272 = scmp.lt.s32.totalorder %s269, 3
          %s273 = scalar_select %p272, %s269, 3
          %s274 = smul.addr %s271, 4
          %s275 = sadd.s32 %s273, %s274
          %s276 = smul.addr %s275, 2
          %s277 = scalar_lea.vmem %s1, %s276
          %s278 = sadd.s32 %s22, 2
          %s279 = smul.u32 4, %s23
        $region40: #{_forward_impl.3} parent=31 // pred_fallthru
          _
      $region32: #{_forward_impl.3} parent=5 // pred_fallthru
        _
      %p280 = scmp.le.s32.totalorder 1, %s15
      %p281 = scmp.lt.s32.totalorder %s15, 3
      %p282 = pnand %p280, %p281
      %p283 = pneg %p282
      // Predicated region
      $region41: #{_forward_impl.3} parent=5 // pred_check
        _
      $region42: #{_forward_impl.3} parent=5 // pred_check_branch
        %285 = sbr.rel (%p282) target = $region44
      $region43: #{_forward_impl.3} parent=5 // pred_region
        %s286 = ssub.s32 %s15, 1
        // Predicated region
        $region45: #{_forward_impl.3} parent=43 // pred_check
          %p287 = pneg %p106
        $region46: #{_forward_impl.3} parent=43 // pred_check_branch
          %289 = sbr.rel (%p287) target = $region48
        $region47: #{_forward_impl.3} parent=43 // pred_region
          %290 = dma.done [#allocation4], 128
        $region48: #{_forward_impl.3} parent=43 // pred_fallthru
          _
        // Predicated region
        $region49: #{_forward_impl.3} parent=43 // pred_check
          %p291 = pneg %p127
        $region50: #{_forward_impl.3} parent=43 // pred_check_branch
          %293 = sbr.rel (%p291) target = $region52
        $region51: #{_forward_impl.3} parent=43 // pred_region
          %294 = dma.done [#allocation6], 16
        $region52: #{_forward_impl.3} parent=43 // pred_fallthru
          _
        // Predicated region
        $region53: #{_forward_impl.3} parent=43 // pred_check
          %p295 = pneg %p148
        $region54: #{_forward_impl.3} parent=43 // pred_check_branch
          %297 = sbr.rel (%p295) target = $region56
        $region55: #{_forward_impl.3} parent=43 // pred_region
          %298 = dma.done [#allocation6], 16
        $region56: #{_forward_impl.3} parent=43 // pred_fallthru
          _
        %299 = sfence
        %s300 = smul.u32 4, %s25
        %p301 = scmp.lt.s32.totalorder %s24, 3
        %s302 = scalar_select %p301, %s24, 3
        %p303 = scmp.lt.s32.totalorder %s300, 3
        %s304 = scalar_select %p303, %s300, 3
        %s305 = smul.addr %s302, 4
        %s306 = sadd.s32 %s304, %s305
        %s307 = smul.addr %s306, 2
        %s308 = scalar_lea.vmem %s0, %s307
        %p309 = pneg %p55
        %p310 = pneg %p52
        %s311 = sadd.s32 %s24, 2
        %s312 = smul.u32 4, %s25
        %p313 = scmp.lt.s32.totalorder %s311, 3
        %s314 = scalar_select %p313, %s311, 3
        %p315 = scmp.lt.s32.totalorder %s312, 3
        %s316 = scalar_select %p315, %s312, 3
        %s317 = smul.addr %s314, 4
        %s318 = sadd.s32 %s316, %s317
        %s319 = smul.addr %s318, 2
        %s320 = scalar_lea.vmem %s1, %s319
        %p321 = pneg %p85
        %p322 = pneg %p82
        %p323 = pneg %p106
        %p324 = pneg %p103
        %p325 = pneg %p127
        %p326 = pneg %p124
        %p327 = pneg %p148
        %p328 = pneg %p145
        %p329 = pneg %p169
        %p330 = pneg %p166
        %p331 = pneg %p197
        %p332 = pneg %p194
        %p333 = scmp.lt.s32.totalorder %s24, 1
        %s334 = scalar_select %p333, %s24, 1
        %p335 = scmp.lt.s32.totalorder %s25, 0
        %s336 = scalar_select %p335, %s25, 0
        %s337 = sadd.s32 %s336, %s334
        %s338 = smul.addr %s337, 4
        %s339 = scalar_lea.vmem %s6, %s338
        %s340 = smul.u32 4, %s25
        %p341 = scmp.lt.s32.totalorder %s24, 3
        %s342 = scalar_select %p341, %s24, 3
        %p343 = scmp.lt.s32.totalorder %s340, 3
        %s344 = scalar_select %p343, %s340, 3
        %s345 = smul.addr %s342, 4
        %s346 = sadd.s32 %s344, %s345
        %s347 = smul.addr %s346, 2
        %s348 = scalar_lea.vmem %s0, %s347
        %s349 = smul.u32 4, %s25
        %s350 = sadd.s32 %s24, 2
        %s351 = smul.u32 4, %s25
        %p352 = scmp.lt.s32.totalorder %s350, 3
        %s353 = scalar_select %p352, %s350, 3
        %p354 = scmp.lt.s32.totalorder %s351, 3
        %s355 = scalar_select %p354, %s351, 3
        %s356 = smul.addr %s353, 4
        %s357 = sadd.s32 %s355, %s356
        %s358 = smul.addr %s357, 2
        %s359 = scalar_lea.vmem %s1, %s358
        %s360 = sadd.s32 %s24, 2
        %s361 = smul.u32 4, %s25
        %p362 = scmp.lt.s32.totalorder %s24, 1
        %s363 = scalar_select %p362, %s24, 1
        %p364 = scmp.lt.s32.totalorder %s25, 0
        %s365 = scalar_select %p364, %s25, 0
        %s366 = sadd.s32 %s365, %s363
        %s367 = smul.addr %s366, 4
        %s368 = scalar_lea.vmem %s6, %s367
        %v370 = vld [vmem:[%s348] sm:$0x3]
        %v371 = vld [vmem:[%s348 + $0x2] sm:$0x3]
        %v372 = vld [vmem:[%s348 + $0x4] sm:$0x3]
        %v373 = vld [vmem:[%s348 + $0x6] sm:$0x3]
        %v374 = vld [vmem:[%s359] sm:$0x3]
        %v375 = vld [vmem:[%s359 + $0x2] sm:$0x3]
        %v376 = vld [vmem:[%s359 + $0x4] sm:$0x3]
        %v377 = vld [vmem:[%s359 + $0x6] sm:$0x3]
        %vm378 = vcmask 523264
        %v380 = vsel %vm378, %v370, 0
        %v383 = vsel %vm378, %v374, 0
        %385 = vmatprep.subr.bf16.mxu0 0
        %386 = vmatpush1.bf16.xpose.msra.mxu0 %v383
        %387 = vmatprep.subr.bf16.mxu0 0
        %388 = vmatpush1.bf16.xpose.msra.mxu0 0
        %389 = vmatprep.subr.bf16.mxu0 0
        %390 = vmatpush1.bf16.xpose.msra.mxu0 0
        %391 = vmatprep.subr.bf16.mxu0 0
        %392 = vmatpush1.bf16.xpose.msra.mxu0 0
        %393 = vmatprep.subr.bf16.mxu0 0
        %394 = vmatpush1.bf16.xpose.msra.mxu0 0
        %395 = vmatprep.subr.bf16.mxu0 0
        %396 = vmatpush1.bf16.xpose.msra.mxu0 0
        %397 = vmatprep.subr.bf16.mxu0 0
        %398 = vmatpush1.bf16.xpose.msra.mxu0 0
        %399 = vmatprep.subr.bf16.mxu0 0
        %400 = vmatpush1.bf16.xpose.msra.mxu0 0
        %401 = vmatprep.subr.bf16.mxu0 0
        %402 = vmatpush1.bf16.xpose.msra.mxu0 0
        %403 = vmatprep.subr.bf16.mxu0 0
        %404 = vmatpush1.bf16.xpose.msra.mxu0 0
        %405 = vmatprep.subr.bf16.mxu0 0
        %406 = vmatpush1.bf16.xpose.msra.mxu0 0
        %407 = vmatprep.subr.bf16.mxu0 0
        %408 = vmatpush1.bf16.xpose.msra.mxu0 0
        %409 = vmatprep.subr.bf16.mxu0 0
        %410 = vmatpush1.bf16.xpose.msra.mxu0 0
        %411 = vmatprep.subr.bf16.mxu0 0
        %412 = vmatpush1.bf16.xpose.msra.mxu0 0
        %413 = vmatprep.subr.bf16.mxu0 0
        %414 = vmatpush1.bf16.xpose.msra.mxu0 0
        %415 = vmatprep.subr.bf16.mxu0 0
        %416 = vmatpush1.bf16.xpose.msra.mxu0 0
        %417 = vmatprep.mubr.bf16.mxu0 0
        %418 = vmatmul.mubr.bf16.gmra.mrb[0].mxu0 %v380
        %v419 = vpop.f32.mrb[0].mxu0
        %v420 = vadd.f32 0.0, %v419
        %v421 = vpop.f32.mrb[0].mxu0
        %v422 = vpop.f32.mrb[0].mxu0
        %v423 = vpop.f32.mrb[0].mxu0
        %424 = vdwg.mxu0
        %v426 = vsel %vm378, %v371, 0
        %v429 = vsel %vm378, %v375, 0
        %431 = vmatprep.subr.bf16.mxu0 0
        %432 = vmatpush1.bf16.xpose.msra.mxu0 %v429
        %433 = vmatprep.subr.bf16.mxu0 0
        %434 = vmatpush1.bf16.xpose.msra.mxu0 0
        %435 = vmatprep.subr.bf16.mxu0 0
        %436 = vmatpush1.bf16.xpose.msra.mxu0 0
        %437 = vmatprep.subr.bf16.mxu0 0
        %438 = vmatpush1.bf16.xpose.msra.mxu0 0
        %439 = vmatprep.subr.bf16.mxu0 0
        %440 = vmatpush1.bf16.xpose.msra.mxu0 0
        %441 = vmatprep.subr.bf16.mxu0 0
        %442 = vmatpush1.bf16.xpose.msra.mxu0 0
        %443 = vmatprep.subr.bf16.mxu0 0
        %444 = vmatpush1.bf16.xpose.msra.mxu0 0
        %445 = vmatprep.subr.bf16.mxu0 0
        %446 = vmatpush1.bf16.xpose.msra.mxu0 0
        %447 = vmatprep.subr.bf16.mxu0 0
        %448 = vmatpush1.bf16.xpose.msra.mxu0 0
        %449 = vmatprep.subr.bf16.mxu0 0
        %450 = vmatpush1.bf16.xpose.msra.mxu0 0
        %451 = vmatprep.subr.bf16.mxu0 0
        %452 = vmatpush1.bf16.xpose.msra.mxu0 0
        %453 = vmatprep.subr.bf16.mxu0 0
        %454 = vmatpush1.bf16.xpose.msra.mxu0 0
        %455 = vmatprep.subr.bf16.mxu0 0
        %456 = vmatpush1.bf16.xpose.msra.mxu0 0
        %457 = vmatprep.subr.bf16.mxu0 0
        %458 = vmatpush1.bf16.xpose.msra.mxu0 0
        %459 = vmatprep.subr.bf16.mxu0 0
        %460 = vmatpush1.bf16.xpose.msra.mxu0 0
        %461 = vmatprep.subr.bf16.mxu0 0
        %462 = vmatpush1.bf16.xpose.msra.mxu0 0
        %463 = vmatprep.mubr.bf16.mxu0 0
        %464 = vmatmul.mubr.bf16.gmra.mrb[0].mxu0 %v426
        %v465 = vpop.f32.mrb[0].mxu0
        %v466 = vadd.f32 0.0, %v465
        %v467 = vpop.f32.mrb[0].mxu0
        %v468 = vpop.f32.mrb[0].mxu0
        %v469 = vpop.f32.mrb[0].mxu0
        %470 = vdwg.mxu0
        %v472 = vsel %vm378, %v372, 0
        %v475 = vsel %vm378, %v376, 0
        %477 = vmatprep.subr.bf16.mxu0 0
        %478 = vmatpush1.bf16.xpose.msra.mxu0 %v475
        %479 = vmatprep.subr.bf16.mxu0 0
        %480 = vmatpush1.bf16.xpose.msra.mxu0 0
        %481 = vmatprep.subr.bf16.mxu0 0
        %482 = vmatpush1.bf16.xpose.msra.mxu0 0
        %483 = vmatprep.subr.bf16.mxu0 0
        %484 = vmatpush1.bf16.xpose.msra.mxu0 0
        %485 = vmatprep.subr.bf16.mxu0 0
        %486 = vmatpush1.bf16.xpose.msra.mxu0 0
        %487 = vmatprep.subr.bf16.mxu0 0
        %488 = vmatpush1.bf16.xpose.msra.mxu0 0
        %489 = vmatprep.subr.bf16.mxu0 0
        %490 = vmatpush1.bf16.xpose.msra.mxu0 0
        %491 = vmatprep.subr.bf16.mxu0 0
        %492 = vmatpush1.bf16.xpose.msra.mxu0 0
        %493 = vmatprep.subr.bf16.mxu0 0
        %494 = vmatpush1.bf16.xpose.msra.mxu0 0
        %495 = vmatprep.subr.bf16.mxu0 0
        %496 = vmatpush1.bf16.xpose.msra.mxu0 0
        %497 = vmatprep.subr.bf16.mxu0 0
        %498 = vmatpush1.bf16.xpose.msra.mxu0 0
        %499 = vmatprep.subr.bf16.mxu0 0
        %500 = vmatpush1.bf16.xpose.msra.mxu0 0
        %501 = vmatprep.subr.bf16.mxu0 0
        %502 = vmatpush1.bf16.xpose.msra.mxu0 0
        %503 = vmatprep.subr.bf16.mxu0 0
        %504 = vmatpush1.bf16.xpose.msra.mxu0 0
        %505 = vmatprep.subr.bf16.mxu0 0
        %506 = vmatpush1.bf16.xpose.msra.mxu0 0
        %507 = vmatprep.subr.bf16.mxu0 0
        %508 = vmatpush1.bf16.xpose.msra.mxu0 0
        %509 = vmatprep.mubr.bf16.mxu0 0
        %510 = vmatmul.mubr.bf16.gmra.mrb[0].mxu0 %v472
        %v511 = vpop.f32.mrb[0].mxu0
        %v512 = vadd.f32 0.0, %v511
        %v513 = vpop.f32.mrb[0].mxu0
        %v514 = vpop.f32.mrb[0].mxu0
        %v515 = vpop.f32.mrb[0].mxu0
        %516 = vdwg.mxu0
        %v518 = vsel %vm378, %v373, 0
        %v521 = vsel %vm378, %v377, 0
        %523 = vmatprep.subr.bf16.mxu0 0
        %524 = vmatpush1.bf16.xpose.msra.mxu0 %v521
        %525 = vmatprep.subr.bf16.mxu0 0
        %526 = vmatpush1.bf16.xpose.msra.mxu0 0
        %527 = vmatprep.subr.bf16.mxu0 0
        %528 = vmatpush1.bf16.xpose.msra.mxu0 0
        %529 = vmatprep.subr.bf16.mxu0 0
        %530 = vmatpush1.bf16.xpose.msra.mxu0 0
        %531 = vmatprep.subr.bf16.mxu0 0
        %532 = vmatpush1.bf16.xpose.msra.mxu0 0
        %533 = vmatprep.subr.bf16.mxu0 0
        %534 = vmatpush1.bf16.xpose.msra.mxu0 0
        %535 = vmatprep.subr.bf16.mxu0 0
        %536 = vmatpush1.bf16.xpose.msra.mxu0 0
        %537 = vmatprep.subr.bf16.mxu0 0
        %538 = vmatpush1.bf16.xpose.msra.mxu0 0
        %539 = vmatprep.subr.bf16.mxu0 0
        %540 = vmatpush1.bf16.xpose.msra.mxu0 0
        %541 = vmatprep.subr.bf16.mxu0 0
        %542 = vmatpush1.bf16.xpose.msra.mxu0 0
        %543 = vmatprep.subr.bf16.mxu0 0
        %544 = vmatpush1.bf16.xpose.msra.mxu0 0
        %545 = vmatprep.subr.bf16.mxu0 0
        %546 = vmatpush1.bf16.xpose.msra.mxu0 0
        %547 = vmatprep.subr.bf16.mxu0 0
        %548 = vmatpush1.bf16.xpose.msra.mxu0 0
        %549 = vmatprep.subr.bf16.mxu0 0
        %550 = vmatpush1.bf16.xpose.msra.mxu0 0
        %551 = vmatprep.subr.bf16.mxu0 0
        %552 = vmatpush1.bf16.xpose.msra.mxu0 0
        %553 = vmatprep.subr.bf16.mxu0 0
        %554 = vmatpush1.bf16.xpose.msra.mxu0 0
        %555 = vmatprep.mubr.bf16.mxu0 0
        %556 = vmatmul.mubr.bf16.gmra.mrb[0].mxu0 %v518
        %v557 = vpop.f32.mrb[0].mxu0
        %v558 = vadd.f32 0.0, %v557
        %v559 = vpop.f32.mrb[0].mxu0
        %v560 = vpop.f32.mrb[0].mxu0
        %v561 = vpop.f32.mrb[0].mxu0
        %562 = vdwg.mxu0
        %v563 = vlaneseq
        %v564 = vshrl.u32 %v563, 7
        %v565 = vlaneseq
        %v566 = vand.u32 %v565, 127
        %v567 = vsub.s32 %v564, %v566
        %vm568 = vcmp.eq.s32.totalorder %v567, 0
        %v569 = vsel %vm568, 1, 0
        %vm570 = vcmp.eq.s32.totalorder %v569, 1
        %v571 = vsel %vm570, %v420, 0.0
        %v572 = vsel %vm570, %v466, 0.0
        %v573 = vsel %vm570, %v512, 0.0
        %v574 = vsel %vm570, %v558, 0.0
        %vm575 = vcmask 27648
        %v576 = vsel %vm575, %v571, 0.0
        %577 = vadd.xlane.f32.xlu0 %v576
        %v578 = vpop.xlane.xlu0 %577
        %v579 = vsel %vm575, %v572, 0.0
        %580 = vadd.xlane.f32.xlu0 %v579
        %v581 = vpop.xlane.xlu0 %580
        %v582 = vsel %vm575, %v573, 0.0
        %583 = vadd.xlane.f32.xlu0 %v582
        %v584 = vpop.xlane.xlu0 %583
        %v585 = vsel %vm575, %v574, 0.0
        %586 = vadd.xlane.f32.xlu0 %v585
        %v587 = vpop.xlane.xlu0 %586
        %v588 = vmul.f32 %v578, 0.125
        %v589 = vmul.f32 %v581, 0.125
        %v590 = vmul.f32 %v584, 0.125
        %v591 = vmul.f32 %v587, 0.125
        %vm592 = vcmp.eq.s32.totalorder %v567, 1
        %v593 = vsel %vm592, 1, 0
        %vm594 = vcmp.eq.s32.totalorder %v593, 1
        %v595 = vsel %vm594, %v420, 0.0
        %v596 = vsel %vm594, %v466, 0.0
        %v597 = vsel %vm594, %v512, 0.0
        %v598 = vsel %vm594, %v558, 0.0
        %v599 = vsel %vm575, %v595, 0.0
        %600 = vadd.xlane.f32.xlu0 %v599
        %v601 = vpop.xlane.xlu0 %600
        %v602 = vsel %vm575, %v596, 0.0
        %603 = vadd.xlane.f32.xlu0 %v602
        %v604 = vpop.xlane.xlu0 %603
        %v605 = vsel %vm575, %v597, 0.0
        %606 = vadd.xlane.f32.xlu0 %v605
        %v607 = vpop.xlane.xlu0 %606
        %v608 = vsel %vm575, %v598, 0.0
        %609 = vadd.xlane.f32.xlu0 %v608
        %v610 = vpop.xlane.xlu0 %609
        %v611 = vmul.f32 %v601, 0.125
        %v612 = vmul.f32 %v604, 0.125
        %v613 = vmul.f32 %v607, 0.125
        %v614 = vmul.f32 %v610, 0.125
        %vm615 = vcmp.eq.s32.totalorder %v567, 2
        %v616 = vsel %vm615, 1, 0
        %vm617 = vcmp.eq.s32.totalorder %v616, 1
        %v618 = vsel %vm617, %v420, 0.0
        %v619 = vsel %vm617, %v466, 0.0
        %v620 = vsel %vm617, %v512, 0.0
        %v621 = vsel %vm617, %v558, 0.0
        %v622 = vsel %vm575, %v618, 0.0
        %623 = vadd.xlane.f32.xlu0 %v622
        %v624 = vpop.xlane.xlu0 %623
        %v625 = vsel %vm575, %v619, 0.0
        %626 = vadd.xlane.f32.xlu0 %v625
        %v627 = vpop.xlane.xlu0 %626
        %v628 = vsel %vm575, %v620, 0.0
        %629 = vadd.xlane.f32.xlu0 %v628
        %v630 = vpop.xlane.xlu0 %629
        %v631 = vsel %vm575, %v621, 0.0
        %632 = vadd.xlane.f32.xlu0 %v631
        %v633 = vpop.xlane.xlu0 %632
        %v634 = vmul.f32 %v624, 0.125
        %v635 = vmul.f32 %v627, 0.125
        %v636 = vmul.f32 %v630, 0.125
        %v637 = vmul.f32 %v633, 0.125
        %vm638 = vcmp.eq.s32.totalorder %v567, 3
        %v639 = vsel %vm638, 1, 0
        %vm640 = vcmp.eq.s32.totalorder %v639, 1
        %v641 = vsel %vm640, %v420, 0.0
        %v642 = vsel %vm640, %v466, 0.0
        %v643 = vsel %vm640, %v512, 0.0
        %v644 = vsel %vm640, %v558, 0.0
        %v645 = vsel %vm575, %v641, 0.0
        %646 = vadd.xlane.f32.xlu0 %v645
        %v647 = vpop.xlane.xlu0 %646
        %v648 = vsel %vm575, %v642, 0.0
        %649 = vadd.xlane.f32.xlu0 %v648
        %v650 = vpop.xlane.xlu0 %649
        %v651 = vsel %vm575, %v643, 0.0
        %652 = vadd.xlane.f32.xlu0 %v651
        %v653 = vpop.xlane.xlu0 %652
        %v654 = vsel %vm575, %v644, 0.0
        %655 = vadd.xlane.f32.xlu0 %v654
        %v656 = vpop.xlane.xlu0 %655
        %v657 = vmul.f32 %v647, 0.125
        %v658 = vmul.f32 %v650, 0.125
        %v659 = vmul.f32 %v653, 0.125
        %v660 = vmul.f32 %v656, 0.125
        %vm661 = vcmp.ge.s32.totalorder %v566, 1
        %v666 = vlaneseq
        %v667 = vshrl.u32 %v666, 7
        %v668 = vsub.s32 %v566, %v667
        %v669 = vrot.slane %v611, %v668
        %v670 = vlaneseq
        %v671 = vshrl.u32 %v670, 7
        %v672 = vsub.s32 %v566, %v671
        %v673 = vrot.slane %v612, %v672
        %v674 = vlaneseq
        %v675 = vshrl.u32 %v674, 7
        %v676 = vsub.s32 %v566, %v675
        %v677 = vrot.slane %v613, %v676
        %v678 = vlaneseq
        %v679 = vshrl.u32 %v678, 7
        %v680 = vsub.s32 %v566, %v679
        %v681 = vrot.slane %v614, %v680
        %vm682 = vcmask 1041409
        %v683 = vsel %vm682, %v673, %v669
        %vm684 = vcmask 1042434
        %v685 = vsel %vm684, %v677, %v683
        %vm686 = vcmask 1043459
        %v687 = vsel %vm686, %v681, %v685
        %v689 = vsel %vm661, %v687, -1e+30
        %v691 = vlaneseq
        %v692 = vshrl.u32 %v691, 7
        %v693 = vsub.s32 0, %v692
        %v694 = vrot.slane %v689, %v693
        %696 = vbcast.lane.b32.xlu0 %v694, 256
        %v697 = vpop.permute.xlu0 %696
        %v698 = vlaneseq
        %v699 = vshrl.u32 %v698, 7
        %v700 = vsub.s32 1, %v699
        %v701 = vrot.slane %v689, %v700
        %703 = vbcast.lane.b32.xlu0 %v701, 256
        %v704 = vpop.permute.xlu0 %703
        %v705 = vlaneseq
        %v706 = vshrl.u32 %v705, 7
        %v707 = vsub.s32 2, %v706
        %v708 = vrot.slane %v689, %v707
        %710 = vbcast.lane.b32.xlu0 %v708, 256
        %v711 = vpop.permute.xlu0 %710
        %v712 = vlaneseq
        %v713 = vshrl.u32 %v712, 7
        %v714 = vsub.s32 3, %v713
        %v715 = vrot.slane %v689, %v714
        %717 = vbcast.lane.b32.xlu0 %v715, 256
        %v718 = vpop.permute.xlu0 %717
        %v723 = vmax.f32 %v588, %v697
        %v724 = vmax.f32 %v589, %v704
        %v725 = vmax.f32 %v590, %v711
        %v726 = vmax.f32 %v591, %v718
        %vm727 = vcmp.ge.s32.totalorder %v566, 2
        %v732 = vlaneseq
        %v733 = vshrl.u32 %v732, 7
        %v734 = vsub.s32 %v566, %v733
        %v735 = vrot.slane %v634, %v734
        %v736 = vlaneseq
        %v737 = vshrl.u32 %v736, 7
        %v738 = vsub.s32 %v566, %v737
        %v739 = vrot.slane %v635, %v738
        %v740 = vlaneseq
        %v741 = vshrl.u32 %v740, 7
        %v742 = vsub.s32 %v566, %v741
        %v743 = vrot.slane %v636, %v742
        %v744 = vlaneseq
        %v745 = vshrl.u32 %v744, 7
        %v746 = vsub.s32 %v566, %v745
        %v747 = vrot.slane %v637, %v746
        %v748 = vsel %vm682, %v739, %v735
        %v749 = vsel %vm684, %v743, %v748
        %v750 = vsel %vm686, %v747, %v749
        %v752 = vsel %vm727, %v750, -1e+30
        %v754 = vlaneseq
        %v755 = vshrl.u32 %v754, 7
        %v756 = vsub.s32 0, %v755
        %v757 = vrot.slane %v752, %v756
        %759 = vbcast.lane.b32.xlu0 %v757, 256
        %v760 = vpop.permute.xlu0 %759
        %v761 = vlaneseq
        %v762 = vshrl.u32 %v761, 7
        %v763 = vsub.s32 1, %v762
        %v764 = vrot.slane %v752, %v763
        %766 = vbcast.lane.b32.xlu0 %v764, 256
        %v767 = vpop.permute.xlu0 %766
        %v768 = vlaneseq
        %v769 = vshrl.u32 %v768, 7
        %v770 = vsub.s32 2, %v769
        %v771 = vrot.slane %v752, %v770
        %773 = vbcast.lane.b32.xlu0 %v771, 256
        %v774 = vpop.permute.xlu0 %773
        %v775 = vlaneseq
        %v776 = vshrl.u32 %v775, 7
        %v777 = vsub.s32 3, %v776
        %v778 = vrot.slane %v752, %v777
        %780 = vbcast.lane.b32.xlu0 %v778, 256
        %v781 = vpop.permute.xlu0 %780
        %v786 = vmax.f32 %v723, %v760
        %v787 = vmax.f32 %v724, %v767
        %v788 = vmax.f32 %v725, %v774
        %v789 = vmax.f32 %v726, %v781
        %vm790 = vcmp.ge.s32.totalorder %v566, 3
        %v795 = vlaneseq
        %v796 = vshrl.u32 %v795, 7
        %v797 = vsub.s32 %v566, %v796
        %v798 = vrot.slane %v657, %v797
        %v799 = vlaneseq
        %v800 = vshrl.u32 %v799, 7
        %v801 = vsub.s32 %v566, %v800
        %v802 = vrot.slane %v658, %v801
        %v803 = vlaneseq
        %v804 = vshrl.u32 %v803, 7
        %v805 = vsub.s32 %v566, %v804
        %v806 = vrot.slane %v659, %v805
        %v807 = vlaneseq
        %v808 = vshrl.u32 %v807, 7
        %v809 = vsub.s32 %v566, %v808
        %v810 = vrot.slane %v660, %v809
        %v811 = vsel %vm682, %v802, %v798
        %v812 = vsel %vm684, %v806, %v811
        %v813 = vsel %vm686, %v810, %v812
        %v815 = vsel %vm790, %v813, -1e+30
        %v817 = vlaneseq
        %v818 = vshrl.u32 %v817, 7
        %v819 = vsub.s32 0, %v818
        %v820 = vrot.slane %v815, %v819
        %822 = vbcast.lane.b32.xlu0 %v820, 256
        %v823 = vpop.permute.xlu0 %822
        %v824 = vlaneseq
        %v825 = vshrl.u32 %v824, 7
        %v826 = vsub.s32 1, %v825
        %v827 = vrot.slane %v815, %v826
        %829 = vbcast.lane.b32.xlu0 %v827, 256
        %v830 = vpop.permute.xlu0 %829
        %v831 = vlaneseq
        %v832 = vshrl.u32 %v831, 7
        %v833 = vsub.s32 2, %v832
        %v834 = vrot.slane %v815, %v833
        %836 = vbcast.lane.b32.xlu0 %v834, 256
        %v837 = vpop.permute.xlu0 %836
        %v838 = vlaneseq
        %v839 = vshrl.u32 %v838, 7
        %v840 = vsub.s32 3, %v839
        %v841 = vrot.slane %v815, %v840
        %843 = vbcast.lane.b32.xlu0 %v841, 256
        %v844 = vpop.permute.xlu0 %843
        %v849 = vmax.f32 %v786, %v823
        %v850 = vmax.f32 %v787, %v830
        %v851 = vmax.f32 %v788, %v837
        %v852 = vmax.f32 %v789, %v844
        %v853 = vsub.f32 %v588, %v849
        %v854 = vsub.f32 %v589, %v850
        %v855 = vsub.f32 %v590, %v851
        %v856 = vsub.f32 %v591, %v852
        %v857 = vmul.f32 %v853, 1.442695
        %v858 = vpow.pop %v857
        %v859 = vmul.f32 %v854, 1.442695
        %v860 = vpow.pop %v859
        %v861 = vmul.f32 %v855, 1.442695
        %v862 = vpow.pop %v861
        %v863 = vmul.f32 %v856, 1.442695
        %v864 = vpow.pop %v863
        %v865 = vadd.f32 %v858, 0.0
        %v866 = vadd.f32 %v860, 0.0
        %v867 = vadd.f32 %v862, 0.0
        %v868 = vadd.f32 %v864, 0.0
        %v869 = vmul.f32 %v858, 0.0
        %v870 = vmul.f32 %v860, 0.0
        %v871 = vmul.f32 %v862, 0.0
        %v872 = vmul.f32 %v864, 0.0
        %v873 = vadd.f32 %v869, 0.0
        %v874 = vadd.f32 %v870, 0.0
        %v875 = vadd.f32 %v871, 0.0
        %v876 = vadd.f32 %v872, 0.0
        %881 = vset.pattern.permute.xlu0 0
        %882 = vperm.xlu0 %881, %v849
        %v883 = vpop.permute.xlu0 %882
        %884 = vset.pattern.permute.xlu0 0
        %885 = vperm.xlu0 %884, %v850
        %v886 = vpop.permute.xlu0 %885
        %887 = vset.pattern.permute.xlu0 0
        %888 = vperm.xlu0 %887, %v851
        %v889 = vpop.permute.xlu0 %888
        %890 = vset.pattern.permute.xlu0 0
        %891 = vperm.xlu0 %890, %v852
        %v892 = vpop.permute.xlu0 %891
        %v893 = vlaneseq
        %v894 = vshrl.u32 %v893, 7
        %v895 = vsub.s32 %v566, %v894
        %v896 = vrot.slane %v883, %v895
        %v897 = vlaneseq
        %v898 = vshrl.u32 %v897, 7
        %v899 = vsub.s32 %v566, %v898
        %v900 = vrot.slane %v886, %v899
        %v901 = vlaneseq
        %v902 = vshrl.u32 %v901, 7
        %v903 = vsub.s32 %v566, %v902
        %v904 = vrot.slane %v889, %v903
        %v905 = vlaneseq
        %v906 = vshrl.u32 %v905, 7
        %v907 = vsub.s32 %v566, %v906
        %v908 = vrot.slane %v892, %v907
        %v909 = vsel %vm682, %v900, %v896
        %v910 = vsel %vm684, %v904, %v909
        %v911 = vsel %vm686, %v908, %v910
        %v913 = vsub.f32 %v689, %v911
        %v914 = vmul.f32 %v913, 1.442695
        %v915 = vpow.pop %v914
        %v917 = vlaneseq
        %v918 = vshrl.u32 %v917, 7
        %v919 = vsub.s32 0, %v918
        %v920 = vrot.slane %v915, %v919
        %922 = vbcast.lane.b32.xlu0 %v920, 256
        %v923 = vpop.permute.xlu0 %922
        %v924 = vlaneseq
        %v925 = vshrl.u32 %v924, 7
        %v926 = vsub.s32 1, %v925
        %v927 = vrot.slane %v915, %v926
        %929 = vbcast.lane.b32.xlu0 %v927, 256
        %v930 = vpop.permute.xlu0 %929
        %v931 = vlaneseq
        %v932 = vshrl.u32 %v931, 7
        %v933 = vsub.s32 2, %v932
        %v934 = vrot.slane %v915, %v933
        %936 = vbcast.lane.b32.xlu0 %v934, 256
        %v937 = vpop.permute.xlu0 %936
        %v938 = vlaneseq
        %v939 = vshrl.u32 %v938, 7
        %v940 = vsub.s32 3, %v939
        %v941 = vrot.slane %v915, %v940
        %943 = vbcast.lane.b32.xlu0 %v941, 256
        %v944 = vpop.permute.xlu0 %943
        %v949 = vadd.f32 %v865, %v923
        %v950 = vadd.f32 %v866, %v930
        %v951 = vadd.f32 %v867, %v937
        %v952 = vadd.f32 %v868, %v944
        %v953 = vadd.f32 %v873, %v923
        %v954 = vadd.f32 %v874, %v930
        %v955 = vadd.f32 %v875, %v937
        %v956 = vadd.f32 %v876, %v944
        %v957 = vsub.f32 %v752, %v911
        %v958 = vmul.f32 %v957, 1.442695
        %v959 = vpow.pop %v958
        %v961 = vlaneseq
        %v962 = vshrl.u32 %v961, 7
        %v963 = vsub.s32 0, %v962
        %v964 = vrot.slane %v959, %v963
        %966 = vbcast.lane.b32.xlu0 %v964, 256
        %v967 = vpop.permute.xlu0 %966
        %v968 = vlaneseq
        %v969 = vshrl.u32 %v968, 7
        %v970 = vsub.s32 1, %v969
        %v971 = vrot.slane %v959, %v970
        %973 = vbcast.lane.b32.xlu0 %v971, 256
        %v974 = vpop.permute.xlu0 %973
        %v975 = vlaneseq
        %v976 = vshrl.u32 %v975, 7
        %v977 = vsub.s32 2, %v976
        %v978 = vrot.slane %v959, %v977
        %980 = vbcast.lane.b32.xlu0 %v978, 256
        %v981 = vpop.permute.xlu0 %980
        %v982 = vlaneseq
        %v983 = vshrl.u32 %v982, 7
        %v984 = vsub.s32 3, %v983
        %v985 = vrot.slane %v959, %v984
        %987 = vbcast.lane.b32.xlu0 %v985, 256
        %v988 = vpop.permute.xlu0 %987
        %v993 = vadd.f32 %v949, %v967
        %v994 = vadd.f32 %v950, %v974
        %v995 = vadd.f32 %v951, %v981
        %v996 = vadd.f32 %v952, %v988
        %v997 = vmul.f32 %v959, 2.0
        %v999 = vlaneseq
        %v1000 = vshrl.u32 %v999, 7
        %v1001 = vsub.s32 0, %v1000
        %v1002 = vrot.slane %v997, %v1001
        %1004 = vbcast.lane.b32.xlu0 %v1002, 256
        %v1005 = vpop.permute.xlu0 %1004
        %v1006 = vlaneseq
        %v1007 = vshrl.u32 %v1006, 7
        %v1008 = vsub.s32 1, %v1007
        %v1009 = vrot.slane %v997, %v1008
        %1011 = vbcast.lane.b32.xlu0 %v1009, 256
        %v1012 = vpop.permute.xlu0 %1011
        %v1013 = vlaneseq
        %v1014 = vshrl.u32 %v1013, 7
        %v1015 = vsub.s32 2, %v1014
        %v1016 = vrot.slane %v997, %v1015
        %1018 = vbcast.lane.b32.xlu0 %v1016, 256
        %v1019 = vpop.permute.xlu0 %1018
        %v1020 = vlaneseq
        %v1021 = vshrl.u32 %v1020, 7
        %v1022 = vsub.s32 3, %v1021
        %v1023 = vrot.slane %v997, %v1022
        %1025 = vbcast.lane.b32.xlu0 %v1023, 256
        %v1026 = vpop.permute.xlu0 %1025
        %v1031 = vadd.f32 %v953, %v1005
        %v1032 = vadd.f32 %v954, %v1012
        %v1033 = vadd.f32 %v955, %v1019
        %v1034 = vadd.f32 %v956, %v1026
        %v1035 = vsub.f32 %v815, %v911
        %v1036 = vmul.f32 %v1035, 1.442695
        %v1037 = vpow.pop %v1036
        %v1039 = vlaneseq
        %v1040 = vshrl.u32 %v1039, 7
        %v1041 = vsub.s32 0, %v1040
        %v1042 = vrot.slane %v1037, %v1041
        %1044 = vbcast.lane.b32.xlu0 %v1042, 256
        %v1045 = vpop.permute.xlu0 %1044
        %v1046 = vlaneseq
        %v1047 = vshrl.u32 %v1046, 7
        %v1048 = vsub.s32 1, %v1047
        %v1049 = vrot.slane %v1037, %v1048
        %1051 = vbcast.lane.b32.xlu0 %v1049, 256
        %v1052 = vpop.permute.xlu0 %1051
        %v1053 = vlaneseq
        %v1054 = vshrl.u32 %v1053, 7
        %v1055 = vsub.s32 2, %v1054
        %v1056 = vrot.slane %v1037, %v1055
        %1058 = vbcast.lane.b32.xlu0 %v1056, 256
        %v1059 = vpop.permute.xlu0 %1058
        %v1060 = vlaneseq
        %v1061 = vshrl.u32 %v1060, 7
        %v1062 = vsub.s32 3, %v1061
        %v1063 = vrot.slane %v1037, %v1062
        %1065 = vbcast.lane.b32.xlu0 %v1063, 256
        %v1066 = vpop.permute.xlu0 %1065
        %v1071 = vadd.f32 %v993, %v1045
        %v1072 = vadd.f32 %v994, %v1052
        %v1073 = vadd.f32 %v995, %v1059
        %v1074 = vadd.f32 %v996, %v1066
        %v1075 = vmul.f32 %v1037, 3.0
        %v1077 = vlaneseq
        %v1078 = vshrl.u32 %v1077, 7
        %v1079 = vsub.s32 0, %v1078
        %v1080 = vrot.slane %v1075, %v1079
        %1082 = vbcast.lane.b32.xlu0 %v1080, 256
        %v1083 = vpop.permute.xlu0 %1082
        %v1084 = vlaneseq
        %v1085 = vshrl.u32 %v1084, 7
        %v1086 = vsub.s32 1, %v1085
        %v1087 = vrot.slane %v1075, %v1086
        %1089 = vbcast.lane.b32.xlu0 %v1087, 256
        %v1090 = vpop.permute.xlu0 %1089
        %v1091 = vlaneseq
        %v1092 = vshrl.u32 %v1091, 7
        %v1093 = vsub.s32 2, %v1092
        %v1094 = vrot.slane %v1075, %v1093
        %1096 = vbcast.lane.b32.xlu0 %v1094, 256
        %v1097 = vpop.permute.xlu0 %1096
        %v1098 = vlaneseq
        %v1099 = vshrl.u32 %v1098, 7
        %v1100 = vsub.s32 3, %v1099
        %v1101 = vrot.slane %v1075, %v1100
        %1103 = vbcast.lane.b32.xlu0 %v1101, 256
        %v1104 = vpop.permute.xlu0 %1103
        %v1109 = vadd.f32 %v1031, %v1083
        %v1110 = vadd.f32 %v1032, %v1090
        %v1111 = vadd.f32 %v1033, %v1097
        %v1112 = vadd.f32 %v1034, %v1104
        %v1113 = vrcp.pop %v1071
        %v1114 = vrcp.pop %v1072
        %v1115 = vrcp.pop %v1073
        %v1116 = vrcp.pop %v1074
        %v1117 = vmul.f32 %v1109, %v1113
        %v1118 = vmul.f32 %v1110, %v1114
        %v1119 = vmul.f32 %v1111, %v1115
        %v1120 = vmul.f32 %v1112, %v1116
        %s1121 = sld [smem:[#allocation3]]
        %s1122 = sld [smem:[#allocation3 + $0x80]]
        %s1123 = sld [smem:[#allocation3 + $0x100]]
        %s1124 = sld [smem:[#allocation3 + $0x180]]
        %s1125 = sld [smem:[#allocation3 + $0x1]]
        %s1126 = sld [smem:[#allocation3 + $0x81]]
        %s1127 = sld [smem:[#allocation3 + $0x101]]
        %s1128 = sld [smem:[#allocation3 + $0x181]]
        %s1129 = sld [smem:[#allocation3 + $0x2]]
        %s1130 = sld [smem:[#allocation3 + $0x82]]
        %s1131 = sld [smem:[#allocation3 + $0x102]]
        %s1132 = sld [smem:[#allocation3 + $0x182]]
        %s1133 = sld [smem:[#allocation3 + $0x3]]
        %s1134 = sld [smem:[#allocation3 + $0x83]]
        %s1135 = sld [smem:[#allocation3 + $0x103]]
        %s1136 = sld [smem:[#allocation3 + $0x183]]
        %s1137 = sld [smem:[#allocation3 + $0x4]]
        %s1138 = sld [smem:[#allocation3 + $0x84]]
        %s1139 = sld [smem:[#allocation3 + $0x104]]
        %s1140 = sld [smem:[#allocation3 + $0x184]]
        %s1141 = sld [smem:[#allocation3 + $0x5]]
        %s1142 = sld [smem:[#allocation3 + $0x85]]
        %s1143 = sld [smem:[#allocation3 + $0x105]]
        %s1144 = sld [smem:[#allocation3 + $0x185]]
        %s1145 = sld [smem:[#allocation3 + $0x6]]
        %s1146 = sld [smem:[#allocation3 + $0x86]]
        %s1147 = sld [smem:[#allocation3 + $0x106]]
        %s1148 = sld [smem:[#allocation3 + $0x186]]
        %s1149 = sld [smem:[#allocation3 + $0x7]]
        %s1150 = sld [smem:[#allocation3 + $0x87]]
        %s1151 = sld [smem:[#allocation3 + $0x107]]
        %s1152 = sld [smem:[#allocation3 + $0x187]]
        %s1153 = sld [smem:[#allocation3 + $0x8]]
        %s1154 = sld [smem:[#allocation3 + $0x88]]
        %s1155 = sld [smem:[#allocation3 + $0x108]]
        %s1156 = sld [smem:[#allocation3 + $0x188]]
        %s1157 = sld [smem:[#allocation3 + $0x9]]
        %s1158 = sld [smem:[#allocation3 + $0x89]]
        %s1159 = sld [smem:[#allocation3 + $0x109]]
        %s1160 = sld [smem:[#allocation3 + $0x189]]
        %s1161 = sld [smem:[#allocation3 + $0xa]]
        %s1162 = sld [smem:[#allocation3 + $0x8a]]
        %s1163 = sld [smem:[#allocation3 + $0x10a]]
        %s1164 = sld [smem:[#allocation3 + $0x18a]]
        %s1165 = sld [smem:[#allocation3 + $0xb]]
        %s1166 = sld [smem:[#allocation3 + $0x8b]]
        %s1167 = sld [smem:[#allocation3 + $0x10b]]
        %s1168 = sld [smem:[#allocation3 + $0x18b]]
        %s1169 = sld [smem:[#allocation3 + $0xc]]
        %s1170 = sld [smem:[#allocation3 + $0x8c]]
        %s1171 = sld [smem:[#allocation3 + $0x10c]]
        %s1172 = sld [smem:[#allocation3 + $0x18c]]
        %s1173 = sld [smem:[#allocation3 + $0xd]]
        %s1174 = sld [smem:[#allocation3 + $0x8d]]
        %s1175 = sld [smem:[#allocation3 + $0x10d]]
        %s1176 = sld [smem:[#allocation3 + $0x18d]]
        %s1177 = sld [smem:[#allocation3 + $0xe]]
        %s1178 = sld [smem:[#allocation3 + $0x8e]]
        %s1179 = sld [smem:[#allocation3 + $0x10e]]
        %s1180 = sld [smem:[#allocation3 + $0x18e]]
        %s1181 = sld [smem:[#allocation3 + $0xf]]
        %s1182 = sld [smem:[#allocation3 + $0x8f]]
        %s1183 = sld [smem:[#allocation3 + $0x10f]]
        %s1184 = sld [smem:[#allocation3 + $0x18f]]
        %s1185 = sld [smem:[#allocation3 + $0x200]]
        %s1186 = sld [smem:[#allocation3 + $0x201]]
        %s1187 = sld [smem:[#allocation3 + $0x202]]
        %s1188 = sld [smem:[#allocation3 + $0x203]]
        %s1189 = sld [smem:[#allocation3 + $0x204]]
        %s1190 = sld [smem:[#allocation3 + $0x205]]
        %s1191 = sld [smem:[#allocation3 + $0x206]]
        %s1192 = sld [smem:[#allocation3 + $0x207]]
        %s1193 = sld [smem:[#allocation3 + $0x208]]
        %s1194 = sld [smem:[#allocation3 + $0x209]]
        %s1195 = sld [smem:[#allocation3 + $0x20a]]
        %s1196 = sld [smem:[#allocation3 + $0x20b]]
        %s1197 = sld [smem:[#allocation3 + $0x20c]]
        %s1198 = sld [smem:[#allocation3 + $0x20d]]
        %s1199 = sld [smem:[#allocation3 + $0x20e]]
        %s1200 = sld [smem:[#allocation3 + $0x20f]]
        %s1201 = sld [smem:[#allocation5]]
        %s1202 = sld [smem:[#allocation5 + $0x1]]
        %s1203 = sld [smem:[#allocation5 + $0x2]]
        %s1204 = sld [smem:[#allocation5 + $0x3]]
        %s1205 = sld [smem:[#allocation5 + $0x4]]
        %s1206 = sld [smem:[#allocation5 + $0x5]]
        %s1207 = sld [smem:[#allocation5 + $0x6]]
        %s1208 = sld [smem:[#allocation5 + $0x7]]
        %s1209 = sld [smem:[#allocation5 + $0x8]]
        %s1210 = sld [smem:[#allocation5 + $0x9]]
        %s1211 = sld [smem:[#allocation5 + $0xa]]
        %s1212 = sld [smem:[#allocation5 + $0xb]]
        %s1213 = sld [smem:[#allocation5 + $0xc]]
        %s1214 = sld [smem:[#allocation5 + $0xd]]
        %s1215 = sld [smem:[#allocation5 + $0xe]]
        %s1216 = sld [smem:[#allocation5 + $0xf]]
        %s1217 = sld [smem:[#allocation7]]
        %s1218 = sld [smem:[#allocation7 + $0x1]]
        %s1219 = sld [smem:[#allocation7 + $0x2]]
        %s1220 = sld [smem:[#allocation7 + $0x3]]
        %s1221 = sld [smem:[#allocation7 + $0x4]]
        %s1222 = sld [smem:[#allocation7 + $0x5]]
        %s1223 = sld [smem:[#allocation7 + $0x6]]
        %s1224 = sld [smem:[#allocation7 + $0x7]]
        %s1225 = sld [smem:[#allocation7 + $0x8]]
        %s1226 = sld [smem:[#allocation7 + $0x9]]
        %s1227 = sld [smem:[#allocation7 + $0xa]]
        %s1228 = sld [smem:[#allocation7 + $0xb]]
        %s1229 = sld [smem:[#allocation7 + $0xc]]
        %s1230 = sld [smem:[#allocation7 + $0xd]]
        %s1231 = sld [smem:[#allocation7 + $0xe]]
        %s1232 = sld [smem:[#allocation7 + $0xf]]
        %s1233 = sld [smem:[#allocation2]]
        %v1234 = vstv %s1185
        %v1235 = vmul.f32 %v1117, %v1234
        %v1236 = vmul.f32 %v1118, %v1234
        %v1237 = vmul.f32 %v1119, %v1234
        %v1238 = vmul.f32 %v1120, %v1234
        %v1239 = vstv %s1201
        %v1240 = vadd.f32 %v1235, %v1239
        %v1241 = vadd.f32 %v1236, %v1239
        %v1242 = vadd.f32 %v1237, %v1239
        %v1243 = vadd.f32 %v1238, %v1239
        %v1244 = vstv %s1121
        %v1245 = vmul.f32 %v588, %v1244
        %v1246 = vmul.f32 %v589, %v1244
        %v1247 = vmul.f32 %v590, %v1244
        %v1248 = vmul.f32 %v591, %v1244
        %v1249 = vadd.f32 %v1240, %v1245
        %v1250 = vadd.f32 %v1241, %v1246
        %v1251 = vadd.f32 %v1242, %v1247
        %v1252 = vadd.f32 %v1243, %v1248
        %v1253 = vstv %s1122
        %v1254 = vmul.f32 %v611, %v1253
        %v1255 = vmul.f32 %v612, %v1253
        %v1256 = vmul.f32 %v613, %v1253
        %v1257 = vmul.f32 %v614, %v1253
        %v1258 = vadd.f32 %v1249, %v1254
        %v1259 = vadd.f32 %v1250, %v1255
        %v1260 = vadd.f32 %v1251, %v1256
        %v1261 = vadd.f32 %v1252, %v1257
        %v1262 = vstv %s1123
        %v1263 = vmul.f32 %v634, %v1262
        %v1264 = vmul.f32 %v635, %v1262
        %v1265 = vmul.f32 %v636, %v1262
        %v1266 = vmul.f32 %v637, %v1262
        %v1267 = vadd.f32 %v1258, %v1263
        %v1268 = vadd.f32 %v1259, %v1264
        %v1269 = vadd.f32 %v1260, %v1265
        %v1270 = vadd.f32 %v1261, %v1266
        %v1271 = vstv %s1124
        %v1272 = vmul.f32 %v657, %v1271
        %v1273 = vmul.f32 %v658, %v1271
        %v1274 = vmul.f32 %v659, %v1271
        %v1275 = vmul.f32 %v660, %v1271
        %v1276 = vadd.f32 %v1267, %v1272
        %v1277 = vadd.f32 %v1268, %v1273
        %v1278 = vadd.f32 %v1269, %v1274
        %v1279 = vadd.f32 %v1270, %v1275
        %v1280 = vtanh.pop %v1276
        %v1281 = vtanh.pop %v1277
        %v1282 = vtanh.pop %v1278
        %v1283 = vtanh.pop %v1279
        %v1284 = vstv %s1217
        %v1285 = vmul.f32 %v1280, %v1284
        %v1286 = vmul.f32 %v1281, %v1284
        %v1287 = vmul.f32 %v1282, %v1284
        %v1288 = vmul.f32 %v1283, %v1284
        %v1289 = vstv %s1186
        %v1290 = vmul.f32 %v1117, %v1289
        %v1291 = vmul.f32 %v1118, %v1289
        %v1292 = vmul.f32 %v1119, %v1289
        %v1293 = vmul.f32 %v1120, %v1289
        %v1294 = vstv %s1202
        %v1295 = vadd.f32 %v1290, %v1294
        %v1296 = vadd.f32 %v1291, %v1294
        %v1297 = vadd.f32 %v1292, %v1294
        %v1298 = vadd.f32 %v1293, %v1294
        %v1299 = vstv %s1125
        %v1300 = vmul.f32 %v588, %v1299
        %v1301 = vmul.f32 %v589, %v1299
        %v1302 = vmul.f32 %v590, %v1299
        %v1303 = vmul.f32 %v591, %v1299
        %v1304 = vadd.f32 %v1295, %v1300
        %v1305 = vadd.f32 %v1296, %v1301
        %v1306 = vadd.f32 %v1297, %v1302
        %v1307 = vadd.f32 %v1298, %v1303
        %v1308 = vstv %s1126
        %v1309 = vmul.f32 %v611, %v1308
        %v1310 = vmul.f32 %v612, %v1308
        %v1311 = vmul.f32 %v613, %v1308
        %v1312 = vmul.f32 %v614, %v1308
        %v1313 = vadd.f32 %v1304, %v1309
        %v1314 = vadd.f32 %v1305, %v1310
        %v1315 = vadd.f32 %v1306, %v1311
        %v1316 = vadd.f32 %v1307, %v1312
        %v1317 = vstv %s1127
        %v1318 = vmul.f32 %v634, %v1317
        %v1319 = vmul.f32 %v635, %v1317
        %v1320 = vmul.f32 %v636, %v1317
        %v1321 = vmul.f32 %v637, %v1317
        %v1322 = vadd.f32 %v1313, %v1318
        %v1323 = vadd.f32 %v1314, %v1319
        %v1324 = vadd.f32 %v1315, %v1320
        %v1325 = vadd.f32 %v1316, %v1321
        %v1326 = vstv %s1128
        %v1327 = vmul.f32 %v657, %v1326
        %v1328 = vmul.f32 %v658, %v1326
        %v1329 = vmul.f32 %v659, %v1326
        %v1330 = vmul.f32 %v660, %v1326
        %v1331 = vadd.f32 %v1322, %v1327
        %v1332 = vadd.f32 %v1323, %v1328
        %v1333 = vadd.f32 %v1324, %v1329
        %v1334 = vadd.f32 %v1325, %v1330
        %v1335 = vtanh.pop %v1331
        %v1336 = vtanh.pop %v1332
        %v1337 = vtanh.pop %v1333
        %v1338 = vtanh.pop %v1334
        %v1339 = vstv %s1218
        %v1340 = vmul.f32 %v1335, %v1339
        %v1341 = vmul.f32 %v1336, %v1339
        %v1342 = vmul.f32 %v1337, %v1339
        %v1343 = vmul.f32 %v1338, %v1339
        %v1344 = vadd.f32 %v1285, %v1340
        %v1345 = vadd.f32 %v1286, %v1341
        %v1346 = vadd.f32 %v1287, %v1342
        %v1347 = vadd.f32 %v1288, %v1343
        %v1348 = vstv %s1187
        %v1349 = vmul.f32 %v1117, %v1348
        %v1350 = vmul.f32 %v1118, %v1348
        %v1351 = vmul.f32 %v1119, %v1348
        %v1352 = vmul.f32 %v1120, %v1348
        %v1353 = vstv %s1203
        %v1354 = vadd.f32 %v1349, %v1353
        %v1355 = vadd.f32 %v1350, %v1353
        %v1356 = vadd.f32 %v1351, %v1353
        %v1357 = vadd.f32 %v1352, %v1353
        %v1358 = vstv %s1129
        %v1359 = vmul.f32 %v588, %v1358
        %v1360 = vmul.f32 %v589, %v1358
        %v1361 = vmul.f32 %v590, %v1358
        %v1362 = vmul.f32 %v591, %v1358
        %v1363 = vadd.f32 %v1354, %v1359
        %v1364 = vadd.f32 %v1355, %v1360
        %v1365 = vadd.f32 %v1356, %v1361
        %v1366 = vadd.f32 %v1357, %v1362
        %v1367 = vstv %s1130
        %v1368 = vmul.f32 %v611, %v1367
        %v1369 = vmul.f32 %v612, %v1367
        %v1370 = vmul.f32 %v613, %v1367
        %v1371 = vmul.f32 %v614, %v1367
        %v1372 = vadd.f32 %v1363, %v1368
        %v1373 = vadd.f32 %v1364, %v1369
        %v1374 = vadd.f32 %v1365, %v1370
        %v1375 = vadd.f32 %v1366, %v1371
        %v1376 = vstv %s1131
        %v1377 = vmul.f32 %v634, %v1376
        %v1378 = vmul.f32 %v635, %v1376
        %v1379 = vmul.f32 %v636, %v1376
        %v1380 = vmul.f32 %v637, %v1376
        %v1381 = vadd.f32 %v1372, %v1377
        %v1382 = vadd.f32 %v1373, %v1378
        %v1383 = vadd.f32 %v1374, %v1379
        %v1384 = vadd.f32 %v1375, %v1380
        %v1385 = vstv %s1132
        %v1386 = vmul.f32 %v657, %v1385
        %v1387 = vmul.f32 %v658, %v1385
        %v1388 = vmul.f32 %v659, %v1385
        %v1389 = vmul.f32 %v660, %v1385
        %v1390 = vadd.f32 %v1381, %v1386
        %v1391 = vadd.f32 %v1382, %v1387
        %v1392 = vadd.f32 %v1383, %v1388
        %v1393 = vadd.f32 %v1384, %v1389
        %v1394 = vtanh.pop %v1390
        %v1395 = vtanh.pop %v1391
        %v1396 = vtanh.pop %v1392
        %v1397 = vtanh.pop %v1393
        %v1398 = vstv %s1219
        %v1399 = vmul.f32 %v1394, %v1398
        %v1400 = vmul.f32 %v1395, %v1398
        %v1401 = vmul.f32 %v1396, %v1398
        %v1402 = vmul.f32 %v1397, %v1398
        %v1403 = vadd.f32 %v1344, %v1399
        %v1404 = vadd.f32 %v1345, %v1400
        %v1405 = vadd.f32 %v1346, %v1401
        %v1406 = vadd.f32 %v1347, %v1402
        %v1407 = vstv %s1188
        %v1408 = vmul.f32 %v1117, %v1407
        %v1409 = vmul.f32 %v1118, %v1407
        %v1410 = vmul.f32 %v1119, %v1407
        %v1411 = vmul.f32 %v1120, %v1407
        %v1412 = vstv %s1204
        %v1413 = vadd.f32 %v1408, %v1412
        %v1414 = vadd.f32 %v1409, %v1412
        %v1415 = vadd.f32 %v1410, %v1412
        %v1416 = vadd.f32 %v1411, %v1412
        %v1417 = vstv %s1133
        %v1418 = vmul.f32 %v588, %v1417
        %v1419 = vmul.f32 %v589, %v1417
        %v1420 = vmul.f32 %v590, %v1417
        %v1421 = vmul.f32 %v591, %v1417
        %v1422 = vadd.f32 %v1413, %v1418
        %v1423 = vadd.f32 %v1414, %v1419
        %v1424 = vadd.f32 %v1415, %v1420
        %v1425 = vadd.f32 %v1416, %v1421
        %v1426 = vstv %s1134
        %v1427 = vmul.f32 %v611, %v1426
        %v1428 = vmul.f32 %v612, %v1426
        %v1429 = vmul.f32 %v613, %v1426
        %v1430 = vmul.f32 %v614, %v1426
        %v1431 = vadd.f32 %v1422, %v1427
        %v1432 = vadd.f32 %v1423, %v1428
        %v1433 = vadd.f32 %v1424, %v1429
        %v1434 = vadd.f32 %v1425, %v1430
        %v1435 = vstv %s1135
        %v1436 = vmul.f32 %v634, %v1435
        %v1437 = vmul.f32 %v635, %v1435
        %v1438 = vmul.f32 %v636, %v1435
        %v1439 = vmul.f32 %v637, %v1435
        %v1440 = vadd.f32 %v1431, %v1436
        %v1441 = vadd.f32 %v1432, %v1437
        %v1442 = vadd.f32 %v1433, %v1438
        %v1443 = vadd.f32 %v1434, %v1439
        %v1444 = vstv %s1136
        %v1445 = vmul.f32 %v657, %v1444
        %v1446 = vmul.f32 %v658, %v1444
        %v1447 = vmul.f32 %v659, %v1444
        %v1448 = vmul.f32 %v660, %v1444
        %v1449 = vadd.f32 %v1440, %v1445
        %v1450 = vadd.f32 %v1441, %v1446
        %v1451 = vadd.f32 %v1442, %v1447
        %v1452 = vadd.f32 %v1443, %v1448
        %v1453 = vtanh.pop %v1449
        %v1454 = vtanh.pop %v1450
        %v1455 = vtanh.pop %v1451
        %v1456 = vtanh.pop %v1452
        %v1457 = vstv %s1220
        %v1458 = vmul.f32 %v1453, %v1457
        %v1459 = vmul.f32 %v1454, %v1457
        %v1460 = vmul.f32 %v1455, %v1457
        %v1461 = vmul.f32 %v1456, %v1457
        %v1462 = vadd.f32 %v1403, %v1458
        %v1463 = vadd.f32 %v1404, %v1459
        %v1464 = vadd.f32 %v1405, %v1460
        %v1465 = vadd.f32 %v1406, %v1461
        %v1466 = vstv %s1189
        %v1467 = vmul.f32 %v1117, %v1466
        %v1468 = vmul.f32 %v1118, %v1466
        %v1469 = vmul.f32 %v1119, %v1466
        %v1470 = vmul.f32 %v1120, %v1466
        %v1471 = vstv %s1205
        %v1472 = vadd.f32 %v1467, %v1471
        %v1473 = vadd.f32 %v1468, %v1471
        %v1474 = vadd.f32 %v1469, %v1471
        %v1475 = vadd.f32 %v1470, %v1471
        %v1476 = vstv %s1137
        %v1477 = vmul.f32 %v588, %v1476
        %v1478 = vmul.f32 %v589, %v1476
        %v1479 = vmul.f32 %v590, %v1476
        %v1480 = vmul.f32 %v591, %v1476
        %v1481 = vadd.f32 %v1472, %v1477
        %v1482 = vadd.f32 %v1473, %v1478
        %v1483 = vadd.f32 %v1474, %v1479
        %v1484 = vadd.f32 %v1475, %v1480
        %v1485 = vstv %s1138
        %v1486 = vmul.f32 %v611, %v1485
        %v1487 = vmul.f32 %v612, %v1485
        %v1488 = vmul.f32 %v613, %v1485
        %v1489 = vmul.f32 %v614, %v1485
        %v1490 = vadd.f32 %v1481, %v1486
        %v1491 = vadd.f32 %v1482, %v1487
        %v1492 = vadd.f32 %v1483, %v1488
        %v1493 = vadd.f32 %v1484, %v1489
        %v1494 = vstv %s1139
        %v1495 = vmul.f32 %v634, %v1494
        %v1496 = vmul.f32 %v635, %v1494
        %v1497 = vmul.f32 %v636, %v1494
        %v1498 = vmul.f32 %v637, %v1494
        %v1499 = vadd.f32 %v1490, %v1495
        %v1500 = vadd.f32 %v1491, %v1496
        %v1501 = vadd.f32 %v1492, %v1497
        %v1502 = vadd.f32 %v1493, %v1498
        %v1503 = vstv %s1140
        %v1504 = vmul.f32 %v657, %v1503
        %v1505 = vmul.f32 %v658, %v1503
        %v1506 = vmul.f32 %v659, %v1503
        %v1507 = vmul.f32 %v660, %v1503
        %v1508 = vadd.f32 %v1499, %v1504
        %v1509 = vadd.f32 %v1500, %v1505
        %v1510 = vadd.f32 %v1501, %v1506
        %v1511 = vadd.f32 %v1502, %v1507
        %v1512 = vtanh.pop %v1508
        %v1513 = vtanh.pop %v1509
        %v1514 = vtanh.pop %v1510
        %v1515 = vtanh.pop %v1511
        %v1516 = vstv %s1221
        %v1517 = vmul.f32 %v1512, %v1516
        %v1518 = vmul.f32 %v1513, %v1516
        %v1519 = vmul.f32 %v1514, %v1516
        %v1520 = vmul.f32 %v1515, %v1516
        %v1521 = vadd.f32 %v1462, %v1517
        %v1522 = vadd.f32 %v1463, %v1518
        %v1523 = vadd.f32 %v1464, %v1519
        %v1524 = vadd.f32 %v1465, %v1520
        %v1525 = vstv %s1190
        %v1526 = vmul.f32 %v1117, %v1525
        %v1527 = vmul.f32 %v1118, %v1525
        %v1528 = vmul.f32 %v1119, %v1525
        %v1529 = vmul.f32 %v1120, %v1525
        %v1530 = vstv %s1206
        %v1531 = vadd.f32 %v1526, %v1530
        %v1532 = vadd.f32 %v1527, %v1530
        %v1533 = vadd.f32 %v1528, %v1530
        %v1534 = vadd.f32 %v1529, %v1530
        %v1535 = vstv %s1141
        %v1536 = vmul.f32 %v588, %v1535
        %v1537 = vmul.f32 %v589, %v1535
        %v1538 = vmul.f32 %v590, %v1535
        %v1539 = vmul.f32 %v591, %v1535
        %v1540 = vadd.f32 %v1531, %v1536
        %v1541 = vadd.f32 %v1532, %v1537
        %v1542 = vadd.f32 %v1533, %v1538
        %v1543 = vadd.f32 %v1534, %v1539
        %v1544 = vstv %s1142
        %v1545 = vmul.f32 %v611, %v1544
        %v1546 = vmul.f32 %v612, %v1544
        %v1547 = vmul.f32 %v613, %v1544
        %v1548 = vmul.f32 %v614, %v1544
        %v1549 = vadd.f32 %v1540, %v1545
        %v1550 = vadd.f32 %v1541, %v1546
        %v1551 = vadd.f32 %v1542, %v1547
        %v1552 = vadd.f32 %v1543, %v1548
        %v1553 = vstv %s1143
        %v1554 = vmul.f32 %v634, %v1553
        %v1555 = vmul.f32 %v635, %v1553
        %v1556 = vmul.f32 %v636, %v1553
        %v1557 = vmul.f32 %v637, %v1553
        %v1558 = vadd.f32 %v1549, %v1554
        %v1559 = vadd.f32 %v1550, %v1555
        %v1560 = vadd.f32 %v1551, %v1556
        %v1561 = vadd.f32 %v1552, %v1557
        %v1562 = vstv %s1144
        %v1563 = vmul.f32 %v657, %v1562
        %v1564 = vmul.f32 %v658, %v1562
        %v1565 = vmul.f32 %v659, %v1562
        %v1566 = vmul.f32 %v660, %v1562
        %v1567 = vadd.f32 %v1558, %v1563
        %v1568 = vadd.f32 %v1559, %v1564
        %v1569 = vadd.f32 %v1560, %v1565
        %v1570 = vadd.f32 %v1561, %v1566
        %v1571 = vtanh.pop %v1567
        %v1572 = vtanh.pop %v1568
        %v1573 = vtanh.pop %v1569
        %v1574 = vtanh.pop %v1570
        %v1575 = vstv %s1222
        %v1576 = vmul.f32 %v1571, %v1575
        %v1577 = vmul.f32 %v1572, %v1575
        %v1578 = vmul.f32 %v1573, %v1575
        %v1579 = vmul.f32 %v1574, %v1575
        %v1580 = vadd.f32 %v1521, %v1576
        %v1581 = vadd.f32 %v1522, %v1577
        %v1582 = vadd.f32 %v1523, %v1578
        %v1583 = vadd.f32 %v1524, %v1579
        %v1584 = vstv %s1191
        %v1585 = vmul.f32 %v1117, %v1584
        %v1586 = vmul.f32 %v1118, %v1584
        %v1587 = vmul.f32 %v1119, %v1584
        %v1588 = vmul.f32 %v1120, %v1584
        %v1589 = vstv %s1207
        %v1590 = vadd.f32 %v1585, %v1589
        %v1591 = vadd.f32 %v1586, %v1589
        %v1592 = vadd.f32 %v1587, %v1589
        %v1593 = vadd.f32 %v1588, %v1589
        %v1594 = vstv %s1145
        %v1595 = vmul.f32 %v588, %v1594
        %v1596 = vmul.f32 %v589, %v1594
        %v1597 = vmul.f32 %v590, %v1594
        %v1598 = vmul.f32 %v591, %v1594
        %v1599 = vadd.f32 %v1590, %v1595
        %v1600 = vadd.f32 %v1591, %v1596
        %v1601 = vadd.f32 %v1592, %v1597
        %v1602 = vadd.f32 %v1593, %v1598
        %v1603 = vstv %s1146
        %v1604 = vmul.f32 %v611, %v1603
        %v1605 = vmul.f32 %v612, %v1603
        %v1606 = vmul.f32 %v613, %v1603
        %v1607 = vmul.f32 %v614, %v1603
        %v1608 = vadd.f32 %v1599, %v1604
        %v1609 = vadd.f32 %v1600, %v1605
        %v1610 = vadd.f32 %v1601, %v1606
        %v1611 = vadd.f32 %v1602, %v1607
        %v1612 = vstv %s1147
        %v1613 = vmul.f32 %v634, %v1612
        %v1614 = vmul.f32 %v635, %v1612
        %v1615 = vmul.f32 %v636, %v1612
        %v1616 = vmul.f32 %v637, %v1612
        %v1617 = vadd.f32 %v1608, %v1613
        %v1618 = vadd.f32 %v1609, %v1614
        %v1619 = vadd.f32 %v1610, %v1615
        %v1620 = vadd.f32 %v1611, %v1616
        %v1621 = vstv %s1148
        %v1622 = vmul.f32 %v657, %v1621
        %v1623 = vmul.f32 %v658, %v1621
        %v1624 = vmul.f32 %v659, %v1621
        %v1625 = vmul.f32 %v660, %v1621
        %v1626 = vadd.f32 %v1617, %v1622
        %v1627 = vadd.f32 %v1618, %v1623
        %v1628 = vadd.f32 %v1619, %v1624
        %v1629 = vadd.f32 %v1620, %v1625
        %v1630 = vtanh.pop %v1626
        %v1631 = vtanh.pop %v1627
        %v1632 = vtanh.pop %v1628
        %v1633 = vtanh.pop %v1629
        %v1634 = vstv %s1223
        %v1635 = vmul.f32 %v1630, %v1634
        %v1636 = vmul.f32 %v1631, %v1634
        %v1637 = vmul.f32 %v1632, %v1634
        %v1638 = vmul.f32 %v1633, %v1634
        %v1639 = vadd.f32 %v1580, %v1635
        %v1640 = vadd.f32 %v1581, %v1636
        %v1641 = vadd.f32 %v1582, %v1637
        %v1642 = vadd.f32 %v1583, %v1638
        %v1643 = vstv %s1192
        %v1644 = vmul.f32 %v1117, %v1643
        %v1645 = vmul.f32 %v1118, %v1643
        %v1646 = vmul.f32 %v1119, %v1643
        %v1647 = vmul.f32 %v1120, %v1643
        %v1648 = vstv %s1208
        %v1649 = vadd.f32 %v1644, %v1648
        %v1650 = vadd.f32 %v1645, %v1648
        %v1651 = vadd.f32 %v1646, %v1648
        %v1652 = vadd.f32 %v1647, %v1648
        %v1653 = vstv %s1149
        %v1654 = vmul.f32 %v588, %v1653
        %v1655 = vmul.f32 %v589, %v1653
        %v1656 = vmul.f32 %v590, %v1653
        %v1657 = vmul.f32 %v591, %v1653
        %v1658 = vadd.f32 %v1649, %v1654
        %v1659 = vadd.f32 %v1650, %v1655
        %v1660 = vadd.f32 %v1651, %v1656
        %v1661 = vadd.f32 %v1652, %v1657
        %v1662 = vstv %s1150
        %v1663 = vmul.f32 %v611, %v1662
        %v1664 = vmul.f32 %v612, %v1662
        %v1665 = vmul.f32 %v613, %v1662
        %v1666 = vmul.f32 %v614, %v1662
        %v1667 = vadd.f32 %v1658, %v1663
        %v1668 = vadd.f32 %v1659, %v1664
        %v1669 = vadd.f32 %v1660, %v1665
        %v1670 = vadd.f32 %v1661, %v1666
        %v1671 = vstv %s1151
        %v1672 = vmul.f32 %v634, %v1671
        %v1673 = vmul.f32 %v635, %v1671
        %v1674 = vmul.f32 %v636, %v1671
        %v1675 = vmul.f32 %v637, %v1671
        %v1676 = vadd.f32 %v1667, %v1672
        %v1677 = vadd.f32 %v1668, %v1673
        %v1678 = vadd.f32 %v1669, %v1674
        %v1679 = vadd.f32 %v1670, %v1675
        %v1680 = vstv %s1152
        %v1681 = vmul.f32 %v657, %v1680
        %v1682 = vmul.f32 %v658, %v1680
        %v1683 = vmul.f32 %v659, %v1680
        %v1684 = vmul.f32 %v660, %v1680
        %v1685 = vadd.f32 %v1676, %v1681
        %v1686 = vadd.f32 %v1677, %v1682
        %v1687 = vadd.f32 %v1678, %v1683
        %v1688 = vadd.f32 %v1679, %v1684
        %v1689 = vtanh.pop %v1685
        %v1690 = vtanh.pop %v1686
        %v1691 = vtanh.pop %v1687
        %v1692 = vtanh.pop %v1688
        %v1693 = vstv %s1224
        %v1694 = vmul.f32 %v1689, %v1693
        %v1695 = vmul.f32 %v1690, %v1693
        %v1696 = vmul.f32 %v1691, %v1693
        %v1697 = vmul.f32 %v1692, %v1693
        %v1698 = vadd.f32 %v1639, %v1694
        %v1699 = vadd.f32 %v1640, %v1695
        %v1700 = vadd.f32 %v1641, %v1696
        %v1701 = vadd.f32 %v1642, %v1697
        %v1702 = vstv %s1193
        %v1703 = vmul.f32 %v1117, %v1702
        %v1704 = vmul.f32 %v1118, %v1702
        %v1705 = vmul.f32 %v1119, %v1702
        %v1706 = vmul.f32 %v1120, %v1702
        %v1707 = vstv %s1209
        %v1708 = vadd.f32 %v1703, %v1707
        %v1709 = vadd.f32 %v1704, %v1707
        %v1710 = vadd.f32 %v1705, %v1707
        %v1711 = vadd.f32 %v1706, %v1707
        %v1712 = vstv %s1153
        %v1713 = vmul.f32 %v588, %v1712
        %v1714 = vmul.f32 %v589, %v1712
        %v1715 = vmul.f32 %v590, %v1712
        %v1716 = vmul.f32 %v591, %v1712
        %v1717 = vadd.f32 %v1708, %v1713
        %v1718 = vadd.f32 %v1709, %v1714
        %v1719 = vadd.f32 %v1710, %v1715
        %v1720 = vadd.f32 %v1711, %v1716
        %v1721 = vstv %s1154
        %v1722 = vmul.f32 %v611, %v1721
        %v1723 = vmul.f32 %v612, %v1721
        %v1724 = vmul.f32 %v613, %v1721
        %v1725 = vmul.f32 %v614, %v1721
        %v1726 = vadd.f32 %v1717, %v1722
        %v1727 = vadd.f32 %v1718, %v1723
        %v1728 = vadd.f32 %v1719, %v1724
        %v1729 = vadd.f32 %v1720, %v1725
        %v1730 = vstv %s1155
        %v1731 = vmul.f32 %v634, %v1730
        %v1732 = vmul.f32 %v635, %v1730
        %v1733 = vmul.f32 %v636, %v1730
        %v1734 = vmul.f32 %v637, %v1730
        %v1735 = vadd.f32 %v1726, %v1731
        %v1736 = vadd.f32 %v1727, %v1732
        %v1737 = vadd.f32 %v1728, %v1733
        %v1738 = vadd.f32 %v1729, %v1734
        %v1739 = vstv %s1156
        %v1740 = vmul.f32 %v657, %v1739
        %v1741 = vmul.f32 %v658, %v1739
        %v1742 = vmul.f32 %v659, %v1739
        %v1743 = vmul.f32 %v660, %v1739
        %v1744 = vadd.f32 %v1735, %v1740
        %v1745 = vadd.f32 %v1736, %v1741
        %v1746 = vadd.f32 %v1737, %v1742
        %v1747 = vadd.f32 %v1738, %v1743
        %v1748 = vtanh.pop %v1744
        %v1749 = vtanh.pop %v1745
        %v1750 = vtanh.pop %v1746
        %v1751 = vtanh.pop %v1747
        %v1752 = vstv %s1225
        %v1753 = vmul.f32 %v1748, %v1752
        %v1754 = vmul.f32 %v1749, %v1752
        %v1755 = vmul.f32 %v1750, %v1752
        %v1756 = vmul.f32 %v1751, %v1752
        %v1757 = vadd.f32 %v1698, %v1753
        %v1758 = vadd.f32 %v1699, %v1754
        %v1759 = vadd.f32 %v1700, %v1755
        %v1760 = vadd.f32 %v1701, %v1756
        %v1761 = vstv %s1194
        %v1762 = vmul.f32 %v1117, %v1761
        %v1763 = vmul.f32 %v1118, %v1761
        %v1764 = vmul.f32 %v1119, %v1761
        %v1765 = vmul.f32 %v1120, %v1761
        %v1766 = vstv %s1210
        %v1767 = vadd.f32 %v1762, %v1766
        %v1768 = vadd.f32 %v1763, %v1766
        %v1769 = vadd.f32 %v1764, %v1766
        %v1770 = vadd.f32 %v1765, %v1766
        %v1771 = vstv %s1157
        %v1772 = vmul.f32 %v588, %v1771
        %v1773 = vmul.f32 %v589, %v1771
        %v1774 = vmul.f32 %v590, %v1771
        %v1775 = vmul.f32 %v591, %v1771
        %v1776 = vadd.f32 %v1767, %v1772
        %v1777 = vadd.f32 %v1768, %v1773
        %v1778 = vadd.f32 %v1769, %v1774
        %v1779 = vadd.f32 %v1770, %v1775
        %v1780 = vstv %s1158
        %v1781 = vmul.f32 %v611, %v1780
        %v1782 = vmul.f32 %v612, %v1780
        %v1783 = vmul.f32 %v613, %v1780
        %v1784 = vmul.f32 %v614, %v1780
        %v1785 = vadd.f32 %v1776, %v1781
        %v1786 = vadd.f32 %v1777, %v1782
        %v1787 = vadd.f32 %v1778, %v1783
        %v1788 = vadd.f32 %v1779, %v1784
        %v1789 = vstv %s1159
        %v1790 = vmul.f32 %v634, %v1789
        %v1791 = vmul.f32 %v635, %v1789
        %v1792 = vmul.f32 %v636, %v1789
        %v1793 = vmul.f32 %v637, %v1789
        %v1794 = vadd.f32 %v1785, %v1790
        %v1795 = vadd.f32 %v1786, %v1791
        %v1796 = vadd.f32 %v1787, %v1792
        %v1797 = vadd.f32 %v1788, %v1793
        %v1798 = vstv %s1160
        %v1799 = vmul.f32 %v657, %v1798
        %v1800 = vmul.f32 %v658, %v1798
        %v1801 = vmul.f32 %v659, %v1798
        %v1802 = vmul.f32 %v660, %v1798
        %v1803 = vadd.f32 %v1794, %v1799
        %v1804 = vadd.f32 %v1795, %v1800
        %v1805 = vadd.f32 %v1796, %v1801
        %v1806 = vadd.f32 %v1797, %v1802
        %v1807 = vtanh.pop %v1803
        %v1808 = vtanh.pop %v1804
        %v1809 = vtanh.pop %v1805
        %v1810 = vtanh.pop %v1806
        %v1811 = vstv %s1226
        %v1812 = vmul.f32 %v1807, %v1811
        %v1813 = vmul.f32 %v1808, %v1811
        %v1814 = vmul.f32 %v1809, %v1811
        %v1815 = vmul.f32 %v1810, %v1811
        %v1816 = vadd.f32 %v1757, %v1812
        %v1817 = vadd.f32 %v1758, %v1813
        %v1818 = vadd.f32 %v1759, %v1814
        %v1819 = vadd.f32 %v1760, %v1815
        %v1820 = vstv %s1195
        %v1821 = vmul.f32 %v1117, %v1820
        %v1822 = vmul.f32 %v1118, %v1820
        %v1823 = vmul.f32 %v1119, %v1820
        %v1824 = vmul.f32 %v1120, %v1820
        %v1825 = vstv %s1211
        %v1826 = vadd.f32 %v1821, %v1825
        %v1827 = vadd.f32 %v1822, %v1825
        %v1828 = vadd.f32 %v1823, %v1825
        %v1829 = vadd.f32 %v1824, %v1825
        %v1830 = vstv %s1161
        %v1831 = vmul.f32 %v588, %v1830
        %v1832 = vmul.f32 %v589, %v1830
        %v1833 = vmul.f32 %v590, %v1830
        %v1834 = vmul.f32 %v591, %v1830
        %v1835 = vadd.f32 %v1826, %v1831
        %v1836 = vadd.f32 %v1827, %v1832
        %v1837 = vadd.f32 %v1828, %v1833
        %v1838 = vadd.f32 %v1829, %v1834
        %v1839 = vstv %s1162
        %v1840 = vmul.f32 %v611, %v1839
        %v1841 = vmul.f32 %v612, %v1839
        %v1842 = vmul.f32 %v613, %v1839
        %v1843 = vmul.f32 %v614, %v1839
        %v1844 = vadd.f32 %v1835, %v1840
        %v1845 = vadd.f32 %v1836, %v1841
        %v1846 = vadd.f32 %v1837, %v1842
        %v1847 = vadd.f32 %v1838, %v1843
        %v1848 = vstv %s1163
        %v1849 = vmul.f32 %v634, %v1848
        %v1850 = vmul.f32 %v635, %v1848
        %v1851 = vmul.f32 %v636, %v1848
        %v1852 = vmul.f32 %v637, %v1848
        %v1853 = vadd.f32 %v1844, %v1849
        %v1854 = vadd.f32 %v1845, %v1850
        %v1855 = vadd.f32 %v1846, %v1851
        %v1856 = vadd.f32 %v1847, %v1852
        %v1857 = vstv %s1164
        %v1858 = vmul.f32 %v657, %v1857
        %v1859 = vmul.f32 %v658, %v1857
        %v1860 = vmul.f32 %v659, %v1857
        %v1861 = vmul.f32 %v660, %v1857
        %v1862 = vadd.f32 %v1853, %v1858
        %v1863 = vadd.f32 %v1854, %v1859
        %v1864 = vadd.f32 %v1855, %v1860
        %v1865 = vadd.f32 %v1856, %v1861
        %v1866 = vtanh.pop %v1862
        %v1867 = vtanh.pop %v1863
        %v1868 = vtanh.pop %v1864
        %v1869 = vtanh.pop %v1865
        %v1870 = vstv %s1227
        %v1871 = vmul.f32 %v1866, %v1870
        %v1872 = vmul.f32 %v1867, %v1870
        %v1873 = vmul.f32 %v1868, %v1870
        %v1874 = vmul.f32 %v1869, %v1870
        %v1875 = vadd.f32 %v1816, %v1871
        %v1876 = vadd.f32 %v1817, %v1872
        %v1877 = vadd.f32 %v1818, %v1873
        %v1878 = vadd.f32 %v1819, %v1874
        %v1879 = vstv %s1196
        %v1880 = vmul.f32 %v1117, %v1879
        %v1881 = vmul.f32 %v1118, %v1879
        %v1882 = vmul.f32 %v1119, %v1879
        %v1883 = vmul.f32 %v1120, %v1879
        %v1884 = vstv %s1212
        %v1885 = vadd.f32 %v1880, %v1884
        %v1886 = vadd.f32 %v1881, %v1884
        %v1887 = vadd.f32 %v1882, %v1884
        %v1888 = vadd.f32 %v1883, %v1884
        %v1889 = vstv %s1165
        %v1890 = vmul.f32 %v588, %v1889
        %v1891 = vmul.f32 %v589, %v1889
        %v1892 = vmul.f32 %v590, %v1889
        %v1893 = vmul.f32 %v591, %v1889
        %v1894 = vadd.f32 %v1885, %v1890
        %v1895 = vadd.f32 %v1886, %v1891
        %v1896 = vadd.f32 %v1887, %v1892
        %v1897 = vadd.f32 %v1888, %v1893
        %v1898 = vstv %s1166
        %v1899 = vmul.f32 %v611, %v1898
        %v1900 = vmul.f32 %v612, %v1898
        %v1901 = vmul.f32 %v613, %v1898
        %v1902 = vmul.f32 %v614, %v1898
        %v1903 = vadd.f32 %v1894, %v1899
        %v1904 = vadd.f32 %v1895, %v1900
        %v1905 = vadd.f32 %v1896, %v1901
        %v1906 = vadd.f32 %v1897, %v1902
        %v1907 = vstv %s1167
        %v1908 = vmul.f32 %v634, %v1907
        %v1909 = vmul.f32 %v635, %v1907
        %v1910 = vmul.f32 %v636, %v1907
        %v1911 = vmul.f32 %v637, %v1907
        %v1912 = vadd.f32 %v1903, %v1908
        %v1913 = vadd.f32 %v1904, %v1909
        %v1914 = vadd.f32 %v1905, %v1910
        %v1915 = vadd.f32 %v1906, %v1911
        %v1916 = vstv %s1168
        %v1917 = vmul.f32 %v657, %v1916
        %v1918 = vmul.f32 %v658, %v1916
        %v1919 = vmul.f32 %v659, %v1916
        %v1920 = vmul.f32 %v660, %v1916
        %v1921 = vadd.f32 %v1912, %v1917
        %v1922 = vadd.f32 %v1913, %v1918
        %v1923 = vadd.f32 %v1914, %v1919
        %v1924 = vadd.f32 %v1915, %v1920
        %v1925 = vtanh.pop %v1921
        %v1926 = vtanh.pop %v1922
        %v1927 = vtanh.pop %v1923
        %v1928 = vtanh.pop %v1924
        %v1929 = vstv %s1228
        %v1930 = vmul.f32 %v1925, %v1929
        %v1931 = vmul.f32 %v1926, %v1929
        %v1932 = vmul.f32 %v1927, %v1929
        %v1933 = vmul.f32 %v1928, %v1929
        %v1934 = vadd.f32 %v1875, %v1930
        %v1935 = vadd.f32 %v1876, %v1931
        %v1936 = vadd.f32 %v1877, %v1932
        %v1937 = vadd.f32 %v1878, %v1933
        %v1938 = vstv %s1197
        %v1939 = vmul.f32 %v1117, %v1938
        %v1940 = vmul.f32 %v1118, %v1938
        %v1941 = vmul.f32 %v1119, %v1938
        %v1942 = vmul.f32 %v1120, %v1938
        %v1943 = vstv %s1213
        %v1944 = vadd.f32 %v1939, %v1943
        %v1945 = vadd.f32 %v1940, %v1943
        %v1946 = vadd.f32 %v1941, %v1943
        %v1947 = vadd.f32 %v1942, %v1943
        %v1948 = vstv %s1169
        %v1949 = vmul.f32 %v588, %v1948
        %v1950 = vmul.f32 %v589, %v1948
        %v1951 = vmul.f32 %v590, %v1948
        %v1952 = vmul.f32 %v591, %v1948
        %v1953 = vadd.f32 %v1944, %v1949
        %v1954 = vadd.f32 %v1945, %v1950
        %v1955 = vadd.f32 %v1946, %v1951
        %v1956 = vadd.f32 %v1947, %v1952
        %v1957 = vstv %s1170
        %v1958 = vmul.f32 %v611, %v1957
        %v1959 = vmul.f32 %v612, %v1957
        %v1960 = vmul.f32 %v613, %v1957
        %v1961 = vmul.f32 %v614, %v1957
        %v1962 = vadd.f32 %v1953, %v1958
        %v1963 = vadd.f32 %v1954, %v1959
        %v1964 = vadd.f32 %v1955, %v1960
        %v1965 = vadd.f32 %v1956, %v1961
        %v1966 = vstv %s1171
        %v1967 = vmul.f32 %v634, %v1966
        %v1968 = vmul.f32 %v635, %v1966
        %v1969 = vmul.f32 %v636, %v1966
        %v1970 = vmul.f32 %v637, %v1966
        %v1971 = vadd.f32 %v1962, %v1967
        %v1972 = vadd.f32 %v1963, %v1968
        %v1973 = vadd.f32 %v1964, %v1969
        %v1974 = vadd.f32 %v1965, %v1970
        %v1975 = vstv %s1172
        %v1976 = vmul.f32 %v657, %v1975
        %v1977 = vmul.f32 %v658, %v1975
        %v1978 = vmul.f32 %v659, %v1975
        %v1979 = vmul.f32 %v660, %v1975
        %v1980 = vadd.f32 %v1971, %v1976
        %v1981 = vadd.f32 %v1972, %v1977
        %v1982 = vadd.f32 %v1973, %v1978
        %v1983 = vadd.f32 %v1974, %v1979
        %v1984 = vtanh.pop %v1980
        %v1985 = vtanh.pop %v1981
        %v1986 = vtanh.pop %v1982
        %v1987 = vtanh.pop %v1983
        %v1988 = vstv %s1229
        %v1989 = vmul.f32 %v1984, %v1988
        %v1990 = vmul.f32 %v1985, %v1988
        %v1991 = vmul.f32 %v1986, %v1988
        %v1992 = vmul.f32 %v1987, %v1988
        %v1993 = vadd.f32 %v1934, %v1989
        %v1994 = vadd.f32 %v1935, %v1990
        %v1995 = vadd.f32 %v1936, %v1991
        %v1996 = vadd.f32 %v1937, %v1992
        %v1997 = vstv %s1198
        %v1998 = vmul.f32 %v1117, %v1997
        %v1999 = vmul.f32 %v1118, %v1997
        %v2000 = vmul.f32 %v1119, %v1997
        %v2001 = vmul.f32 %v1120, %v1997
        %v2002 = vstv %s1214
        %v2003 = vadd.f32 %v1998, %v2002
        %v2004 = vadd.f32 %v1999, %v2002
        %v2005 = vadd.f32 %v2000, %v2002
        %v2006 = vadd.f32 %v2001, %v2002
        %v2007 = vstv %s1173
        %v2008 = vmul.f32 %v588, %v2007
        %v2009 = vmul.f32 %v589, %v2007
        %v2010 = vmul.f32 %v590, %v2007
        %v2011 = vmul.f32 %v591, %v2007
        %v2012 = vadd.f32 %v2003, %v2008
        %v2013 = vadd.f32 %v2004, %v2009
        %v2014 = vadd.f32 %v2005, %v2010
        %v2015 = vadd.f32 %v2006, %v2011
        %v2016 = vstv %s1174
        %v2017 = vmul.f32 %v611, %v2016
        %v2018 = vmul.f32 %v612, %v2016
        %v2019 = vmul.f32 %v613, %v2016
        %v2020 = vmul.f32 %v614, %v2016
        %v2021 = vadd.f32 %v2012, %v2017
        %v2022 = vadd.f32 %v2013, %v2018
        %v2023 = vadd.f32 %v2014, %v2019
        %v2024 = vadd.f32 %v2015, %v2020
        %v2025 = vstv %s1175
        %v2026 = vmul.f32 %v634, %v2025
        %v2027 = vmul.f32 %v635, %v2025
        %v2028 = vmul.f32 %v636, %v2025
        %v2029 = vmul.f32 %v637, %v2025
        %v2030 = vadd.f32 %v2021, %v2026
        %v2031 = vadd.f32 %v2022, %v2027
        %v2032 = vadd.f32 %v2023, %v2028
        %v2033 = vadd.f32 %v2024, %v2029
        %v2034 = vstv %s1176
        %v2035 = vmul.f32 %v657, %v2034
        %v2036 = vmul.f32 %v658, %v2034
        %v2037 = vmul.f32 %v659, %v2034
        %v2038 = vmul.f32 %v660, %v2034
        %v2039 = vadd.f32 %v2030, %v2035
        %v2040 = vadd.f32 %v2031, %v2036
        %v2041 = vadd.f32 %v2032, %v2037
        %v2042 = vadd.f32 %v2033, %v2038
        %v2043 = vtanh.pop %v2039
        %v2044 = vtanh.pop %v2040
        %v2045 = vtanh.pop %v2041
        %v2046 = vtanh.pop %v2042
        %v2047 = vstv %s1230
        %v2048 = vmul.f32 %v2043, %v2047
        %v2049 = vmul.f32 %v2044, %v2047
        %v2050 = vmul.f32 %v2045, %v2047
        %v2051 = vmul.f32 %v2046, %v2047
        %v2052 = vadd.f32 %v1993, %v2048
        %v2053 = vadd.f32 %v1994, %v2049
        %v2054 = vadd.f32 %v1995, %v2050
        %v2055 = vadd.f32 %v1996, %v2051
        %v2056 = vstv %s1199
        %v2057 = vmul.f32 %v1117, %v2056
        %v2058 = vmul.f32 %v1118, %v2056
        %v2059 = vmul.f32 %v1119, %v2056
        %v2060 = vmul.f32 %v1120, %v2056
        %v2061 = vstv %s1215
        %v2062 = vadd.f32 %v2057, %v2061
        %v2063 = vadd.f32 %v2058, %v2061
        %v2064 = vadd.f32 %v2059, %v2061
        %v2065 = vadd.f32 %v2060, %v2061
        %v2066 = vstv %s1177
        %v2067 = vmul.f32 %v588, %v2066
        %v2068 = vmul.f32 %v589, %v2066
        %v2069 = vmul.f32 %v590, %v2066
        %v2070 = vmul.f32 %v591, %v2066
        %v2071 = vadd.f32 %v2062, %v2067
        %v2072 = vadd.f32 %v2063, %v2068
        %v2073 = vadd.f32 %v2064, %v2069
        %v2074 = vadd.f32 %v2065, %v2070
        %v2075 = vstv %s1178
        %v2076 = vmul.f32 %v611, %v2075
        %v2077 = vmul.f32 %v612, %v2075
        %v2078 = vmul.f32 %v613, %v2075
        %v2079 = vmul.f32 %v614, %v2075
        %v2080 = vadd.f32 %v2071, %v2076
        %v2081 = vadd.f32 %v2072, %v2077
        %v2082 = vadd.f32 %v2073, %v2078
        %v2083 = vadd.f32 %v2074, %v2079
        %v2084 = vstv %s1179
        %v2085 = vmul.f32 %v634, %v2084
        %v2086 = vmul.f32 %v635, %v2084
        %v2087 = vmul.f32 %v636, %v2084
        %v2088 = vmul.f32 %v637, %v2084
        %v2089 = vadd.f32 %v2080, %v2085
        %v2090 = vadd.f32 %v2081, %v2086
        %v2091 = vadd.f32 %v2082, %v2087
        %v2092 = vadd.f32 %v2083, %v2088
        %v2093 = vstv %s1180
        %v2094 = vmul.f32 %v657, %v2093
        %v2095 = vmul.f32 %v658, %v2093
        %v2096 = vmul.f32 %v659, %v2093
        %v2097 = vmul.f32 %v660, %v2093
        %v2098 = vadd.f32 %v2089, %v2094
        %v2099 = vadd.f32 %v2090, %v2095
        %v2100 = vadd.f32 %v2091, %v2096
        %v2101 = vadd.f32 %v2092, %v2097
        %v2102 = vtanh.pop %v2098
        %v2103 = vtanh.pop %v2099
        %v2104 = vtanh.pop %v2100
        %v2105 = vtanh.pop %v2101
        %v2106 = vstv %s1231
        %v2107 = vmul.f32 %v2102, %v2106
        %v2108 = vmul.f32 %v2103, %v2106
        %v2109 = vmul.f32 %v2104, %v2106
        %v2110 = vmul.f32 %v2105, %v2106
        %v2111 = vadd.f32 %v2052, %v2107
        %v2112 = vadd.f32 %v2053, %v2108
        %v2113 = vadd.f32 %v2054, %v2109
        %v2114 = vadd.f32 %v2055, %v2110
        %v2115 = vstv %s1200
        %v2116 = vmul.f32 %v1117, %v2115
        %v2117 = vmul.f32 %v1118, %v2115
        %v2118 = vmul.f32 %v1119, %v2115
        %v2119 = vmul.f32 %v1120, %v2115
        %v2120 = vstv %s1216
        %v2121 = vadd.f32 %v2116, %v2120
        %v2122 = vadd.f32 %v2117, %v2120
        %v2123 = vadd.f32 %v2118, %v2120
        %v2124 = vadd.f32 %v2119, %v2120
        %v2125 = vstv %s1181
        %v2126 = vmul.f32 %v588, %v2125
        %v2127 = vmul.f32 %v589, %v2125
        %v2128 = vmul.f32 %v590, %v2125
        %v2129 = vmul.f32 %v591, %v2125
        %v2130 = vadd.f32 %v2121, %v2126
        %v2131 = vadd.f32 %v2122, %v2127
        %v2132 = vadd.f32 %v2123, %v2128
        %v2133 = vadd.f32 %v2124, %v2129
        %v2134 = vstv %s1182
        %v2135 = vmul.f32 %v611, %v2134
        %v2136 = vmul.f32 %v612, %v2134
        %v2137 = vmul.f32 %v613, %v2134
        %v2138 = vmul.f32 %v614, %v2134
        %v2139 = vadd.f32 %v2130, %v2135
        %v2140 = vadd.f32 %v2131, %v2136
        %v2141 = vadd.f32 %v2132, %v2137
        %v2142 = vadd.f32 %v2133, %v2138
        %v2143 = vstv %s1183
        %v2144 = vmul.f32 %v634, %v2143
        %v2145 = vmul.f32 %v635, %v2143
        %v2146 = vmul.f32 %v636, %v2143
        %v2147 = vmul.f32 %v637, %v2143
        %v2148 = vadd.f32 %v2139, %v2144
        %v2149 = vadd.f32 %v2140, %v2145
        %v2150 = vadd.f32 %v2141, %v2146
        %v2151 = vadd.f32 %v2142, %v2147
        %v2152 = vstv %s1184
        %v2153 = vmul.f32 %v657, %v2152
        %v2154 = vmul.f32 %v658, %v2152
        %v2155 = vmul.f32 %v659, %v2152
        %v2156 = vmul.f32 %v660, %v2152
        %v2157 = vadd.f32 %v2148, %v2153
        %v2158 = vadd.f32 %v2149, %v2154
        %v2159 = vadd.f32 %v2150, %v2155
        %v2160 = vadd.f32 %v2151, %v2156
        %v2161 = vtanh.pop %v2157
        %v2162 = vtanh.pop %v2158
        %v2163 = vtanh.pop %v2159
        %v2164 = vtanh.pop %v2160
        %v2165 = vstv %s1232
        %v2166 = vmul.f32 %v2161, %v2165
        %v2167 = vmul.f32 %v2162, %v2165
        %v2168 = vmul.f32 %v2163, %v2165
        %v2169 = vmul.f32 %v2164, %v2165
        %v2170 = vadd.f32 %v2111, %v2166
        %v2171 = vadd.f32 %v2112, %v2167
        %v2172 = vadd.f32 %v2113, %v2168
        %v2173 = vadd.f32 %v2114, %v2169
        %v2174 = vadd.f32 %v1117, %v2170
        %v2175 = vadd.f32 %v1118, %v2171
        %v2176 = vadd.f32 %v1119, %v2172
        %v2177 = vadd.f32 %v1120, %v2173
        %v2178 = vstv %s1233
        %v2179 = vadd.f32 %v2174, %v2178
        %v2180 = vadd.f32 %v2175, %v2178
        %v2181 = vadd.f32 %v2176, %v2178
        %v2182 = vadd.f32 %v2177, %v2178
        %v2183 = vmul.f32 %v2179, %v1234
        %v2184 = vmul.f32 %v2180, %v1234
        %v2185 = vmul.f32 %v2181, %v1234
        %v2186 = vmul.f32 %v2182, %v1234
        %v2187 = vadd.f32 %v2183, %v1239
        %v2188 = vadd.f32 %v2184, %v1239
        %v2189 = vadd.f32 %v2185, %v1239
        %v2190 = vadd.f32 %v2186, %v1239
        %v2191 = vadd.f32 %v2187, %v1245
        %v2192 = vadd.f32 %v2188, %v1246
        %v2193 = vadd.f32 %v2189, %v1247
        %v2194 = vadd.f32 %v2190, %v1248
        %v2195 = vadd.f32 %v2191, %v1254
        %v2196 = vadd.f32 %v2192, %v1255
        %v2197 = vadd.f32 %v2193, %v1256
        %v2198 = vadd.f32 %v2194, %v1257
        %v2199 = vadd.f32 %v2195, %v1263
        %v2200 = vadd.f32 %v2196, %v1264
        %v2201 = vadd.f32 %v2197, %v1265
        %v2202 = vadd.f32 %v2198, %v1266
        %v2203 = vadd.f32 %v2199, %v1272
        %v2204 = vadd.f32 %v2200, %v1273
        %v2205 = vadd.f32 %v2201, %v1274
        %v2206 = vadd.f32 %v2202, %v1275
        %v2207 = vtanh.pop %v2203
        %v2208 = vtanh.pop %v2204
        %v2209 = vtanh.pop %v2205
        %v2210 = vtanh.pop %v2206
        %v2211 = vmul.f32 %v2207, %v1284
        %v2212 = vmul.f32 %v2208, %v1284
        %v2213 = vmul.f32 %v2209, %v1284
        %v2214 = vmul.f32 %v2210, %v1284
        %v2215 = vmul.f32 %v2179, %v1289
        %v2216 = vmul.f32 %v2180, %v1289
        %v2217 = vmul.f32 %v2181, %v1289
        %v2218 = vmul.f32 %v2182, %v1289
        %v2219 = vadd.f32 %v2215, %v1294
        %v2220 = vadd.f32 %v2216, %v1294
        %v2221 = vadd.f32 %v2217, %v1294
        %v2222 = vadd.f32 %v2218, %v1294
        %v2223 = vadd.f32 %v2219, %v1300
        %v2224 = vadd.f32 %v2220, %v1301
        %v2225 = vadd.f32 %v2221, %v1302
        %v2226 = vadd.f32 %v2222, %v1303
        %v2227 = vadd.f32 %v2223, %v1309
        %v2228 = vadd.f32 %v2224, %v1310
        %v2229 = vadd.f32 %v2225, %v1311
        %v2230 = vadd.f32 %v2226, %v1312
        %v2231 = vadd.f32 %v2227, %v1318
        %v2232 = vadd.f32 %v2228, %v1319
        %v2233 = vadd.f32 %v2229, %v1320
        %v2234 = vadd.f32 %v2230, %v1321
        %v2235 = vadd.f32 %v2231, %v1327
        %v2236 = vadd.f32 %v2232, %v1328
        %v2237 = vadd.f32 %v2233, %v1329
        %v2238 = vadd.f32 %v2234, %v1330
        %v2239 = vtanh.pop %v2235
        %v2240 = vtanh.pop %v2236
        %v2241 = vtanh.pop %v2237
        %v2242 = vtanh.pop %v2238
        %v2243 = vmul.f32 %v2239, %v1339
        %v2244 = vmul.f32 %v2240, %v1339
        %v2245 = vmul.f32 %v2241, %v1339
        %v2246 = vmul.f32 %v2242, %v1339
        %v2247 = vadd.f32 %v2211, %v2243
        %v2248 = vadd.f32 %v2212, %v2244
        %v2249 = vadd.f32 %v2213, %v2245
        %v2250 = vadd.f32 %v2214, %v2246
        %v2251 = vmul.f32 %v2179, %v1348
        %v2252 = vmul.f32 %v2180, %v1348
        %v2253 = vmul.f32 %v2181, %v1348
        %v2254 = vmul.f32 %v2182, %v1348
        %v2255 = vadd.f32 %v2251, %v1353
        %v2256 = vadd.f32 %v2252, %v1353
        %v2257 = vadd.f32 %v2253, %v1353
        %v2258 = vadd.f32 %v2254, %v1353
        %v2259 = vadd.f32 %v2255, %v1359
        %v2260 = vadd.f32 %v2256, %v1360
        %v2261 = vadd.f32 %v2257, %v1361
        %v2262 = vadd.f32 %v2258, %v1362
        %v2263 = vadd.f32 %v2259, %v1368
        %v2264 = vadd.f32 %v2260, %v1369
        %v2265 = vadd.f32 %v2261, %v1370
        %v2266 = vadd.f32 %v2262, %v1371
        %v2267 = vadd.f32 %v2263, %v1377
        %v2268 = vadd.f32 %v2264, %v1378
        %v2269 = vadd.f32 %v2265, %v1379
        %v2270 = vadd.f32 %v2266, %v1380
        %v2271 = vadd.f32 %v2267, %v1386
        %v2272 = vadd.f32 %v2268, %v1387
        %v2273 = vadd.f32 %v2269, %v1388
        %v2274 = vadd.f32 %v2270, %v1389
        %v2275 = vtanh.pop %v2271
        %v2276 = vtanh.pop %v2272
        %v2277 = vtanh.pop %v2273
        %v2278 = vtanh.pop %v2274
        %v2279 = vmul.f32 %v2275, %v1398
        %v2280 = vmul.f32 %v2276, %v1398
        %v2281 = vmul.f32 %v2277, %v1398
        %v2282 = vmul.f32 %v2278, %v1398
        %v2283 = vadd.f32 %v2247, %v2279
        %v2284 = vadd.f32 %v2248, %v2280
        %v2285 = vadd.f32 %v2249, %v2281
        %v2286 = vadd.f32 %v2250, %v2282
        %v2287 = vmul.f32 %v2179, %v1407
        %v2288 = vmul.f32 %v2180, %v1407
        %v2289 = vmul.f32 %v2181, %v1407
        %v2290 = vmul.f32 %v2182, %v1407
        %v2291 = vadd.f32 %v2287, %v1412
        %v2292 = vadd.f32 %v2288, %v1412
        %v2293 = vadd.f32 %v2289, %v1412
        %v2294 = vadd.f32 %v2290, %v1412
        %v2295 = vadd.f32 %v2291, %v1418
        %v2296 = vadd.f32 %v2292, %v1419
        %v2297 = vadd.f32 %v2293, %v1420
        %v2298 = vadd.f32 %v2294, %v1421
        %v2299 = vadd.f32 %v2295, %v1427
        %v2300 = vadd.f32 %v2296, %v1428
        %v2301 = vadd.f32 %v2297, %v1429
        %v2302 = vadd.f32 %v2298, %v1430
        %v2303 = vadd.f32 %v2299, %v1436
        %v2304 = vadd.f32 %v2300, %v1437
        %v2305 = vadd.f32 %v2301, %v1438
        %v2306 = vadd.f32 %v2302, %v1439
        %v2307 = vadd.f32 %v2303, %v1445
        %v2308 = vadd.f32 %v2304, %v1446
        %v2309 = vadd.f32 %v2305, %v1447
        %v2310 = vadd.f32 %v2306, %v1448
        %v2311 = vtanh.pop %v2307
        %v2312 = vtanh.pop %v2308
        %v2313 = vtanh.pop %v2309
        %v2314 = vtanh.pop %v2310
        %v2315 = vmul.f32 %v2311, %v1457
        %v2316 = vmul.f32 %v2312, %v1457
        %v2317 = vmul.f32 %v2313, %v1457
        %v2318 = vmul.f32 %v2314, %v1457
        %v2319 = vadd.f32 %v2283, %v2315
        %v2320 = vadd.f32 %v2284, %v2316
        %v2321 = vadd.f32 %v2285, %v2317
        %v2322 = vadd.f32 %v2286, %v2318
        %v2323 = vmul.f32 %v2179, %v1466
        %v2324 = vmul.f32 %v2180, %v1466
        %v2325 = vmul.f32 %v2181, %v1466
        %v2326 = vmul.f32 %v2182, %v1466
        %v2327 = vadd.f32 %v2323, %v1471
        %v2328 = vadd.f32 %v2324, %v1471
        %v2329 = vadd.f32 %v2325, %v1471
        %v2330 = vadd.f32 %v2326, %v1471
        %v2331 = vadd.f32 %v2327, %v1477
        %v2332 = vadd.f32 %v2328, %v1478
        %v2333 = vadd.f32 %v2329, %v1479
        %v2334 = vadd.f32 %v2330, %v1480
        %v2335 = vadd.f32 %v2331, %v1486
        %v2336 = vadd.f32 %v2332, %v1487
        %v2337 = vadd.f32 %v2333, %v1488
        %v2338 = vadd.f32 %v2334, %v1489
        %v2339 = vadd.f32 %v2335, %v1495
        %v2340 = vadd.f32 %v2336, %v1496
        %v2341 = vadd.f32 %v2337, %v1497
        %v2342 = vadd.f32 %v2338, %v1498
        %v2343 = vadd.f32 %v2339, %v1504
        %v2344 = vadd.f32 %v2340, %v1505
        %v2345 = vadd.f32 %v2341, %v1506
        %v2346 = vadd.f32 %v2342, %v1507
        %v2347 = vtanh.pop %v2343
        %v2348 = vtanh.pop %v2344
        %v2349 = vtanh.pop %v2345
        %v2350 = vtanh.pop %v2346
        %v2351 = vmul.f32 %v2347, %v1516
        %v2352 = vmul.f32 %v2348, %v1516
        %v2353 = vmul.f32 %v2349, %v1516
        %v2354 = vmul.f32 %v2350, %v1516
        %v2355 = vadd.f32 %v2319, %v2351
        %v2356 = vadd.f32 %v2320, %v2352
        %v2357 = vadd.f32 %v2321, %v2353
        %v2358 = vadd.f32 %v2322, %v2354
        %v2359 = vmul.f32 %v2179, %v1525
        %v2360 = vmul.f32 %v2180, %v1525
        %v2361 = vmul.f32 %v2181, %v1525
        %v2362 = vmul.f32 %v2182, %v1525
        %v2363 = vadd.f32 %v2359, %v1530
        %v2364 = vadd.f32 %v2360, %v1530
        %v2365 = vadd.f32 %v2361, %v1530
        %v2366 = vadd.f32 %v2362, %v1530
        %v2367 = vadd.f32 %v2363, %v1536
        %v2368 = vadd.f32 %v2364, %v1537
        %v2369 = vadd.f32 %v2365, %v1538
        %v2370 = vadd.f32 %v2366, %v1539
        %v2371 = vadd.f32 %v2367, %v1545
        %v2372 = vadd.f32 %v2368, %v1546
        %v2373 = vadd.f32 %v2369, %v1547
        %v2374 = vadd.f32 %v2370, %v1548
        %v2375 = vadd.f32 %v2371, %v1554
        %v2376 = vadd.f32 %v2372, %v1555
        %v2377 = vadd.f32 %v2373, %v1556
        %v2378 = vadd.f32 %v2374, %v1557
        %v2379 = vadd.f32 %v2375, %v1563
        %v2380 = vadd.f32 %v2376, %v1564
        %v2381 = vadd.f32 %v2377, %v1565
        %v2382 = vadd.f32 %v2378, %v1566
        %v2383 = vtanh.pop %v2379
        %v2384 = vtanh.pop %v2380
        %v2385 = vtanh.pop %v2381
        %v2386 = vtanh.pop %v2382
        %v2387 = vmul.f32 %v2383, %v1575
        %v2388 = vmul.f32 %v2384, %v1575
        %v2389 = vmul.f32 %v2385, %v1575
        %v2390 = vmul.f32 %v2386, %v1575
        %v2391 = vadd.f32 %v2355, %v2387
        %v2392 = vadd.f32 %v2356, %v2388
        %v2393 = vadd.f32 %v2357, %v2389
        %v2394 = vadd.f32 %v2358, %v2390
        %v2395 = vmul.f32 %v2179, %v1584
        %v2396 = vmul.f32 %v2180, %v1584
        %v2397 = vmul.f32 %v2181, %v1584
        %v2398 = vmul.f32 %v2182, %v1584
        %v2399 = vadd.f32 %v2395, %v1589
        %v2400 = vadd.f32 %v2396, %v1589
        %v2401 = vadd.f32 %v2397, %v1589
        %v2402 = vadd.f32 %v2398, %v1589
        %v2403 = vadd.f32 %v2399, %v1595
        %v2404 = vadd.f32 %v2400, %v1596
        %v2405 = vadd.f32 %v2401, %v1597
        %v2406 = vadd.f32 %v2402, %v1598
        %v2407 = vadd.f32 %v2403, %v1604
        %v2408 = vadd.f32 %v2404, %v1605
        %v2409 = vadd.f32 %v2405, %v1606
        %v2410 = vadd.f32 %v2406, %v1607
        %v2411 = vadd.f32 %v2407, %v1613
        %v2412 = vadd.f32 %v2408, %v1614
        %v2413 = vadd.f32 %v2409, %v1615
        %v2414 = vadd.f32 %v2410, %v1616
        %v2415 = vadd.f32 %v2411, %v1622
        %v2416 = vadd.f32 %v2412, %v1623
        %v2417 = vadd.f32 %v2413, %v1624
        %v2418 = vadd.f32 %v2414, %v1625
        %v2419 = vtanh.pop %v2415
        %v2420 = vtanh.pop %v2416
        %v2421 = vtanh.pop %v2417
        %v2422 = vtanh.pop %v2418
        %v2423 = vmul.f32 %v2419, %v1634
        %v2424 = vmul.f32 %v2420, %v1634
        %v2425 = vmul.f32 %v2421, %v1634
        %v2426 = vmul.f32 %v2422, %v1634
        %v2427 = vadd.f32 %v2391, %v2423
        %v2428 = vadd.f32 %v2392, %v2424
        %v2429 = vadd.f32 %v2393, %v2425
        %v2430 = vadd.f32 %v2394, %v2426
        %v2431 = vmul.f32 %v2179, %v1643
        %v2432 = vmul.f32 %v2180, %v1643
        %v2433 = vmul.f32 %v2181, %v1643
        %v2434 = vmul.f32 %v2182, %v1643
        %v2435 = vadd.f32 %v2431, %v1648
        %v2436 = vadd.f32 %v2432, %v1648
        %v2437 = vadd.f32 %v2433, %v1648
        %v2438 = vadd.f32 %v2434, %v1648
        %v2439 = vadd.f32 %v2435, %v1654
        %v2440 = vadd.f32 %v2436, %v1655
        %v2441 = vadd.f32 %v2437, %v1656
        %v2442 = vadd.f32 %v2438, %v1657
        %v2443 = vadd.f32 %v2439, %v1663
        %v2444 = vadd.f32 %v2440, %v1664
        %v2445 = vadd.f32 %v2441, %v1665
        %v2446 = vadd.f32 %v2442, %v1666
        %v2447 = vadd.f32 %v2443, %v1672
        %v2448 = vadd.f32 %v2444, %v1673
        %v2449 = vadd.f32 %v2445, %v1674
        %v2450 = vadd.f32 %v2446, %v1675
        %v2451 = vadd.f32 %v2447, %v1681
        %v2452 = vadd.f32 %v2448, %v1682
        %v2453 = vadd.f32 %v2449, %v1683
        %v2454 = vadd.f32 %v2450, %v1684
        %v2455 = vtanh.pop %v2451
        %v2456 = vtanh.pop %v2452
        %v2457 = vtanh.pop %v2453
        %v2458 = vtanh.pop %v2454
        %v2459 = vmul.f32 %v2455, %v1693
        %v2460 = vmul.f32 %v2456, %v1693
        %v2461 = vmul.f32 %v2457, %v1693
        %v2462 = vmul.f32 %v2458, %v1693
        %v2463 = vadd.f32 %v2427, %v2459
        %v2464 = vadd.f32 %v2428, %v2460
        %v2465 = vadd.f32 %v2429, %v2461
        %v2466 = vadd.f32 %v2430, %v2462
        %v2467 = vmul.f32 %v2179, %v1702
        %v2468 = vmul.f32 %v2180, %v1702
        %v2469 = vmul.f32 %v2181, %v1702
        %v2470 = vmul.f32 %v2182, %v1702
        %v2471 = vadd.f32 %v2467, %v1707
        %v2472 = vadd.f32 %v2468, %v1707
        %v2473 = vadd.f32 %v2469, %v1707
        %v2474 = vadd.f32 %v2470, %v1707
        %v2475 = vadd.f32 %v2471, %v1713
        %v2476 = vadd.f32 %v2472, %v1714
        %v2477 = vadd.f32 %v2473, %v1715
        %v2478 = vadd.f32 %v2474, %v1716
        %v2479 = vadd.f32 %v2475, %v1722
        %v2480 = vadd.f32 %v2476, %v1723
        %v2481 = vadd.f32 %v2477, %v1724
        %v2482 = vadd.f32 %v2478, %v1725
        %v2483 = vadd.f32 %v2479, %v1731
        %v2484 = vadd.f32 %v2480, %v1732
        %v2485 = vadd.f32 %v2481, %v1733
        %v2486 = vadd.f32 %v2482, %v1734
        %v2487 = vadd.f32 %v2483, %v1740
        %v2488 = vadd.f32 %v2484, %v1741
        %v2489 = vadd.f32 %v2485, %v1742
        %v2490 = vadd.f32 %v2486, %v1743
        %v2491 = vtanh.pop %v2487
        %v2492 = vtanh.pop %v2488
        %v2493 = vtanh.pop %v2489
        %v2494 = vtanh.pop %v2490
        %v2495 = vmul.f32 %v2491, %v1752
        %v2496 = vmul.f32 %v2492, %v1752
        %v2497 = vmul.f32 %v2493, %v1752
        %v2498 = vmul.f32 %v2494, %v1752
        %v2499 = vadd.f32 %v2463, %v2495
        %v2500 = vadd.f32 %v2464, %v2496
        %v2501 = vadd.f32 %v2465, %v2497
        %v2502 = vadd.f32 %v2466, %v2498
        %v2503 = vmul.f32 %v2179, %v1761
        %v2504 = vmul.f32 %v2180, %v1761
        %v2505 = vmul.f32 %v2181, %v1761
        %v2506 = vmul.f32 %v2182, %v1761
        %v2507 = vadd.f32 %v2503, %v1766
        %v2508 = vadd.f32 %v2504, %v1766
        %v2509 = vadd.f32 %v2505, %v1766
        %v2510 = vadd.f32 %v2506, %v1766
        %v2511 = vadd.f32 %v2507, %v1772
        %v2512 = vadd.f32 %v2508, %v1773
        %v2513 = vadd.f32 %v2509, %v1774
        %v2514 = vadd.f32 %v2510, %v1775
        %v2515 = vadd.f32 %v2511, %v1781
        %v2516 = vadd.f32 %v2512, %v1782
        %v2517 = vadd.f32 %v2513, %v1783
        %v2518 = vadd.f32 %v2514, %v1784
        %v2519 = vadd.f32 %v2515, %v1790
        %v2520 = vadd.f32 %v2516, %v1791
        %v2521 = vadd.f32 %v2517, %v1792
        %v2522 = vadd.f32 %v2518, %v1793
        %v2523 = vadd.f32 %v2519, %v1799
        %v2524 = vadd.f32 %v2520, %v1800
        %v2525 = vadd.f32 %v2521, %v1801
        %v2526 = vadd.f32 %v2522, %v1802
        %v2527 = vtanh.pop %v2523
        %v2528 = vtanh.pop %v2524
        %v2529 = vtanh.pop %v2525
        %v2530 = vtanh.pop %v2526
        %v2531 = vmul.f32 %v2527, %v1811
        %v2532 = vmul.f32 %v2528, %v1811
        %v2533 = vmul.f32 %v2529, %v1811
        %v2534 = vmul.f32 %v2530, %v1811
        %v2535 = vadd.f32 %v2499, %v2531
        %v2536 = vadd.f32 %v2500, %v2532
        %v2537 = vadd.f32 %v2501, %v2533
        %v2538 = vadd.f32 %v2502, %v2534
        %v2539 = vmul.f32 %v2179, %v1820
        %v2540 = vmul.f32 %v2180, %v1820
        %v2541 = vmul.f32 %v2181, %v1820
        %v2542 = vmul.f32 %v2182, %v1820
        %v2543 = vadd.f32 %v2539, %v1825
        %v2544 = vadd.f32 %v2540, %v1825
        %v2545 = vadd.f32 %v2541, %v1825
        %v2546 = vadd.f32 %v2542, %v1825
        %v2547 = vadd.f32 %v2543, %v1831
        %v2548 = vadd.f32 %v2544, %v1832
        %v2549 = vadd.f32 %v2545, %v1833
        %v2550 = vadd.f32 %v2546, %v1834
        %v2551 = vadd.f32 %v2547, %v1840
        %v2552 = vadd.f32 %v2548, %v1841
        %v2553 = vadd.f32 %v2549, %v1842
        %v2554 = vadd.f32 %v2550, %v1843
        %v2555 = vadd.f32 %v2551, %v1849
        %v2556 = vadd.f32 %v2552, %v1850
        %v2557 = vadd.f32 %v2553, %v1851
        %v2558 = vadd.f32 %v2554, %v1852
        %v2559 = vadd.f32 %v2555, %v1858
        %v2560 = vadd.f32 %v2556, %v1859
        %v2561 = vadd.f32 %v2557, %v1860
        %v2562 = vadd.f32 %v2558, %v1861
        %v2563 = vtanh.pop %v2559
        %v2564 = vtanh.pop %v2560
        %v2565 = vtanh.pop %v2561
        %v2566 = vtanh.pop %v2562
        %v2567 = vmul.f32 %v2563, %v1870
        %v2568 = vmul.f32 %v2564, %v1870
        %v2569 = vmul.f32 %v2565, %v1870
        %v2570 = vmul.f32 %v2566, %v1870
        %v2571 = vadd.f32 %v2535, %v2567
        %v2572 = vadd.f32 %v2536, %v2568
        %v2573 = vadd.f32 %v2537, %v2569
        %v2574 = vadd.f32 %v2538, %v2570
        %v2575 = vmul.f32 %v2179, %v1879
        %v2576 = vmul.f32 %v2180, %v1879
        %v2577 = vmul.f32 %v2181, %v1879
        %v2578 = vmul.f32 %v2182, %v1879
        %v2579 = vadd.f32 %v2575, %v1884
        %v2580 = vadd.f32 %v2576, %v1884
        %v2581 = vadd.f32 %v2577, %v1884
        %v2582 = vadd.f32 %v2578, %v1884
        %v2583 = vadd.f32 %v2579, %v1890
        %v2584 = vadd.f32 %v2580, %v1891
        %v2585 = vadd.f32 %v2581, %v1892
        %v2586 = vadd.f32 %v2582, %v1893
        %v2587 = vadd.f32 %v2583, %v1899
        %v2588 = vadd.f32 %v2584, %v1900
        %v2589 = vadd.f32 %v2585, %v1901
        %v2590 = vadd.f32 %v2586, %v1902
        %v2591 = vadd.f32 %v2587, %v1908
        %v2592 = vadd.f32 %v2588, %v1909
        %v2593 = vadd.f32 %v2589, %v1910
        %v2594 = vadd.f32 %v2590, %v1911
        %v2595 = vadd.f32 %v2591, %v1917
        %v2596 = vadd.f32 %v2592, %v1918
        %v2597 = vadd.f32 %v2593, %v1919
        %v2598 = vadd.f32 %v2594, %v1920
        %v2599 = vtanh.pop %v2595
        %v2600 = vtanh.pop %v2596
        %v2601 = vtanh.pop %v2597
        %v2602 = vtanh.pop %v2598
        %v2603 = vmul.f32 %v2599, %v1929
        %v2604 = vmul.f32 %v2600, %v1929
        %v2605 = vmul.f32 %v2601, %v1929
        %v2606 = vmul.f32 %v2602, %v1929
        %v2607 = vadd.f32 %v2571, %v2603
        %v2608 = vadd.f32 %v2572, %v2604
        %v2609 = vadd.f32 %v2573, %v2605
        %v2610 = vadd.f32 %v2574, %v2606
        %v2611 = vmul.f32 %v2179, %v1938
        %v2612 = vmul.f32 %v2180, %v1938
        %v2613 = vmul.f32 %v2181, %v1938
        %v2614 = vmul.f32 %v2182, %v1938
        %v2615 = vadd.f32 %v2611, %v1943
        %v2616 = vadd.f32 %v2612, %v1943
        %v2617 = vadd.f32 %v2613, %v1943
        %v2618 = vadd.f32 %v2614, %v1943
        %v2619 = vadd.f32 %v2615, %v1949
        %v2620 = vadd.f32 %v2616, %v1950
        %v2621 = vadd.f32 %v2617, %v1951
        %v2622 = vadd.f32 %v2618, %v1952
        %v2623 = vadd.f32 %v2619, %v1958
        %v2624 = vadd.f32 %v2620, %v1959
        %v2625 = vadd.f32 %v2621, %v1960
        %v2626 = vadd.f32 %v2622, %v1961
        %v2627 = vadd.f32 %v2623, %v1967
        %v2628 = vadd.f32 %v2624, %v1968
        %v2629 = vadd.f32 %v2625, %v1969
        %v2630 = vadd.f32 %v2626, %v1970
        %v2631 = vadd.f32 %v2627, %v1976
        %v2632 = vadd.f32 %v2628, %v1977
        %v2633 = vadd.f32 %v2629, %v1978
        %v2634 = vadd.f32 %v2630, %v1979
        %v2635 = vtanh.pop %v2631
        %v2636 = vtanh.pop %v2632
        %v2637 = vtanh.pop %v2633
        %v2638 = vtanh.pop %v2634
        %v2639 = vmul.f32 %v2635, %v1988
        %v2640 = vmul.f32 %v2636, %v1988
        %v2641 = vmul.f32 %v2637, %v1988
        %v2642 = vmul.f32 %v2638, %v1988
        %v2643 = vadd.f32 %v2607, %v2639
        %v2644 = vadd.f32 %v2608, %v2640
        %v2645 = vadd.f32 %v2609, %v2641
        %v2646 = vadd.f32 %v2610, %v2642
        %v2647 = vmul.f32 %v2179, %v1997
        %v2648 = vmul.f32 %v2180, %v1997
        %v2649 = vmul.f32 %v2181, %v1997
        %v2650 = vmul.f32 %v2182, %v1997
        %v2651 = vadd.f32 %v2647, %v2002
        %v2652 = vadd.f32 %v2648, %v2002
        %v2653 = vadd.f32 %v2649, %v2002
        %v2654 = vadd.f32 %v2650, %v2002
        %v2655 = vadd.f32 %v2651, %v2008
        %v2656 = vadd.f32 %v2652, %v2009
        %v2657 = vadd.f32 %v2653, %v2010
        %v2658 = vadd.f32 %v2654, %v2011
        %v2659 = vadd.f32 %v2655, %v2017
        %v2660 = vadd.f32 %v2656, %v2018
        %v2661 = vadd.f32 %v2657, %v2019
        %v2662 = vadd.f32 %v2658, %v2020
        %v2663 = vadd.f32 %v2659, %v2026
        %v2664 = vadd.f32 %v2660, %v2027
        %v2665 = vadd.f32 %v2661, %v2028
        %v2666 = vadd.f32 %v2662, %v2029
        %v2667 = vadd.f32 %v2663, %v2035
        %v2668 = vadd.f32 %v2664, %v2036
        %v2669 = vadd.f32 %v2665, %v2037
        %v2670 = vadd.f32 %v2666, %v2038
        %v2671 = vtanh.pop %v2667
        %v2672 = vtanh.pop %v2668
        %v2673 = vtanh.pop %v2669
        %v2674 = vtanh.pop %v2670
        %v2675 = vmul.f32 %v2671, %v2047
        %v2676 = vmul.f32 %v2672, %v2047
        %v2677 = vmul.f32 %v2673, %v2047
        %v2678 = vmul.f32 %v2674, %v2047
        %v2679 = vadd.f32 %v2643, %v2675
        %v2680 = vadd.f32 %v2644, %v2676
        %v2681 = vadd.f32 %v2645, %v2677
        %v2682 = vadd.f32 %v2646, %v2678
        %v2683 = vmul.f32 %v2179, %v2056
        %v2684 = vmul.f32 %v2180, %v2056
        %v2685 = vmul.f32 %v2181, %v2056
        %v2686 = vmul.f32 %v2182, %v2056
        %v2687 = vadd.f32 %v2683, %v2061
        %v2688 = vadd.f32 %v2684, %v2061
        %v2689 = vadd.f32 %v2685, %v2061
        %v2690 = vadd.f32 %v2686, %v2061
        %v2691 = vadd.f32 %v2687, %v2067
        %v2692 = vadd.f32 %v2688, %v2068
        %v2693 = vadd.f32 %v2689, %v2069
        %v2694 = vadd.f32 %v2690, %v2070
        %v2695 = vadd.f32 %v2691, %v2076
        %v2696 = vadd.f32 %v2692, %v2077
        %v2697 = vadd.f32 %v2693, %v2078
        %v2698 = vadd.f32 %v2694, %v2079
        %v2699 = vadd.f32 %v2695, %v2085
        %v2700 = vadd.f32 %v2696, %v2086
        %v2701 = vadd.f32 %v2697, %v2087
        %v2702 = vadd.f32 %v2698, %v2088
        %v2703 = vadd.f32 %v2699, %v2094
        %v2704 = vadd.f32 %v2700, %v2095
        %v2705 = vadd.f32 %v2701, %v2096
        %v2706 = vadd.f32 %v2702, %v2097
        %v2707 = vtanh.pop %v2703
        %v2708 = vtanh.pop %v2704
        %v2709 = vtanh.pop %v2705
        %v2710 = vtanh.pop %v2706
        %v2711 = vmul.f32 %v2707, %v2106
        %v2712 = vmul.f32 %v2708, %v2106
        %v2713 = vmul.f32 %v2709, %v2106
        %v2714 = vmul.f32 %v2710, %v2106
        %v2715 = vadd.f32 %v2679, %v2711
        %v2716 = vadd.f32 %v2680, %v2712
        %v2717 = vadd.f32 %v2681, %v2713
        %v2718 = vadd.f32 %v2682, %v2714
        %v2719 = vmul.f32 %v2179, %v2115
        %v2720 = vmul.f32 %v2180, %v2115
        %v2721 = vmul.f32 %v2181, %v2115
        %v2722 = vmul.f32 %v2182, %v2115
        %v2723 = vadd.f32 %v2719, %v2120
        %v2724 = vadd.f32 %v2720, %v2120
        %v2725 = vadd.f32 %v2721, %v2120
        %v2726 = vadd.f32 %v2722, %v2120
        %v2727 = vadd.f32 %v2723, %v2126
        %v2728 = vadd.f32 %v2724, %v2127
        %v2729 = vadd.f32 %v2725, %v2128
        %v2730 = vadd.f32 %v2726, %v2129
        %v2731 = vadd.f32 %v2727, %v2135
        %v2732 = vadd.f32 %v2728, %v2136
        %v2733 = vadd.f32 %v2729, %v2137
        %v2734 = vadd.f32 %v2730, %v2138
        %v2735 = vadd.f32 %v2731, %v2144
        %v2736 = vadd.f32 %v2732, %v2145
        %v2737 = vadd.f32 %v2733, %v2146
        %v2738 = vadd.f32 %v2734, %v2147
        %v2739 = vadd.f32 %v2735, %v2153
        %v2740 = vadd.f32 %v2736, %v2154
        %v2741 = vadd.f32 %v2737, %v2155
        %v2742 = vadd.f32 %v2738, %v2156
        %v2743 = vtanh.pop %v2739
        %v2744 = vtanh.pop %v2740
        %v2745 = vtanh.pop %v2741
        %v2746 = vtanh.pop %v2742
        %v2747 = vmul.f32 %v2743, %v2165
        %v2748 = vmul.f32 %v2744, %v2165
        %v2749 = vmul.f32 %v2745, %v2165
        %v2750 = vmul.f32 %v2746, %v2165
        %v2751 = vadd.f32 %v2715, %v2747
        %v2752 = vadd.f32 %v2716, %v2748
        %v2753 = vadd.f32 %v2717, %v2749
        %v2754 = vadd.f32 %v2718, %v2750
        %v2755 = vadd.f32 %v2179, %v2751
        %v2756 = vadd.f32 %v2180, %v2752
        %v2757 = vadd.f32 %v2181, %v2753
        %v2758 = vadd.f32 %v2182, %v2754
        %v2759 = vadd.f32 %v2755, %v2178
        %v2760 = vadd.f32 %v2756, %v2178
        %v2761 = vadd.f32 %v2757, %v2178
        %v2762 = vadd.f32 %v2758, %v2178
        %v2763 = vmul.f32 %v2759, %v1234
        %v2764 = vmul.f32 %v2760, %v1234
        %v2765 = vmul.f32 %v2761, %v1234
        %v2766 = vmul.f32 %v2762, %v1234
        %v2767 = vadd.f32 %v2763, %v1239
        %v2768 = vadd.f32 %v2764, %v1239
        %v2769 = vadd.f32 %v2765, %v1239
        %v2770 = vadd.f32 %v2766, %v1239
        %v2771 = vadd.f32 %v2767, %v1245
        %v2772 = vadd.f32 %v2768, %v1246
        %v2773 = vadd.f32 %v2769, %v1247
        %v2774 = vadd.f32 %v2770, %v1248
        %v2775 = vadd.f32 %v2771, %v1254
        %v2776 = vadd.f32 %v2772, %v1255
        %v2777 = vadd.f32 %v2773, %v1256
        %v2778 = vadd.f32 %v2774, %v1257
        %v2779 = vadd.f32 %v2775, %v1263
        %v2780 = vadd.f32 %v2776, %v1264
        %v2781 = vadd.f32 %v2777, %v1265
        %v2782 = vadd.f32 %v2778, %v1266
        %v2783 = vadd.f32 %v2779, %v1272
        %v2784 = vadd.f32 %v2780, %v1273
        %v2785 = vadd.f32 %v2781, %v1274
        %v2786 = vadd.f32 %v2782, %v1275
        %v2787 = vtanh.pop %v2783
        %v2788 = vtanh.pop %v2784
        %v2789 = vtanh.pop %v2785
        %v2790 = vtanh.pop %v2786
        %v2791 = vmul.f32 %v2787, %v1284
        %v2792 = vmul.f32 %v2788, %v1284
        %v2793 = vmul.f32 %v2789, %v1284
        %v2794 = vmul.f32 %v2790, %v1284
        %v2795 = vmul.f32 %v2759, %v1289
        %v2796 = vmul.f32 %v2760, %v1289
        %v2797 = vmul.f32 %v2761, %v1289
        %v2798 = vmul.f32 %v2762, %v1289
        %v2799 = vadd.f32 %v2795, %v1294
        %v2800 = vadd.f32 %v2796, %v1294
        %v2801 = vadd.f32 %v2797, %v1294
        %v2802 = vadd.f32 %v2798, %v1294
        %v2803 = vadd.f32 %v2799, %v1300
        %v2804 = vadd.f32 %v2800, %v1301
        %v2805 = vadd.f32 %v2801, %v1302
        %v2806 = vadd.f32 %v2802, %v1303
        %v2807 = vadd.f32 %v2803, %v1309
        %v2808 = vadd.f32 %v2804, %v1310
        %v2809 = vadd.f32 %v2805, %v1311
        %v2810 = vadd.f32 %v2806, %v1312
        %v2811 = vadd.f32 %v2807, %v1318
        %v2812 = vadd.f32 %v2808, %v1319
        %v2813 = vadd.f32 %v2809, %v1320
        %v2814 = vadd.f32 %v2810, %v1321
        %v2815 = vadd.f32 %v2811, %v1327
        %v2816 = vadd.f32 %v2812, %v1328
        %v2817 = vadd.f32 %v2813, %v1329
        %v2818 = vadd.f32 %v2814, %v1330
        %v2819 = vtanh.pop %v2815
        %v2820 = vtanh.pop %v2816
        %v2821 = vtanh.pop %v2817
        %v2822 = vtanh.pop %v2818
        %v2823 = vmul.f32 %v2819, %v1339
        %v2824 = vmul.f32 %v2820, %v1339
        %v2825 = vmul.f32 %v2821, %v1339
        %v2826 = vmul.f32 %v2822, %v1339
        %v2827 = vadd.f32 %v2791, %v2823
        %v2828 = vadd.f32 %v2792, %v2824
        %v2829 = vadd.f32 %v2793, %v2825
        %v2830 = vadd.f32 %v2794, %v2826
        %v2831 = vmul.f32 %v2759, %v1348
        %v2832 = vmul.f32 %v2760, %v1348
        %v2833 = vmul.f32 %v2761, %v1348
        %v2834 = vmul.f32 %v2762, %v1348
        %v2835 = vadd.f32 %v2831, %v1353
        %v2836 = vadd.f32 %v2832, %v1353
        %v2837 = vadd.f32 %v2833, %v1353
        %v2838 = vadd.f32 %v2834, %v1353
        %v2839 = vadd.f32 %v2835, %v1359
        %v2840 = vadd.f32 %v2836, %v1360
        %v2841 = vadd.f32 %v2837, %v1361
        %v2842 = vadd.f32 %v2838, %v1362
        %v2843 = vadd.f32 %v2839, %v1368
        %v2844 = vadd.f32 %v2840, %v1369
        %v2845 = vadd.f32 %v2841, %v1370
        %v2846 = vadd.f32 %v2842, %v1371
        %v2847 = vadd.f32 %v2843, %v1377
        %v2848 = vadd.f32 %v2844, %v1378
        %v2849 = vadd.f32 %v2845, %v1379
        %v2850 = vadd.f32 %v2846, %v1380
        %v2851 = vadd.f32 %v2847, %v1386
        %v2852 = vadd.f32 %v2848, %v1387
        %v2853 = vadd.f32 %v2849, %v1388
        %v2854 = vadd.f32 %v2850, %v1389
        %v2855 = vtanh.pop %v2851
        %v2856 = vtanh.pop %v2852
        %v2857 = vtanh.pop %v2853
        %v2858 = vtanh.pop %v2854
        %v2859 = vmul.f32 %v2855, %v1398
        %v2860 = vmul.f32 %v2856, %v1398
        %v2861 = vmul.f32 %v2857, %v1398
        %v2862 = vmul.f32 %v2858, %v1398
        %v2863 = vadd.f32 %v2827, %v2859
        %v2864 = vadd.f32 %v2828, %v2860
        %v2865 = vadd.f32 %v2829, %v2861
        %v2866 = vadd.f32 %v2830, %v2862
        %v2867 = vmul.f32 %v2759, %v1407
        %v2868 = vmul.f32 %v2760, %v1407
        %v2869 = vmul.f32 %v2761, %v1407
        %v2870 = vmul.f32 %v2762, %v1407
        %v2871 = vadd.f32 %v2867, %v1412
        %v2872 = vadd.f32 %v2868, %v1412
        %v2873 = vadd.f32 %v2869, %v1412
        %v2874 = vadd.f32 %v2870, %v1412
        %v2875 = vadd.f32 %v2871, %v1418
        %v2876 = vadd.f32 %v2872, %v1419
        %v2877 = vadd.f32 %v2873, %v1420
        %v2878 = vadd.f32 %v2874, %v1421
        %v2879 = vadd.f32 %v2875, %v1427
        %v2880 = vadd.f32 %v2876, %v1428
        %v2881 = vadd.f32 %v2877, %v1429
        %v2882 = vadd.f32 %v2878, %v1430
        %v2883 = vadd.f32 %v2879, %v1436
        %v2884 = vadd.f32 %v2880, %v1437
        %v2885 = vadd.f32 %v2881, %v1438
        %v2886 = vadd.f32 %v2882, %v1439
        %v2887 = vadd.f32 %v2883, %v1445
        %v2888 = vadd.f32 %v2884, %v1446
        %v2889 = vadd.f32 %v2885, %v1447
        %v2890 = vadd.f32 %v2886, %v1448
        %v2891 = vtanh.pop %v2887
        %v2892 = vtanh.pop %v2888
        %v2893 = vtanh.pop %v2889
        %v2894 = vtanh.pop %v2890
        %v2895 = vmul.f32 %v2891, %v1457
        %v2896 = vmul.f32 %v2892, %v1457
        %v2897 = vmul.f32 %v2893, %v1457
        %v2898 = vmul.f32 %v2894, %v1457
        %v2899 = vadd.f32 %v2863, %v2895
        %v2900 = vadd.f32 %v2864, %v2896
        %v2901 = vadd.f32 %v2865, %v2897
        %v2902 = vadd.f32 %v2866, %v2898
        %v2903 = vmul.f32 %v2759, %v1466
        %v2904 = vmul.f32 %v2760, %v1466
        %v2905 = vmul.f32 %v2761, %v1466
        %v2906 = vmul.f32 %v2762, %v1466
        %v2907 = vadd.f32 %v2903, %v1471
        %v2908 = vadd.f32 %v2904, %v1471
        %v2909 = vadd.f32 %v2905, %v1471
        %v2910 = vadd.f32 %v2906, %v1471
        %v2911 = vadd.f32 %v2907, %v1477
        %v2912 = vadd.f32 %v2908, %v1478
        %v2913 = vadd.f32 %v2909, %v1479
        %v2914 = vadd.f32 %v2910, %v1480
        %v2915 = vadd.f32 %v2911, %v1486
        %v2916 = vadd.f32 %v2912, %v1487
        %v2917 = vadd.f32 %v2913, %v1488
        %v2918 = vadd.f32 %v2914, %v1489
        %v2919 = vadd.f32 %v2915, %v1495
        %v2920 = vadd.f32 %v2916, %v1496
        %v2921 = vadd.f32 %v2917, %v1497
        %v2922 = vadd.f32 %v2918, %v1498
        %v2923 = vadd.f32 %v2919, %v1504
        %v2924 = vadd.f32 %v2920, %v1505
        %v2925 = vadd.f32 %v2921, %v1506
        %v2926 = vadd.f32 %v2922, %v1507
        %v2927 = vtanh.pop %v2923
        %v2928 = vtanh.pop %v2924
        %v2929 = vtanh.pop %v2925
        %v2930 = vtanh.pop %v2926
        %v2931 = vmul.f32 %v2927, %v1516
        %v2932 = vmul.f32 %v2928, %v1516
        %v2933 = vmul.f32 %v2929, %v1516
        %v2934 = vmul.f32 %v2930, %v1516
        %v2935 = vadd.f32 %v2899, %v2931
        %v2936 = vadd.f32 %v2900, %v2932
        %v2937 = vadd.f32 %v2901, %v2933
        %v2938 = vadd.f32 %v2902, %v2934
        %v2939 = vmul.f32 %v2759, %v1525
        %v2940 = vmul.f32 %v2760, %v1525
        %v2941 = vmul.f32 %v2761, %v1525
        %v2942 = vmul.f32 %v2762, %v1525
        %v2943 = vadd.f32 %v2939, %v1530
        %v2944 = vadd.f32 %v2940, %v1530
        %v2945 = vadd.f32 %v2941, %v1530
        %v2946 = vadd.f32 %v2942, %v1530
        %v2947 = vadd.f32 %v2943, %v1536
        %v2948 = vadd.f32 %v2944, %v1537
        %v2949 = vadd.f32 %v2945, %v1538
        %v2950 = vadd.f32 %v2946, %v1539
        %v2951 = vadd.f32 %v2947, %v1545
        %v2952 = vadd.f32 %v2948, %v1546
        %v2953 = vadd.f32 %v2949, %v1547
        %v2954 = vadd.f32 %v2950, %v1548
        %v2955 = vadd.f32 %v2951, %v1554
        %v2956 = vadd.f32 %v2952, %v1555
        %v2957 = vadd.f32 %v2953, %v1556
        %v2958 = vadd.f32 %v2954, %v1557
        %v2959 = vadd.f32 %v2955, %v1563
        %v2960 = vadd.f32 %v2956, %v1564
        %v2961 = vadd.f32 %v2957, %v1565
        %v2962 = vadd.f32 %v2958, %v1566
        %v2963 = vtanh.pop %v2959
        %v2964 = vtanh.pop %v2960
        %v2965 = vtanh.pop %v2961
        %v2966 = vtanh.pop %v2962
        %v2967 = vmul.f32 %v2963, %v1575
        %v2968 = vmul.f32 %v2964, %v1575
        %v2969 = vmul.f32 %v2965, %v1575
        %v2970 = vmul.f32 %v2966, %v1575
        %v2971 = vadd.f32 %v2935, %v2967
        %v2972 = vadd.f32 %v2936, %v2968
        %v2973 = vadd.f32 %v2937, %v2969
        %v2974 = vadd.f32 %v2938, %v2970
        %v2975 = vmul.f32 %v2759, %v1584
        %v2976 = vmul.f32 %v2760, %v1584
        %v2977 = vmul.f32 %v2761, %v1584
        %v2978 = vmul.f32 %v2762, %v1584
        %v2979 = vadd.f32 %v2975, %v1589
        %v2980 = vadd.f32 %v2976, %v1589
        %v2981 = vadd.f32 %v2977, %v1589
        %v2982 = vadd.f32 %v2978, %v1589
        %v2983 = vadd.f32 %v2979, %v1595
        %v2984 = vadd.f32 %v2980, %v1596
        %v2985 = vadd.f32 %v2981, %v1597
        %v2986 = vadd.f32 %v2982, %v1598
        %v2987 = vadd.f32 %v2983, %v1604
        %v2988 = vadd.f32 %v2984, %v1605
        %v2989 = vadd.f32 %v2985, %v1606
        %v2990 = vadd.f32 %v2986, %v1607
        %v2991 = vadd.f32 %v2987, %v1613
        %v2992 = vadd.f32 %v2988, %v1614
        %v2993 = vadd.f32 %v2989, %v1615
        %v2994 = vadd.f32 %v2990, %v1616
        %v2995 = vadd.f32 %v2991, %v1622
        %v2996 = vadd.f32 %v2992, %v1623
        %v2997 = vadd.f32 %v2993, %v1624
        %v2998 = vadd.f32 %v2994, %v1625
        %v2999 = vtanh.pop %v2995
        %v3000 = vtanh.pop %v2996
        %v3001 = vtanh.pop %v2997
        %v3002 = vtanh.pop %v2998
        %v3003 = vmul.f32 %v2999, %v1634
        %v3004 = vmul.f32 %v3000, %v1634
        %v3005 = vmul.f32 %v3001, %v1634
        %v3006 = vmul.f32 %v3002, %v1634
        %v3007 = vadd.f32 %v2971, %v3003
        %v3008 = vadd.f32 %v2972, %v3004
        %v3009 = vadd.f32 %v2973, %v3005
        %v3010 = vadd.f32 %v2974, %v3006
        %v3011 = vmul.f32 %v2759, %v1643
        %v3012 = vmul.f32 %v2760, %v1643
        %v3013 = vmul.f32 %v2761, %v1643
        %v3014 = vmul.f32 %v2762, %v1643
        %v3015 = vadd.f32 %v3011, %v1648
        %v3016 = vadd.f32 %v3012, %v1648
        %v3017 = vadd.f32 %v3013, %v1648
        %v3018 = vadd.f32 %v3014, %v1648
        %v3019 = vadd.f32 %v3015, %v1654
        %v3020 = vadd.f32 %v3016, %v1655
        %v3021 = vadd.f32 %v3017, %v1656
        %v3022 = vadd.f32 %v3018, %v1657
        %v3023 = vadd.f32 %v3019, %v1663
        %v3024 = vadd.f32 %v3020, %v1664
        %v3025 = vadd.f32 %v3021, %v1665
        %v3026 = vadd.f32 %v3022, %v1666
        %v3027 = vadd.f32 %v3023, %v1672
        %v3028 = vadd.f32 %v3024, %v1673
        %v3029 = vadd.f32 %v3025, %v1674
        %v3030 = vadd.f32 %v3026, %v1675
        %v3031 = vadd.f32 %v3027, %v1681
        %v3032 = vadd.f32 %v3028, %v1682
        %v3033 = vadd.f32 %v3029, %v1683
        %v3034 = vadd.f32 %v3030, %v1684
        %v3035 = vtanh.pop %v3031
        %v3036 = vtanh.pop %v3032
        %v3037 = vtanh.pop %v3033
        %v3038 = vtanh.pop %v3034
        %v3039 = vmul.f32 %v3035, %v1693
        %v3040 = vmul.f32 %v3036, %v1693
        %v3041 = vmul.f32 %v3037, %v1693
        %v3042 = vmul.f32 %v3038, %v1693
        %v3043 = vadd.f32 %v3007, %v3039
        %v3044 = vadd.f32 %v3008, %v3040
        %v3045 = vadd.f32 %v3009, %v3041
        %v3046 = vadd.f32 %v3010, %v3042
        %v3047 = vmul.f32 %v2759, %v1702
        %v3048 = vmul.f32 %v2760, %v1702
        %v3049 = vmul.f32 %v2761, %v1702
        %v3050 = vmul.f32 %v2762, %v1702
        %v3051 = vadd.f32 %v3047, %v1707
        %v3052 = vadd.f32 %v3048, %v1707
        %v3053 = vadd.f32 %v3049, %v1707
        %v3054 = vadd.f32 %v3050, %v1707
        %v3055 = vadd.f32 %v3051, %v1713
        %v3056 = vadd.f32 %v3052, %v1714
        %v3057 = vadd.f32 %v3053, %v1715
        %v3058 = vadd.f32 %v3054, %v1716
        %v3059 = vadd.f32 %v3055, %v1722
        %v3060 = vadd.f32 %v3056, %v1723
        %v3061 = vadd.f32 %v3057, %v1724
        %v3062 = vadd.f32 %v3058, %v1725
        %v3063 = vadd.f32 %v3059, %v1731
        %v3064 = vadd.f32 %v3060, %v1732
        %v3065 = vadd.f32 %v3061, %v1733
        %v3066 = vadd.f32 %v3062, %v1734
        %v3067 = vadd.f32 %v3063, %v1740
        %v3068 = vadd.f32 %v3064, %v1741
        %v3069 = vadd.f32 %v3065, %v1742
        %v3070 = vadd.f32 %v3066, %v1743
        %v3071 = vtanh.pop %v3067
        %v3072 = vtanh.pop %v3068
        %v3073 = vtanh.pop %v3069
        %v3074 = vtanh.pop %v3070
        %v3075 = vmul.f32 %v3071, %v1752
        %v3076 = vmul.f32 %v3072, %v1752
        %v3077 = vmul.f32 %v3073, %v1752
        %v3078 = vmul.f32 %v3074, %v1752
        %v3079 = vadd.f32 %v3043, %v3075
        %v3080 = vadd.f32 %v3044, %v3076
        %v3081 = vadd.f32 %v3045, %v3077
        %v3082 = vadd.f32 %v3046, %v3078
        %v3083 = vmul.f32 %v2759, %v1761
        %v3084 = vmul.f32 %v2760, %v1761
        %v3085 = vmul.f32 %v2761, %v1761
        %v3086 = vmul.f32 %v2762, %v1761
        %v3087 = vadd.f32 %v3083, %v1766
        %v3088 = vadd.f32 %v3084, %v1766
        %v3089 = vadd.f32 %v3085, %v1766
        %v3090 = vadd.f32 %v3086, %v1766
        %v3091 = vadd.f32 %v3087, %v1772
        %v3092 = vadd.f32 %v3088, %v1773
        %v3093 = vadd.f32 %v3089, %v1774
        %v3094 = vadd.f32 %v3090, %v1775
        %v3095 = vadd.f32 %v3091, %v1781
        %v3096 = vadd.f32 %v3092, %v1782
        %v3097 = vadd.f32 %v3093, %v1783
        %v3098 = vadd.f32 %v3094, %v1784
        %v3099 = vadd.f32 %v3095, %v1790
        %v3100 = vadd.f32 %v3096, %v1791
        %v3101 = vadd.f32 %v3097, %v1792
        %v3102 = vadd.f32 %v3098, %v1793
        %v3103 = vadd.f32 %v3099, %v1799
        %v3104 = vadd.f32 %v3100, %v1800
        %v3105 = vadd.f32 %v3101, %v1801
        %v3106 = vadd.f32 %v3102, %v1802
        %v3107 = vtanh.pop %v3103
        %v3108 = vtanh.pop %v3104
        %v3109 = vtanh.pop %v3105
        %v3110 = vtanh.pop %v3106
        %v3111 = vmul.f32 %v3107, %v1811
        %v3112 = vmul.f32 %v3108, %v1811
        %v3113 = vmul.f32 %v3109, %v1811
        %v3114 = vmul.f32 %v3110, %v1811
        %v3115 = vadd.f32 %v3079, %v3111
        %v3116 = vadd.f32 %v3080, %v3112
        %v3117 = vadd.f32 %v3081, %v3113
        %v3118 = vadd.f32 %v3082, %v3114
        %v3119 = vmul.f32 %v2759, %v1820
        %v3120 = vmul.f32 %v2760, %v1820
        %v3121 = vmul.f32 %v2761, %v1820
        %v3122 = vmul.f32 %v2762, %v1820
        %v3123 = vadd.f32 %v3119, %v1825
        %v3124 = vadd.f32 %v3120, %v1825
        %v3125 = vadd.f32 %v3121, %v1825
        %v3126 = vadd.f32 %v3122, %v1825
        %v3127 = vadd.f32 %v3123, %v1831
        %v3128 = vadd.f32 %v3124, %v1832
        %v3129 = vadd.f32 %v3125, %v1833
        %v3130 = vadd.f32 %v3126, %v1834
        %v3131 = vadd.f32 %v3127, %v1840
        %v3132 = vadd.f32 %v3128, %v1841
        %v3133 = vadd.f32 %v3129, %v1842
        %v3134 = vadd.f32 %v3130, %v1843
        %v3135 = vadd.f32 %v3131, %v1849
        %v3136 = vadd.f32 %v3132, %v1850
        %v3137 = vadd.f32 %v3133, %v1851
        %v3138 = vadd.f32 %v3134, %v1852
        %v3139 = vadd.f32 %v3135, %v1858
        %v3140 = vadd.f32 %v3136, %v1859
        %v3141 = vadd.f32 %v3137, %v1860
        %v3142 = vadd.f32 %v3138, %v1861
        %v3143 = vtanh.pop %v3139
        %v3144 = vtanh.pop %v3140
        %v3145 = vtanh.pop %v3141
        %v3146 = vtanh.pop %v3142
        %v3147 = vmul.f32 %v3143, %v1870
        %v3148 = vmul.f32 %v3144, %v1870
        %v3149 = vmul.f32 %v3145, %v1870
        %v3150 = vmul.f32 %v3146, %v1870
        %v3151 = vadd.f32 %v3115, %v3147
        %v3152 = vadd.f32 %v3116, %v3148
        %v3153 = vadd.f32 %v3117, %v3149
        %v3154 = vadd.f32 %v3118, %v3150
        %v3155 = vmul.f32 %v2759, %v1879
        %v3156 = vmul.f32 %v2760, %v1879
        %v3157 = vmul.f32 %v2761, %v1879
        %v3158 = vmul.f32 %v2762, %v1879
        %v3159 = vadd.f32 %v3155, %v1884
        %v3160 = vadd.f32 %v3156, %v1884
        %v3161 = vadd.f32 %v3157, %v1884
        %v3162 = vadd.f32 %v3158, %v1884
        %v3163 = vadd.f32 %v3159, %v1890
        %v3164 = vadd.f32 %v3160, %v1891
        %v3165 = vadd.f32 %v3161, %v1892
        %v3166 = vadd.f32 %v3162, %v1893
        %v3167 = vadd.f32 %v3163, %v1899
        %v3168 = vadd.f32 %v3164, %v1900
        %v3169 = vadd.f32 %v3165, %v1901
        %v3170 = vadd.f32 %v3166, %v1902
        %v3171 = vadd.f32 %v3167, %v1908
        %v3172 = vadd.f32 %v3168, %v1909
        %v3173 = vadd.f32 %v3169, %v1910
        %v3174 = vadd.f32 %v3170, %v1911
        %v3175 = vadd.f32 %v3171, %v1917
        %v3176 = vadd.f32 %v3172, %v1918
        %v3177 = vadd.f32 %v3173, %v1919
        %v3178 = vadd.f32 %v3174, %v1920
        %v3179 = vtanh.pop %v3175
        %v3180 = vtanh.pop %v3176
        %v3181 = vtanh.pop %v3177
        %v3182 = vtanh.pop %v3178
        %v3183 = vmul.f32 %v3179, %v1929
        %v3184 = vmul.f32 %v3180, %v1929
        %v3185 = vmul.f32 %v3181, %v1929
        %v3186 = vmul.f32 %v3182, %v1929
        %v3187 = vadd.f32 %v3151, %v3183
        %v3188 = vadd.f32 %v3152, %v3184
        %v3189 = vadd.f32 %v3153, %v3185
        %v3190 = vadd.f32 %v3154, %v3186
        %v3191 = vmul.f32 %v2759, %v1938
        %v3192 = vmul.f32 %v2760, %v1938
        %v3193 = vmul.f32 %v2761, %v1938
        %v3194 = vmul.f32 %v2762, %v1938
        %v3195 = vadd.f32 %v3191, %v1943
        %v3196 = vadd.f32 %v3192, %v1943
        %v3197 = vadd.f32 %v3193, %v1943
        %v3198 = vadd.f32 %v3194, %v1943
        %v3199 = vadd.f32 %v3195, %v1949
        %v3200 = vadd.f32 %v3196, %v1950
        %v3201 = vadd.f32 %v3197, %v1951
        %v3202 = vadd.f32 %v3198, %v1952
        %v3203 = vadd.f32 %v3199, %v1958
        %v3204 = vadd.f32 %v3200, %v1959
        %v3205 = vadd.f32 %v3201, %v1960
        %v3206 = vadd.f32 %v3202, %v1961
        %v3207 = vadd.f32 %v3203, %v1967
        %v3208 = vadd.f32 %v3204, %v1968
        %v3209 = vadd.f32 %v3205, %v1969
        %v3210 = vadd.f32 %v3206, %v1970
        %v3211 = vadd.f32 %v3207, %v1976
        %v3212 = vadd.f32 %v3208, %v1977
        %v3213 = vadd.f32 %v3209, %v1978
        %v3214 = vadd.f32 %v3210, %v1979
        %v3215 = vtanh.pop %v3211
        %v3216 = vtanh.pop %v3212
        %v3217 = vtanh.pop %v3213
        %v3218 = vtanh.pop %v3214
        %v3219 = vmul.f32 %v3215, %v1988
        %v3220 = vmul.f32 %v3216, %v1988
        %v3221 = vmul.f32 %v3217, %v1988
        %v3222 = vmul.f32 %v3218, %v1988
        %v3223 = vadd.f32 %v3187, %v3219
        %v3224 = vadd.f32 %v3188, %v3220
        %v3225 = vadd.f32 %v3189, %v3221
        %v3226 = vadd.f32 %v3190, %v3222
        %v3227 = vmul.f32 %v2759, %v1997
        %v3228 = vmul.f32 %v2760, %v1997
        %v3229 = vmul.f32 %v2761, %v1997
        %v3230 = vmul.f32 %v2762, %v1997
        %v3231 = vadd.f32 %v3227, %v2002
        %v3232 = vadd.f32 %v3228, %v2002
        %v3233 = vadd.f32 %v3229, %v2002
        %v3234 = vadd.f32 %v3230, %v2002
        %v3235 = vadd.f32 %v3231, %v2008
        %v3236 = vadd.f32 %v3232, %v2009
        %v3237 = vadd.f32 %v3233, %v2010
        %v3238 = vadd.f32 %v3234, %v2011
        %v3239 = vadd.f32 %v3235, %v2017
        %v3240 = vadd.f32 %v3236, %v2018
        %v3241 = vadd.f32 %v3237, %v2019
        %v3242 = vadd.f32 %v3238, %v2020
        %v3243 = vadd.f32 %v3239, %v2026
        %v3244 = vadd.f32 %v3240, %v2027
        %v3245 = vadd.f32 %v3241, %v2028
        %v3246 = vadd.f32 %v3242, %v2029
        %v3247 = vadd.f32 %v3243, %v2035
        %v3248 = vadd.f32 %v3244, %v2036
        %v3249 = vadd.f32 %v3245, %v2037
        %v3250 = vadd.f32 %v3246, %v2038
        %v3251 = vtanh.pop %v3247
        %v3252 = vtanh.pop %v3248
        %v3253 = vtanh.pop %v3249
        %v3254 = vtanh.pop %v3250
        %v3255 = vmul.f32 %v3251, %v2047
        %v3256 = vmul.f32 %v3252, %v2047
        %v3257 = vmul.f32 %v3253, %v2047
        %v3258 = vmul.f32 %v3254, %v2047
        %v3259 = vadd.f32 %v3223, %v3255
        %v3260 = vadd.f32 %v3224, %v3256
        %v3261 = vadd.f32 %v3225, %v3257
        %v3262 = vadd.f32 %v3226, %v3258
        %v3263 = vmul.f32 %v2759, %v2056
        %v3264 = vmul.f32 %v2760, %v2056
        %v3265 = vmul.f32 %v2761, %v2056
        %v3266 = vmul.f32 %v2762, %v2056
        %v3267 = vadd.f32 %v3263, %v2061
        %v3268 = vadd.f32 %v3264, %v2061
        %v3269 = vadd.f32 %v3265, %v2061
        %v3270 = vadd.f32 %v3266, %v2061
        %v3271 = vadd.f32 %v3267, %v2067
        %v3272 = vadd.f32 %v3268, %v2068
        %v3273 = vadd.f32 %v3269, %v2069
        %v3274 = vadd.f32 %v3270, %v2070
        %v3275 = vadd.f32 %v3271, %v2076
        %v3276 = vadd.f32 %v3272, %v2077
        %v3277 = vadd.f32 %v3273, %v2078
        %v3278 = vadd.f32 %v3274, %v2079
        %v3279 = vadd.f32 %v3275, %v2085
        %v3280 = vadd.f32 %v3276, %v2086
        %v3281 = vadd.f32 %v3277, %v2087
        %v3282 = vadd.f32 %v3278, %v2088
        %v3283 = vadd.f32 %v3279, %v2094
        %v3284 = vadd.f32 %v3280, %v2095
        %v3285 = vadd.f32 %v3281, %v2096
        %v3286 = vadd.f32 %v3282, %v2097
        %v3287 = vtanh.pop %v3283
        %v3288 = vtanh.pop %v3284
        %v3289 = vtanh.pop %v3285
        %v3290 = vtanh.pop %v3286
        %v3291 = vmul.f32 %v3287, %v2106
        %v3292 = vmul.f32 %v3288, %v2106
        %v3293 = vmul.f32 %v3289, %v2106
        %v3294 = vmul.f32 %v3290, %v2106
        %v3295 = vadd.f32 %v3259, %v3291
        %v3296 = vadd.f32 %v3260, %v3292
        %v3297 = vadd.f32 %v3261, %v3293
        %v3298 = vadd.f32 %v3262, %v3294
        %v3299 = vmul.f32 %v2759, %v2115
        %v3300 = vmul.f32 %v2760, %v2115
        %v3301 = vmul.f32 %v2761, %v2115
        %v3302 = vmul.f32 %v2762, %v2115
        %v3303 = vadd.f32 %v3299, %v2120
        %v3304 = vadd.f32 %v3300, %v2120
        %v3305 = vadd.f32 %v3301, %v2120
        %v3306 = vadd.f32 %v3302, %v2120
        %v3307 = vadd.f32 %v3303, %v2126
        %v3308 = vadd.f32 %v3304, %v2127
        %v3309 = vadd.f32 %v3305, %v2128
        %v3310 = vadd.f32 %v3306, %v2129
        %v3311 = vadd.f32 %v3307, %v2135
        %v3312 = vadd.f32 %v3308, %v2136
        %v3313 = vadd.f32 %v3309, %v2137
        %v3314 = vadd.f32 %v3310, %v2138
        %v3315 = vadd.f32 %v3311, %v2144
        %v3316 = vadd.f32 %v3312, %v2145
        %v3317 = vadd.f32 %v3313, %v2146
        %v3318 = vadd.f32 %v3314, %v2147
        %v3319 = vadd.f32 %v3315, %v2153
        %v3320 = vadd.f32 %v3316, %v2154
        %v3321 = vadd.f32 %v3317, %v2155
        %v3322 = vadd.f32 %v3318, %v2156
        %v3323 = vtanh.pop %v3319
        %v3324 = vtanh.pop %v3320
        %v3325 = vtanh.pop %v3321
        %v3326 = vtanh.pop %v3322
        %v3327 = vmul.f32 %v3323, %v2165
        %v3328 = vmul.f32 %v3324, %v2165
        %v3329 = vmul.f32 %v3325, %v2165
        %v3330 = vmul.f32 %v3326, %v2165
        %v3331 = vadd.f32 %v3295, %v3327
        %v3332 = vadd.f32 %v3296, %v3328
        %v3333 = vadd.f32 %v3297, %v3329
        %v3334 = vadd.f32 %v3298, %v3330
        %v3335 = vadd.f32 %v2759, %v3331
        %v3336 = vadd.f32 %v2760, %v3332
        %v3337 = vadd.f32 %v2761, %v3333
        %v3338 = vadd.f32 %v2762, %v3334
        %v3339 = vadd.f32 %v3335, %v2178
        %v3340 = vadd.f32 %v3336, %v2178
        %v3341 = vadd.f32 %v3337, %v2178
        %v3342 = vadd.f32 %v3338, %v2178
        %v3343 = vmul.f32 %v3339, %v1234
        %v3344 = vmul.f32 %v3340, %v1234
        %v3345 = vmul.f32 %v3341, %v1234
        %v3346 = vmul.f32 %v3342, %v1234
        %v3347 = vadd.f32 %v3343, %v1239
        %v3348 = vadd.f32 %v3344, %v1239
        %v3349 = vadd.f32 %v3345, %v1239
        %v3350 = vadd.f32 %v3346, %v1239
        %v3351 = vadd.f32 %v3347, %v1245
        %v3352 = vadd.f32 %v3348, %v1246
        %v3353 = vadd.f32 %v3349, %v1247
        %v3354 = vadd.f32 %v3350, %v1248
        %v3355 = vadd.f32 %v3351, %v1254
        %v3356 = vadd.f32 %v3352, %v1255
        %v3357 = vadd.f32 %v3353, %v1256
        %v3358 = vadd.f32 %v3354, %v1257
        %v3359 = vadd.f32 %v3355, %v1263
        %v3360 = vadd.f32 %v3356, %v1264
        %v3361 = vadd.f32 %v3357, %v1265
        %v3362 = vadd.f32 %v3358, %v1266
        %v3363 = vadd.f32 %v3359, %v1272
        %v3364 = vadd.f32 %v3360, %v1273
        %v3365 = vadd.f32 %v3361, %v1274
        %v3366 = vadd.f32 %v3362, %v1275
        %v3367 = vtanh.pop %v3363
        %v3368 = vtanh.pop %v3364
        %v3369 = vtanh.pop %v3365
        %v3370 = vtanh.pop %v3366
        %v3371 = vmul.f32 %v3367, %v1284
        %v3372 = vmul.f32 %v3368, %v1284
        %v3373 = vmul.f32 %v3369, %v1284
        %v3374 = vmul.f32 %v3370, %v1284
        %v3375 = vmul.f32 %v3339, %v1289
        %v3376 = vmul.f32 %v3340, %v1289
        %v3377 = vmul.f32 %v3341, %v1289
        %v3378 = vmul.f32 %v3342, %v1289
        %v3379 = vadd.f32 %v3375, %v1294
        %v3380 = vadd.f32 %v3376, %v1294
        %v3381 = vadd.f32 %v3377, %v1294
        %v3382 = vadd.f32 %v3378, %v1294
        %v3383 = vadd.f32 %v3379, %v1300
        %v3384 = vadd.f32 %v3380, %v1301
        %v3385 = vadd.f32 %v3381, %v1302
        %v3386 = vadd.f32 %v3382, %v1303
        %v3387 = vadd.f32 %v3383, %v1309
        %v3388 = vadd.f32 %v3384, %v1310
        %v3389 = vadd.f32 %v3385, %v1311
        %v3390 = vadd.f32 %v3386, %v1312
        %v3391 = vadd.f32 %v3387, %v1318
        %v3392 = vadd.f32 %v3388, %v1319
        %v3393 = vadd.f32 %v3389, %v1320
        %v3394 = vadd.f32 %v3390, %v1321
        %v3395 = vadd.f32 %v3391, %v1327
        %v3396 = vadd.f32 %v3392, %v1328
        %v3397 = vadd.f32 %v3393, %v1329
        %v3398 = vadd.f32 %v3394, %v1330
        %v3399 = vtanh.pop %v3395
        %v3400 = vtanh.pop %v3396
        %v3401 = vtanh.pop %v3397
        %v3402 = vtanh.pop %v3398
        %v3403 = vmul.f32 %v3399, %v1339
        %v3404 = vmul.f32 %v3400, %v1339
        %v3405 = vmul.f32 %v3401, %v1339
        %v3406 = vmul.f32 %v3402, %v1339
        %v3407 = vadd.f32 %v3371, %v3403
        %v3408 = vadd.f32 %v3372, %v3404
        %v3409 = vadd.f32 %v3373, %v3405
        %v3410 = vadd.f32 %v3374, %v3406
        %v3411 = vmul.f32 %v3339, %v1348
        %v3412 = vmul.f32 %v3340, %v1348
        %v3413 = vmul.f32 %v3341, %v1348
        %v3414 = vmul.f32 %v3342, %v1348
        %v3415 = vadd.f32 %v3411, %v1353
        %v3416 = vadd.f32 %v3412, %v1353
        %v3417 = vadd.f32 %v3413, %v1353
        %v3418 = vadd.f32 %v3414, %v1353
        %v3419 = vadd.f32 %v3415, %v1359
        %v3420 = vadd.f32 %v3416, %v1360
        %v3421 = vadd.f32 %v3417, %v1361
        %v3422 = vadd.f32 %v3418, %v1362
        %v3423 = vadd.f32 %v3419, %v1368
        %v3424 = vadd.f32 %v3420, %v1369
        %v3425 = vadd.f32 %v3421, %v1370
        %v3426 = vadd.f32 %v3422, %v1371
        %v3427 = vadd.f32 %v3423, %v1377
        %v3428 = vadd.f32 %v3424, %v1378
        %v3429 = vadd.f32 %v3425, %v1379
        %v3430 = vadd.f32 %v3426, %v1380
        %v3431 = vadd.f32 %v3427, %v1386
        %v3432 = vadd.f32 %v3428, %v1387
        %v3433 = vadd.f32 %v3429, %v1388
        %v3434 = vadd.f32 %v3430, %v1389
        %v3435 = vtanh.pop %v3431
        %v3436 = vtanh.pop %v3432
        %v3437 = vtanh.pop %v3433
        %v3438 = vtanh.pop %v3434
        %v3439 = vmul.f32 %v3435, %v1398
        %v3440 = vmul.f32 %v3436, %v1398
        %v3441 = vmul.f32 %v3437, %v1398
        %v3442 = vmul.f32 %v3438, %v1398
        %v3443 = vadd.f32 %v3407, %v3439
        %v3444 = vadd.f32 %v3408, %v3440
        %v3445 = vadd.f32 %v3409, %v3441
        %v3446 = vadd.f32 %v3410, %v3442
        %v3447 = vmul.f32 %v3339, %v1407
        %v3448 = vmul.f32 %v3340, %v1407
        %v3449 = vmul.f32 %v3341, %v1407
        %v3450 = vmul.f32 %v3342, %v1407
        %v3451 = vadd.f32 %v3447, %v1412
        %v3452 = vadd.f32 %v3448, %v1412
        %v3453 = vadd.f32 %v3449, %v1412
        %v3454 = vadd.f32 %v3450, %v1412
        %v3455 = vadd.f32 %v3451, %v1418
        %v3456 = vadd.f32 %v3452, %v1419
        %v3457 = vadd.f32 %v3453, %v1420
        %v3458 = vadd.f32 %v3454, %v1421
        %v3459 = vadd.f32 %v3455, %v1427
        %v3460 = vadd.f32 %v3456, %v1428
        %v3461 = vadd.f32 %v3457, %v1429
        %v3462 = vadd.f32 %v3458, %v1430
        %v3463 = vadd.f32 %v3459, %v1436
        %v3464 = vadd.f32 %v3460, %v1437
        %v3465 = vadd.f32 %v3461, %v1438
        %v3466 = vadd.f32 %v3462, %v1439
        %v3467 = vadd.f32 %v3463, %v1445
        %v3468 = vadd.f32 %v3464, %v1446
        %v3469 = vadd.f32 %v3465, %v1447
        %v3470 = vadd.f32 %v3466, %v1448
        %v3471 = vtanh.pop %v3467
        %v3472 = vtanh.pop %v3468
        %v3473 = vtanh.pop %v3469
        %v3474 = vtanh.pop %v3470
        %v3475 = vmul.f32 %v3471, %v1457
        %v3476 = vmul.f32 %v3472, %v1457
        %v3477 = vmul.f32 %v3473, %v1457
        %v3478 = vmul.f32 %v3474, %v1457
        %v3479 = vadd.f32 %v3443, %v3475
        %v3480 = vadd.f32 %v3444, %v3476
        %v3481 = vadd.f32 %v3445, %v3477
        %v3482 = vadd.f32 %v3446, %v3478
        %v3483 = vmul.f32 %v3339, %v1466
        %v3484 = vmul.f32 %v3340, %v1466
        %v3485 = vmul.f32 %v3341, %v1466
        %v3486 = vmul.f32 %v3342, %v1466
        %v3487 = vadd.f32 %v3483, %v1471
        %v3488 = vadd.f32 %v3484, %v1471
        %v3489 = vadd.f32 %v3485, %v1471
        %v3490 = vadd.f32 %v3486, %v1471
        %v3491 = vadd.f32 %v3487, %v1477
        %v3492 = vadd.f32 %v3488, %v1478
        %v3493 = vadd.f32 %v3489, %v1479
        %v3494 = vadd.f32 %v3490, %v1480
        %v3495 = vadd.f32 %v3491, %v1486
        %v3496 = vadd.f32 %v3492, %v1487
        %v3497 = vadd.f32 %v3493, %v1488
        %v3498 = vadd.f32 %v3494, %v1489
        %v3499 = vadd.f32 %v3495, %v1495
        %v3500 = vadd.f32 %v3496, %v1496
        %v3501 = vadd.f32 %v3497, %v1497
        %v3502 = vadd.f32 %v3498, %v1498
        %v3503 = vadd.f32 %v3499, %v1504
        %v3504 = vadd.f32 %v3500, %v1505
        %v3505 = vadd.f32 %v3501, %v1506
        %v3506 = vadd.f32 %v3502, %v1507
        %v3507 = vtanh.pop %v3503
        %v3508 = vtanh.pop %v3504
        %v3509 = vtanh.pop %v3505
        %v3510 = vtanh.pop %v3506
        %v3511 = vmul.f32 %v3507, %v1516
        %v3512 = vmul.f32 %v3508, %v1516
        %v3513 = vmul.f32 %v3509, %v1516
        %v3514 = vmul.f32 %v3510, %v1516
        %v3515 = vadd.f32 %v3479, %v3511
        %v3516 = vadd.f32 %v3480, %v3512
        %v3517 = vadd.f32 %v3481, %v3513
        %v3518 = vadd.f32 %v3482, %v3514
        %v3519 = vmul.f32 %v3339, %v1525
        %v3520 = vmul.f32 %v3340, %v1525
        %v3521 = vmul.f32 %v3341, %v1525
        %v3522 = vmul.f32 %v3342, %v1525
        %v3523 = vadd.f32 %v3519, %v1530
        %v3524 = vadd.f32 %v3520, %v1530
        %v3525 = vadd.f32 %v3521, %v1530
        %v3526 = vadd.f32 %v3522, %v1530
        %v3527 = vadd.f32 %v3523, %v1536
        %v3528 = vadd.f32 %v3524, %v1537
        %v3529 = vadd.f32 %v3525, %v1538
        %v3530 = vadd.f32 %v3526, %v1539
        %v3531 = vadd.f32 %v3527, %v1545
        %v3532 = vadd.f32 %v3528, %v1546
        %v3533 = vadd.f32 %v3529, %v1547
        %v3534 = vadd.f32 %v3530, %v1548
        %v3535 = vadd.f32 %v3531, %v1554
        %v3536 = vadd.f32 %v3532, %v1555
        %v3537 = vadd.f32 %v3533, %v1556
        %v3538 = vadd.f32 %v3534, %v1557
        %v3539 = vadd.f32 %v3535, %v1563
        %v3540 = vadd.f32 %v3536, %v1564
        %v3541 = vadd.f32 %v3537, %v1565
        %v3542 = vadd.f32 %v3538, %v1566
        %v3543 = vtanh.pop %v3539
        %v3544 = vtanh.pop %v3540
        %v3545 = vtanh.pop %v3541
        %v3546 = vtanh.pop %v3542
        %v3547 = vmul.f32 %v3543, %v1575
        %v3548 = vmul.f32 %v3544, %v1575
        %v3549 = vmul.f32 %v3545, %v1575
        %v3550 = vmul.f32 %v3546, %v1575
        %v3551 = vadd.f32 %v3515, %v3547
        %v3552 = vadd.f32 %v3516, %v3548
        %v3553 = vadd.f32 %v3517, %v3549
        %v3554 = vadd.f32 %v3518, %v3550
        %v3555 = vmul.f32 %v3339, %v1584
        %v3556 = vmul.f32 %v3340, %v1584
        %v3557 = vmul.f32 %v3341, %v1584
        %v3558 = vmul.f32 %v3342, %v1584
        %v3559 = vadd.f32 %v3555, %v1589
        %v3560 = vadd.f32 %v3556, %v1589
        %v3561 = vadd.f32 %v3557, %v1589
        %v3562 = vadd.f32 %v3558, %v1589
        %v3563 = vadd.f32 %v3559, %v1595
        %v3564 = vadd.f32 %v3560, %v1596
        %v3565 = vadd.f32 %v3561, %v1597
        %v3566 = vadd.f32 %v3562, %v1598
        %v3567 = vadd.f32 %v3563, %v1604
        %v3568 = vadd.f32 %v3564, %v1605
        %v3569 = vadd.f32 %v3565, %v1606
        %v3570 = vadd.f32 %v3566, %v1607
        %v3571 = vadd.f32 %v3567, %v1613
        %v3572 = vadd.f32 %v3568, %v1614
        %v3573 = vadd.f32 %v3569, %v1615
        %v3574 = vadd.f32 %v3570, %v1616
        %v3575 = vadd.f32 %v3571, %v1622
        %v3576 = vadd.f32 %v3572, %v1623
        %v3577 = vadd.f32 %v3573, %v1624
        %v3578 = vadd.f32 %v3574, %v1625
        %v3579 = vtanh.pop %v3575
        %v3580 = vtanh.pop %v3576
        %v3581 = vtanh.pop %v3577
        %v3582 = vtanh.pop %v3578
        %v3583 = vmul.f32 %v3579, %v1634
        %v3584 = vmul.f32 %v3580, %v1634
        %v3585 = vmul.f32 %v3581, %v1634
        %v3586 = vmul.f32 %v3582, %v1634
        %v3587 = vadd.f32 %v3551, %v3583
        %v3588 = vadd.f32 %v3552, %v3584
        %v3589 = vadd.f32 %v3553, %v3585
        %v3590 = vadd.f32 %v3554, %v3586
        %v3591 = vmul.f32 %v3339, %v1643
        %v3592 = vmul.f32 %v3340, %v1643
        %v3593 = vmul.f32 %v3341, %v1643
        %v3594 = vmul.f32 %v3342, %v1643
        %v3595 = vadd.f32 %v3591, %v1648
        %v3596 = vadd.f32 %v3592, %v1648
        %v3597 = vadd.f32 %v3593, %v1648
        %v3598 = vadd.f32 %v3594, %v1648
        %v3599 = vadd.f32 %v3595, %v1654
        %v3600 = vadd.f32 %v3596, %v1655
        %v3601 = vadd.f32 %v3597, %v1656
        %v3602 = vadd.f32 %v3598, %v1657
        %v3603 = vadd.f32 %v3599, %v1663
        %v3604 = vadd.f32 %v3600, %v1664
        %v3605 = vadd.f32 %v3601, %v1665
        %v3606 = vadd.f32 %v3602, %v1666
        %v3607 = vadd.f32 %v3603, %v1672
        %v3608 = vadd.f32 %v3604, %v1673
        %v3609 = vadd.f32 %v3605, %v1674
        %v3610 = vadd.f32 %v3606, %v1675
        %v3611 = vadd.f32 %v3607, %v1681
        %v3612 = vadd.f32 %v3608, %v1682
        %v3613 = vadd.f32 %v3609, %v1683
        %v3614 = vadd.f32 %v3610, %v1684
        %v3615 = vtanh.pop %v3611
        %v3616 = vtanh.pop %v3612
        %v3617 = vtanh.pop %v3613
        %v3618 = vtanh.pop %v3614
        %v3619 = vmul.f32 %v3615, %v1693
        %v3620 = vmul.f32 %v3616, %v1693
        %v3621 = vmul.f32 %v3617, %v1693
        %v3622 = vmul.f32 %v3618, %v1693
        %v3623 = vadd.f32 %v3587, %v3619
        %v3624 = vadd.f32 %v3588, %v3620
        %v3625 = vadd.f32 %v3589, %v3621
        %v3626 = vadd.f32 %v3590, %v3622
        %v3627 = vmul.f32 %v3339, %v1702
        %v3628 = vmul.f32 %v3340, %v1702
        %v3629 = vmul.f32 %v3341, %v1702
        %v3630 = vmul.f32 %v3342, %v1702
        %v3631 = vadd.f32 %v3627, %v1707
        %v3632 = vadd.f32 %v3628, %v1707
        %v3633 = vadd.f32 %v3629, %v1707
        %v3634 = vadd.f32 %v3630, %v1707
        %v3635 = vadd.f32 %v3631, %v1713
        %v3636 = vadd.f32 %v3632, %v1714
        %v3637 = vadd.f32 %v3633, %v1715
        %v3638 = vadd.f32 %v3634, %v1716
        %v3639 = vadd.f32 %v3635, %v1722
        %v3640 = vadd.f32 %v3636, %v1723
        %v3641 = vadd.f32 %v3637, %v1724
        %v3642 = vadd.f32 %v3638, %v1725
        %v3643 = vadd.f32 %v3639, %v1731
        %v3644 = vadd.f32 %v3640, %v1732
        %v3645 = vadd.f32 %v3641, %v1733
        %v3646 = vadd.f32 %v3642, %v1734
        %v3647 = vadd.f32 %v3643, %v1740
        %v3648 = vadd.f32 %v3644, %v1741
        %v3649 = vadd.f32 %v3645, %v1742
        %v3650 = vadd.f32 %v3646, %v1743
        %v3651 = vtanh.pop %v3647
        %v3652 = vtanh.pop %v3648
        %v3653 = vtanh.pop %v3649
        %v3654 = vtanh.pop %v3650
        %v3655 = vmul.f32 %v3651, %v1752
        %v3656 = vmul.f32 %v3652, %v1752
        %v3657 = vmul.f32 %v3653, %v1752
        %v3658 = vmul.f32 %v3654, %v1752
        %v3659 = vadd.f32 %v3623, %v3655
        %v3660 = vadd.f32 %v3624, %v3656
        %v3661 = vadd.f32 %v3625, %v3657
        %v3662 = vadd.f32 %v3626, %v3658
        %v3663 = vmul.f32 %v3339, %v1761
        %v3664 = vmul.f32 %v3340, %v1761
        %v3665 = vmul.f32 %v3341, %v1761
        %v3666 = vmul.f32 %v3342, %v1761
        %v3667 = vadd.f32 %v3663, %v1766
        %v3668 = vadd.f32 %v3664, %v1766
        %v3669 = vadd.f32 %v3665, %v1766
        %v3670 = vadd.f32 %v3666, %v1766
        %v3671 = vadd.f32 %v3667, %v1772
        %v3672 = vadd.f32 %v3668, %v1773
        %v3673 = vadd.f32 %v3669, %v1774
        %v3674 = vadd.f32 %v3670, %v1775
        %v3675 = vadd.f32 %v3671, %v1781
        %v3676 = vadd.f32 %v3672, %v1782
        %v3677 = vadd.f32 %v3673, %v1783
        %v3678 = vadd.f32 %v3674, %v1784
        %v3679 = vadd.f32 %v3675, %v1790
        %v3680 = vadd.f32 %v3676, %v1791
        %v3681 = vadd.f32 %v3677, %v1792
        %v3682 = vadd.f32 %v3678, %v1793
        %v3683 = vadd.f32 %v3679, %v1799
        %v3684 = vadd.f32 %v3680, %v1800
        %v3685 = vadd.f32 %v3681, %v1801
        %v3686 = vadd.f32 %v3682, %v1802
        %v3687 = vtanh.pop %v3683
        %v3688 = vtanh.pop %v3684
        %v3689 = vtanh.pop %v3685
        %v3690 = vtanh.pop %v3686
        %v3691 = vmul.f32 %v3687, %v1811
        %v3692 = vmul.f32 %v3688, %v1811
        %v3693 = vmul.f32 %v3689, %v1811
        %v3694 = vmul.f32 %v3690, %v1811
        %v3695 = vadd.f32 %v3659, %v3691
        %v3696 = vadd.f32 %v3660, %v3692
        %v3697 = vadd.f32 %v3661, %v3693
        %v3698 = vadd.f32 %v3662, %v3694
        %v3699 = vmul.f32 %v3339, %v1820
        %v3700 = vmul.f32 %v3340, %v1820
        %v3701 = vmul.f32 %v3341, %v1820
        %v3702 = vmul.f32 %v3342, %v1820
        %v3703 = vadd.f32 %v3699, %v1825
        %v3704 = vadd.f32 %v3700, %v1825
        %v3705 = vadd.f32 %v3701, %v1825
        %v3706 = vadd.f32 %v3702, %v1825
        %v3707 = vadd.f32 %v3703, %v1831
        %v3708 = vadd.f32 %v3704, %v1832
        %v3709 = vadd.f32 %v3705, %v1833
        %v3710 = vadd.f32 %v3706, %v1834
        %v3711 = vadd.f32 %v3707, %v1840
        %v3712 = vadd.f32 %v3708, %v1841
        %v3713 = vadd.f32 %v3709, %v1842
        %v3714 = vadd.f32 %v3710, %v1843
        %v3715 = vadd.f32 %v3711, %v1849
        %v3716 = vadd.f32 %v3712, %v1850
        %v3717 = vadd.f32 %v3713, %v1851
        %v3718 = vadd.f32 %v3714, %v1852
        %v3719 = vadd.f32 %v3715, %v1858
        %v3720 = vadd.f32 %v3716, %v1859
        %v3721 = vadd.f32 %v3717, %v1860
        %v3722 = vadd.f32 %v3718, %v1861
        %v3723 = vtanh.pop %v3719
        %v3724 = vtanh.pop %v3720
        %v3725 = vtanh.pop %v3721
        %v3726 = vtanh.pop %v3722
        %v3727 = vmul.f32 %v3723, %v1870
        %v3728 = vmul.f32 %v3724, %v1870
        %v3729 = vmul.f32 %v3725, %v1870
        %v3730 = vmul.f32 %v3726, %v1870
        %v3731 = vadd.f32 %v3695, %v3727
        %v3732 = vadd.f32 %v3696, %v3728
        %v3733 = vadd.f32 %v3697, %v3729
        %v3734 = vadd.f32 %v3698, %v3730
        %v3735 = vmul.f32 %v3339, %v1879
        %v3736 = vmul.f32 %v3340, %v1879
        %v3737 = vmul.f32 %v3341, %v1879
        %v3738 = vmul.f32 %v3342, %v1879
        %v3739 = vadd.f32 %v3735, %v1884
        %v3740 = vadd.f32 %v3736, %v1884
        %v3741 = vadd.f32 %v3737, %v1884
        %v3742 = vadd.f32 %v3738, %v1884
        %v3743 = vadd.f32 %v3739, %v1890
        %v3744 = vadd.f32 %v3740, %v1891
        %v3745 = vadd.f32 %v3741, %v1892
        %v3746 = vadd.f32 %v3742, %v1893
        %v3747 = vadd.f32 %v3743, %v1899
        %v3748 = vadd.f32 %v3744, %v1900
        %v3749 = vadd.f32 %v3745, %v1901
        %v3750 = vadd.f32 %v3746, %v1902
        %v3751 = vadd.f32 %v3747, %v1908
        %v3752 = vadd.f32 %v3748, %v1909
        %v3753 = vadd.f32 %v3749, %v1910
        %v3754 = vadd.f32 %v3750, %v1911
        %v3755 = vadd.f32 %v3751, %v1917
        %v3756 = vadd.f32 %v3752, %v1918
        %v3757 = vadd.f32 %v3753, %v1919
        %v3758 = vadd.f32 %v3754, %v1920
        %v3759 = vtanh.pop %v3755
        %v3760 = vtanh.pop %v3756
        %v3761 = vtanh.pop %v3757
        %v3762 = vtanh.pop %v3758
        %v3763 = vmul.f32 %v3759, %v1929
        %v3764 = vmul.f32 %v3760, %v1929
        %v3765 = vmul.f32 %v3761, %v1929
        %v3766 = vmul.f32 %v3762, %v1929
        %v3767 = vadd.f32 %v3731, %v3763
        %v3768 = vadd.f32 %v3732, %v3764
        %v3769 = vadd.f32 %v3733, %v3765
        %v3770 = vadd.f32 %v3734, %v3766
        %v3771 = vmul.f32 %v3339, %v1938
        %v3772 = vmul.f32 %v3340, %v1938
        %v3773 = vmul.f32 %v3341, %v1938
        %v3774 = vmul.f32 %v3342, %v1938
        %v3775 = vadd.f32 %v3771, %v1943
        %v3776 = vadd.f32 %v3772, %v1943
        %v3777 = vadd.f32 %v3773, %v1943
        %v3778 = vadd.f32 %v3774, %v1943
        %v3779 = vadd.f32 %v3775, %v1949
        %v3780 = vadd.f32 %v3776, %v1950
        %v3781 = vadd.f32 %v3777, %v1951
        %v3782 = vadd.f32 %v3778, %v1952
        %v3783 = vadd.f32 %v3779, %v1958
        %v3784 = vadd.f32 %v3780, %v1959
        %v3785 = vadd.f32 %v3781, %v1960
        %v3786 = vadd.f32 %v3782, %v1961
        %v3787 = vadd.f32 %v3783, %v1967
        %v3788 = vadd.f32 %v3784, %v1968
        %v3789 = vadd.f32 %v3785, %v1969
        %v3790 = vadd.f32 %v3786, %v1970
        %v3791 = vadd.f32 %v3787, %v1976
        %v3792 = vadd.f32 %v3788, %v1977
        %v3793 = vadd.f32 %v3789, %v1978
        %v3794 = vadd.f32 %v3790, %v1979
        %v3795 = vtanh.pop %v3791
        %v3796 = vtanh.pop %v3792
        %v3797 = vtanh.pop %v3793
        %v3798 = vtanh.pop %v3794
        %v3799 = vmul.f32 %v3795, %v1988
        %v3800 = vmul.f32 %v3796, %v1988
        %v3801 = vmul.f32 %v3797, %v1988
        %v3802 = vmul.f32 %v3798, %v1988
        %v3803 = vadd.f32 %v3767, %v3799
        %v3804 = vadd.f32 %v3768, %v3800
        %v3805 = vadd.f32 %v3769, %v3801
        %v3806 = vadd.f32 %v3770, %v3802
        %v3807 = vmul.f32 %v3339, %v1997
        %v3808 = vmul.f32 %v3340, %v1997
        %v3809 = vmul.f32 %v3341, %v1997
        %v3810 = vmul.f32 %v3342, %v1997
        %v3811 = vadd.f32 %v3807, %v2002
        %v3812 = vadd.f32 %v3808, %v2002
        %v3813 = vadd.f32 %v3809, %v2002
        %v3814 = vadd.f32 %v3810, %v2002
        %v3815 = vadd.f32 %v3811, %v2008
        %v3816 = vadd.f32 %v3812, %v2009
        %v3817 = vadd.f32 %v3813, %v2010
        %v3818 = vadd.f32 %v3814, %v2011
        %v3819 = vadd.f32 %v3815, %v2017
        %v3820 = vadd.f32 %v3816, %v2018
        %v3821 = vadd.f32 %v3817, %v2019
        %v3822 = vadd.f32 %v3818, %v2020
        %v3823 = vadd.f32 %v3819, %v2026
        %v3824 = vadd.f32 %v3820, %v2027
        %v3825 = vadd.f32 %v3821, %v2028
        %v3826 = vadd.f32 %v3822, %v2029
        %v3827 = vadd.f32 %v3823, %v2035
        %v3828 = vadd.f32 %v3824, %v2036
        %v3829 = vadd.f32 %v3825, %v2037
        %v3830 = vadd.f32 %v3826, %v2038
        %v3831 = vtanh.pop %v3827
        %v3832 = vtanh.pop %v3828
        %v3833 = vtanh.pop %v3829
        %v3834 = vtanh.pop %v3830
        %v3835 = vmul.f32 %v3831, %v2047
        %v3836 = vmul.f32 %v3832, %v2047
        %v3837 = vmul.f32 %v3833, %v2047
        %v3838 = vmul.f32 %v3834, %v2047
        %v3839 = vadd.f32 %v3803, %v3835
        %v3840 = vadd.f32 %v3804, %v3836
        %v3841 = vadd.f32 %v3805, %v3837
        %v3842 = vadd.f32 %v3806, %v3838
        %v3843 = vmul.f32 %v3339, %v2056
        %v3844 = vmul.f32 %v3340, %v2056
        %v3845 = vmul.f32 %v3341, %v2056
        %v3846 = vmul.f32 %v3342, %v2056
        %v3847 = vadd.f32 %v3843, %v2061
        %v3848 = vadd.f32 %v3844, %v2061
        %v3849 = vadd.f32 %v3845, %v2061
        %v3850 = vadd.f32 %v3846, %v2061
        %v3851 = vadd.f32 %v3847, %v2067
        %v3852 = vadd.f32 %v3848, %v2068
        %v3853 = vadd.f32 %v3849, %v2069
        %v3854 = vadd.f32 %v3850, %v2070
        %v3855 = vadd.f32 %v3851, %v2076
        %v3856 = vadd.f32 %v3852, %v2077
        %v3857 = vadd.f32 %v3853, %v2078
        %v3858 = vadd.f32 %v3854, %v2079
        %v3859 = vadd.f32 %v3855, %v2085
        %v3860 = vadd.f32 %v3856, %v2086
        %v3861 = vadd.f32 %v3857, %v2087
        %v3862 = vadd.f32 %v3858, %v2088
        %v3863 = vadd.f32 %v3859, %v2094
        %v3864 = vadd.f32 %v3860, %v2095
        %v3865 = vadd.f32 %v3861, %v2096
        %v3866 = vadd.f32 %v3862, %v2097
        %v3867 = vtanh.pop %v3863
        %v3868 = vtanh.pop %v3864
        %v3869 = vtanh.pop %v3865
        %v3870 = vtanh.pop %v3866
        %v3871 = vmul.f32 %v3867, %v2106
        %v3872 = vmul.f32 %v3868, %v2106
        %v3873 = vmul.f32 %v3869, %v2106
        %v3874 = vmul.f32 %v3870, %v2106
        %v3875 = vadd.f32 %v3839, %v3871
        %v3876 = vadd.f32 %v3840, %v3872
        %v3877 = vadd.f32 %v3841, %v3873
        %v3878 = vadd.f32 %v3842, %v3874
        %v3879 = vmul.f32 %v3339, %v2115
        %v3880 = vmul.f32 %v3340, %v2115
        %v3881 = vmul.f32 %v3341, %v2115
        %v3882 = vmul.f32 %v3342, %v2115
        %v3883 = vadd.f32 %v3879, %v2120
        %v3884 = vadd.f32 %v3880, %v2120
        %v3885 = vadd.f32 %v3881, %v2120
        %v3886 = vadd.f32 %v3882, %v2120
        %v3887 = vadd.f32 %v3883, %v2126
        %v3888 = vadd.f32 %v3884, %v2127
        %v3889 = vadd.f32 %v3885, %v2128
        %v3890 = vadd.f32 %v3886, %v2129
        %v3891 = vadd.f32 %v3887, %v2135
        %v3892 = vadd.f32 %v3888, %v2136
        %v3893 = vadd.f32 %v3889, %v2137
        %v3894 = vadd.f32 %v3890, %v2138
        %v3895 = vadd.f32 %v3891, %v2144
        %v3896 = vadd.f32 %v3892, %v2145
        %v3897 = vadd.f32 %v3893, %v2146
        %v3898 = vadd.f32 %v3894, %v2147
        %v3899 = vadd.f32 %v3895, %v2153
        %v3900 = vadd.f32 %v3896, %v2154
        %v3901 = vadd.f32 %v3897, %v2155
        %v3902 = vadd.f32 %v3898, %v2156
        %v3903 = vtanh.pop %v3899
        %v3904 = vtanh.pop %v3900
        %v3905 = vtanh.pop %v3901
        %v3906 = vtanh.pop %v3902
        %v3907 = vmul.f32 %v3903, %v2165
        %v3908 = vmul.f32 %v3904, %v2165
        %v3909 = vmul.f32 %v3905, %v2165
        %v3910 = vmul.f32 %v3906, %v2165
        %v3911 = vadd.f32 %v3875, %v3907
        %v3912 = vadd.f32 %v3876, %v3908
        %v3913 = vadd.f32 %v3877, %v3909
        %v3914 = vadd.f32 %v3878, %v3910
        %v3915 = vadd.f32 %v3339, %v3911
        %v3916 = vadd.f32 %v3340, %v3912
        %v3917 = vadd.f32 %v3341, %v3913
        %v3918 = vadd.f32 %v3342, %v3914
        %v3919 = vadd.f32 %v3915, %v2178
        %v3920 = vadd.f32 %v3916, %v2178
        %v3921 = vadd.f32 %v3917, %v2178
        %v3922 = vadd.f32 %v3918, %v2178
        %v3923 = vmax.f32 %v3919, 0.0
        %v3924 = vmax.f32 %v3920, 0.0
        %v3925 = vmax.f32 %v3921, 0.0
        %v3926 = vmax.f32 %v3922, 0.0
        %v3927 = vmin.f32 %v3923, 3.0
        %v3928 = vmin.f32 %v3924, 3.0
        %v3929 = vmin.f32 %v3925, 3.0
        %v3930 = vmin.f32 %v3926, 3.0
        %3935 = vset.pattern.permute.xlu0 0
        %3936 = vperm.xlu0 %3935, %v3927
        %v3937 = vpop.permute.xlu0 %3936
        %3938 = vset.pattern.permute.xlu0 0
        %3939 = vperm.xlu0 %3938, %v3928
        %v3940 = vpop.permute.xlu0 %3939
        %3941 = vset.pattern.permute.xlu0 0
        %3942 = vperm.xlu0 %3941, %v3929
        %v3943 = vpop.permute.xlu0 %3942
        %3944 = vset.pattern.permute.xlu0 0
        %3945 = vperm.xlu0 %3944, %v3930
        %v3946 = vpop.permute.xlu0 %3945
        %v3947 = vlaneseq
        %v3948 = vshrl.u32 %v3947, 7
        %v3949 = vsub.s32 %v566, %v3948
        %v3950 = vrot.slane %v3937, %v3949
        %v3951 = vlaneseq
        %v3952 = vshrl.u32 %v3951, 7
        %v3953 = vsub.s32 %v566, %v3952
        %v3954 = vrot.slane %v3940, %v3953
        %v3955 = vlaneseq
        %v3956 = vshrl.u32 %v3955, 7
        %v3957 = vsub.s32 %v566, %v3956
        %v3958 = vrot.slane %v3943, %v3957
        %v3959 = vlaneseq
        %v3960 = vshrl.u32 %v3959, 7
        %v3961 = vsub.s32 %v566, %v3960
        %v3962 = vrot.slane %v3946, %v3961
        %v3963 = vsel %vm682, %v3954, %v3950
        %v3964 = vsel %vm684, %v3958, %v3963
        %v3965 = vsel %vm686, %v3962, %v3964
        %3967 = vst.msk [vmem:[%s368] sm:$0xf] %vm575, %v3965
        %p3968 = scmp.lt.s32.totalorder %s24, 1
        %s3969 = scalar_select %p3968, %s24, 1
        %p3970 = scmp.lt.s32.totalorder %s25, 0
        %s3971 = scalar_select %p3970, %s25, 0
        %s3972 = sadd.s32 %s3971, %s3969
        %s3973 = smul.addr %s3972, 4
        %s3974 = scalar_lea.vmem %s6, %s3973
        // Predicated region
        $region57: #{_forward_impl.3} parent=43 // pred_check
          %p3975 = pneg %p194
        $region58: #{_forward_impl.3} parent=43 // pred_check_branch
          %3977 = sbr.rel (%p3975) target = $region60
        $region59: #{_forward_impl.3} parent=43 // pred_region
          _
        $region60: #{_forward_impl.3} parent=43 // pred_fallthru
          _
      $region44: #{_forward_impl.3} parent=5 // pred_fallthru
        _
      %p3978 = scmp.le.s32.totalorder 2, %s15
      // Predicated region
      $region61: #{_forward_impl.3} parent=5 // pred_check
        %p3979 = pneg %p3978
      $region62: #{_forward_impl.3} parent=5 // pred_check_branch
        %3981 = sbr.rel (%p3979) target = $region64
      $region63: #{_forward_impl.3} parent=5 // pred_region
        %s3982 = ssub.s32 %s15, 2
        // Predicated region
        $region65: #{_forward_impl.3} parent=63 // pred_check
          %p3983 = pneg %p200
        $region66: #{_forward_impl.3} parent=63 // pred_check_branch
          %3985 = sbr.rel (%p3983) target = $region68
        $region67: #{_forward_impl.3} parent=63 // pred_region
          %p3986 = scmp.lt.s32.totalorder %s26, 1
          %s3987 = scalar_select %p3986, %s26, 1
          %p3988 = scmp.lt.s32.totalorder %s27, 0
          %s3989 = scalar_select %p3988, %s27, 0
          %s3990 = sadd.s32 %s3989, %s3987
          %s3991 = smul.addr %s3990, 4
          %s3992 = scalar_lea.vmem %s6, %s3991
        $region68: #{_forward_impl.3} parent=63 // pred_fallthru
          _
      $region64: #{_forward_impl.3} parent=5 // pred_fallthru
        _
    $region6: #{_forward_impl.3} parent=1 // loop_footer
      %s19 = sadd.s32 1, %s15
    $region7: #{_forward_impl.3} parent=1 // loop_footer_branch
      %14 = sbr.rel target = $region3
    $region8: #{_forward_impl.3} parent=1 // loop_exit
      _
    %3993 = vsyncpa [#allocation4], 1
    %s3994 = scalar_lea.sflag [#allocation4], 1
    %3995 = vsyncpa %s3994, 1
    %3996 = vsyncpa [#allocation6], 1

</llo_original>
